<compile_context>
chip_gen: v5e
topology: v5e:2x2
jax: 0.10.0
libtpu: 0.0.40
codegen_flags: <defaults>
</compile_context>

<pallas_src>
import jax
import jax.numpy as jnp
from jax import lax
from jax.experimental import pallas as pl
from jax.experimental.pallas import tpu as pltpu

_EPS = 1e-5                        # nn.BatchNorm2d default eps
_VMEM_LIMIT = 48 * 1024 * 1024     # safe on v5e/v6e (128 MiB) and v7x (64 MiB)


def _round_up(x, m):
    return (x + m - 1) // m * m


def _pick_tm(m, cap=512):
    """Largest row tile that exactly divides m (multiple of 8 when possible).

    Exact division keeps every block fully valid, so no masking is needed and
    padded rows can never leak into the fused BN batch statistics.
    """
    if m <= cap or m % 8 != 0:
        return m                    # single full-extent block
    best = 8
    for t in range(8, cap + 1, 8):
        if m % t == 0:
            best = t
    return best


def _cparams():
    return pltpu.CompilerParams(
        dimension_semantics=("parallel",),   # megacore-shardable on v7x
        vmem_limit_bytes=_VMEM_LIMIT)


# --------------------------- Pallas kernels ---------------------------------

def _mm_stats_kernel(a_ref, b_ref, y_ref, st_ref):
    """y = a @ b (bf16 x bf16 -> f32); y stored bf16; BN partials in rows 0/1."""
    y = jnp.dot(a_ref[...], b_ref[...], preferred_element_type=jnp.float32)
    y_ref[...] = y.astype(y_ref.dtype)
    s = jnp.sum(y, axis=0, keepdims=True)
    ss = jnp.sum(y * y, axis=0, keepdims=True)
    st_ref[...] = jnp.concatenate(
        [s, ss, jnp.zeros((6, s.shape[1]), jnp.float32)], axis=0)


def _mm_bnrelu_stats_kernel(a_ref, sc_ref, bi_ref, b_ref, y_ref, st_ref):
    """Previous layer's BN-apply + ReLU fused into the A load, then matmul."""
    a = jnp.maximum(a_ref[...] * sc_ref[...] + bi_ref[...], 0.0)
    y = jnp.dot(a.astype(jnp.bfloat16), b_ref[...],
                preferred_element_type=jnp.float32)
    y_ref[...] = y.astype(y_ref.dtype)
    s = jnp.sum(y, axis=0, keepdims=True)
    ss = jnp.sum(y * y, axis=0, keepdims=True)
    st_ref[...] = jnp.concatenate(
        [s, ss, jnp.zeros((6, s.shape[1]), jnp.float32)], axis=0)


def _make_conv3x3_kernel(H, W, Ho, Wo, Hp, Wp, C, Cout, stride):
    """Per-image 3x3 conv: fused bn1+ReLU, VMEM tap gather (no HBM im2col)."""

    def kernel(y1_ref, sc_ref, bi_ref, w_ref, y2_ref, st_ref, xpad_ref):
        # bn1 apply + ReLU on the loaded conv1 output, assembled into a
        # zero-padded bf16 slab held in VMEM (border stays exactly zero).
        xpad_ref[...] = jnp.zeros((Hp, Wp, C), jnp.bfloat16)
        h = jnp.maximum(y1_ref[0] * sc_ref[0] + bi_ref[0], 0.0)
        xpad_ref[1:H + 1, 1:W + 1, :] = h.astype(jnp.bfloat16)
        xp = xpad_ref[...]

        acc = jnp.zeros((Ho * Wo, Cout), jnp.float32)
        for dy in range(3):
            if stride == 1:
                rows = xp[dy:dy + Ho]                       # (Ho, Wp, C)
            else:  # stride == 2: even/odd row planes, contiguous slices only
                rows = xp.reshape(Hp // 2, 2, Wp, C)[dy // 2:dy // 2 + Ho,
                                                     dy % 2]
                rows = rows.reshape(Ho, Wp // 2, 2, C)
            for dx in range(3):
                if stride == 1:
                    tap = rows[:, dx:dx + Wo, :]            # (Ho, Wo, C)
                else:
                    tap = rows[:, dx // 2:dx // 2 + Wo, dx % 2, :]
                acc = acc + jnp.dot(tap.reshape(Ho * Wo, C), w_ref[dy, dx],
                                    preferred_element_type=jnp.float32)

        s = jnp.sum(acc, axis=0, keepdims=True)
        ss = jnp.sum(acc * acc, axis=0, keepdims=True)
        st_ref[...] = jnp.concatenate(
            [s, ss, jnp.zeros((6, Cout), jnp.float32)], axis=0)
        y2_ref[...] = acc[None].astype(y2_ref.dtype)

    return kernel


def _bn_add_relu_kernel(y_ref, sc_ref, bi_ref, r_ref, rsc_ref, rbi_ref,
                        out_ref):
    pre = (y_ref[...] * sc_ref[...] + bi_ref[...]
           + r_ref[...] * rsc_ref[...] + rbi_ref[...])
    out_ref[...] = jnp.maximum(pre, 0.0)


def _bn_add_relu_pre_kernel(y_ref, sc_ref, bi_ref, r_ref, rsc_ref, rbi_ref,
                            out_ref, pre_ref):
    pre = (y_ref[...] * sc_ref[...] + bi_ref[...]
           + r_ref[...] * rsc_ref[...] + rbi_ref[...])
    pre_ref[...] = pre
    out_ref[...] = jnp.maximum(pre, 0.0)


# --------------------------- Pallas wrappers ---------------------------------

def _matmul_stats(a, w, sc=None, bi=None):
    """1x1 conv as a row-tiled matmul.  a:(M,K) bf16, w:(K,Cout) bf16.

    If sc/bi are given, relu(a*sc+bi) is applied to the A tile in-kernel
    (the previous layer's BatchNorm+ReLU fused into this conv's load).
    Returns (y bf16 (M,Cout), colsum (Cout,), colsumsq (Cout,)).
    """
    M, K = a.shape
    Cout = w.shape[1]
    tm = _pick_tm(M)
    n_m = M // tm
    fused = sc is not None

    in_specs = [pl.BlockSpec((tm, K), lambda i: (i, 0))]
    operands = [a]
    if fused:
        in_specs += [pl.BlockSpec((1, K), lambda i: (0, 0)),
                     pl.BlockSpec((1, K), lambda i: (0, 0))]
        operands += [sc, bi]
    in_specs.append(pl.BlockSpec((K, Cout), lambda i: (0, 0)))   # resident W
    operands.append(w)

    y, st = pl.pallas_call(
        _mm_bnrelu_stats_kernel if fused else _mm_stats_kernel,
        out_shape=(jax.ShapeDtypeStruct((M, Cout), jnp.bfloat16),
                   jax.ShapeDtypeStruct((n_m * 8, Cout), jnp.float32)),
        grid=(n_m,),
        in_specs=in_specs,
        out_specs=(pl.BlockSpec((tm, Cout), lambda i: (i, 0)),
                   pl.BlockSpec((8, Cout), lambda i: (i, 0))),
        compiler_params=_cparams(),
    )(*operands)
    return y, st[0::8].sum(axis=0), st[1::8].sum(axis=0)


def _conv3x3_stats(y1_nhwc, sc1, bi1, w2_hwio, stride):
    """conv2: per-image kernel; bn1+ReLU fused on load; no im2col in HBM."""
    N, H, W, C = y1_nhwc.shape
    Cout = w2_hwio.shape[-1]
    assert stride in (1, 2), "Bottleneck conv2 only uses stride 1 or 2"
    Ho = (H - 1) // stride + 1
    Wo = (W - 1) // stride + 1
    Hp = _round_up(H + 2, stride)
    Wp = _round_up(W + 2, stride)

    kernel = _make_conv3x3_kernel(H, W, Ho, Wo, Hp, Wp, C, Cout, stride)
    y2, st = pl.pallas_call(
        kernel,
        out_shape=(jax.ShapeDtypeStruct((N, Ho * Wo, Cout), jnp.bfloat16),
                   jax.ShapeDtypeStruct((N * 8, Cout), jnp.float32)),
        grid=(N,),
        in_specs=[pl.BlockSpec((1, H, W, C), lambda n: (n, 0, 0, 0)),
                  pl.BlockSpec((1, C), lambda n: (0, 0)),
                  pl.BlockSpec((1, C), lambda n: (0, 0)),
                  pl.BlockSpec((3, 3, C, Cout), lambda n: (0, 0, 0, 0))],
        out_specs=(pl.BlockSpec((1, Ho * Wo, Cout), lambda n: (n, 0, 0)),
                   pl.BlockSpec((8, Cout), lambda n: (n, 0))),
        scratch_shapes=[pltpu.VMEM((Hp, Wp, C), jnp.bfloat16)],
        compiler_params=_cparams(),
    )(y1_nhwc, sc1, bi1, w2_hwio)
    return (y2.reshape(N * Ho * Wo, Cout),
            st[0::8].sum(axis=0), st[1::8].sum(axis=0))


def _bn_add_relu(y3, sc3, bi3, res, rsc, rbi, with_pre):
    """relu(bn3(y3) + bn_sc(res)); optionally also returns the pre-activation."""
    M, C = y3.shape
    tm = _pick_tm(M)
    n_m = M // tm
    in_specs = [pl.BlockSpec((tm, C), lambda i: (i, 0)),
                pl.BlockSpec((1, C), lambda i: (0, 0)),
                pl.BlockSpec((1, C), lambda i: (0, 0)),
                pl.BlockSpec((tm, C), lambda i: (i, 0)),
                pl.BlockSpec((1, C), lambda i: (0, 0)),
                pl.BlockSpec((1, C), lambda i: (0, 0))]
    if with_pre:
        out, pre = pl.pallas_call(
            _bn_add_relu_pre_kernel,
            out_shape=(jax.ShapeDtypeStruct((M, C), jnp.float32),
                       jax.ShapeDtypeStruct((M, C), jnp.float32)),
            grid=(n_m,), in_specs=in_specs,
            out_specs=(pl.BlockSpec((tm, C), lambda i: (i, 0)),
                       pl.BlockSpec((tm, C), lambda i: (i, 0))),
            compiler_params=_cparams(),
        )(y3, sc3, bi3, res, rsc, rbi)
        return out, pre
    out = pl.pallas_call(
        _bn_add_relu_kernel,
        out_shape=jax.ShapeDtypeStruct((M, C), jnp.float32),
        grid=(n_m,), in_specs=in_specs,
        out_specs=pl.BlockSpec((tm, C), lambda i: (i, 0)),
        compiler_params=_cparams(),
    )(y3, sc3, bi3, res, rsc, rbi)
    return out, None


# --------------------------- plain-JAX glue ----------------------------------

def _flatten_1x1(w):
    """(Cout, Cin, 1, 1) -> (Cin, Cout) bf16 matmul weight."""
    cout, cin = w.shape[:2]
    return jnp.transpose(w, (2, 3, 1, 0)).reshape(cin, cout).astype(jnp.bfloat16)


def _hwio(w):
    """(Cout, Cin, 3, 3) -> (3, 3, Cin, Cout) bf16."""
    return jnp.transpose(w, (2, 3, 1, 0)).astype(jnp.bfloat16)


def bn_scale_bias(colsum, colsumsq, m, gamma, beta):
    """Fold training-mode (batch-stats, biased-var) BatchNorm into scale/bias."""
    mean = colsum / m
    var = jnp.maximum(colsumsq / m - mean * mean, 0.0)
    scale = gamma * lax.rsqrt(var + _EPS)
    bias = beta - mean * scale
    return scale.reshape(1, -1), bias.reshape(1, -1)


def bottleneck_forward(x_nhwc, params, stride, is_last):
    """Pallas-backed Bottleneck.forward.  x_nhwc: (N, H, W, Cin) float32."""
    N, H, W, Cin = x_nhwc.shape
    planes = params["w1"].shape[0]
    cexp = params["w3"].shape[0]
    x_bf = x_nhwc.astype(jnp.bfloat16)

    # ---- conv1 (1x1): matmul + bn1 batch stats ------------------------------
    M1 = N * H * W
    y1, s1, ss1 = _matmul_stats(x_bf.reshape(M1, Cin), _flatten_1x1(params["w1"]))
    sc1, bi1 = bn_scale_bias(s1, ss1, M1, params["g1"], params["b1"])

    # ---- conv2 (3x3, stride): bn1+ReLU fused on load, taps gathered in VMEM -
    y2, s2, ss2 = _conv3x3_stats(y1.reshape(N, H, W, planes), sc1, bi1,
                                 _hwio(params["w2"]), stride)
    Ho = (H - 1) // stride + 1
    Wo = (W - 1) // stride + 1
    M2 = N * Ho * Wo
    sc2, bi2 = bn_scale_bias(s2, ss2, M2, params["g2"], params["b2"])

    # ---- conv3 (1x1): bn2+ReLU fused on load + bn3 batch stats --------------
    y3, s3, ss3 = _matmul_stats(y2, _flatten_1x1(params["w3"]), sc2, bi2)
    sc3, bi3 = bn_scale_bias(s3, ss3, M2, params["g3"], params["b3"])

    # ---- shortcut ------------------------------------------------------------
    if "wsc" in params:            # 1x1 strided conv + bn (folded into epilogue)
        xs = x_bf[:, ::stride, ::stride, :].reshape(M2, Cin)
        res, ssc, sssc = _matmul_stats(xs, _flatten_1x1(params["wsc"]))
        rsc, rbi = bn_scale_bias(ssc, sssc, M2, params["gsc"], params["bsc"])
    else:                          # identity (stride == 1, Cin == 4*planes)
        assert stride == 1 and Cin == cexp
        res = x_nhwc.reshape(M2, Cin)          # no padding / no extra copy
        rsc = jnp.ones((1, cexp), jnp.float32)
        rbi = jnp.zeros((1, cexp), jnp.float32)

    # ---- bn3 apply + shortcut-bn apply + residual add + relu ----------------
    out, pre = _bn_add_relu(y3, sc3, bi3, res, rsc, rbi, with_pre=is_last)
    out = out.reshape(N, Ho, Wo, cexp)
    if is_last:
        return out, pre.reshape(N, Ho, Wo, cexp)
    return out


# --------------------------- references & params -----------------------------

def ref_matched(x, params, stride, is_last):
    """Reference mirroring the kernel's numerics (bf16 operands & intermediates,
    f32 accumulation, folded training-mode BN) with independent conv math."""
    q32 = lambda t: t.astype(jnp.bfloat16).astype(jnp.float32)

    def conv(x, w, s, pad):
        return lax.conv_general_dilated(
            q32(x), jnp.transpose(q32(w), (2, 3, 1, 0)), (s, s),
            [(pad, pad), (pad, pad)],
            dimension_numbers=("NHWC", "HWIO", "NHWC"),
            precision=lax.Precision.HIGHEST)

    def fold(y, g, b):
        m = y.shape[0] * y.shape[1] * y.shape[2]
        cs = jnp.sum(y, axis=(0, 1, 2))
        css = jnp.sum(y * y, axis=(0, 1, 2))
        return bn_scale_bias(cs, css, m, g, b)

    y1 = conv(x, params["w1"], 1, 0)
    sc1, bi1 = fold(y1, params["g1"], params["b1"])
    h1 = jax.nn.relu(q32(y1) * sc1 + bi1)
    y2 = conv(h1, params["w2"], stride, 1)
    sc2, bi2 = fold(y2, params["g2"], params["b2"])
    h2 = jax.nn.relu(q32(y2) * sc2 + bi2)
    y3 = conv(h2, params["w3"], 1, 0)
    sc3, bi3 = fold(y3, params["g3"], params["b3"])
    if "wsc" in params:
        ys = conv(x, params["wsc"], stride, 0)
        scs, bis = fold(ys, params["gsc"], params["bsc"])
        res = q32(ys) * scs + bis
    else:
        res = x
    pre = q32(y3) * sc3 + bi3 + res
    out = jax.nn.relu(pre)
    return (out, pre) if is_last else out


def ref_fp32(x, params, stride, is_last):
    """Pure-f32 reference mirroring the PyTorch module (training-mode BN)."""
    def conv(x, w, s, pad):
        return lax.conv_general_dilated(
            x, jnp.transpose(w, (2, 3, 1, 0)), (s, s), [(pad, pad), (pad, pad)],
            dimension_numbers=("NHWC", "HWIO", "NHWC"),
            precision=lax.Precision.HIGHEST)

    def bn(y, g, b):
        mean = jnp.mean(y, axis=(0, 1, 2), keepdims=True)
        var = jnp.mean((y - mean) ** 2, axis=(0, 1, 2), keepdims=True)
        return (y - mean) * lax.rsqrt(var + _EPS) * g + b

    out = jax.nn.relu(bn(conv(x, params["w1"], 1, 0), params["g1"], params["b1"]))
    out = jax.nn.relu(bn(conv(out, params["w2"], stride, 1), params["g2"], params["b2"]))
    out = bn(conv(out, params["w3"], 1, 0), params["g3"], params["b3"])
    if "wsc" in params:
        sc = bn(conv(x, params["wsc"], stride, 0), params["gsc"], params["bsc"])
    else:
        sc = x
    pre = out + sc
    out = jax.nn.relu(pre)
    return (out, pre) if is_last else out


def init_params(key, in_planes, planes, stride, expansion=4):
    ks = jax.random.split(key, 12)

    def conv_init(k, shape):
        fan_in = shape[1] * shape[2] * shape[3]
        return jax.random.normal(k, shape, jnp.float32) * (2.0 / fan_in) ** 0.5

    cexp = expansion * planes
    params = dict(
        w1=conv_init(ks[0], (planes, in_planes, 1, 1)),
        g1=1.0 + 0.1 * jax.random.normal(ks[1], (planes,), jnp.float32),
        b1=0.1 * jax.random.normal(ks[2], (planes,), jnp.float32),
        w2=conv_init(ks[3], (planes, planes, 3, 3)),
        g2=1.0 + 0.1 * jax.random.normal(ks[4], (planes,), jnp.float32),
        b2=0.1 * jax.random.normal(ks[5], (planes,), jnp.float32),
        w3=conv_init(ks[6], (cexp, planes, 1, 1)),
        g3=1.0 + 0.1 * jax.random.normal(ks[7], (cexp,), jnp.float32),
        b3=0.1 * jax.random.normal(ks[8], (cexp,), jnp.float32),
    )
    if stride != 1 or in_planes != cexp:
        params.update(
            wsc=conv_init(ks[9], (cexp, in_planes, 1, 1)),
            gsc=1.0 + 0.1 * jax.random.normal(ks[10], (cexp,), jnp.float32),
            bsc=0.1 * jax.random.normal(ks[11], (cexp,), jnp.float32),
        )
    return params


if __name__ == "__main__":
    key = jax.random.PRNGKey(0)
    kx, kp, kp2 = jax.random.split(key, 3)

    # x is NCHW [2, 4, 16, 16]; Bottleneck(in_planes=4, planes=8, stride=2,
    # is_last=True) -> expansion*planes = 32, shortcut conv active.
    N, Cin, H, W = 2, 4, 16, 16
    planes, stride, is_last = 8, 2, True

    x_nchw = jax.random.normal(kx, (N, Cin, H, W), jnp.float32)
    x_nhwc = jnp.transpose(x_nchw, (0, 2, 3, 1))
    params = init_params(kp, Cin, planes, stride)

    fwd = jax.jit(bottleneck_forward, static_argnums=(2, 3))
    out, pre = jax.block_until_ready(fwd(x_nhwc, params, stride, is_last))

    Ho = (H - 1) // stride + 1
    assert out.shape == (N, Ho, Ho, 4 * planes)
    assert pre.shape == (N, Ho, Ho, 4 * planes)

    # Primary check: reference with the same bf16/f32 numerics pipeline but
    # independent conv / tap / stats code paths.
    m_out, m_pre = ref_matched(x_nhwc, params, stride, True)
    assert jnp.allclose(out, m_out, atol=3e-2, rtol=3e-2)
    assert jnp.allclose(pre, m_pre, atol=3e-2, rtol=3e-2)

    # Sanity check vs. the full-f32 PyTorch-style reference (global relative
    # error; loose to account for the bf16 operand/intermediate pipeline).
    f_out, f_pre = ref_fp32(x_nhwc, params, stride, True)
    rel_out = jnp.linalg.norm(out - f_out) / (jnp.linalg.norm(f_out) + 1e-6)
    rel_pre = jnp.linalg.norm(pre - f_pre) / (jnp.linalg.norm(f_pre) + 1e-6)
    assert float(rel_out) < 5e-2
    assert float(rel_pre) < 5e-2

    # is_last=False path (no pre-activation written).
    out_nl = jax.block_until_ready(fwd(x_nhwc, params, stride, False))
    assert jnp.allclose(out_nl, m_out, atol=3e-2, rtol=3e-2)

    # Identity-shortcut / stride-1 path (in_planes == expansion * planes).
    params_id = init_params(kp2, 4 * planes, planes, 1)
    x_id = jnp.transpose(
        jax.random.normal(kx, (N, 4 * planes, H, W), jnp.float32), (0, 2, 3, 1))
    out_id = jax.block_until_ready(fwd(x_id, params_id, 1, False))
    m_id = ref_matched(x_id, params_id, 1, False)
    assert out_id.shape == (N, H, W, 4 * planes)
    assert jnp.allclose(out_id, m_id, atol=3e-2, rtol=3e-2)

    print("KERNEL_OK")
</pallas_src>

<mosaic_0001>
module attributes {stable_mosaic.version = 11 : i64} {
  func.func @_mm_stats_kernel(%arg0: i32, %arg1: memref<512x4xbf16, #tpu.memory_space<vmem>>, %arg2: memref<4x8xbf16, #tpu.memory_space<vmem>>, %arg3: memref<512x8xbf16, #tpu.memory_space<vmem>>, %arg4: memref<8x8xf32, #tpu.memory_space<vmem>>) attributes {dimension_semantics = [#tpu.dimension_semantics<parallel>], iteration_bounds = array<i64: 1>, scalar_prefetch = 0 : i64, scratch_operands = 0 : i64, tpu.core_type = #tpu.core_type<tc>, window_params = [{transform_indices = @transform_0, window_bounds = array<i64: 512, 4>}, {pipeline_mode = #tpu.pipeline_mode<synchronous>, transform_indices = @transform_1, window_bounds = array<i64: 4, 8>}, {transform_indices = @transform_2, window_bounds = array<i64: 512, 8>}, {transform_indices = @transform_3, window_bounds = array<i64: 8, 8>}]} {
    %c0 = arith.constant 0 : index
    %c0_0 = arith.constant 0 : index
    %0 = vector.load %arg1[%c0, %c0_0] : memref<512x4xbf16, #tpu.memory_space<vmem>>, vector<512x4xbf16>
    %c0_1 = arith.constant 0 : index
    %c0_2 = arith.constant 0 : index
    %1 = vector.load %arg2[%c0_1, %c0_2] : memref<4x8xbf16, #tpu.memory_space<vmem>>, vector<4x8xbf16>
    %cst = arith.constant dense<0.000000e+00> : vector<512x8xf32>
    %2 = tpu.matmul %0, %1, %cst {dimension_numbers = #tpu.dot_dimension_numbers<[1], [0], [0], [1], [0, 0, 1, 1], [], []>} : vector<512x4xbf16>, vector<4x8xbf16>, vector<512x8xf32> -> vector<512x8xf32>
    %3 = arith.truncf %2 : vector<512x8xf32> to vector<512x8xbf16>
    %c0_3 = arith.constant 0 : index
    %c0_4 = arith.constant 0 : index
    %4 = vector.load %arg3[%c0_3, %c0_4] : memref<512x8xbf16, #tpu.memory_space<vmem>>, vector<512x8xbf16>
    tpu.vector_store %arg3[%c0_3, %c0_4], %3 {strides = array<i32>} : memref<512x8xbf16, #tpu.memory_space<vmem>>, vector<512x8xbf16>,
    %cst_5 = arith.constant dense<0.000000e+00> : vector<8xf32>
    %5 = vector.multi_reduction <add>, %2, %cst_5 [0] : vector<512x8xf32> to vector<8xf32>
    %6 = vector.shape_cast %5 : vector<8xf32> to vector<1x8xf32>
    %7 = arith.mulf %2, %2 : vector<512x8xf32>
    %cst_6 = arith.constant dense<0.000000e+00> : vector<8xf32>
    %8 = vector.multi_reduction <add>, %7, %cst_6 [0] : vector<512x8xf32> to vector<8xf32>
    %9 = vector.shape_cast %8 : vector<8xf32> to vector<1x8xf32>
    %cst_7 = arith.constant 0.000000e+00 : f32
    %10 = vector.broadcast %cst_7 : f32 to vector<6x8xf32>
    %11 = tpu.concatenate %6, %9, %10 in 0 : vector<1x8xf32>, vector<1x8xf32>, vector<6x8xf32> -> vector<8x8xf32>
    %c0_8 = arith.constant 0 : index
    %c0_9 = arith.constant 0 : index
    %12 = vector.load %arg4[%c0_8, %c0_9] : memref<8x8xf32, #tpu.memory_space<vmem>>, vector<8x8xf32>
    tpu.vector_store %arg4[%c0_8, %c0_9], %11 {strides = array<i32>} : memref<8x8xf32, #tpu.memory_space<vmem>>, vector<8x8xf32>,
    return
  }
  func.func @transform_0(%arg0: i32) -> (i32, i32) {
    %c0_i32 = arith.constant 0 : i32
    %c0_i32_0 = arith.constant 0 : i32
    return %arg0, %c0_i32 : i32, i32
  }
  func.func @transform_1(%arg0: i32) -> (i32, i32) {
    %c0_i32 = arith.constant 0 : i32
    %c0_i32_0 = arith.constant 0 : i32
    %c0_i32_1 = arith.constant 0 : i32
    return %c0_i32, %c0_i32_0 : i32, i32
  }
  func.func @transform_2(%arg0: i32) -> (i32, i32) {
    %c0_i32 = arith.constant 0 : i32
    %c0_i32_0 = arith.constant 0 : i32
    return %arg0, %c0_i32 : i32, i32
  }
  func.func @transform_3(%arg0: i32) -> (i32, i32) {
    %c0_i32 = arith.constant 0 : i32
    %c0_i32_0 = arith.constant 0 : i32
    return %arg0, %c0_i32 : i32, i32
  }
}

module attributes {stable_mosaic.version = 11 : i64} {
  func.func @kernel(%arg0: i32, %arg1: memref<1x16x16x8xbf16, #tpu.memory_space<vmem>>, %arg2: memref<1x8xf32, #tpu.memory_space<vmem>>, %arg3: memref<1x8xf32, #tpu.memory_space<vmem>>, %arg4: memref<3x3x8x8xbf16, #tpu.memory_space<vmem>>, %arg5: memref<1x64x8xbf16, #tpu.memory_space<vmem>>, %arg6: memref<8x8xf32, #tpu.memory_space<vmem>>, %arg7: memref<18x18x8xbf16, #tpu.memory_space<vmem>>) attributes {dimension_semantics = [#tpu.dimension_semantics<parallel>], iteration_bounds = array<i64: 2>, scalar_prefetch = 0 : i64, scratch_operands = 1 : i64, tpu.core_type = #tpu.core_type<tc>, window_params = [{transform_indices = @transform_0, window_bounds = array<i64: 1, 16, 16, 8>}, {pipeline_mode = #tpu.pipeline_mode<synchronous>, transform_indices = @transform_1, window_bounds = array<i64: 1, 8>}, {pipeline_mode = #tpu.pipeline_mode<synchronous>, transform_indices = @transform_2, window_bounds = array<i64: 1, 8>}, {pipeline_mode = #tpu.pipeline_mode<synchronous>, transform_indices = @transform_3, window_bounds = array<i64: 3, 3, 8, 8>}, {transform_indices = @transform_4, window_bounds = array<i64: 1, 64, 8>}, {transform_indices = @transform_5, window_bounds = array<i64: 8, 8>}]} {
    %cst = arith.constant 0.000000e+00 : bf16
    %0 = vector.broadcast %cst : bf16 to vector<18x18x8xbf16>
    %c0 = arith.constant 0 : index
    %c0_0 = arith.constant 0 : index
    %c0_1 = arith.constant 0 : index
    %1 = vector.load %arg7[%c0, %c0_0, %c0_1] : memref<18x18x8xbf16, #tpu.memory_space<vmem>>, vector<18x18x8xbf16>
    tpu.vector_store %arg7[%c0, %c0_0, %c0_1], %0 {strides = array<i32>} : memref<18x18x8xbf16, #tpu.memory_space<vmem>>, vector<18x18x8xbf16>,
    %c0_2 = arith.constant 0 : index
    %c0_3 = arith.constant 0 : index
    %c0_4 = arith.constant 0 : index
    %c0_5 = arith.constant 0 : index
    %2 = vector.load %arg1[%c0_2, %c0_3, %c0_4, %c0_5] : memref<1x16x16x8xbf16, #tpu.memory_space<vmem>>, vector<1x16x16x8xbf16>
    %3 = vector.shape_cast %2 : vector<1x16x16x8xbf16> to vector<16x16x8xbf16>
    %c0_6 = arith.constant 0 : index
    %c0_7 = arith.constant 0 : index
    %4 = vector.load %arg2[%c0_6, %c0_7] : memref<1x8xf32, #tpu.memory_space<vmem>>, vector<1x8xf32>
    %5 = vector.shape_cast %4 : vector<1x8xf32> to vector<8xf32>
    %6 = arith.extf %3 : vector<16x16x8xbf16> to vector<16x16x8xf32>
    %7 = vector.shape_cast %5 : vector<8xf32> to vector<1x1x8xf32>
    %8 = vector.broadcast %7 : vector<1x1x8xf32> to vector<16x16x8xf32>
    %9 = arith.mulf %6, %8 : vector<16x16x8xf32>
    %c0_8 = arith.constant 0 : index
    %c0_9 = arith.constant 0 : index
    %10 = vector.load %arg3[%c0_8, %c0_9] : memref<1x8xf32, #tpu.memory_space<vmem>>, vector<1x8xf32>
    %11 = vector.shape_cast %10 : vector<1x8xf32> to vector<8xf32>
    %12 = vector.shape_cast %11 : vector<8xf32> to vector<1x1x8xf32>
    %13 = vector.broadcast %12 : vector<1x1x8xf32> to vector<16x16x8xf32>
    %14 = arith.addf %9, %13 : vector<16x16x8xf32>
    %cst_10 = arith.constant 0.000000e+00 : f32
    %15 = vector.broadcast %cst_10 : f32 to vector<16x16x8xf32>
    %16 = arith.maximumf %14, %15 : vector<16x16x8xf32>
    %17 = arith.truncf %16 : vector<16x16x8xf32> to vector<16x16x8xbf16>
    %c1 = arith.constant 1 : index
    %c1_11 = arith.constant 1 : index
    %c0_12 = arith.constant 0 : index
    %18 = vector.load %arg7[%c1, %c1_11, %c0_12] : memref<18x18x8xbf16, #tpu.memory_space<vmem>>, vector<16x16x8xbf16>
    tpu.vector_store %arg7[%c1, %c1_11, %c0_12], %17 {strides = array<i32>} : memref<18x18x8xbf16, #tpu.memory_space<vmem>>, vector<16x16x8xbf16>,
    %c0_13 = arith.constant 0 : index
    %c0_14 = arith.constant 0 : index
    %c0_15 = arith.constant 0 : index
    %19 = vector.load %arg7[%c0_13, %c0_14, %c0_15] : memref<18x18x8xbf16, #tpu.memory_space<vmem>>, vector<18x18x8xbf16>
    %cst_16 = arith.constant 0.000000e+00 : f32
    %20 = vector.broadcast %cst_16 : f32 to vector<64x8xf32>
    %21 = vector.shape_cast %19 : vector<18x18x8xbf16> to vector<9x2x18x8xbf16>
    %22 = vector.extract_strided_slice %21 {offsets = [0, 0, 0, 0], sizes = [8, 1, 18, 8], strides = [1, 1, 1, 1]} : vector<9x2x18x8xbf16> to vector<8x1x18x8xbf16>
    %23 = vector.shape_cast %22 : vector<8x1x18x8xbf16> to vector<8x18x8xbf16>
    %24 = vector.shape_cast %23 : vector<8x18x8xbf16> to vector<8x9x2x8xbf16>
    %25 = vector.extract_strided_slice %24 {offsets = [0, 0, 0, 0], sizes = [8, 8, 1, 8], strides = [1, 1, 1, 1]} : vector<8x9x2x8xbf16> to vector<8x8x1x8xbf16>
    %26 = vector.shape_cast %25 : vector<8x8x1x8xbf16> to vector<8x8x8xbf16>
    %27 = vector.shape_cast %26 : vector<8x8x8xbf16> to vector<64x8xbf16>
    %c0_17 = arith.constant 0 : index
    %c0_18 = arith.constant 0 : index
    %c0_19 = arith.constant 0 : index
    %c0_20 = arith.constant 0 : index
    %28 = vector.load %arg4[%c0_17, %c0_18, %c0_19, %c0_20] : memref<3x3x8x8xbf16, #tpu.memory_space<vmem>>, vector<1x1x8x8xbf16>
    %29 = vector.shape_cast %28 : vector<1x1x8x8xbf16> to vector<8x8xbf16>
    %cst_21 = arith.constant dense<0.000000e+00> : vector<64x8xf32>
    %30 = tpu.matmul %27, %29, %cst_21 {dimension_numbers = #tpu.dot_dimension_numbers<[1], [0], [0], [1], [0, 0, 1, 1], [], []>} : vector<64x8xbf16>, vector<8x8xbf16>, vector<64x8xf32> -> vector<64x8xf32>
    %31 = arith.addf %20, %30 : vector<64x8xf32>
    %32 = vector.extract_strided_slice %24 {offsets = [0, 0, 1, 0], sizes = [8, 8, 1, 8], strides = [1, 1, 1, 1]} : vector<8x9x2x8xbf16> to vector<8x8x1x8xbf16>
    %33 = vector.shape_cast %32 : vector<8x8x1x8xbf16> to vector<8x8x8xbf16>
    %34 = vector.shape_cast %33 : vector<8x8x8xbf16> to vector<64x8xbf16>
    %c0_22 = arith.constant 0 : index
    %c1_23 = arith.constant 1 : index
    %c0_24 = arith.constant 0 : index
    %c0_25 = arith.constant 0 : index
    %35 = vector.load %arg4[%c0_22, %c1_23, %c0_24, %c0_25] : memref<3x3x8x8xbf16, #tpu.memory_space<vmem>>, vector<1x1x8x8xbf16>
    %36 = vector.shape_cast %35 : vector<1x1x8x8xbf16> to vector<8x8xbf16>
    %cst_26 = arith.constant dense<0.000000e+00> : vector<64x8xf32>
    %37 = tpu.matmul %34, %36, %cst_26 {dimension_numbers = #tpu.dot_dimension_numbers<[1], [0], [0], [1], [0, 0, 1, 1], [], []>} : vector<64x8xbf16>, vector<8x8xbf16>, vector<64x8xf32> -> vector<64x8xf32>
    %38 = arith.addf %31, %37 : vector<64x8xf32>
    %39 = vector.extract_strided_slice %24 {offsets = [0, 1, 0, 0], sizes = [8, 8, 1, 8], strides = [1, 1, 1, 1]} : vector<8x9x2x8xbf16> to vector<8x8x1x8xbf16>
    %40 = vector.shape_cast %39 : vector<8x8x1x8xbf16> to vector<8x8x8xbf16>
    %41 = vector.shape_cast %40 : vector<8x8x8xbf16> to vector<64x8xbf16>
    %c0_27 = arith.constant 0 : index
    %c2 = arith.constant 2 : index
    %c0_28 = arith.constant 0 : index
    %c0_29 = arith.constant 0 : index
    %42 = vector.load %arg4[%c0_27, %c2, %c0_28, %c0_29] : memref<3x3x8x8xbf16, #tpu.memory_space<vmem>>, vector<1x1x8x8xbf16>
    %43 = vector.shape_cast %42 : vector<1x1x8x8xbf16> to vector<8x8xbf16>
    %cst_30 = arith.constant dense<0.000000e+00> : vector<64x8xf32>
    %44 = tpu.matmul %41, %43, %cst_30 {dimension_numbers = #tpu.dot_dimension_numbers<[1], [0], [0], [1], [0, 0, 1, 1], [], []>} : vector<64x8xbf16>, vector<8x8xbf16>, vector<64x8xf32> -> vector<64x8xf32>
    %45 = arith.addf %38, %44 : vector<64x8xf32>
    %46 = vector.shape_cast %19 : vector<18x18x8xbf16> to vector<9x2x18x8xbf16>
    %47 = vector.extract_strided_slice %46 {offsets = [0, 1, 0, 0], sizes = [8, 1, 18, 8], strides = [1, 1, 1, 1]} : vector<9x2x18x8xbf16> to vector<8x1x18x8xbf16>
    %48 = vector.shape_cast %47 : vector<8x1x18x8xbf16> to vector<8x18x8xbf16>
    %49 = vector.shape_cast %48 : vector<8x18x8xbf16> to vector<8x9x2x8xbf16>
    %50 = vector.extract_strided_slice %49 {offsets = [0, 0, 0, 0], sizes = [8, 8, 1, 8], strides = [1, 1, 1, 1]} : vector<8x9x2x8xbf16> to vector<8x8x1x8xbf16>
    %51 = vector.shape_cast %50 : vector<8x8x1x8xbf16> to vector<8x8x8xbf16>
    %52 = vector.shape_cast %51 : vector<8x8x8xbf16> to vector<64x8xbf16>
    %c1_31 = arith.constant 1 : index
    %c0_32 = arith.constant 0 : index
    %c0_33 = arith.constant 0 : index
    %c0_34 = arith.constant 0 : index
    %53 = vector.load %arg4[%c1_31, %c0_32, %c0_33, %c0_34] : memref<3x3x8x8xbf16, #tpu.memory_space<vmem>>, vector<1x1x8x8xbf16>
    %54 = vector.shape_cast %53 : vector<1x1x8x8xbf16> to vector<8x8xbf16>
    %cst_35 = arith.constant dense<0.000000e+00> : vector<64x8xf32>
    %55 = tpu.matmul %52, %54, %cst_35 {dimension_numbers = #tpu.dot_dimension_numbers<[1], [0], [0], [1], [0, 0, 1, 1], [], []>} : vector<64x8xbf16>, vector<8x8xbf16>, vector<64x8xf32> -> vector<64x8xf32>
    %56 = arith.addf %45, %55 : vector<64x8xf32>
    %57 = vector.extract_strided_slice %49 {offsets = [0, 0, 1, 0], sizes = [8, 8, 1, 8], strides = [1, 1, 1, 1]} : vector<8x9x2x8xbf16> to vector<8x8x1x8xbf16>
    %58 = vector.shape_cast %57 : vector<8x8x1x8xbf16> to vector<8x8x8xbf16>
    %59 = vector.shape_cast %58 : vector<8x8x8xbf16> to vector<64x8xbf16>
    %c1_36 = arith.constant 1 : index
    %c1_37 = arith.constant 1 : index
    %c0_38 = arith.constant 0 : index
    %c0_39 = arith.constant 0 : index
    %60 = vector.load %arg4[%c1_36, %c1_37, %c0_38, %c0_39] : memref<3x3x8x8xbf16, #tpu.memory_space<vmem>>, vector<1x1x8x8xbf16>
    %61 = vector.shape_cast %60 : vector<1x1x8x8xbf16> to vector<8x8xbf16>
    %cst_40 = arith.constant dense<0.000000e+00> : vector<64x8xf32>
    %62 = tpu.matmul %59, %61, %cst_40 {dimension_numbers = #tpu.dot_dimension_numbers<[1], [0], [0], [1], [0, 0, 1, 1], [], []>} : vector<64x8xbf16>, vector<8x8xbf16>, vector<64x8xf32> -> vector<64x8xf32>
    %63 = arith.addf %56, %62 : vector<64x8xf32>
    %64 = vector.extract_strided_slice %49 {offsets = [0, 1, 0, 0], sizes = [8, 8, 1, 8], strides = [1, 1, 1, 1]} : vector<8x9x2x8xbf16> to vector<8x8x1x8xbf16>
    %65 = vector.shape_cast %64 : vector<8x8x1x8xbf16> to vector<8x8x8xbf16>
    %66 = vector.shape_cast %65 : vector<8x8x8xbf16> to vector<64x8xbf16>
    %c1_41 = arith.constant 1 : index
    %c2_42 = arith.constant 2 : index
    %c0_43 = arith.constant 0 : index
    %c0_44 = arith.constant 0 : index
    %67 = vector.load %arg4[%c1_41, %c2_42, %c0_43, %c0_44] : memref<3x3x8x8xbf16, #tpu.memory_space<vmem>>, vector<1x1x8x8xbf16>
    %68 = vector.shape_cast %67 : vector<1x1x8x8xbf16> to vector<8x8xbf16>
    %cst_45 = arith.constant dense<0.000000e+00> : vector<64x8xf32>
    %69 = tpu.matmul %66, %68, %cst_45 {dimension_numbers = #tpu.dot_dimension_numbers<[1], [0], [0], [1], [0, 0, 1, 1], [], []>} : vector<64x8xbf16>, vector<8x8xbf16>, vector<64x8xf32> -> vector<64x8xf32>
    %70 = arith.addf %63, %69 : vector<64x8xf32>
    %71 = vector.shape_cast %19 : vector<18x18x8xbf16> to vector<9x2x18x8xbf16>
    %72 = vector.extract_strided_slice %71 {offsets = [1, 0, 0, 0], sizes = [8, 1, 18, 8], strides = [1, 1, 1, 1]} : vector<9x2x18x8xbf16> to vector<8x1x18x8xbf16>
    %73 = vector.shape_cast %72 : vector<8x1x18x8xbf16> to vector<8x18x8xbf16>
    %74 = vector.shape_cast %73 : vector<8x18x8xbf16> to vector<8x9x2x8xbf16>
    %75 = vector.extract_strided_slice %74 {offsets = [0, 0, 0, 0], sizes = [8, 8, 1, 8], strides = [1, 1, 1, 1]} : vector<8x9x2x8xbf16> to vector<8x8x1x8xbf16>
    %76 = vector.shape_cast %75 : vector<8x8x1x8xbf16> to vector<8x8x8xbf16>
    %77 = vector.shape_cast %76 : vector<8x8x8xbf16> to vector<64x8xbf16>
    %c2_46 = arith.constant 2 : index
    %c0_47 = arith.constant 0 : index
    %c0_48 = arith.constant 0 : index
    %c0_49 = arith.constant 0 : index
    %78 = vector.load %arg4[%c2_46, %c0_47, %c0_48, %c0_49] : memref<3x3x8x8xbf16, #tpu.memory_space<vmem>>, vector<1x1x8x8xbf16>
    %79 = vector.shape_cast %78 : vector<1x1x8x8xbf16> to vector<8x8xbf16>
    %cst_50 = arith.constant dense<0.000000e+00> : vector<64x8xf32>
    %80 = tpu.matmul %77, %79, %cst_50 {dimension_numbers = #tpu.dot_dimension_numbers<[1], [0], [0], [1], [0, 0, 1, 1], [], []>} : vector<64x8xbf16>, vector<8x8xbf16>, vector<64x8xf32> -> vector<64x8xf32>
    %81 = arith.addf %70, %80 : vector<64x8xf32>
    %82 = vector.extract_strided_slice %74 {offsets = [0, 0, 1, 0], sizes = [8, 8, 1, 8], strides = [1, 1, 1, 1]} : vector<8x9x2x8xbf16> to vector<8x8x1x8xbf16>
    %83 = vector.shape_cast %82 : vector<8x8x1x8xbf16> to vector<8x8x8xbf16>
    %84 = vector.shape_cast %83 : vector<8x8x8xbf16> to vector<64x8xbf16>
    %c2_51 = arith.constant 2 : index
    %c1_52 = arith.constant 1 : index
    %c0_53 = arith.constant 0 : index
    %c0_54 = arith.constant 0 : index
    %85 = vector.load %arg4[%c2_51, %c1_52, %c0_53, %c0_54] : memref<3x3x8x8xbf16, #tpu.memory_space<vmem>>, vector<1x1x8x8xbf16>
    %86 = vector.shape_cast %85 : vector<1x1x8x8xbf16> to vector<8x8xbf16>
    %cst_55 = arith.constant dense<0.000000e+00> : vector<64x8xf32>
    %87 = tpu.matmul %84, %86, %cst_55 {dimension_numbers = #tpu.dot_dimension_numbers<[1], [0], [0], [1], [0, 0, 1, 1], [], []>} : vector<64x8xbf16>, vector<8x8xbf16>, vector<64x8xf32> -> vector<64x8xf32>
    %88 = arith.addf %81, %87 : vector<64x8xf32>
    %89 = vector.extract_strided_slice %74 {offsets = [0, 1, 0, 0], sizes = [8, 8, 1, 8], strides = [1, 1, 1, 1]} : vector<8x9x2x8xbf16> to vector<8x8x1x8xbf16>
    %90 = vector.shape_cast %89 : vector<8x8x1x8xbf16> to vector<8x8x8xbf16>
    %91 = vector.shape_cast %90 : vector<8x8x8xbf16> to vector<64x8xbf16>
    %c2_56 = arith.constant 2 : index
    %c2_57 = arith.constant 2 : index
    %c0_58 = arith.constant 0 : index
    %c0_59 = arith.constant 0 : index
    %92 = vector.load %arg4[%c2_56, %c2_57, %c0_58, %c0_59] : memref<3x3x8x8xbf16, #tpu.memory_space<vmem>>, vector<1x1x8x8xbf16>
    %93 = vector.shape_cast %92 : vector<1x1x8x8xbf16> to vector<8x8xbf16>
    %cst_60 = arith.constant dense<0.000000e+00> : vector<64x8xf32>
    %94 = tpu.matmul %91, %93, %cst_60 {dimension_numbers = #tpu.dot_dimension_numbers<[1], [0], [0], [1], [0, 0, 1, 1], [], []>} : vector<64x8xbf16>, vector<8x8xbf16>, vector<64x8xf32> -> vector<64x8xf32>
    %95 = arith.addf %88, %94 : vector<64x8xf32>
    %cst_61 = arith.constant dense<0.000000e+00> : vector<8xf32>
    %96 = vector.multi_reduction <add>, %95, %cst_61 [0] : vector<64x8xf32> to vector<8xf32>
    %97 = vector.shape_cast %96 : vector<8xf32> to vector<1x8xf32>
    %98 = arith.mulf %95, %95 : vector<64x8xf32>
    %cst_62 = arith.constant dense<0.000000e+00> : vector<8xf32>
    %99 = vector.multi_reduction <add>, %98, %cst_62 [0] : vector<64x8xf32> to vector<8xf32>
    %100 = vector.shape_cast %99 : vector<8xf32> to vector<1x8xf32>
    %cst_63 = arith.constant 0.000000e+00 : f32
    %101 = vector.broadcast %cst_63 : f32 to vector<6x8xf32>
    %102 = tpu.concatenate %97, %100, %101 in 0 : vector<1x8xf32>, vector<1x8xf32>, vector<6x8xf32> -> vector<8x8xf32>
    %c0_64 = arith.constant 0 : index
    %c0_65 = arith.constant 0 : index
    %103 = vector.load %arg6[%c0_64, %c0_65] : memref<8x8xf32, #tpu.memory_space<vmem>>, vector<8x8xf32>
    tpu.vector_store %arg6[%c0_64, %c0_65], %102 {strides = array<i32>} : memref<8x8xf32, #tpu.memory_space<vmem>>, vector<8x8xf32>,
    %104 = vector.shape_cast %95 : vector<64x8xf32> to vector<1x64x8xf32>
    %105 = arith.truncf %104 : vector<1x64x8xf32> to vector<1x64x8xbf16>
    %c0_66 = arith.constant 0 : index
    %c0_67 = arith.constant 0 : index
    %c0_68 = arith.constant 0 : index
    %106 = vector.load %arg5[%c0_66, %c0_67, %c0_68] : memref<1x64x8xbf16, #tpu.memory_space<vmem>>, vector<1x64x8xbf16>
    tpu.vector_store %arg5[%c0_66, %c0_67, %c0_68], %105 {strides = array<i32>} : memref<1x64x8xbf16, #tpu.memory_space<vmem>>, vector<1x64x8xbf16>,
    return
  }
  func.func @transform_0(%arg0: i32) -> (i32, i32, i32, i32) {
    %c0_i32 = arith.constant 0 : i32
    %c0_i32_0 = arith.constant 0 : i32
    %c0_i32_1 = arith.constant 0 : i32
    %c0_i32_2 = arith.constant 0 : i32
    return %arg0, %c0_i32, %c0_i32_0, %c0_i32_1 : i32, i32, i32, i32
  }
  func.func @transform_1(%arg0: i32) -> (i32, i32) {
    %c0_i32 = arith.constant 0 : i32
    %c0_i32_0 = arith.constant 0 : i32
    %c0_i32_1 = arith.constant 0 : i32
    return %c0_i32, %c0_i32_0 : i32, i32
  }
  func.func @transform_2(%arg0: i32) -> (i32, i32) {
    %c0_i32 = arith.constant 0 : i32
    %c0_i32_0 = arith.constant 0 : i32
    %c0_i32_1 = arith.constant 0 : i32
    return %c0_i32, %c0_i32_0 : i32, i32
  }
  func.func @transform_3(%arg0: i32) -> (i32, i32, i32, i32) {
    %c0_i32 = arith.constant 0 : i32
    %c0_i32_0 = arith.constant 0 : i32
    %c0_i32_1 = arith.constant 0 : i32
    %c0_i32_2 = arith.constant 0 : i32
    %c0_i32_3 = arith.constant 0 : i32
    return %c0_i32, %c0_i32_0, %c0_i32_1, %c0_i32_2 : i32, i32, i32, i32
  }
  func.func @transform_4(%arg0: i32) -> (i32, i32, i32) {
    %c0_i32 = arith.constant 0 : i32
    %c0_i32_0 = arith.constant 0 : i32
    %c0_i32_1 = arith.constant 0 : i32
    return %arg0, %c0_i32, %c0_i32_0 : i32, i32, i32
  }
  func.func @transform_5(%arg0: i32) -> (i32, i32) {
    %c0_i32 = arith.constant 0 : i32
    %c0_i32_0 = arith.constant 0 : i32
    return %arg0, %c0_i32 : i32, i32
  }
}

module attributes {stable_mosaic.version = 11 : i64} {
  func.func @_mm_bnrelu_stats_kernel(%arg0: i32, %arg1: memref<128x8xbf16, #tpu.memory_space<vmem>>, %arg2: memref<1x8xf32, #tpu.memory_space<vmem>>, %arg3: memref<1x8xf32, #tpu.memory_space<vmem>>, %arg4: memref<8x32xbf16, #tpu.memory_space<vmem>>, %arg5: memref<128x32xbf16, #tpu.memory_space<vmem>>, %arg6: memref<8x32xf32, #tpu.memory_space<vmem>>) attributes {dimension_semantics = [#tpu.dimension_semantics<parallel>], iteration_bounds = array<i64: 1>, scalar_prefetch = 0 : i64, scratch_operands = 0 : i64, tpu.core_type = #tpu.core_type<tc>, window_params = [{transform_indices = @transform_0, window_bounds = array<i64: 128, 8>}, {pipeline_mode = #tpu.pipeline_mode<synchronous>, transform_indices = @transform_1, window_bounds = array<i64: 1, 8>}, {pipeline_mode = #tpu.pipeline_mode<synchronous>, transform_indices = @transform_2, window_bounds = array<i64: 1, 8>}, {pipeline_mode = #tpu.pipeline_mode<synchronous>, transform_indices = @transform_3, window_bounds = array<i64: 8, 32>}, {transform_indices = @transform_4, window_bounds = array<i64: 128, 32>}, {transform_indices = @transform_5, window_bounds = array<i64: 8, 32>}]} {
    %c0 = arith.constant 0 : index
    %c0_0 = arith.constant 0 : index
    %0 = vector.load %arg1[%c0, %c0_0] : memref<128x8xbf16, #tpu.memory_space<vmem>>, vector<128x8xbf16>
    %c0_1 = arith.constant 0 : index
    %c0_2 = arith.constant 0 : index
    %1 = vector.load %arg2[%c0_1, %c0_2] : memref<1x8xf32, #tpu.memory_space<vmem>>, vector<1x8xf32>
    %2 = arith.extf %0 : vector<128x8xbf16> to vector<128x8xf32>
    %3 = vector.broadcast %1 : vector<1x8xf32> to vector<128x8xf32>
    %4 = arith.mulf %2, %3 : vector<128x8xf32>
    %c0_3 = arith.constant 0 : index
    %c0_4 = arith.constant 0 : index
    %5 = vector.load %arg3[%c0_3, %c0_4] : memref<1x8xf32, #tpu.memory_space<vmem>>, vector<1x8xf32>
    %6 = vector.broadcast %5 : vector<1x8xf32> to vector<128x8xf32>
    %7 = arith.addf %4, %6 : vector<128x8xf32>
    %cst = arith.constant 0.000000e+00 : f32
    %8 = vector.broadcast %cst : f32 to vector<128x8xf32>
    %9 = arith.maximumf %7, %8 : vector<128x8xf32>
    %10 = arith.truncf %9 : vector<128x8xf32> to vector<128x8xbf16>
    %c0_5 = arith.constant 0 : index
    %c0_6 = arith.constant 0 : index
    %11 = vector.load %arg4[%c0_5, %c0_6] : memref<8x32xbf16, #tpu.memory_space<vmem>>, vector<8x32xbf16>
    %cst_7 = arith.constant dense<0.000000e+00> : vector<128x32xf32>
    %12 = tpu.matmul %10, %11, %cst_7 {dimension_numbers = #tpu.dot_dimension_numbers<[1], [0], [0], [1], [0, 0, 1, 1], [], []>} : vector<128x8xbf16>, vector<8x32xbf16>, vector<128x32xf32> -> vector<128x32xf32>
    %13 = arith.truncf %12 : vector<128x32xf32> to vector<128x32xbf16>
    %c0_8 = arith.constant 0 : index
    %c0_9 = arith.constant 0 : index
    %14 = vector.load %arg5[%c0_8, %c0_9] : memref<128x32xbf16, #tpu.memory_space<vmem>>, vector<128x32xbf16>
    tpu.vector_store %arg5[%c0_8, %c0_9], %13 {strides = array<i32>} : memref<128x32xbf16, #tpu.memory_space<vmem>>, vector<128x32xbf16>,
    %cst_10 = arith.constant dense<0.000000e+00> : vector<32xf32>
    %15 = vector.multi_reduction <add>, %12, %cst_10 [0] : vector<128x32xf32> to vector<32xf32>
    %16 = vector.shape_cast %15 : vector<32xf32> to vector<1x32xf32>
    %17 = arith.mulf %12, %12 : vector<128x32xf32>
    %cst_11 = arith.constant dense<0.000000e+00> : vector<32xf32>
    %18 = vector.multi_reduction <add>, %17, %cst_11 [0] : vector<128x32xf32> to vector<32xf32>
    %19 = vector.shape_cast %18 : vector<32xf32> to vector<1x32xf32>
    %cst_12 = arith.constant 0.000000e+00 : f32
    %20 = vector.broadcast %cst_12 : f32 to vector<6x32xf32>
    %21 = tpu.concatenate %16, %19, %20 in 0 : vector<1x32xf32>, vector<1x32xf32>, vector<6x32xf32> -> vector<8x32xf32>
    %c0_13 = arith.constant 0 : index
    %c0_14 = arith.constant 0 : index
    %22 = vector.load %arg6[%c0_13, %c0_14] : memref<8x32xf32, #tpu.memory_space<vmem>>, vector<8x32xf32>
    tpu.vector_store %arg6[%c0_13, %c0_14], %21 {strides = array<i32>} : memref<8x32xf32, #tpu.memory_space<vmem>>, vector<8x32xf32>,
    return
  }
  func.func @transform_0(%arg0: i32) -> (i32, i32) {
    %c0_i32 = arith.constant 0 : i32
    %c0_i32_0 = arith.constant 0 : i32
    return %arg0, %c0_i32 : i32, i32
  }
  func.func @transform_1(%arg0: i32) -> (i32, i32) {
    %c0_i32 = arith.constant 0 : i32
    %c0_i32_0 = arith.constant 0 : i32
    %c0_i32_1 = arith.constant 0 : i32
    return %c0_i32, %c0_i32_0 : i32, i32
  }
  func.func @transform_2(%arg0: i32) -> (i32, i32) {
    %c0_i32 = arith.constant 0 : i32
    %c0_i32_0 = arith.constant 0 : i32
    %c0_i32_1 = arith.constant 0 : i32
    return %c0_i32, %c0_i32_0 : i32, i32
  }
  func.func @transform_3(%arg0: i32) -> (i32, i32) {
    %c0_i32 = arith.constant 0 : i32
    %c0_i32_0 = arith.constant 0 : i32
    %c0_i32_1 = arith.constant 0 : i32
    return %c0_i32, %c0_i32_0 : i32, i32
  }
  func.func @transform_4(%arg0: i32) -> (i32, i32) {
    %c0_i32 = arith.constant 0 : i32
    %c0_i32_0 = arith.constant 0 : i32
    return %arg0, %c0_i32 : i32, i32
  }
  func.func @transform_5(%arg0: i32) -> (i32, i32) {
    %c0_i32 = arith.constant 0 : i32
    %c0_i32_0 = arith.constant 0 : i32
    return %arg0, %c0_i32 : i32, i32
  }
}

module attributes {stable_mosaic.version = 11 : i64} {
  func.func @_mm_stats_kernel(%arg0: i32, %arg1: memref<128x4xbf16, #tpu.memory_space<vmem>>, %arg2: memref<4x32xbf16, #tpu.memory_space<vmem>>, %arg3: memref<128x32xbf16, #tpu.memory_space<vmem>>, %arg4: memref<8x32xf32, #tpu.memory_space<vmem>>) attributes {dimension_semantics = [#tpu.dimension_semantics<parallel>], iteration_bounds = array<i64: 1>, scalar_prefetch = 0 : i64, scratch_operands = 0 : i64, tpu.core_type = #tpu.core_type<tc>, window_params = [{transform_indices = @transform_0, window_bounds = array<i64: 128, 4>}, {pipeline_mode = #tpu.pipeline_mode<synchronous>, transform_indices = @transform_1, window_bounds = array<i64: 4, 32>}, {transform_indices = @transform_2, window_bounds = array<i64: 128, 32>}, {transform_indices = @transform_3, window_bounds = array<i64: 8, 32>}]} {
    %c0 = arith.constant 0 : index
    %c0_0 = arith.constant 0 : index
    %0 = vector.load %arg1[%c0, %c0_0] : memref<128x4xbf16, #tpu.memory_space<vmem>>, vector<128x4xbf16>
    %c0_1 = arith.constant 0 : index
    %c0_2 = arith.constant 0 : index
    %1 = vector.load %arg2[%c0_1, %c0_2] : memref<4x32xbf16, #tpu.memory_space<vmem>>, vector<4x32xbf16>
    %cst = arith.constant dense<0.000000e+00> : vector<128x32xf32>
    %2 = tpu.matmul %0, %1, %cst {dimension_numbers = #tpu.dot_dimension_numbers<[1], [0], [0], [1], [0, 0, 1, 1], [], []>} : vector<128x4xbf16>, vector<4x32xbf16>, vector<128x32xf32> -> vector<128x32xf32>
    %3 = arith.truncf %2 : vector<128x32xf32> to vector<128x32xbf16>
    %c0_3 = arith.constant 0 : index
    %c0_4 = arith.constant 0 : index
    %4 = vector.load %arg3[%c0_3, %c0_4] : memref<128x32xbf16, #tpu.memory_space<vmem>>, vector<128x32xbf16>
    tpu.vector_store %arg3[%c0_3, %c0_4], %3 {strides = array<i32>} : memref<128x32xbf16, #tpu.memory_space<vmem>>, vector<128x32xbf16>,
    %cst_5 = arith.constant dense<0.000000e+00> : vector<32xf32>
    %5 = vector.multi_reduction <add>, %2, %cst_5 [0] : vector<128x32xf32> to vector<32xf32>
    %6 = vector.shape_cast %5 : vector<32xf32> to vector<1x32xf32>
    %7 = arith.mulf %2, %2 : vector<128x32xf32>
    %cst_6 = arith.constant dense<0.000000e+00> : vector<32xf32>
    %8 = vector.multi_reduction <add>, %7, %cst_6 [0] : vector<128x32xf32> to vector<32xf32>
    %9 = vector.shape_cast %8 : vector<32xf32> to vector<1x32xf32>
    %cst_7 = arith.constant 0.000000e+00 : f32
    %10 = vector.broadcast %cst_7 : f32 to vector<6x32xf32>
    %11 = tpu.concatenate %6, %9, %10 in 0 : vector<1x32xf32>, vector<1x32xf32>, vector<6x32xf32> -> vector<8x32xf32>
    %c0_8 = arith.constant 0 : index
    %c0_9 = arith.constant 0 : index
    %12 = vector.load %arg4[%c0_8, %c0_9] : memref<8x32xf32, #tpu.memory_space<vmem>>, vector<8x32xf32>
    tpu.vector_store %arg4[%c0_8, %c0_9], %11 {strides = array<i32>} : memref<8x32xf32, #tpu.memory_space<vmem>>, vector<8x32xf32>,
    return
  }
  func.func @transform_0(%arg0: i32) -> (i32, i32) {
    %c0_i32 = arith.constant 0 : i32
    %c0_i32_0 = arith.constant 0 : i32
    return %arg0, %c0_i32 : i32, i32
  }
  func.func @transform_1(%arg0: i32) -> (i32, i32) {
    %c0_i32 = arith.constant 0 : i32
    %c0_i32_0 = arith.constant 0 : i32
    %c0_i32_1 = arith.constant 0 : i32
    return %c0_i32, %c0_i32_0 : i32, i32
  }
  func.func @transform_2(%arg0: i32) -> (i32, i32) {
    %c0_i32 = arith.constant 0 : i32
    %c0_i32_0 = arith.constant 0 : i32
    return %arg0, %c0_i32 : i32, i32
  }
  func.func @transform_3(%arg0: i32) -> (i32, i32) {
    %c0_i32 = arith.constant 0 : i32
    %c0_i32_0 = arith.constant 0 : i32
    return %arg0, %c0_i32 : i32, i32
  }
}

module attributes {stable_mosaic.version = 11 : i64} {
  func.func @_bn_add_relu_pre_kernel(%arg0: i32, %arg1: memref<128x32xbf16, #tpu.memory_space<vmem>>, %arg2: memref<1x32xf32, #tpu.memory_space<vmem>>, %arg3: memref<1x32xf32, #tpu.memory_space<vmem>>, %arg4: memref<128x32xbf16, #tpu.memory_space<vmem>>, %arg5: memref<1x32xf32, #tpu.memory_space<vmem>>, %arg6: memref<1x32xf32, #tpu.memory_space<vmem>>, %arg7: memref<128x32xf32, #tpu.memory_space<vmem>>, %arg8: memref<128x32xf32, #tpu.memory_space<vmem>>) attributes {dimension_semantics = [#tpu.dimension_semantics<parallel>], iteration_bounds = array<i64: 1>, scalar_prefetch = 0 : i64, scratch_operands = 0 : i64, tpu.core_type = #tpu.core_type<tc>, window_params = [{transform_indices = @transform_0, window_bounds = array<i64: 128, 32>}, {pipeline_mode = #tpu.pipeline_mode<synchronous>, transform_indices = @transform_1, window_bounds = array<i64: 1, 32>}, {pipeline_mode = #tpu.pipeline_mode<synchronous>, transform_indices = @transform_2, window_bounds = array<i64: 1, 32>}, {transform_indices = @transform_3, window_bounds = array<i64: 128, 32>}, {pipeline_mode = #tpu.pipeline_mode<synchronous>, transform_indices = @transform_4, window_bounds = array<i64: 1, 32>}, {pipeline_mode = #tpu.pipeline_mode<synchronous>, transform_indices = @transform_5, window_bounds = array<i64: 1, 32>}, {transform_indices = @transform_6, window_bounds = array<i64: 128, 32>}, {transform_indices = @transform_7, window_bounds = array<i64: 128, 32>}]} {
    %c0 = arith.constant 0 : index
    %c0_0 = arith.constant 0 : index
    %0 = vector.load %arg1[%c0, %c0_0] : memref<128x32xbf16, #tpu.memory_space<vmem>>, vector<128x32xbf16>
    %c0_1 = arith.constant 0 : index
    %c0_2 = arith.constant 0 : index
    %1 = vector.load %arg2[%c0_1, %c0_2] : memref<1x32xf32, #tpu.memory_space<vmem>>, vector<1x32xf32>
    %2 = arith.extf %0 : vector<128x32xbf16> to vector<128x32xf32>
    %3 = vector.broadcast %1 : vector<1x32xf32> to vector<128x32xf32>
    %4 = arith.mulf %2, %3 : vector<128x32xf32>
    %c0_3 = arith.constant 0 : index
    %c0_4 = arith.constant 0 : index
    %5 = vector.load %arg3[%c0_3, %c0_4] : memref<1x32xf32, #tpu.memory_space<vmem>>, vector<1x32xf32>
    %6 = vector.broadcast %5 : vector<1x32xf32> to vector<128x32xf32>
    %7 = arith.addf %4, %6 : vector<128x32xf32>
    %c0_5 = arith.constant 0 : index
    %c0_6 = arith.constant 0 : index
    %8 = vector.load %arg4[%c0_5, %c0_6] : memref<128x32xbf16, #tpu.memory_space<vmem>>, vector<128x32xbf16>
    %c0_7 = arith.constant 0 : index
    %c0_8 = arith.constant 0 : index
    %9 = vector.load %arg5[%c0_7, %c0_8] : memref<1x32xf32, #tpu.memory_space<vmem>>, vector<1x32xf32>
    %10 = arith.extf %8 : vector<128x32xbf16> to vector<128x32xf32>
    %11 = vector.broadcast %9 : vector<1x32xf32> to vector<128x32xf32>
    %12 = arith.mulf %10, %11 : vector<128x32xf32>
    %13 = arith.addf %7, %12 : vector<128x32xf32>
    %c0_9 = arith.constant 0 : index
    %c0_10 = arith.constant 0 : index
    %14 = vector.load %arg6[%c0_9, %c0_10] : memref<1x32xf32, #tpu.memory_space<vmem>>, vector<1x32xf32>
    %15 = vector.broadcast %14 : vector<1x32xf32> to vector<128x32xf32>
    %16 = arith.addf %13, %15 : vector<128x32xf32>
    %c0_11 = arith.constant 0 : index
    %c0_12 = arith.constant 0 : index
    %17 = vector.load %arg8[%c0_11, %c0_12] : memref<128x32xf32, #tpu.memory_space<vmem>>, vector<128x32xf32>
    tpu.vector_store %arg8[%c0_11, %c0_12], %16 {strides = array<i32>} : memref<128x32xf32, #tpu.memory_space<vmem>>, vector<128x32xf32>,
    %cst = arith.constant 0.000000e+00 : f32
    %18 = vector.broadcast %cst : f32 to vector<128x32xf32>
    %19 = arith.maximumf %16, %18 : vector<128x32xf32>
    %c0_13 = arith.constant 0 : index
    %c0_14 = arith.constant 0 : index
    %20 = vector.load %arg7[%c0_13, %c0_14] : memref<128x32xf32, #tpu.memory_space<vmem>>, vector<128x32xf32>
    tpu.vector_store %arg7[%c0_13, %c0_14], %19 {strides = array<i32>} : memref<128x32xf32, #tpu.memory_space<vmem>>, vector<128x32xf32>,
    return
  }
  func.func @transform_0(%arg0: i32) -> (i32, i32) {
    %c0_i32 = arith.constant 0 : i32
    %c0_i32_0 = arith.constant 0 : i32
    return %arg0, %c0_i32 : i32, i32
  }
  func.func @transform_1(%arg0: i32) -> (i32, i32) {
    %c0_i32 = arith.constant 0 : i32
    %c0_i32_0 = arith.constant 0 : i32
    %c0_i32_1 = arith.constant 0 : i32
    return %c0_i32, %c0_i32_0 : i32, i32
  }
  func.func @transform_2(%arg0: i32) -> (i32, i32) {
    %c0_i32 = arith.constant 0 : i32
    %c0_i32_0 = arith.constant 0 : i32
    %c0_i32_1 = arith.constant 0 : i32
    return %c0_i32, %c0_i32_0 : i32, i32
  }
  func.func @transform_3(%arg0: i32) -> (i32, i32) {
    %c0_i32 = arith.constant 0 : i32
    %c0_i32_0 = arith.constant 0 : i32
    return %arg0, %c0_i32 : i32, i32
  }
  func.func @transform_4(%arg0: i32) -> (i32, i32) {
    %c0_i32 = arith.constant 0 : i32
    %c0_i32_0 = arith.constant 0 : i32
    %c0_i32_1 = arith.constant 0 : i32
    return %c0_i32, %c0_i32_0 : i32, i32
  }
  func.func @transform_5(%arg0: i32) -> (i32, i32) {
    %c0_i32 = arith.constant 0 : i32
    %c0_i32_0 = arith.constant 0 : i32
    %c0_i32_1 = arith.constant 0 : i32
    return %c0_i32, %c0_i32_0 : i32, i32
  }
  func.func @transform_6(%arg0: i32) -> (i32, i32) {
    %c0_i32 = arith.constant 0 : i32
    %c0_i32_0 = arith.constant 0 : i32
    return %arg0, %c0_i32 : i32, i32
  }
  func.func @transform_7(%arg0: i32) -> (i32, i32) {
    %c0_i32 = arith.constant 0 : i32
    %c0_i32_0 = arith.constant 0 : i32
    return %arg0, %c0_i32 : i32, i32
  }
}

</mosaic_0001>

<llo_original>
// kernel: bottleneck_forward.7
$region0: #{bottleneck_forward.7}
  #allocation0 [shape = 'u32[]', space=smem, size = 0x4, offset = 0x4, fixed_abs, tag = 'smem constant byte address 0x4 - core index']
  #allocation1 [shape = 'u32[72,128]{1,0:T(1,128)}', space=vmem, size = 0x9000, scoped, tag = 'internal scratch']
  %s0 = inlined_call_operand.vmem [shape: bf16[128,8], index: 0, kind: input, shape index: {}]
  %s1 = inlined_call_operand.vmem [shape: f32[1,8], index: 1, kind: input, shape index: {}]
  %s2 = inlined_call_operand.vmem [shape: f32[1,8], index: 2, kind: input, shape index: {}]
  %s3 = inlined_call_operand.vmem [shape: bf16[8,32], index: 3, kind: input, shape index: {}]
  %s4 = inlined_call_operand.vmem [shape: bf16[128,32], index: 4, kind: output, shape index: {0}]
  %s5 = inlined_call_operand.vmem [shape: f32[8,32], index: 5, kind: output, shape index: {1}]
  %6 = xla_tuple %s4, %s5
  %s7 = sld [smem:[#allocation0]]
  $region34: #{bottleneck_forward.7} parent=0
    _
  %s9 = ssub.s32 1, %s7
  %s10 = scalar_select 0, %s9, %s7
  // Predicated region
  $region2: #{bottleneck_forward.7} parent=0 // pred_check
    _
  $region3: #{bottleneck_forward.7} parent=0 // pred_check_branch
    %12 = sbr.rel (0) target = $region5
  $region4: #{bottleneck_forward.7} parent=0 // pred_region
    _
  $region5: #{bottleneck_forward.7} parent=0 // pred_fallthru
    _
  // Predicated region
  $region6: #{bottleneck_forward.7} parent=0 // pred_check
    _
  $region7: #{bottleneck_forward.7} parent=0 // pred_check_branch
    %14 = sbr.rel (0) target = $region9
  $region8: #{bottleneck_forward.7} parent=0 // pred_region
    _
  $region9: #{bottleneck_forward.7} parent=0 // pred_fallthru
    _
  // Predicated region
  $region10: #{bottleneck_forward.7} parent=0 // pred_check
    _
  $region11: #{bottleneck_forward.7} parent=0 // pred_check_branch
    %16 = sbr.rel (0) target = $region13
  $region12: #{bottleneck_forward.7} parent=0 // pred_region
    _
  $region13: #{bottleneck_forward.7} parent=0 // pred_fallthru
    _
  // Predicated region
  $region14: #{bottleneck_forward.7} parent=0 // pred_check
    _
  $region15: #{bottleneck_forward.7} parent=0 // pred_check_branch
    %18 = sbr.rel (0) target = $region17
  $region16: #{bottleneck_forward.7} parent=0 // pred_region
    _
  $region17: #{bottleneck_forward.7} parent=0 // pred_fallthru
    _
  %v20 = vld [vmem:[%s0] sm:$0xf]
  %v21 = vld [vmem:[%s0 + $0x4] sm:$0xf]
  %v22 = vld [vmem:[%s0 + $0x8] sm:$0xf]
  %v23 = vld [vmem:[%s0 + $0xc] sm:$0xf]
  %v24 = vld [vmem:[%s0 + $0x10] sm:$0xf]
  %v25 = vld [vmem:[%s0 + $0x14] sm:$0xf]
  %v26 = vld [vmem:[%s0 + $0x18] sm:$0xf]
  %v27 = vld [vmem:[%s0 + $0x1c] sm:$0xf]
  %v28 = vld [vmem:[%s0 + $0x20] sm:$0xf]
  %v29 = vld [vmem:[%s0 + $0x24] sm:$0xf]
  %v30 = vld [vmem:[%s0 + $0x28] sm:$0xf]
  %v31 = vld [vmem:[%s0 + $0x2c] sm:$0xf]
  %v32 = vld [vmem:[%s0 + $0x30] sm:$0xf]
  %v33 = vld [vmem:[%s0 + $0x34] sm:$0xf]
  %v34 = vld [vmem:[%s0 + $0x38] sm:$0xf]
  %v35 = vld [vmem:[%s0 + $0x3c] sm:$0xf]
  %v36 = vld [vmem:[%s1] sm:$0x1]
  %v37 = vunpack.c.l.bf16 %v20
  %v38 = vunpack.c.l.bf16 %v21
  %v39 = vunpack.c.l.bf16 %v22
  %v40 = vunpack.c.l.bf16 %v23
  %v41 = vunpack.c.l.bf16 %v24
  %v42 = vunpack.c.l.bf16 %v25
  %v43 = vunpack.c.l.bf16 %v26
  %v44 = vunpack.c.l.bf16 %v27
  %v45 = vunpack.c.l.bf16 %v28
  %v46 = vunpack.c.l.bf16 %v29
  %v47 = vunpack.c.l.bf16 %v30
  %v48 = vunpack.c.l.bf16 %v31
  %v49 = vunpack.c.l.bf16 %v32
  %v50 = vunpack.c.l.bf16 %v33
  %v51 = vunpack.c.l.bf16 %v34
  %v52 = vunpack.c.l.bf16 %v35
  %v54 = vperm.slane %v36, 0
  %v56 = vmul.f32 %v37, %v54
  %v57 = vmul.f32 %v38, %v54
  %v58 = vmul.f32 %v39, %v54
  %v59 = vmul.f32 %v40, %v54
  %v60 = vmul.f32 %v41, %v54
  %v61 = vmul.f32 %v42, %v54
  %v62 = vmul.f32 %v43, %v54
  %v63 = vmul.f32 %v44, %v54
  %v64 = vmul.f32 %v45, %v54
  %v65 = vmul.f32 %v46, %v54
  %v66 = vmul.f32 %v47, %v54
  %v67 = vmul.f32 %v48, %v54
  %v68 = vmul.f32 %v49, %v54
  %v69 = vmul.f32 %v50, %v54
  %v70 = vmul.f32 %v51, %v54
  %v71 = vmul.f32 %v52, %v54
  %v72 = vld [vmem:[%s2] sm:$0x1]
  %v74 = vperm.slane %v72, 0
  %v76 = vadd.f32 %v56, %v74
  %v77 = vadd.f32 %v57, %v74
  %v78 = vadd.f32 %v58, %v74
  %v79 = vadd.f32 %v59, %v74
  %v80 = vadd.f32 %v60, %v74
  %v81 = vadd.f32 %v61, %v74
  %v82 = vadd.f32 %v62, %v74
  %v83 = vadd.f32 %v63, %v74
  %v84 = vadd.f32 %v64, %v74
  %v85 = vadd.f32 %v65, %v74
  %v86 = vadd.f32 %v66, %v74
  %v87 = vadd.f32 %v67, %v74
  %v88 = vadd.f32 %v68, %v74
  %v89 = vadd.f32 %v69, %v74
  %v90 = vadd.f32 %v70, %v74
  %v91 = vadd.f32 %v71, %v74
  %v92 = vmax.f32 %v76, 0.0
  %v93 = vmax.f32 %v77, 0.0
  %v94 = vmax.f32 %v78, 0.0
  %v95 = vmax.f32 %v79, 0.0
  %v96 = vmax.f32 %v80, 0.0
  %v97 = vmax.f32 %v81, 0.0
  %v98 = vmax.f32 %v82, 0.0
  %v99 = vmax.f32 %v83, 0.0
  %v100 = vmax.f32 %v84, 0.0
  %v101 = vmax.f32 %v85, 0.0
  %v102 = vmax.f32 %v86, 0.0
  %v103 = vmax.f32 %v87, 0.0
  %v104 = vmax.f32 %v88, 0.0
  %v105 = vmax.f32 %v89, 0.0
  %v106 = vmax.f32 %v90, 0.0
  %v107 = vmax.f32 %v91, 0.0
  %v108 = vpack.c.bf16 %v93, %v92
  %v109 = vpack.c.bf16 %v95, %v94
  %v110 = vpack.c.bf16 %v97, %v96
  %v111 = vpack.c.bf16 %v99, %v98
  %v112 = vpack.c.bf16 %v101, %v100
  %v113 = vpack.c.bf16 %v103, %v102
  %v114 = vpack.c.bf16 %v105, %v104
  %v115 = vpack.c.bf16 %v107, %v106
  %v116 = vld [vmem:[%s3] sm:$0xf]
  %vm117 = vcmask 64512
  %v119 = vsel %vm117, %v108, 0
  %v122 = vsel %vm117, %v109, 0
  %v125 = vsel %vm117, %v110, 0
  %v128 = vsel %vm117, %v111, 0
  %v131 = vsel %vm117, %v112, 0
  %v134 = vsel %vm117, %v113, 0
  %v137 = vsel %vm117, %v114, 0
  %v140 = vsel %vm117, %v115, 0
  %vm142 = vcmask 1043456
  %v144 = vsel %vm142, %v116, 0
  %146 = vmatpush.bf16.msra.mxu0 0
  %147 = vmatpush.bf16.msra.mxu0 0
  %148 = vmatpush.bf16.msra.mxu0 0
  %149 = vmatpush.bf16.msra.mxu0 0
  %150 = vmatpush.bf16.msra.mxu0 0
  %151 = vmatpush.bf16.msra.mxu0 0
  %152 = vmatpush.bf16.msra.mxu0 0
  %153 = vmatpush.bf16.msra.mxu0 %v144
  %154 = vmatmul.bf16.gmra.mxu0 %v119
  %v155 = vpop.f32.mrf.mxu0
  %v156 = vadd.f32 0.0, %v155
  %v157 = vpop.f32.mrf.mxu0
  %v158 = vadd.f32 0.0, %v157
  %159 = vmatmul.bf16.gmra.mxu0 %v122
  %v160 = vpop.f32.mrf.mxu0
  %v161 = vadd.f32 0.0, %v160
  %v162 = vpop.f32.mrf.mxu0
  %v163 = vadd.f32 0.0, %v162
  %164 = vmatmul.bf16.gmra.mxu0 %v125
  %v165 = vpop.f32.mrf.mxu0
  %v166 = vadd.f32 0.0, %v165
  %v167 = vpop.f32.mrf.mxu0
  %v168 = vadd.f32 0.0, %v167
  %169 = vmatmul.bf16.gmra.mxu0 %v128
  %v170 = vpop.f32.mrf.mxu0
  %v171 = vadd.f32 0.0, %v170
  %v172 = vpop.f32.mrf.mxu0
  %v173 = vadd.f32 0.0, %v172
  %174 = vmatmul.bf16.gmra.mxu0 %v131
  %v175 = vpop.f32.mrf.mxu0
  %v176 = vadd.f32 0.0, %v175
  %v177 = vpop.f32.mrf.mxu0
  %v178 = vadd.f32 0.0, %v177
  %179 = vmatmul.bf16.gmra.mxu0 %v134
  %v180 = vpop.f32.mrf.mxu0
  %v181 = vadd.f32 0.0, %v180
  %v182 = vpop.f32.mrf.mxu0
  %v183 = vadd.f32 0.0, %v182
  %184 = vmatmul.bf16.gmra.mxu0 %v137
  %v185 = vpop.f32.mrf.mxu0
  %v186 = vadd.f32 0.0, %v185
  %v187 = vpop.f32.mrf.mxu0
  %v188 = vadd.f32 0.0, %v187
  %189 = vmatmul.bf16.gmra.mxu0 %v140
  %v190 = vpop.f32.mrf.mxu0
  %v191 = vadd.f32 0.0, %v190
  %v192 = vpop.f32.mrf.mxu0
  %v193 = vadd.f32 0.0, %v192
  %194 = vdwg.mxu0
  %v195 = vpack.c.bf16 %v156, %v156
  %v196 = vpack.c.bf16 %v158, %v158
  %v197 = vpack.c.bf16 %v161, %v161
  %v198 = vpack.c.bf16 %v163, %v163
  %v199 = vpack.c.bf16 %v166, %v166
  %v200 = vpack.c.bf16 %v168, %v168
  %v201 = vpack.c.bf16 %v171, %v171
  %v202 = vpack.c.bf16 %v173, %v173
  %v203 = vpack.c.bf16 %v176, %v176
  %v204 = vpack.c.bf16 %v178, %v178
  %v205 = vpack.c.bf16 %v181, %v181
  %v206 = vpack.c.bf16 %v183, %v183
  %v207 = vpack.c.bf16 %v186, %v186
  %v208 = vpack.c.bf16 %v188, %v188
  %v209 = vpack.c.bf16 %v191, %v191
  %v210 = vpack.c.bf16 %v193, %v193
  %vm211 = vcmask 257024
  %212 = vst.msk [vmem:[%s4] sm:$0xf] %vm211, %v195
  %213 = vst.msk [vmem:[%s4 + $0x4] sm:$0xf] %vm211, %v196
  %214 = vst.msk [vmem:[%s4 + $0x8] sm:$0xf] %vm211, %v197
  %215 = vst.msk [vmem:[%s4 + $0xc] sm:$0xf] %vm211, %v198
  %216 = vst.msk [vmem:[%s4 + $0x10] sm:$0xf] %vm211, %v199
  %217 = vst.msk [vmem:[%s4 + $0x14] sm:$0xf] %vm211, %v200
  %218 = vst.msk [vmem:[%s4 + $0x18] sm:$0xf] %vm211, %v201
  %219 = vst.msk [vmem:[%s4 + $0x1c] sm:$0xf] %vm211, %v202
  %220 = vst.msk [vmem:[%s4 + $0x20] sm:$0xf] %vm211, %v203
  %221 = vst.msk [vmem:[%s4 + $0x24] sm:$0xf] %vm211, %v204
  %222 = vst.msk [vmem:[%s4 + $0x28] sm:$0xf] %vm211, %v205
  %223 = vst.msk [vmem:[%s4 + $0x2c] sm:$0xf] %vm211, %v206
  %224 = vst.msk [vmem:[%s4 + $0x30] sm:$0xf] %vm211, %v207
  %225 = vst.msk [vmem:[%s4 + $0x34] sm:$0xf] %vm211, %v208
  %226 = vst.msk [vmem:[%s4 + $0x38] sm:$0xf] %vm211, %v209
  %227 = vst.msk [vmem:[%s4 + $0x3c] sm:$0xf] %vm211, %v210
  %vm228 = vcmask 261120
  %v229 = vsel %vm228, %v156, 0.0
  %v230 = vsel %vm228, %v158, 0.0
  %v231 = vadd.f32 %v229, %v230
  %v232 = vsel %vm228, %v161, 0.0
  %v233 = vadd.f32 %v231, %v232
  %v234 = vsel %vm228, %v163, 0.0
  %v235 = vadd.f32 %v233, %v234
  %v236 = vsel %vm228, %v166, 0.0
  %v237 = vadd.f32 %v235, %v236
  %v238 = vsel %vm228, %v168, 0.0
  %v239 = vadd.f32 %v237, %v238
  %v240 = vsel %vm228, %v171, 0.0
  %v241 = vadd.f32 %v239, %v240
  %v242 = vsel %vm228, %v173, 0.0
  %v243 = vadd.f32 %v241, %v242
  %v244 = vsel %vm228, %v176, 0.0
  %v245 = vadd.f32 %v243, %v244
  %v246 = vsel %vm228, %v178, 0.0
  %v247 = vadd.f32 %v245, %v246
  %v248 = vsel %vm228, %v181, 0.0
  %v249 = vadd.f32 %v247, %v248
  %v250 = vsel %vm228, %v183, 0.0
  %v251 = vadd.f32 %v249, %v250
  %v252 = vsel %vm228, %v186, 0.0
  %v253 = vadd.f32 %v251, %v252
  %v254 = vsel %vm228, %v188, 0.0
  %v255 = vadd.f32 %v253, %v254
  %v256 = vsel %vm228, %v191, 0.0
  %v257 = vadd.f32 %v255, %v256
  %v258 = vsel %vm228, %v193, 0.0
  %v259 = vadd.f32 %v257, %v258
  %v260 = vrot.slane %v259, 4
  %v261 = vadd.f32 %v259, %v260
  %v262 = vrot.slane %v261, 2
  %v263 = vadd.f32 %v261, %v262
  %v264 = vrot.slane %v263, 1
  %v265 = vadd.f32 %v263, %v264
  %v266 = vmul.f32 %v156, %v156
  %v267 = vmul.f32 %v158, %v158
  %v268 = vmul.f32 %v161, %v161
  %v269 = vmul.f32 %v163, %v163
  %v270 = vmul.f32 %v166, %v166
  %v271 = vmul.f32 %v168, %v168
  %v272 = vmul.f32 %v171, %v171
  %v273 = vmul.f32 %v173, %v173
  %v274 = vmul.f32 %v176, %v176
  %v275 = vmul.f32 %v178, %v178
  %v276 = vmul.f32 %v181, %v181
  %v277 = vmul.f32 %v183, %v183
  %v278 = vmul.f32 %v186, %v186
  %v279 = vmul.f32 %v188, %v188
  %v280 = vmul.f32 %v191, %v191
  %v281 = vmul.f32 %v193, %v193
  %v282 = vsel %vm228, %v266, 0.0
  %v283 = vsel %vm228, %v267, 0.0
  %v284 = vadd.f32 %v282, %v283
  %v285 = vsel %vm228, %v268, 0.0
  %v286 = vadd.f32 %v284, %v285
  %v287 = vsel %vm228, %v269, 0.0
  %v288 = vadd.f32 %v286, %v287
  %v289 = vsel %vm228, %v270, 0.0
  %v290 = vadd.f32 %v288, %v289
  %v291 = vsel %vm228, %v271, 0.0
  %v292 = vadd.f32 %v290, %v291
  %v293 = vsel %vm228, %v272, 0.0
  %v294 = vadd.f32 %v292, %v293
  %v295 = vsel %vm228, %v273, 0.0
  %v296 = vadd.f32 %v294, %v295
  %v297 = vsel %vm228, %v274, 0.0
  %v298 = vadd.f32 %v296, %v297
  %v299 = vsel %vm228, %v275, 0.0
  %v300 = vadd.f32 %v298, %v299
  %v301 = vsel %vm228, %v276, 0.0
  %v302 = vadd.f32 %v300, %v301
  %v303 = vsel %vm228, %v277, 0.0
  %v304 = vadd.f32 %v302, %v303
  %v305 = vsel %vm228, %v278, 0.0
  %v306 = vadd.f32 %v304, %v305
  %v307 = vsel %vm228, %v279, 0.0
  %v308 = vadd.f32 %v306, %v307
  %v309 = vsel %vm228, %v280, 0.0
  %v310 = vadd.f32 %v308, %v309
  %v311 = vsel %vm228, %v281, 0.0
  %v312 = vadd.f32 %v310, %v311
  %v313 = vrot.slane %v312, 4
  %v314 = vadd.f32 %v312, %v313
  %v315 = vrot.slane %v314, 2
  %v316 = vadd.f32 %v314, %v315
  %v317 = vrot.slane %v316, 1
  %v318 = vadd.f32 %v316, %v317
  %vm319 = vcmask 1040384
  %v320 = vsel %vm319, %v265, %v318
  %vm321 = vcmask 1041408
  %v322 = vsel %vm321, %v320, 0.0
  %323 = vst.msk [vmem:[%s5] sm:$0xff] %vm228, %v322
  // Predicated region
  $region18: #{bottleneck_forward.7} parent=0 // pred_check
    _
  $region19: #{bottleneck_forward.7} parent=0 // pred_check_branch
    %325 = sbr.rel (0) target = $region21
  $region20: #{bottleneck_forward.7} parent=0 // pred_region
    _
  $region21: #{bottleneck_forward.7} parent=0 // pred_fallthru
    _
  // Predicated region
  $region22: #{bottleneck_forward.7} parent=0 // pred_check
    _
  $region23: #{bottleneck_forward.7} parent=0 // pred_check_branch
    %327 = sbr.rel (0) target = $region25
  $region24: #{bottleneck_forward.7} parent=0 // pred_region
    _
  $region25: #{bottleneck_forward.7} parent=0 // pred_fallthru
    _
  // Predicated region
  $region26: #{bottleneck_forward.7} parent=0 // pred_check
    _
  $region27: #{bottleneck_forward.7} parent=0 // pred_check_branch
    %329 = sbr.rel (0) target = $region29
  $region28: #{bottleneck_forward.7} parent=0 // pred_region
    _
  $region29: #{bottleneck_forward.7} parent=0 // pred_fallthru
    _
  // Predicated region
  $region30: #{bottleneck_forward.7} parent=0 // pred_check
    _
  $region31: #{bottleneck_forward.7} parent=0 // pred_check_branch
    %331 = sbr.rel (0) target = $region33
  $region32: #{bottleneck_forward.7} parent=0 // pred_region
    _
  $region33: #{bottleneck_forward.7} parent=0 // pred_fallthru
    _

// kernel: bottleneck_forward.8
$region0: #{bottleneck_forward.8}
  #allocation0 [shape = 'u32[]', space=smem, size = 0x4, offset = 0x4, fixed_abs, tag = 'smem constant byte address 0x4 - core index']
  #allocation1 [shape = 'u32[72,128]{1,0:T(1,128)}', space=vmem, size = 0x9000, scoped, tag = 'internal scratch']
  %s0 = inlined_call_operand.vmem [shape: bf16[128,4], index: 0, kind: input, shape index: {}]
  %s1 = inlined_call_operand.vmem [shape: bf16[4,32], index: 1, kind: input, shape index: {}]
  %s2 = inlined_call_operand.vmem [shape: bf16[128,32], index: 2, kind: output, shape index: {0}]
  %s3 = inlined_call_operand.vmem [shape: f32[8,32], index: 3, kind: output, shape index: {1}]
  %4 = xla_tuple %s2, %s3
  %s5 = sld [smem:[#allocation0]]
  $region26: #{bottleneck_forward.8} parent=0
    _
  %s7 = ssub.s32 1, %s5
  %s8 = scalar_select 0, %s7, %s5
  // Predicated region
  $region2: #{bottleneck_forward.8} parent=0 // pred_check
    _
  $region3: #{bottleneck_forward.8} parent=0 // pred_check_branch
    %10 = sbr.rel (0) target = $region5
  $region4: #{bottleneck_forward.8} parent=0 // pred_region
    _
  $region5: #{bottleneck_forward.8} parent=0 // pred_fallthru
    _
  // Predicated region
  $region6: #{bottleneck_forward.8} parent=0 // pred_check
    _
  $region7: #{bottleneck_forward.8} parent=0 // pred_check_branch
    %12 = sbr.rel (0) target = $region9
  $region8: #{bottleneck_forward.8} parent=0 // pred_region
    _
  $region9: #{bottleneck_forward.8} parent=0 // pred_fallthru
    _
  %v14 = vld [vmem:[%s0] sm:$0xf]
  %v15 = vld [vmem:[%s0 + $0x4] sm:$0xf]
  %v16 = vld [vmem:[%s0 + $0x8] sm:$0xf]
  %v17 = vld [vmem:[%s0 + $0xc] sm:$0xf]
  %v18 = vld [vmem:[%s0 + $0x10] sm:$0xf]
  %v19 = vld [vmem:[%s0 + $0x14] sm:$0xf]
  %v20 = vld [vmem:[%s0 + $0x18] sm:$0xf]
  %v21 = vld [vmem:[%s0 + $0x1c] sm:$0xf]
  %v22 = vld [vmem:[%s0 + $0x20] sm:$0xf]
  %v23 = vld [vmem:[%s0 + $0x24] sm:$0xf]
  %v24 = vld [vmem:[%s0 + $0x28] sm:$0xf]
  %v25 = vld [vmem:[%s0 + $0x2c] sm:$0xf]
  %v26 = vld [vmem:[%s0 + $0x30] sm:$0xf]
  %v27 = vld [vmem:[%s0 + $0x34] sm:$0xf]
  %v28 = vld [vmem:[%s0 + $0x38] sm:$0xf]
  %v29 = vld [vmem:[%s0 + $0x3c] sm:$0xf]
  %v30 = vld [vmem:[%s1] sm:$0x3]
  %v47 = vunpack.c.l.b16 %v14
  %v48 = vunpack.c.l.b16 %v15
  %v49 = vunpack.c.l.b16 %v16
  %v50 = vunpack.c.l.b16 %v17
  %v51 = vunpack.c.l.b16 %v18
  %v52 = vunpack.c.l.b16 %v19
  %v53 = vunpack.c.l.b16 %v20
  %v54 = vunpack.c.l.b16 %v21
  %v55 = vunpack.c.l.b16 %v22
  %v56 = vunpack.c.l.b16 %v23
  %v57 = vunpack.c.l.b16 %v24
  %v58 = vunpack.c.l.b16 %v25
  %v59 = vunpack.c.l.b16 %v26
  %v60 = vunpack.c.l.b16 %v27
  %v61 = vunpack.c.l.b16 %v28
  %v62 = vunpack.c.l.b16 %v29
  %v63 = vpack.c.b16 %v48, %v47
  %v64 = vpack.c.b16 %v50, %v49
  %v65 = vpack.c.b16 %v52, %v51
  %v66 = vpack.c.b16 %v54, %v53
  %v67 = vpack.c.b16 %v56, %v55
  %v68 = vpack.c.b16 %v58, %v57
  %v69 = vpack.c.b16 %v60, %v59
  %v70 = vpack.c.b16 %v62, %v61
  %vm71 = vcmask 31744
  %v73 = vsel %vm71, %v63, 0
  %v76 = vsel %vm71, %v64, 0
  %v79 = vsel %vm71, %v65, 0
  %v82 = vsel %vm71, %v66, 0
  %v85 = vsel %vm71, %v67, 0
  %v88 = vsel %vm71, %v68, 0
  %v91 = vsel %vm71, %v69, 0
  %v94 = vsel %vm71, %v70, 0
  %vm96 = vcmask 1041408
  %v98 = vsel %vm96, %v30, 0
  %100 = vmatpush.bf16.msra.mxu0 0
  %101 = vmatpush.bf16.msra.mxu0 0
  %102 = vmatpush.bf16.msra.mxu0 0
  %103 = vmatpush.bf16.msra.mxu0 0
  %104 = vmatpush.bf16.msra.mxu0 0
  %105 = vmatpush.bf16.msra.mxu0 0
  %106 = vmatpush.bf16.msra.mxu0 0
  %107 = vmatpush.bf16.msra.mxu0 %v98
  %108 = vmatmul.bf16.gmra.mxu0 %v73
  %v109 = vpop.f32.mrf.mxu0
  %v110 = vadd.f32 0.0, %v109
  %v111 = vpop.f32.mrf.mxu0
  %v112 = vadd.f32 0.0, %v111
  %113 = vmatmul.bf16.gmra.mxu0 %v76
  %v114 = vpop.f32.mrf.mxu0
  %v115 = vadd.f32 0.0, %v114
  %v116 = vpop.f32.mrf.mxu0
  %v117 = vadd.f32 0.0, %v116
  %118 = vmatmul.bf16.gmra.mxu0 %v79
  %v119 = vpop.f32.mrf.mxu0
  %v120 = vadd.f32 0.0, %v119
  %v121 = vpop.f32.mrf.mxu0
  %v122 = vadd.f32 0.0, %v121
  %123 = vmatmul.bf16.gmra.mxu0 %v82
  %v124 = vpop.f32.mrf.mxu0
  %v125 = vadd.f32 0.0, %v124
  %v126 = vpop.f32.mrf.mxu0
  %v127 = vadd.f32 0.0, %v126
  %128 = vmatmul.bf16.gmra.mxu0 %v85
  %v129 = vpop.f32.mrf.mxu0
  %v130 = vadd.f32 0.0, %v129
  %v131 = vpop.f32.mrf.mxu0
  %v132 = vadd.f32 0.0, %v131
  %133 = vmatmul.bf16.gmra.mxu0 %v88
  %v134 = vpop.f32.mrf.mxu0
  %v135 = vadd.f32 0.0, %v134
  %v136 = vpop.f32.mrf.mxu0
  %v137 = vadd.f32 0.0, %v136
  %138 = vmatmul.bf16.gmra.mxu0 %v91
  %v139 = vpop.f32.mrf.mxu0
  %v140 = vadd.f32 0.0, %v139
  %v141 = vpop.f32.mrf.mxu0
  %v142 = vadd.f32 0.0, %v141
  %143 = vmatmul.bf16.gmra.mxu0 %v94
  %v144 = vpop.f32.mrf.mxu0
  %v145 = vadd.f32 0.0, %v144
  %v146 = vpop.f32.mrf.mxu0
  %v147 = vadd.f32 0.0, %v146
  %148 = vdwg.mxu0
  %v149 = vpack.c.bf16 %v110, %v110
  %v150 = vpack.c.bf16 %v112, %v112
  %v151 = vpack.c.bf16 %v115, %v115
  %v152 = vpack.c.bf16 %v117, %v117
  %v153 = vpack.c.bf16 %v120, %v120
  %v154 = vpack.c.bf16 %v122, %v122
  %v155 = vpack.c.bf16 %v125, %v125
  %v156 = vpack.c.bf16 %v127, %v127
  %v157 = vpack.c.bf16 %v130, %v130
  %v158 = vpack.c.bf16 %v132, %v132
  %v159 = vpack.c.bf16 %v135, %v135
  %v160 = vpack.c.bf16 %v137, %v137
  %v161 = vpack.c.bf16 %v140, %v140
  %v162 = vpack.c.bf16 %v142, %v142
  %v163 = vpack.c.bf16 %v145, %v145
  %v164 = vpack.c.bf16 %v147, %v147
  %vm165 = vcmask 257024
  %166 = vst.msk [vmem:[%s2] sm:$0xf] %vm165, %v149
  %167 = vst.msk [vmem:[%s2 + $0x4] sm:$0xf] %vm165, %v150
  %168 = vst.msk [vmem:[%s2 + $0x8] sm:$0xf] %vm165, %v151
  %169 = vst.msk [vmem:[%s2 + $0xc] sm:$0xf] %vm165, %v152
  %170 = vst.msk [vmem:[%s2 + $0x10] sm:$0xf] %vm165, %v153
  %171 = vst.msk [vmem:[%s2 + $0x14] sm:$0xf] %vm165, %v154
  %172 = vst.msk [vmem:[%s2 + $0x18] sm:$0xf] %vm165, %v155
  %173 = vst.msk [vmem:[%s2 + $0x1c] sm:$0xf] %vm165, %v156
  %174 = vst.msk [vmem:[%s2 + $0x20] sm:$0xf] %vm165, %v157
  %175 = vst.msk [vmem:[%s2 + $0x24] sm:$0xf] %vm165, %v158
  %176 = vst.msk [vmem:[%s2 + $0x28] sm:$0xf] %vm165, %v159
  %177 = vst.msk [vmem:[%s2 + $0x2c] sm:$0xf] %vm165, %v160
  %178 = vst.msk [vmem:[%s2 + $0x30] sm:$0xf] %vm165, %v161
  %179 = vst.msk [vmem:[%s2 + $0x34] sm:$0xf] %vm165, %v162
  %180 = vst.msk [vmem:[%s2 + $0x38] sm:$0xf] %vm165, %v163
  %181 = vst.msk [vmem:[%s2 + $0x3c] sm:$0xf] %vm165, %v164
  %vm182 = vcmask 261120
  %v183 = vsel %vm182, %v110, 0.0
  %v184 = vsel %vm182, %v112, 0.0
  %v185 = vadd.f32 %v183, %v184
  %v186 = vsel %vm182, %v115, 0.0
  %v187 = vadd.f32 %v185, %v186
  %v188 = vsel %vm182, %v117, 0.0
  %v189 = vadd.f32 %v187, %v188
  %v190 = vsel %vm182, %v120, 0.0
  %v191 = vadd.f32 %v189, %v190
  %v192 = vsel %vm182, %v122, 0.0
  %v193 = vadd.f32 %v191, %v192
  %v194 = vsel %vm182, %v125, 0.0
  %v195 = vadd.f32 %v193, %v194
  %v196 = vsel %vm182, %v127, 0.0
  %v197 = vadd.f32 %v195, %v196
  %v198 = vsel %vm182, %v130, 0.0
  %v199 = vadd.f32 %v197, %v198
  %v200 = vsel %vm182, %v132, 0.0
  %v201 = vadd.f32 %v199, %v200
  %v202 = vsel %vm182, %v135, 0.0
  %v203 = vadd.f32 %v201, %v202
  %v204 = vsel %vm182, %v137, 0.0
  %v205 = vadd.f32 %v203, %v204
  %v206 = vsel %vm182, %v140, 0.0
  %v207 = vadd.f32 %v205, %v206
  %v208 = vsel %vm182, %v142, 0.0
  %v209 = vadd.f32 %v207, %v208
  %v210 = vsel %vm182, %v145, 0.0
  %v211 = vadd.f32 %v209, %v210
  %v212 = vsel %vm182, %v147, 0.0
  %v213 = vadd.f32 %v211, %v212
  %v214 = vrot.slane %v213, 4
  %v215 = vadd.f32 %v213, %v214
  %v216 = vrot.slane %v215, 2
  %v217 = vadd.f32 %v215, %v216
  %v218 = vrot.slane %v217, 1
  %v219 = vadd.f32 %v217, %v218
  %v220 = vmul.f32 %v110, %v110
  %v221 = vmul.f32 %v112, %v112
  %v222 = vmul.f32 %v115, %v115
  %v223 = vmul.f32 %v117, %v117
  %v224 = vmul.f32 %v120, %v120
  %v225 = vmul.f32 %v122, %v122
  %v226 = vmul.f32 %v125, %v125
  %v227 = vmul.f32 %v127, %v127
  %v228 = vmul.f32 %v130, %v130
  %v229 = vmul.f32 %v132, %v132
  %v230 = vmul.f32 %v135, %v135
  %v231 = vmul.f32 %v137, %v137
  %v232 = vmul.f32 %v140, %v140
  %v233 = vmul.f32 %v142, %v142
  %v234 = vmul.f32 %v145, %v145
  %v235 = vmul.f32 %v147, %v147
  %v236 = vsel %vm182, %v220, 0.0
  %v237 = vsel %vm182, %v221, 0.0
  %v238 = vadd.f32 %v236, %v237
  %v239 = vsel %vm182, %v222, 0.0
  %v240 = vadd.f32 %v238, %v239
  %v241 = vsel %vm182, %v223, 0.0
  %v242 = vadd.f32 %v240, %v241
  %v243 = vsel %vm182, %v224, 0.0
  %v244 = vadd.f32 %v242, %v243
  %v245 = vsel %vm182, %v225, 0.0
  %v246 = vadd.f32 %v244, %v245
  %v247 = vsel %vm182, %v226, 0.0
  %v248 = vadd.f32 %v246, %v247
  %v249 = vsel %vm182, %v227, 0.0
  %v250 = vadd.f32 %v248, %v249
  %v251 = vsel %vm182, %v228, 0.0
  %v252 = vadd.f32 %v250, %v251
  %v253 = vsel %vm182, %v229, 0.0
  %v254 = vadd.f32 %v252, %v253
  %v255 = vsel %vm182, %v230, 0.0
  %v256 = vadd.f32 %v254, %v255
  %v257 = vsel %vm182, %v231, 0.0
  %v258 = vadd.f32 %v256, %v257
  %v259 = vsel %vm182, %v232, 0.0
  %v260 = vadd.f32 %v258, %v259
  %v261 = vsel %vm182, %v233, 0.0
  %v262 = vadd.f32 %v260, %v261
  %v263 = vsel %vm182, %v234, 0.0
  %v264 = vadd.f32 %v262, %v263
  %v265 = vsel %vm182, %v235, 0.0
  %v266 = vadd.f32 %v264, %v265
  %v267 = vrot.slane %v266, 4
  %v268 = vadd.f32 %v266, %v267
  %v269 = vrot.slane %v268, 2
  %v270 = vadd.f32 %v268, %v269
  %v271 = vrot.slane %v270, 1
  %v272 = vadd.f32 %v270, %v271
  %vm273 = vcmask 1040384
  %v274 = vsel %vm273, %v219, %v272
  %v275 = vsel %vm96, %v274, 0.0
  %276 = vst.msk [vmem:[%s3] sm:$0xff] %vm182, %v275
  // Predicated region
  $region10: #{bottleneck_forward.8} parent=0 // pred_check
    _
  $region11: #{bottleneck_forward.8} parent=0 // pred_check_branch
    %278 = sbr.rel (0) target = $region13
  $region12: #{bottleneck_forward.8} parent=0 // pred_region
    _
  $region13: #{bottleneck_forward.8} parent=0 // pred_fallthru
    _
  // Predicated region
  $region14: #{bottleneck_forward.8} parent=0 // pred_check
    _
  $region15: #{bottleneck_forward.8} parent=0 // pred_check_branch
    %280 = sbr.rel (0) target = $region17
  $region16: #{bottleneck_forward.8} parent=0 // pred_region
    _
  $region17: #{bottleneck_forward.8} parent=0 // pred_fallthru
    _
  // Predicated region
  $region18: #{bottleneck_forward.8} parent=0 // pred_check
    _
  $region19: #{bottleneck_forward.8} parent=0 // pred_check_branch
    %282 = sbr.rel (0) target = $region21
  $region20: #{bottleneck_forward.8} parent=0 // pred_region
    _
  $region21: #{bottleneck_forward.8} parent=0 // pred_fallthru
    _
  // Predicated region
  $region22: #{bottleneck_forward.8} parent=0 // pred_check
    _
  $region23: #{bottleneck_forward.8} parent=0 // pred_check_branch
    %284 = sbr.rel (0) target = $region25
  $region24: #{bottleneck_forward.8} parent=0 // pred_region
    _
  $region25: #{bottleneck_forward.8} parent=0 // pred_fallthru
    _

// kernel: bottleneck_forward.5
$region0: #{bottleneck_forward.5}
  #allocation0 [shape = 'u32[]', space=smem, size = 0x4, offset = 0x4, fixed_abs, tag = 'smem constant byte address 0x4 - core index']
  #allocation1 [shape = 'u32[72,128]{1,0:T(1,128)}', space=vmem, size = 0x9000, scoped, tag = 'internal scratch']
  %s0 = inlined_call_operand.vmem [shape: bf16[512,4], index: 0, kind: input, shape index: {}]
  %s1 = inlined_call_operand.vmem [shape: bf16[4,8], index: 1, kind: input, shape index: {}]
  %s2 = inlined_call_operand.vmem [shape: bf16[512,8], index: 2, kind: output, shape index: {0}]
  %s3 = inlined_call_operand.vmem [shape: f32[8,8], index: 3, kind: output, shape index: {1}]
  %4 = xla_tuple %s2, %s3
  %s5 = sld [smem:[#allocation0]]
  $region26: #{bottleneck_forward.5} parent=0
    _
  %s7 = ssub.s32 1, %s5
  %s8 = scalar_select 0, %s7, %s5
  // Predicated region
  $region2: #{bottleneck_forward.5} parent=0 // pred_check
    _
  $region3: #{bottleneck_forward.5} parent=0 // pred_check_branch
    %10 = sbr.rel (0) target = $region5
  $region4: #{bottleneck_forward.5} parent=0 // pred_region
    _
  $region5: #{bottleneck_forward.5} parent=0 // pred_fallthru
    _
  // Predicated region
  $region6: #{bottleneck_forward.5} parent=0 // pred_check
    _
  $region7: #{bottleneck_forward.5} parent=0 // pred_check_branch
    %12 = sbr.rel (0) target = $region9
  $region8: #{bottleneck_forward.5} parent=0 // pred_region
    _
  $region9: #{bottleneck_forward.5} parent=0 // pred_fallthru
    _
  %v14 = vld [vmem:[%s0] sm:$0xf]
  %v15 = vld [vmem:[%s0 + $0x4] sm:$0xf]
  %v16 = vld [vmem:[%s0 + $0x8] sm:$0xf]
  %v17 = vld [vmem:[%s0 + $0xc] sm:$0xf]
  %v18 = vld [vmem:[%s0 + $0x10] sm:$0xf]
  %v19 = vld [vmem:[%s0 + $0x14] sm:$0xf]
  %v20 = vld [vmem:[%s0 + $0x18] sm:$0xf]
  %v21 = vld [vmem:[%s0 + $0x1c] sm:$0xf]
  %v22 = vld [vmem:[%s0 + $0x20] sm:$0xf]
  %v23 = vld [vmem:[%s0 + $0x24] sm:$0xf]
  %v24 = vld [vmem:[%s0 + $0x28] sm:$0xf]
  %v25 = vld [vmem:[%s0 + $0x2c] sm:$0xf]
  %v26 = vld [vmem:[%s0 + $0x30] sm:$0xf]
  %v27 = vld [vmem:[%s0 + $0x34] sm:$0xf]
  %v28 = vld [vmem:[%s0 + $0x38] sm:$0xf]
  %v29 = vld [vmem:[%s0 + $0x3c] sm:$0xf]
  %v30 = vld [vmem:[%s0 + $0x40] sm:$0xf]
  %v31 = vld [vmem:[%s0 + $0x44] sm:$0xf]
  %v32 = vld [vmem:[%s0 + $0x48] sm:$0xf]
  %v33 = vld [vmem:[%s0 + $0x4c] sm:$0xf]
  %v34 = vld [vmem:[%s0 + $0x50] sm:$0xf]
  %v35 = vld [vmem:[%s0 + $0x54] sm:$0xf]
  %v36 = vld [vmem:[%s0 + $0x58] sm:$0xf]
  %v37 = vld [vmem:[%s0 + $0x5c] sm:$0xf]
  %v38 = vld [vmem:[%s0 + $0x60] sm:$0xf]
  %v39 = vld [vmem:[%s0 + $0x64] sm:$0xf]
  %v40 = vld [vmem:[%s0 + $0x68] sm:$0xf]
  %v41 = vld [vmem:[%s0 + $0x6c] sm:$0xf]
  %v42 = vld [vmem:[%s0 + $0x70] sm:$0xf]
  %v43 = vld [vmem:[%s0 + $0x74] sm:$0xf]
  %v44 = vld [vmem:[%s0 + $0x78] sm:$0xf]
  %v45 = vld [vmem:[%s0 + $0x7c] sm:$0xf]
  %v46 = vld [vmem:[%s0 + $0x80] sm:$0xf]
  %v47 = vld [vmem:[%s0 + $0x84] sm:$0xf]
  %v48 = vld [vmem:[%s0 + $0x88] sm:$0xf]
  %v49 = vld [vmem:[%s0 + $0x8c] sm:$0xf]
  %v50 = vld [vmem:[%s0 + $0x90] sm:$0xf]
  %v51 = vld [vmem:[%s0 + $0x94] sm:$0xf]
  %v52 = vld [vmem:[%s0 + $0x98] sm:$0xf]
  %v53 = vld [vmem:[%s0 + $0x9c] sm:$0xf]
  %v54 = vld [vmem:[%s0 + $0xa0] sm:$0xf]
  %v55 = vld [vmem:[%s0 + $0xa4] sm:$0xf]
  %v56 = vld [vmem:[%s0 + $0xa8] sm:$0xf]
  %v57 = vld [vmem:[%s0 + $0xac] sm:$0xf]
  %v58 = vld [vmem:[%s0 + $0xb0] sm:$0xf]
  %v59 = vld [vmem:[%s0 + $0xb4] sm:$0xf]
  %v60 = vld [vmem:[%s0 + $0xb8] sm:$0xf]
  %v61 = vld [vmem:[%s0 + $0xbc] sm:$0xf]
  %v62 = vld [vmem:[%s0 + $0xc0] sm:$0xf]
  %v63 = vld [vmem:[%s0 + $0xc4] sm:$0xf]
  %v64 = vld [vmem:[%s0 + $0xc8] sm:$0xf]
  %v65 = vld [vmem:[%s0 + $0xcc] sm:$0xf]
  %v66 = vld [vmem:[%s0 + $0xd0] sm:$0xf]
  %v67 = vld [vmem:[%s0 + $0xd4] sm:$0xf]
  %v68 = vld [vmem:[%s0 + $0xd8] sm:$0xf]
  %v69 = vld [vmem:[%s0 + $0xdc] sm:$0xf]
  %v70 = vld [vmem:[%s0 + $0xe0] sm:$0xf]
  %v71 = vld [vmem:[%s0 + $0xe4] sm:$0xf]
  %v72 = vld [vmem:[%s0 + $0xe8] sm:$0xf]
  %v73 = vld [vmem:[%s0 + $0xec] sm:$0xf]
  %v74 = vld [vmem:[%s0 + $0xf0] sm:$0xf]
  %v75 = vld [vmem:[%s0 + $0xf4] sm:$0xf]
  %v76 = vld [vmem:[%s0 + $0xf8] sm:$0xf]
  %v77 = vld [vmem:[%s0 + $0xfc] sm:$0xf]
  %v78 = vld [vmem:[%s1] sm:$0x3]
  %v143 = vunpack.c.l.b16 %v14
  %v144 = vunpack.c.l.b16 %v15
  %v145 = vunpack.c.l.b16 %v16
  %v146 = vunpack.c.l.b16 %v17
  %v147 = vunpack.c.l.b16 %v18
  %v148 = vunpack.c.l.b16 %v19
  %v149 = vunpack.c.l.b16 %v20
  %v150 = vunpack.c.l.b16 %v21
  %v151 = vunpack.c.l.b16 %v22
  %v152 = vunpack.c.l.b16 %v23
  %v153 = vunpack.c.l.b16 %v24
  %v154 = vunpack.c.l.b16 %v25
  %v155 = vunpack.c.l.b16 %v26
  %v156 = vunpack.c.l.b16 %v27
  %v157 = vunpack.c.l.b16 %v28
  %v158 = vunpack.c.l.b16 %v29
  %v159 = vunpack.c.l.b16 %v30
  %v160 = vunpack.c.l.b16 %v31
  %v161 = vunpack.c.l.b16 %v32
  %v162 = vunpack.c.l.b16 %v33
  %v163 = vunpack.c.l.b16 %v34
  %v164 = vunpack.c.l.b16 %v35
  %v165 = vunpack.c.l.b16 %v36
  %v166 = vunpack.c.l.b16 %v37
  %v167 = vunpack.c.l.b16 %v38
  %v168 = vunpack.c.l.b16 %v39
  %v169 = vunpack.c.l.b16 %v40
  %v170 = vunpack.c.l.b16 %v41
  %v171 = vunpack.c.l.b16 %v42
  %v172 = vunpack.c.l.b16 %v43
  %v173 = vunpack.c.l.b16 %v44
  %v174 = vunpack.c.l.b16 %v45
  %v175 = vunpack.c.l.b16 %v46
  %v176 = vunpack.c.l.b16 %v47
  %v177 = vunpack.c.l.b16 %v48
  %v178 = vunpack.c.l.b16 %v49
  %v179 = vunpack.c.l.b16 %v50
  %v180 = vunpack.c.l.b16 %v51
  %v181 = vunpack.c.l.b16 %v52
  %v182 = vunpack.c.l.b16 %v53
  %v183 = vunpack.c.l.b16 %v54
  %v184 = vunpack.c.l.b16 %v55
  %v185 = vunpack.c.l.b16 %v56
  %v186 = vunpack.c.l.b16 %v57
  %v187 = vunpack.c.l.b16 %v58
  %v188 = vunpack.c.l.b16 %v59
  %v189 = vunpack.c.l.b16 %v60
  %v190 = vunpack.c.l.b16 %v61
  %v191 = vunpack.c.l.b16 %v62
  %v192 = vunpack.c.l.b16 %v63
  %v193 = vunpack.c.l.b16 %v64
  %v194 = vunpack.c.l.b16 %v65
  %v195 = vunpack.c.l.b16 %v66
  %v196 = vunpack.c.l.b16 %v67
  %v197 = vunpack.c.l.b16 %v68
  %v198 = vunpack.c.l.b16 %v69
  %v199 = vunpack.c.l.b16 %v70
  %v200 = vunpack.c.l.b16 %v71
  %v201 = vunpack.c.l.b16 %v72
  %v202 = vunpack.c.l.b16 %v73
  %v203 = vunpack.c.l.b16 %v74
  %v204 = vunpack.c.l.b16 %v75
  %v205 = vunpack.c.l.b16 %v76
  %v206 = vunpack.c.l.b16 %v77
  %v207 = vpack.c.b16 %v144, %v143
  %v208 = vpack.c.b16 %v146, %v145
  %v209 = vpack.c.b16 %v148, %v147
  %v210 = vpack.c.b16 %v150, %v149
  %v211 = vpack.c.b16 %v152, %v151
  %v212 = vpack.c.b16 %v154, %v153
  %v213 = vpack.c.b16 %v156, %v155
  %v214 = vpack.c.b16 %v158, %v157
  %v215 = vpack.c.b16 %v160, %v159
  %v216 = vpack.c.b16 %v162, %v161
  %v217 = vpack.c.b16 %v164, %v163
  %v218 = vpack.c.b16 %v166, %v165
  %v219 = vpack.c.b16 %v168, %v167
  %v220 = vpack.c.b16 %v170, %v169
  %v221 = vpack.c.b16 %v172, %v171
  %v222 = vpack.c.b16 %v174, %v173
  %v223 = vpack.c.b16 %v176, %v175
  %v224 = vpack.c.b16 %v178, %v177
  %v225 = vpack.c.b16 %v180, %v179
  %v226 = vpack.c.b16 %v182, %v181
  %v227 = vpack.c.b16 %v184, %v183
  %v228 = vpack.c.b16 %v186, %v185
  %v229 = vpack.c.b16 %v188, %v187
  %v230 = vpack.c.b16 %v190, %v189
  %v231 = vpack.c.b16 %v192, %v191
  %v232 = vpack.c.b16 %v194, %v193
  %v233 = vpack.c.b16 %v196, %v195
  %v234 = vpack.c.b16 %v198, %v197
  %v235 = vpack.c.b16 %v200, %v199
  %v236 = vpack.c.b16 %v202, %v201
  %v237 = vpack.c.b16 %v204, %v203
  %v238 = vpack.c.b16 %v206, %v205
  %vm239 = vcmask 31744
  %v241 = vsel %vm239, %v207, 0
  %v244 = vsel %vm239, %v208, 0
  %v247 = vsel %vm239, %v209, 0
  %v250 = vsel %vm239, %v210, 0
  %v253 = vsel %vm239, %v211, 0
  %v256 = vsel %vm239, %v212, 0
  %v259 = vsel %vm239, %v213, 0
  %v262 = vsel %vm239, %v214, 0
  %v265 = vsel %vm239, %v215, 0
  %v268 = vsel %vm239, %v216, 0
  %v271 = vsel %vm239, %v217, 0
  %v274 = vsel %vm239, %v218, 0
  %v277 = vsel %vm239, %v219, 0
  %v280 = vsel %vm239, %v220, 0
  %v283 = vsel %vm239, %v221, 0
  %v286 = vsel %vm239, %v222, 0
  %v289 = vsel %vm239, %v223, 0
  %v292 = vsel %vm239, %v224, 0
  %v295 = vsel %vm239, %v225, 0
  %v298 = vsel %vm239, %v226, 0
  %v301 = vsel %vm239, %v227, 0
  %v304 = vsel %vm239, %v228, 0
  %v307 = vsel %vm239, %v229, 0
  %v310 = vsel %vm239, %v230, 0
  %v313 = vsel %vm239, %v231, 0
  %v316 = vsel %vm239, %v232, 0
  %v319 = vsel %vm239, %v233, 0
  %v322 = vsel %vm239, %v234, 0
  %v325 = vsel %vm239, %v235, 0
  %v328 = vsel %vm239, %v236, 0
  %v331 = vsel %vm239, %v237, 0
  %v334 = vsel %vm239, %v238, 0
  %vm336 = vcmask 1041408
  %v338 = vsel %vm336, %v78, 0
  %340 = vmatpush.bf16.msra.mxu0 0
  %341 = vmatpush.bf16.msra.mxu0 0
  %342 = vmatpush.bf16.msra.mxu0 0
  %343 = vmatpush.bf16.msra.mxu0 0
  %344 = vmatpush.bf16.msra.mxu0 0
  %345 = vmatpush.bf16.msra.mxu0 0
  %346 = vmatpush.bf16.msra.mxu0 0
  %347 = vmatpush.bf16.msra.mxu0 %v338
  %348 = vmatmul.bf16.gmra.mxu0 %v241
  %v349 = vpop.f32.mrf.mxu0
  %v350 = vadd.f32 0.0, %v349
  %v351 = vpop.f32.mrf.mxu0
  %v352 = vadd.f32 0.0, %v351
  %353 = vmatmul.bf16.gmra.mxu0 %v244
  %v354 = vpop.f32.mrf.mxu0
  %v355 = vadd.f32 0.0, %v354
  %v356 = vpop.f32.mrf.mxu0
  %v357 = vadd.f32 0.0, %v356
  %358 = vmatmul.bf16.gmra.mxu0 %v247
  %v359 = vpop.f32.mrf.mxu0
  %v360 = vadd.f32 0.0, %v359
  %v361 = vpop.f32.mrf.mxu0
  %v362 = vadd.f32 0.0, %v361
  %363 = vmatmul.bf16.gmra.mxu0 %v250
  %v364 = vpop.f32.mrf.mxu0
  %v365 = vadd.f32 0.0, %v364
  %v366 = vpop.f32.mrf.mxu0
  %v367 = vadd.f32 0.0, %v366
  %368 = vmatmul.bf16.gmra.mxu0 %v253
  %v369 = vpop.f32.mrf.mxu0
  %v370 = vadd.f32 0.0, %v369
  %v371 = vpop.f32.mrf.mxu0
  %v372 = vadd.f32 0.0, %v371
  %373 = vmatmul.bf16.gmra.mxu0 %v256
  %v374 = vpop.f32.mrf.mxu0
  %v375 = vadd.f32 0.0, %v374
  %v376 = vpop.f32.mrf.mxu0
  %v377 = vadd.f32 0.0, %v376
  %378 = vmatmul.bf16.gmra.mxu0 %v259
  %v379 = vpop.f32.mrf.mxu0
  %v380 = vadd.f32 0.0, %v379
  %v381 = vpop.f32.mrf.mxu0
  %v382 = vadd.f32 0.0, %v381
  %383 = vmatmul.bf16.gmra.mxu0 %v262
  %v384 = vpop.f32.mrf.mxu0
  %v385 = vadd.f32 0.0, %v384
  %v386 = vpop.f32.mrf.mxu0
  %v387 = vadd.f32 0.0, %v386
  %388 = vmatmul.bf16.gmra.mxu0 %v265
  %v389 = vpop.f32.mrf.mxu0
  %v390 = vadd.f32 0.0, %v389
  %v391 = vpop.f32.mrf.mxu0
  %v392 = vadd.f32 0.0, %v391
  %393 = vmatmul.bf16.gmra.mxu0 %v268
  %v394 = vpop.f32.mrf.mxu0
  %v395 = vadd.f32 0.0, %v394
  %v396 = vpop.f32.mrf.mxu0
  %v397 = vadd.f32 0.0, %v396
  %398 = vmatmul.bf16.gmra.mxu0 %v271
  %v399 = vpop.f32.mrf.mxu0
  %v400 = vadd.f32 0.0, %v399
  %v401 = vpop.f32.mrf.mxu0
  %v402 = vadd.f32 0.0, %v401
  %403 = vmatmul.bf16.gmra.mxu0 %v274
  %v404 = vpop.f32.mrf.mxu0
  %v405 = vadd.f32 0.0, %v404
  %v406 = vpop.f32.mrf.mxu0
  %v407 = vadd.f32 0.0, %v406
  %408 = vmatmul.bf16.gmra.mxu0 %v277
  %v409 = vpop.f32.mrf.mxu0
  %v410 = vadd.f32 0.0, %v409
  %v411 = vpop.f32.mrf.mxu0
  %v412 = vadd.f32 0.0, %v411
  %413 = vmatmul.bf16.gmra.mxu0 %v280
  %v414 = vpop.f32.mrf.mxu0
  %v415 = vadd.f32 0.0, %v414
  %v416 = vpop.f32.mrf.mxu0
  %v417 = vadd.f32 0.0, %v416
  %418 = vmatmul.bf16.gmra.mxu0 %v283
  %v419 = vpop.f32.mrf.mxu0
  %v420 = vadd.f32 0.0, %v419
  %v421 = vpop.f32.mrf.mxu0
  %v422 = vadd.f32 0.0, %v421
  %423 = vmatmul.bf16.gmra.mxu0 %v286
  %v424 = vpop.f32.mrf.mxu0
  %v425 = vadd.f32 0.0, %v424
  %v426 = vpop.f32.mrf.mxu0
  %v427 = vadd.f32 0.0, %v426
  %428 = vmatmul.bf16.gmra.mxu0 %v289
  %v429 = vpop.f32.mrf.mxu0
  %v430 = vadd.f32 0.0, %v429
  %v431 = vpop.f32.mrf.mxu0
  %v432 = vadd.f32 0.0, %v431
  %433 = vmatmul.bf16.gmra.mxu0 %v292
  %v434 = vpop.f32.mrf.mxu0
  %v435 = vadd.f32 0.0, %v434
  %v436 = vpop.f32.mrf.mxu0
  %v437 = vadd.f32 0.0, %v436
  %438 = vmatmul.bf16.gmra.mxu0 %v295
  %v439 = vpop.f32.mrf.mxu0
  %v440 = vadd.f32 0.0, %v439
  %v441 = vpop.f32.mrf.mxu0
  %v442 = vadd.f32 0.0, %v441
  %443 = vmatmul.bf16.gmra.mxu0 %v298
  %v444 = vpop.f32.mrf.mxu0
  %v445 = vadd.f32 0.0, %v444
  %v446 = vpop.f32.mrf.mxu0
  %v447 = vadd.f32 0.0, %v446
  %448 = vmatmul.bf16.gmra.mxu0 %v301
  %v449 = vpop.f32.mrf.mxu0
  %v450 = vadd.f32 0.0, %v449
  %v451 = vpop.f32.mrf.mxu0
  %v452 = vadd.f32 0.0, %v451
  %453 = vmatmul.bf16.gmra.mxu0 %v304
  %v454 = vpop.f32.mrf.mxu0
  %v455 = vadd.f32 0.0, %v454
  %v456 = vpop.f32.mrf.mxu0
  %v457 = vadd.f32 0.0, %v456
  %458 = vmatmul.bf16.gmra.mxu0 %v307
  %v459 = vpop.f32.mrf.mxu0
  %v460 = vadd.f32 0.0, %v459
  %v461 = vpop.f32.mrf.mxu0
  %v462 = vadd.f32 0.0, %v461
  %463 = vmatmul.bf16.gmra.mxu0 %v310
  %v464 = vpop.f32.mrf.mxu0
  %v465 = vadd.f32 0.0, %v464
  %v466 = vpop.f32.mrf.mxu0
  %v467 = vadd.f32 0.0, %v466
  %468 = vmatmul.bf16.gmra.mxu0 %v313
  %v469 = vpop.f32.mrf.mxu0
  %v470 = vadd.f32 0.0, %v469
  %v471 = vpop.f32.mrf.mxu0
  %v472 = vadd.f32 0.0, %v471
  %473 = vmatmul.bf16.gmra.mxu0 %v316
  %v474 = vpop.f32.mrf.mxu0
  %v475 = vadd.f32 0.0, %v474
  %v476 = vpop.f32.mrf.mxu0
  %v477 = vadd.f32 0.0, %v476
  %478 = vmatmul.bf16.gmra.mxu0 %v319
  %v479 = vpop.f32.mrf.mxu0
  %v480 = vadd.f32 0.0, %v479
  %v481 = vpop.f32.mrf.mxu0
  %v482 = vadd.f32 0.0, %v481
  %483 = vmatmul.bf16.gmra.mxu0 %v322
  %v484 = vpop.f32.mrf.mxu0
  %v485 = vadd.f32 0.0, %v484
  %v486 = vpop.f32.mrf.mxu0
  %v487 = vadd.f32 0.0, %v486
  %488 = vmatmul.bf16.gmra.mxu0 %v325
  %v489 = vpop.f32.mrf.mxu0
  %v490 = vadd.f32 0.0, %v489
  %v491 = vpop.f32.mrf.mxu0
  %v492 = vadd.f32 0.0, %v491
  %493 = vmatmul.bf16.gmra.mxu0 %v328
  %v494 = vpop.f32.mrf.mxu0
  %v495 = vadd.f32 0.0, %v494
  %v496 = vpop.f32.mrf.mxu0
  %v497 = vadd.f32 0.0, %v496
  %498 = vmatmul.bf16.gmra.mxu0 %v331
  %v499 = vpop.f32.mrf.mxu0
  %v500 = vadd.f32 0.0, %v499
  %v501 = vpop.f32.mrf.mxu0
  %v502 = vadd.f32 0.0, %v501
  %503 = vmatmul.bf16.gmra.mxu0 %v334
  %v504 = vpop.f32.mrf.mxu0
  %v505 = vadd.f32 0.0, %v504
  %v506 = vpop.f32.mrf.mxu0
  %v507 = vadd.f32 0.0, %v506
  %508 = vdwg.mxu0
  %v509 = vpack.c.bf16 %v350, %v350
  %v510 = vpack.c.bf16 %v352, %v352
  %v511 = vpack.c.bf16 %v355, %v355
  %v512 = vpack.c.bf16 %v357, %v357
  %v513 = vpack.c.bf16 %v360, %v360
  %v514 = vpack.c.bf16 %v362, %v362
  %v515 = vpack.c.bf16 %v365, %v365
  %v516 = vpack.c.bf16 %v367, %v367
  %v517 = vpack.c.bf16 %v370, %v370
  %v518 = vpack.c.bf16 %v372, %v372
  %v519 = vpack.c.bf16 %v375, %v375
  %v520 = vpack.c.bf16 %v377, %v377
  %v521 = vpack.c.bf16 %v380, %v380
  %v522 = vpack.c.bf16 %v382, %v382
  %v523 = vpack.c.bf16 %v385, %v385
  %v524 = vpack.c.bf16 %v387, %v387
  %v525 = vpack.c.bf16 %v390, %v390
  %v526 = vpack.c.bf16 %v392, %v392
  %v527 = vpack.c.bf16 %v395, %v395
  %v528 = vpack.c.bf16 %v397, %v397
  %v529 = vpack.c.bf16 %v400, %v400
  %v530 = vpack.c.bf16 %v402, %v402
  %v531 = vpack.c.bf16 %v405, %v405
  %v532 = vpack.c.bf16 %v407, %v407
  %v533 = vpack.c.bf16 %v410, %v410
  %v534 = vpack.c.bf16 %v412, %v412
  %v535 = vpack.c.bf16 %v415, %v415
  %v536 = vpack.c.bf16 %v417, %v417
  %v537 = vpack.c.bf16 %v420, %v420
  %v538 = vpack.c.bf16 %v422, %v422
  %v539 = vpack.c.bf16 %v425, %v425
  %v540 = vpack.c.bf16 %v427, %v427
  %v541 = vpack.c.bf16 %v430, %v430
  %v542 = vpack.c.bf16 %v432, %v432
  %v543 = vpack.c.bf16 %v435, %v435
  %v544 = vpack.c.bf16 %v437, %v437
  %v545 = vpack.c.bf16 %v440, %v440
  %v546 = vpack.c.bf16 %v442, %v442
  %v547 = vpack.c.bf16 %v445, %v445
  %v548 = vpack.c.bf16 %v447, %v447
  %v549 = vpack.c.bf16 %v450, %v450
  %v550 = vpack.c.bf16 %v452, %v452
  %v551 = vpack.c.bf16 %v455, %v455
  %v552 = vpack.c.bf16 %v457, %v457
  %v553 = vpack.c.bf16 %v460, %v460
  %v554 = vpack.c.bf16 %v462, %v462
  %v555 = vpack.c.bf16 %v465, %v465
  %v556 = vpack.c.bf16 %v467, %v467
  %v557 = vpack.c.bf16 %v470, %v470
  %v558 = vpack.c.bf16 %v472, %v472
  %v559 = vpack.c.bf16 %v475, %v475
  %v560 = vpack.c.bf16 %v477, %v477
  %v561 = vpack.c.bf16 %v480, %v480
  %v562 = vpack.c.bf16 %v482, %v482
  %v563 = vpack.c.bf16 %v485, %v485
  %v564 = vpack.c.bf16 %v487, %v487
  %v565 = vpack.c.bf16 %v490, %v490
  %v566 = vpack.c.bf16 %v492, %v492
  %v567 = vpack.c.bf16 %v495, %v495
  %v568 = vpack.c.bf16 %v497, %v497
  %v569 = vpack.c.bf16 %v500, %v500
  %v570 = vpack.c.bf16 %v502, %v502
  %v571 = vpack.c.bf16 %v505, %v505
  %v572 = vpack.c.bf16 %v507, %v507
  %vm573 = vcmask 60416
  %574 = vst.msk [vmem:[%s2] sm:$0xf] %vm573, %v509
  %575 = vst.msk [vmem:[%s2 + $0x4] sm:$0xf] %vm573, %v510
  %576 = vst.msk [vmem:[%s2 + $0x8] sm:$0xf] %vm573, %v511
  %577 = vst.msk [vmem:[%s2 + $0xc] sm:$0xf] %vm573, %v512
  %578 = vst.msk [vmem:[%s2 + $0x10] sm:$0xf] %vm573, %v513
  %579 = vst.msk [vmem:[%s2 + $0x14] sm:$0xf] %vm573, %v514
  %580 = vst.msk [vmem:[%s2 + $0x18] sm:$0xf] %vm573, %v515
  %581 = vst.msk [vmem:[%s2 + $0x1c] sm:$0xf] %vm573, %v516
  %582 = vst.msk [vmem:[%s2 + $0x20] sm:$0xf] %vm573, %v517
  %583 = vst.msk [vmem:[%s2 + $0x24] sm:$0xf] %vm573, %v518
  %584 = vst.msk [vmem:[%s2 + $0x28] sm:$0xf] %vm573, %v519
  %585 = vst.msk [vmem:[%s2 + $0x2c] sm:$0xf] %vm573, %v520
  %586 = vst.msk [vmem:[%s2 + $0x30] sm:$0xf] %vm573, %v521
  %587 = vst.msk [vmem:[%s2 + $0x34] sm:$0xf] %vm573, %v522
  %588 = vst.msk [vmem:[%s2 + $0x38] sm:$0xf] %vm573, %v523
  %589 = vst.msk [vmem:[%s2 + $0x3c] sm:$0xf] %vm573, %v524
  %590 = vst.msk [vmem:[%s2 + $0x40] sm:$0xf] %vm573, %v525
  %591 = vst.msk [vmem:[%s2 + $0x44] sm:$0xf] %vm573, %v526
  %592 = vst.msk [vmem:[%s2 + $0x48] sm:$0xf] %vm573, %v527
  %593 = vst.msk [vmem:[%s2 + $0x4c] sm:$0xf] %vm573, %v528
  %594 = vst.msk [vmem:[%s2 + $0x50] sm:$0xf] %vm573, %v529
  %595 = vst.msk [vmem:[%s2 + $0x54] sm:$0xf] %vm573, %v530
  %596 = vst.msk [vmem:[%s2 + $0x58] sm:$0xf] %vm573, %v531
  %597 = vst.msk [vmem:[%s2 + $0x5c] sm:$0xf] %vm573, %v532
  %598 = vst.msk [vmem:[%s2 + $0x60] sm:$0xf] %vm573, %v533
  %599 = vst.msk [vmem:[%s2 + $0x64] sm:$0xf] %vm573, %v534
  %600 = vst.msk [vmem:[%s2 + $0x68] sm:$0xf] %vm573, %v535
  %601 = vst.msk [vmem:[%s2 + $0x6c] sm:$0xf] %vm573, %v536
  %602 = vst.msk [vmem:[%s2 + $0x70] sm:$0xf] %vm573, %v537
  %603 = vst.msk [vmem:[%s2 + $0x74] sm:$0xf] %vm573, %v538
  %604 = vst.msk [vmem:[%s2 + $0x78] sm:$0xf] %vm573, %v539
  %605 = vst.msk [vmem:[%s2 + $0x7c] sm:$0xf] %vm573, %v540
  %606 = vst.msk [vmem:[%s2 + $0x80] sm:$0xf] %vm573, %v541
  %607 = vst.msk [vmem:[%s2 + $0x84] sm:$0xf] %vm573, %v542
  %608 = vst.msk [vmem:[%s2 + $0x88] sm:$0xf] %vm573, %v543
  %609 = vst.msk [vmem:[%s2 + $0x8c] sm:$0xf] %vm573, %v544
  %610 = vst.msk [vmem:[%s2 + $0x90] sm:$0xf] %vm573, %v545
  %611 = vst.msk [vmem:[%s2 + $0x94] sm:$0xf] %vm573, %v546
  %612 = vst.msk [vmem:[%s2 + $0x98] sm:$0xf] %vm573, %v547
  %613 = vst.msk [vmem:[%s2 + $0x9c] sm:$0xf] %vm573, %v548
  %614 = vst.msk [vmem:[%s2 + $0xa0] sm:$0xf] %vm573, %v549
  %615 = vst.msk [vmem:[%s2 + $0xa4] sm:$0xf] %vm573, %v550
  %616 = vst.msk [vmem:[%s2 + $0xa8] sm:$0xf] %vm573, %v551
  %617 = vst.msk [vmem:[%s2 + $0xac] sm:$0xf] %vm573, %v552
  %618 = vst.msk [vmem:[%s2 + $0xb0] sm:$0xf] %vm573, %v553
  %619 = vst.msk [vmem:[%s2 + $0xb4] sm:$0xf] %vm573, %v554
  %620 = vst.msk [vmem:[%s2 + $0xb8] sm:$0xf] %vm573, %v555
  %621 = vst.msk [vmem:[%s2 + $0xbc] sm:$0xf] %vm573, %v556
  %622 = vst.msk [vmem:[%s2 + $0xc0] sm:$0xf] %vm573, %v557
  %623 = vst.msk [vmem:[%s2 + $0xc4] sm:$0xf] %vm573, %v558
  %624 = vst.msk [vmem:[%s2 + $0xc8] sm:$0xf] %vm573, %v559
  %625 = vst.msk [vmem:[%s2 + $0xcc] sm:$0xf] %vm573, %v560
  %626 = vst.msk [vmem:[%s2 + $0xd0] sm:$0xf] %vm573, %v561
  %627 = vst.msk [vmem:[%s2 + $0xd4] sm:$0xf] %vm573, %v562
  %628 = vst.msk [vmem:[%s2 + $0xd8] sm:$0xf] %vm573, %v563
  %629 = vst.msk [vmem:[%s2 + $0xdc] sm:$0xf] %vm573, %v564
  %630 = vst.msk [vmem:[%s2 + $0xe0] sm:$0xf] %vm573, %v565
  %631 = vst.msk [vmem:[%s2 + $0xe4] sm:$0xf] %vm573, %v566
  %632 = vst.msk [vmem:[%s2 + $0xe8] sm:$0xf] %vm573, %v567
  %633 = vst.msk [vmem:[%s2 + $0xec] sm:$0xf] %vm573, %v568
  %634 = vst.msk [vmem:[%s2 + $0xf0] sm:$0xf] %vm573, %v569
  %635 = vst.msk [vmem:[%s2 + $0xf4] sm:$0xf] %vm573, %v570
  %636 = vst.msk [vmem:[%s2 + $0xf8] sm:$0xf] %vm573, %v571
  %637 = vst.msk [vmem:[%s2 + $0xfc] sm:$0xf] %vm573, %v572
  %vm638 = vcmask 64512
  %v639 = vsel %vm638, %v350, 0.0
  %v640 = vsel %vm638, %v352, 0.0
  %v641 = vadd.f32 %v639, %v640
  %v642 = vsel %vm638, %v355, 0.0
  %v643 = vadd.f32 %v641, %v642
  %v644 = vsel %vm638, %v357, 0.0
  %v645 = vadd.f32 %v643, %v644
  %v646 = vsel %vm638, %v360, 0.0
  %v647 = vadd.f32 %v645, %v646
  %v648 = vsel %vm638, %v362, 0.0
  %v649 = vadd.f32 %v647, %v648
  %v650 = vsel %vm638, %v365, 0.0
  %v651 = vadd.f32 %v649, %v650
  %v652 = vsel %vm638, %v367, 0.0
  %v653 = vadd.f32 %v651, %v652
  %v654 = vsel %vm638, %v370, 0.0
  %v655 = vadd.f32 %v653, %v654
  %v656 = vsel %vm638, %v372, 0.0
  %v657 = vadd.f32 %v655, %v656
  %v658 = vsel %vm638, %v375, 0.0
  %v659 = vadd.f32 %v657, %v658
  %v660 = vsel %vm638, %v377, 0.0
  %v661 = vadd.f32 %v659, %v660
  %v662 = vsel %vm638, %v380, 0.0
  %v663 = vadd.f32 %v661, %v662
  %v664 = vsel %vm638, %v382, 0.0
  %v665 = vadd.f32 %v663, %v664
  %v666 = vsel %vm638, %v385, 0.0
  %v667 = vadd.f32 %v665, %v666
  %v668 = vsel %vm638, %v387, 0.0
  %v669 = vadd.f32 %v667, %v668
  %v670 = vsel %vm638, %v390, 0.0
  %v671 = vadd.f32 %v669, %v670
  %v672 = vsel %vm638, %v392, 0.0
  %v673 = vadd.f32 %v671, %v672
  %v674 = vsel %vm638, %v395, 0.0
  %v675 = vadd.f32 %v673, %v674
  %v676 = vsel %vm638, %v397, 0.0
  %v677 = vadd.f32 %v675, %v676
  %v678 = vsel %vm638, %v400, 0.0
  %v679 = vadd.f32 %v677, %v678
  %v680 = vsel %vm638, %v402, 0.0
  %v681 = vadd.f32 %v679, %v680
  %v682 = vsel %vm638, %v405, 0.0
  %v683 = vadd.f32 %v681, %v682
  %v684 = vsel %vm638, %v407, 0.0
  %v685 = vadd.f32 %v683, %v684
  %v686 = vsel %vm638, %v410, 0.0
  %v687 = vadd.f32 %v685, %v686
  %v688 = vsel %vm638, %v412, 0.0
  %v689 = vadd.f32 %v687, %v688
  %v690 = vsel %vm638, %v415, 0.0
  %v691 = vadd.f32 %v689, %v690
  %v692 = vsel %vm638, %v417, 0.0
  %v693 = vadd.f32 %v691, %v692
  %v694 = vsel %vm638, %v420, 0.0
  %v695 = vadd.f32 %v693, %v694
  %v696 = vsel %vm638, %v422, 0.0
  %v697 = vadd.f32 %v695, %v696
  %v698 = vsel %vm638, %v425, 0.0
  %v699 = vadd.f32 %v697, %v698
  %v700 = vsel %vm638, %v427, 0.0
  %v701 = vadd.f32 %v699, %v700
  %v702 = vsel %vm638, %v430, 0.0
  %v703 = vadd.f32 %v701, %v702
  %v704 = vsel %vm638, %v432, 0.0
  %v705 = vadd.f32 %v703, %v704
  %v706 = vsel %vm638, %v435, 0.0
  %v707 = vadd.f32 %v705, %v706
  %v708 = vsel %vm638, %v437, 0.0
  %v709 = vadd.f32 %v707, %v708
  %v710 = vsel %vm638, %v440, 0.0
  %v711 = vadd.f32 %v709, %v710
  %v712 = vsel %vm638, %v442, 0.0
  %v713 = vadd.f32 %v711, %v712
  %v714 = vsel %vm638, %v445, 0.0
  %v715 = vadd.f32 %v713, %v714
  %v716 = vsel %vm638, %v447, 0.0
  %v717 = vadd.f32 %v715, %v716
  %v718 = vsel %vm638, %v450, 0.0
  %v719 = vadd.f32 %v717, %v718
  %v720 = vsel %vm638, %v452, 0.0
  %v721 = vadd.f32 %v719, %v720
  %v722 = vsel %vm638, %v455, 0.0
  %v723 = vadd.f32 %v721, %v722
  %v724 = vsel %vm638, %v457, 0.0
  %v725 = vadd.f32 %v723, %v724
  %v726 = vsel %vm638, %v460, 0.0
  %v727 = vadd.f32 %v725, %v726
  %v728 = vsel %vm638, %v462, 0.0
  %v729 = vadd.f32 %v727, %v728
  %v730 = vsel %vm638, %v465, 0.0
  %v731 = vadd.f32 %v729, %v730
  %v732 = vsel %vm638, %v467, 0.0
  %v733 = vadd.f32 %v731, %v732
  %v734 = vsel %vm638, %v470, 0.0
  %v735 = vadd.f32 %v733, %v734
  %v736 = vsel %vm638, %v472, 0.0
  %v737 = vadd.f32 %v735, %v736
  %v738 = vsel %vm638, %v475, 0.0
  %v739 = vadd.f32 %v737, %v738
  %v740 = vsel %vm638, %v477, 0.0
  %v741 = vadd.f32 %v739, %v740
  %v742 = vsel %vm638, %v480, 0.0
  %v743 = vadd.f32 %v741, %v742
  %v744 = vsel %vm638, %v482, 0.0
  %v745 = vadd.f32 %v743, %v744
  %v746 = vsel %vm638, %v485, 0.0
  %v747 = vadd.f32 %v745, %v746
  %v748 = vsel %vm638, %v487, 0.0
  %v749 = vadd.f32 %v747, %v748
  %v750 = vsel %vm638, %v490, 0.0
  %v751 = vadd.f32 %v749, %v750
  %v752 = vsel %vm638, %v492, 0.0
  %v753 = vadd.f32 %v751, %v752
  %v754 = vsel %vm638, %v495, 0.0
  %v755 = vadd.f32 %v753, %v754
  %v756 = vsel %vm638, %v497, 0.0
  %v757 = vadd.f32 %v755, %v756
  %v758 = vsel %vm638, %v500, 0.0
  %v759 = vadd.f32 %v757, %v758
  %v760 = vsel %vm638, %v502, 0.0
  %v761 = vadd.f32 %v759, %v760
  %v762 = vsel %vm638, %v505, 0.0
  %v763 = vadd.f32 %v761, %v762
  %v764 = vsel %vm638, %v507, 0.0
  %v765 = vadd.f32 %v763, %v764
  %v766 = vrot.slane %v765, 4
  %v767 = vadd.f32 %v765, %v766
  %v768 = vrot.slane %v767, 2
  %v769 = vadd.f32 %v767, %v768
  %v770 = vrot.slane %v769, 1
  %v771 = vadd.f32 %v769, %v770
  %v772 = vmul.f32 %v350, %v350
  %v773 = vmul.f32 %v352, %v352
  %v774 = vmul.f32 %v355, %v355
  %v775 = vmul.f32 %v357, %v357
  %v776 = vmul.f32 %v360, %v360
  %v777 = vmul.f32 %v362, %v362
  %v778 = vmul.f32 %v365, %v365
  %v779 = vmul.f32 %v367, %v367
  %v780 = vmul.f32 %v370, %v370
  %v781 = vmul.f32 %v372, %v372
  %v782 = vmul.f32 %v375, %v375
  %v783 = vmul.f32 %v377, %v377
  %v784 = vmul.f32 %v380, %v380
  %v785 = vmul.f32 %v382, %v382
  %v786 = vmul.f32 %v385, %v385
  %v787 = vmul.f32 %v387, %v387
  %v788 = vmul.f32 %v390, %v390
  %v789 = vmul.f32 %v392, %v392
  %v790 = vmul.f32 %v395, %v395
  %v791 = vmul.f32 %v397, %v397
  %v792 = vmul.f32 %v400, %v400
  %v793 = vmul.f32 %v402, %v402
  %v794 = vmul.f32 %v405, %v405
  %v795 = vmul.f32 %v407, %v407
  %v796 = vmul.f32 %v410, %v410
  %v797 = vmul.f32 %v412, %v412
  %v798 = vmul.f32 %v415, %v415
  %v799 = vmul.f32 %v417, %v417
  %v800 = vmul.f32 %v420, %v420
  %v801 = vmul.f32 %v422, %v422
  %v802 = vmul.f32 %v425, %v425
  %v803 = vmul.f32 %v427, %v427
  %v804 = vmul.f32 %v430, %v430
  %v805 = vmul.f32 %v432, %v432
  %v806 = vmul.f32 %v435, %v435
  %v807 = vmul.f32 %v437, %v437
  %v808 = vmul.f32 %v440, %v440
  %v809 = vmul.f32 %v442, %v442
  %v810 = vmul.f32 %v445, %v445
  %v811 = vmul.f32 %v447, %v447
  %v812 = vmul.f32 %v450, %v450
  %v813 = vmul.f32 %v452, %v452
  %v814 = vmul.f32 %v455, %v455
  %v815 = vmul.f32 %v457, %v457
  %v816 = vmul.f32 %v460, %v460
  %v817 = vmul.f32 %v462, %v462
  %v818 = vmul.f32 %v465, %v465
  %v819 = vmul.f32 %v467, %v467
  %v820 = vmul.f32 %v470, %v470
  %v821 = vmul.f32 %v472, %v472
  %v822 = vmul.f32 %v475, %v475
  %v823 = vmul.f32 %v477, %v477
  %v824 = vmul.f32 %v480, %v480
  %v825 = vmul.f32 %v482, %v482
  %v826 = vmul.f32 %v485, %v485
  %v827 = vmul.f32 %v487, %v487
  %v828 = vmul.f32 %v490, %v490
  %v829 = vmul.f32 %v492, %v492
  %v830 = vmul.f32 %v495, %v495
  %v831 = vmul.f32 %v497, %v497
  %v832 = vmul.f32 %v500, %v500
  %v833 = vmul.f32 %v502, %v502
  %v834 = vmul.f32 %v505, %v505
  %v835 = vmul.f32 %v507, %v507
  %v836 = vsel %vm638, %v772, 0.0
  %v837 = vsel %vm638, %v773, 0.0
  %v838 = vadd.f32 %v836, %v837
  %v839 = vsel %vm638, %v774, 0.0
  %v840 = vadd.f32 %v838, %v839
  %v841 = vsel %vm638, %v775, 0.0
  %v842 = vadd.f32 %v840, %v841
  %v843 = vsel %vm638, %v776, 0.0
  %v844 = vadd.f32 %v842, %v843
  %v845 = vsel %vm638, %v777, 0.0
  %v846 = vadd.f32 %v844, %v845
  %v847 = vsel %vm638, %v778, 0.0
  %v848 = vadd.f32 %v846, %v847
  %v849 = vsel %vm638, %v779, 0.0
  %v850 = vadd.f32 %v848, %v849
  %v851 = vsel %vm638, %v780, 0.0
  %v852 = vadd.f32 %v850, %v851
  %v853 = vsel %vm638, %v781, 0.0
  %v854 = vadd.f32 %v852, %v853
  %v855 = vsel %vm638, %v782, 0.0
  %v856 = vadd.f32 %v854, %v855
  %v857 = vsel %vm638, %v783, 0.0
  %v858 = vadd.f32 %v856, %v857
  %v859 = vsel %vm638, %v784, 0.0
  %v860 = vadd.f32 %v858, %v859
  %v861 = vsel %vm638, %v785, 0.0
  %v862 = vadd.f32 %v860, %v861
  %v863 = vsel %vm638, %v786, 0.0
  %v864 = vadd.f32 %v862, %v863
  %v865 = vsel %vm638, %v787, 0.0
  %v866 = vadd.f32 %v864, %v865
  %v867 = vsel %vm638, %v788, 0.0
  %v868 = vadd.f32 %v866, %v867
  %v869 = vsel %vm638, %v789, 0.0
  %v870 = vadd.f32 %v868, %v869
  %v871 = vsel %vm638, %v790, 0.0
  %v872 = vadd.f32 %v870, %v871
  %v873 = vsel %vm638, %v791, 0.0
  %v874 = vadd.f32 %v872, %v873
  %v875 = vsel %vm638, %v792, 0.0
  %v876 = vadd.f32 %v874, %v875
  %v877 = vsel %vm638, %v793, 0.0
  %v878 = vadd.f32 %v876, %v877
  %v879 = vsel %vm638, %v794, 0.0
  %v880 = vadd.f32 %v878, %v879
  %v881 = vsel %vm638, %v795, 0.0
  %v882 = vadd.f32 %v880, %v881
  %v883 = vsel %vm638, %v796, 0.0
  %v884 = vadd.f32 %v882, %v883
  %v885 = vsel %vm638, %v797, 0.0
  %v886 = vadd.f32 %v884, %v885
  %v887 = vsel %vm638, %v798, 0.0
  %v888 = vadd.f32 %v886, %v887
  %v889 = vsel %vm638, %v799, 0.0
  %v890 = vadd.f32 %v888, %v889
  %v891 = vsel %vm638, %v800, 0.0
  %v892 = vadd.f32 %v890, %v891
  %v893 = vsel %vm638, %v801, 0.0
  %v894 = vadd.f32 %v892, %v893
  %v895 = vsel %vm638, %v802, 0.0
  %v896 = vadd.f32 %v894, %v895
  %v897 = vsel %vm638, %v803, 0.0
  %v898 = vadd.f32 %v896, %v897
  %v899 = vsel %vm638, %v804, 0.0
  %v900 = vadd.f32 %v898, %v899
  %v901 = vsel %vm638, %v805, 0.0
  %v902 = vadd.f32 %v900, %v901
  %v903 = vsel %vm638, %v806, 0.0
  %v904 = vadd.f32 %v902, %v903
  %v905 = vsel %vm638, %v807, 0.0
  %v906 = vadd.f32 %v904, %v905
  %v907 = vsel %vm638, %v808, 0.0
  %v908 = vadd.f32 %v906, %v907
  %v909 = vsel %vm638, %v809, 0.0
  %v910 = vadd.f32 %v908, %v909
  %v911 = vsel %vm638, %v810, 0.0
  %v912 = vadd.f32 %v910, %v911
  %v913 = vsel %vm638, %v811, 0.0
  %v914 = vadd.f32 %v912, %v913
  %v915 = vsel %vm638, %v812, 0.0
  %v916 = vadd.f32 %v914, %v915
  %v917 = vsel %vm638, %v813, 0.0
  %v918 = vadd.f32 %v916, %v917
  %v919 = vsel %vm638, %v814, 0.0
  %v920 = vadd.f32 %v918, %v919
  %v921 = vsel %vm638, %v815, 0.0
  %v922 = vadd.f32 %v920, %v921
  %v923 = vsel %vm638, %v816, 0.0
  %v924 = vadd.f32 %v922, %v923
  %v925 = vsel %vm638, %v817, 0.0
  %v926 = vadd.f32 %v924, %v925
  %v927 = vsel %vm638, %v818, 0.0
  %v928 = vadd.f32 %v926, %v927
  %v929 = vsel %vm638, %v819, 0.0
  %v930 = vadd.f32 %v928, %v929
  %v931 = vsel %vm638, %v820, 0.0
  %v932 = vadd.f32 %v930, %v931
  %v933 = vsel %vm638, %v821, 0.0
  %v934 = vadd.f32 %v932, %v933
  %v935 = vsel %vm638, %v822, 0.0
  %v936 = vadd.f32 %v934, %v935
  %v937 = vsel %vm638, %v823, 0.0
  %v938 = vadd.f32 %v936, %v937
  %v939 = vsel %vm638, %v824, 0.0
  %v940 = vadd.f32 %v938, %v939
  %v941 = vsel %vm638, %v825, 0.0
  %v942 = vadd.f32 %v940, %v941
  %v943 = vsel %vm638, %v826, 0.0
  %v944 = vadd.f32 %v942, %v943
  %v945 = vsel %vm638, %v827, 0.0
  %v946 = vadd.f32 %v944, %v945
  %v947 = vsel %vm638, %v828, 0.0
  %v948 = vadd.f32 %v946, %v947
  %v949 = vsel %vm638, %v829, 0.0
  %v950 = vadd.f32 %v948, %v949
  %v951 = vsel %vm638, %v830, 0.0
  %v952 = vadd.f32 %v950, %v951
  %v953 = vsel %vm638, %v831, 0.0
  %v954 = vadd.f32 %v952, %v953
  %v955 = vsel %vm638, %v832, 0.0
  %v956 = vadd.f32 %v954, %v955
  %v957 = vsel %vm638, %v833, 0.0
  %v958 = vadd.f32 %v956, %v957
  %v959 = vsel %vm638, %v834, 0.0
  %v960 = vadd.f32 %v958, %v959
  %v961 = vsel %vm638, %v835, 0.0
  %v962 = vadd.f32 %v960, %v961
  %v963 = vrot.slane %v962, 4
  %v964 = vadd.f32 %v962, %v963
  %v965 = vrot.slane %v964, 2
  %v966 = vadd.f32 %v964, %v965
  %v967 = vrot.slane %v966, 1
  %v968 = vadd.f32 %v966, %v967
  %vm969 = vcmask 1040384
  %v970 = vsel %vm969, %v771, %v968
  %v971 = vsel %vm336, %v970, 0.0
  %972 = vst.msk [vmem:[%s3] sm:$0xff] %vm638, %v971
  // Predicated region
  $region10: #{bottleneck_forward.5} parent=0 // pred_check
    _
  $region11: #{bottleneck_forward.5} parent=0 // pred_check_branch
    %974 = sbr.rel (0) target = $region13
  $region12: #{bottleneck_forward.5} parent=0 // pred_region
    _
  $region13: #{bottleneck_forward.5} parent=0 // pred_fallthru
    _
  // Predicated region
  $region14: #{bottleneck_forward.5} parent=0 // pred_check
    _
  $region15: #{bottleneck_forward.5} parent=0 // pred_check_branch
    %976 = sbr.rel (0) target = $region17
  $region16: #{bottleneck_forward.5} parent=0 // pred_region
    _
  $region17: #{bottleneck_forward.5} parent=0 // pred_fallthru
    _
  // Predicated region
  $region18: #{bottleneck_forward.5} parent=0 // pred_check
    _
  $region19: #{bottleneck_forward.5} parent=0 // pred_check_branch
    %978 = sbr.rel (0) target = $region21
  $region20: #{bottleneck_forward.5} parent=0 // pred_region
    _
  $region21: #{bottleneck_forward.5} parent=0 // pred_fallthru
    _
  // Predicated region
  $region22: #{bottleneck_forward.5} parent=0 // pred_check
    _
  $region23: #{bottleneck_forward.5} parent=0 // pred_check_branch
    %980 = sbr.rel (0) target = $region25
  $region24: #{bottleneck_forward.5} parent=0 // pred_region
    _
  $region25: #{bottleneck_forward.5} parent=0 // pred_fallthru
    _

// kernel: bottleneck_forward.9
$region0: #{bottleneck_forward.9}
  #allocation0 [shape = 'u32[]', space=smem, size = 0x4, offset = 0x4, fixed_abs, tag = 'smem constant byte address 0x4 - core index']
  #allocation1 [shape = 'u32[72,128]{1,0:T(1,128)}', space=vmem, size = 0x9000, scoped, tag = 'internal scratch']
  %s0 = inlined_call_operand.vmem [shape: bf16[128,32], index: 0, kind: input, shape index: {}]
  %s1 = inlined_call_operand.vmem [shape: f32[1,32], index: 1, kind: input, shape index: {}]
  %s2 = inlined_call_operand.vmem [shape: f32[1,32], index: 2, kind: input, shape index: {}]
  %s3 = inlined_call_operand.vmem [shape: bf16[128,32], index: 3, kind: input, shape index: {}]
  %s4 = inlined_call_operand.vmem [shape: f32[1,32], index: 4, kind: input, shape index: {}]
  %s5 = inlined_call_operand.vmem [shape: f32[1,32], index: 5, kind: input, shape index: {}]
  %s6 = inlined_call_operand.hbm [shape: f32[128,32], index: 6, kind: output, shape index: {0}]
  %s7 = inlined_call_operand.hbm [shape: f32[128,32], index: 7, kind: output, shape index: {1}]
  %8 = xla_tuple %s6, %s7
  %s9 = sld [smem:[#allocation0]]
  $region42: #{bottleneck_forward.9} parent=0
    _
  %s11 = ssub.s32 1, %s9
  %s12 = scalar_select 0, %s11, %s9
  $region1: #{bottleneck_forward.9} parent=0
    #allocation2 [shape = 'u8[65536]{0}', space=vmem, size = 0x10000, scoped, tag = 'output window, operand 0, single buffered']
    #allocation3 [shape = 's32[1]{0}', space=sflag, size = 0x4, scoped, tag = 'scoped memory for bottleneck_forward.9']
    #allocation4 [shape = 'u8[65536]{0}', space=vmem, size = 0x10000, scoped, tag = 'output window, operand 1, single buffered']
    #allocation5 [shape = 's32[1]{0}', space=sflag, size = 0x4, scoped, tag = 'scoped memory for bottleneck_forward.9']
    %13 = vsyncpa [#allocation3], 0
    %14 = vsyncpa [#allocation5], 0
    // Predicated region
    $region2: #{bottleneck_forward.9} parent=1 // pred_check
      _
    $region3: #{bottleneck_forward.9} parent=1 // pred_check_branch
      %16 = sbr.rel (0) target = $region5
    $region4: #{bottleneck_forward.9} parent=1 // pred_region
      _
    $region5: #{bottleneck_forward.9} parent=1 // pred_fallthru
      _
    // Predicated region
    $region6: #{bottleneck_forward.9} parent=1 // pred_check
      _
    $region7: #{bottleneck_forward.9} parent=1 // pred_check_branch
      %18 = sbr.rel (0) target = $region9
    $region8: #{bottleneck_forward.9} parent=1 // pred_region
      _
    $region9: #{bottleneck_forward.9} parent=1 // pred_fallthru
      _
    // Predicated region
    $region10: #{bottleneck_forward.9} parent=1 // pred_check
      _
    $region11: #{bottleneck_forward.9} parent=1 // pred_check_branch
      %20 = sbr.rel (0) target = $region13
    $region12: #{bottleneck_forward.9} parent=1 // pred_region
      _
    $region13: #{bottleneck_forward.9} parent=1 // pred_fallthru
      _
    // Predicated region
    $region14: #{bottleneck_forward.9} parent=1 // pred_check
      _
    $region15: #{bottleneck_forward.9} parent=1 // pred_check_branch
      %22 = sbr.rel (0) target = $region17
    $region16: #{bottleneck_forward.9} parent=1 // pred_region
      _
    $region17: #{bottleneck_forward.9} parent=1 // pred_fallthru
      _
    // Predicated region
    $region18: #{bottleneck_forward.9} parent=1 // pred_check
      _
    $region19: #{bottleneck_forward.9} parent=1 // pred_check_branch
      %24 = sbr.rel (0) target = $region21
    $region20: #{bottleneck_forward.9} parent=1 // pred_region
      _
    $region21: #{bottleneck_forward.9} parent=1 // pred_fallthru
      _
    // Predicated region
    $region22: #{bottleneck_forward.9} parent=1 // pred_check
      _
    $region23: #{bottleneck_forward.9} parent=1 // pred_check_branch
      %26 = sbr.rel (0) target = $region25
    $region24: #{bottleneck_forward.9} parent=1 // pred_region
      _
    $region25: #{bottleneck_forward.9} parent=1 // pred_fallthru
      _
    %v27 = vld [vmem:[%s0] sm:$0xf]
    %v28 = vld [vmem:[%s0 + $0x4] sm:$0xf]
    %v29 = vld [vmem:[%s0 + $0x8] sm:$0xf]
    %v30 = vld [vmem:[%s0 + $0xc] sm:$0xf]
    %v31 = vld [vmem:[%s0 + $0x10] sm:$0xf]
    %v32 = vld [vmem:[%s0 + $0x14] sm:$0xf]
    %v33 = vld [vmem:[%s0 + $0x18] sm:$0xf]
    %v34 = vld [vmem:[%s0 + $0x1c] sm:$0xf]
    %v35 = vld [vmem:[%s0 + $0x20] sm:$0xf]
    %v36 = vld [vmem:[%s0 + $0x24] sm:$0xf]
    %v37 = vld [vmem:[%s0 + $0x28] sm:$0xf]
    %v38 = vld [vmem:[%s0 + $0x2c] sm:$0xf]
    %v39 = vld [vmem:[%s0 + $0x30] sm:$0xf]
    %v40 = vld [vmem:[%s0 + $0x34] sm:$0xf]
    %v41 = vld [vmem:[%s0 + $0x38] sm:$0xf]
    %v42 = vld [vmem:[%s0 + $0x3c] sm:$0xf]
    %v43 = vld [vmem:[%s1] sm:$0x1]
    %v44 = vunpack.c.l.bf16 %v27
    %v45 = vunpack.c.l.bf16 %v28
    %v46 = vunpack.c.l.bf16 %v29
    %v47 = vunpack.c.l.bf16 %v30
    %v48 = vunpack.c.l.bf16 %v31
    %v49 = vunpack.c.l.bf16 %v32
    %v50 = vunpack.c.l.bf16 %v33
    %v51 = vunpack.c.l.bf16 %v34
    %v52 = vunpack.c.l.bf16 %v35
    %v53 = vunpack.c.l.bf16 %v36
    %v54 = vunpack.c.l.bf16 %v37
    %v55 = vunpack.c.l.bf16 %v38
    %v56 = vunpack.c.l.bf16 %v39
    %v57 = vunpack.c.l.bf16 %v40
    %v58 = vunpack.c.l.bf16 %v41
    %v59 = vunpack.c.l.bf16 %v42
    %v61 = vperm.slane %v43, 0
    %v63 = vmul.f32 %v44, %v61
    %v64 = vmul.f32 %v45, %v61
    %v65 = vmul.f32 %v46, %v61
    %v66 = vmul.f32 %v47, %v61
    %v67 = vmul.f32 %v48, %v61
    %v68 = vmul.f32 %v49, %v61
    %v69 = vmul.f32 %v50, %v61
    %v70 = vmul.f32 %v51, %v61
    %v71 = vmul.f32 %v52, %v61
    %v72 = vmul.f32 %v53, %v61
    %v73 = vmul.f32 %v54, %v61
    %v74 = vmul.f32 %v55, %v61
    %v75 = vmul.f32 %v56, %v61
    %v76 = vmul.f32 %v57, %v61
    %v77 = vmul.f32 %v58, %v61
    %v78 = vmul.f32 %v59, %v61
    %v79 = vld [vmem:[%s2] sm:$0x1]
    %v81 = vperm.slane %v79, 0
    %v83 = vadd.f32 %v63, %v81
    %v84 = vadd.f32 %v64, %v81
    %v85 = vadd.f32 %v65, %v81
    %v86 = vadd.f32 %v66, %v81
    %v87 = vadd.f32 %v67, %v81
    %v88 = vadd.f32 %v68, %v81
    %v89 = vadd.f32 %v69, %v81
    %v90 = vadd.f32 %v70, %v81
    %v91 = vadd.f32 %v71, %v81
    %v92 = vadd.f32 %v72, %v81
    %v93 = vadd.f32 %v73, %v81
    %v94 = vadd.f32 %v74, %v81
    %v95 = vadd.f32 %v75, %v81
    %v96 = vadd.f32 %v76, %v81
    %v97 = vadd.f32 %v77, %v81
    %v98 = vadd.f32 %v78, %v81
    %v99 = vld [vmem:[%s3] sm:$0xf]
    %v100 = vld [vmem:[%s3 + $0x4] sm:$0xf]
    %v101 = vld [vmem:[%s3 + $0x8] sm:$0xf]
    %v102 = vld [vmem:[%s3 + $0xc] sm:$0xf]
    %v103 = vld [vmem:[%s3 + $0x10] sm:$0xf]
    %v104 = vld [vmem:[%s3 + $0x14] sm:$0xf]
    %v105 = vld [vmem:[%s3 + $0x18] sm:$0xf]
    %v106 = vld [vmem:[%s3 + $0x1c] sm:$0xf]
    %v107 = vld [vmem:[%s3 + $0x20] sm:$0xf]
    %v108 = vld [vmem:[%s3 + $0x24] sm:$0xf]
    %v109 = vld [vmem:[%s3 + $0x28] sm:$0xf]
    %v110 = vld [vmem:[%s3 + $0x2c] sm:$0xf]
    %v111 = vld [vmem:[%s3 + $0x30] sm:$0xf]
    %v112 = vld [vmem:[%s3 + $0x34] sm:$0xf]
    %v113 = vld [vmem:[%s3 + $0x38] sm:$0xf]
    %v114 = vld [vmem:[%s3 + $0x3c] sm:$0xf]
    %v115 = vld [vmem:[%s4] sm:$0x1]
    %v116 = vunpack.c.l.bf16 %v99
    %v117 = vunpack.c.l.bf16 %v100
    %v118 = vunpack.c.l.bf16 %v101
    %v119 = vunpack.c.l.bf16 %v102
    %v120 = vunpack.c.l.bf16 %v103
    %v121 = vunpack.c.l.bf16 %v104
    %v122 = vunpack.c.l.bf16 %v105
    %v123 = vunpack.c.l.bf16 %v106
    %v124 = vunpack.c.l.bf16 %v107
    %v125 = vunpack.c.l.bf16 %v108
    %v126 = vunpack.c.l.bf16 %v109
    %v127 = vunpack.c.l.bf16 %v110
    %v128 = vunpack.c.l.bf16 %v111
    %v129 = vunpack.c.l.bf16 %v112
    %v130 = vunpack.c.l.bf16 %v113
    %v131 = vunpack.c.l.bf16 %v114
    %v133 = vperm.slane %v115, 0
    %v135 = vmul.f32 %v116, %v133
    %v136 = vmul.f32 %v117, %v133
    %v137 = vmul.f32 %v118, %v133
    %v138 = vmul.f32 %v119, %v133
    %v139 = vmul.f32 %v120, %v133
    %v140 = vmul.f32 %v121, %v133
    %v141 = vmul.f32 %v122, %v133
    %v142 = vmul.f32 %v123, %v133
    %v143 = vmul.f32 %v124, %v133
    %v144 = vmul.f32 %v125, %v133
    %v145 = vmul.f32 %v126, %v133
    %v146 = vmul.f32 %v127, %v133
    %v147 = vmul.f32 %v128, %v133
    %v148 = vmul.f32 %v129, %v133
    %v149 = vmul.f32 %v130, %v133
    %v150 = vmul.f32 %v131, %v133
    %v151 = vadd.f32 %v83, %v135
    %v152 = vadd.f32 %v84, %v136
    %v153 = vadd.f32 %v85, %v137
    %v154 = vadd.f32 %v86, %v138
    %v155 = vadd.f32 %v87, %v139
    %v156 = vadd.f32 %v88, %v140
    %v157 = vadd.f32 %v89, %v141
    %v158 = vadd.f32 %v90, %v142
    %v159 = vadd.f32 %v91, %v143
    %v160 = vadd.f32 %v92, %v144
    %v161 = vadd.f32 %v93, %v145
    %v162 = vadd.f32 %v94, %v146
    %v163 = vadd.f32 %v95, %v147
    %v164 = vadd.f32 %v96, %v148
    %v165 = vadd.f32 %v97, %v149
    %v166 = vadd.f32 %v98, %v150
    %v167 = vld [vmem:[%s5] sm:$0x1]
    %v169 = vperm.slane %v167, 0
    %v171 = vadd.f32 %v151, %v169
    %v172 = vadd.f32 %v152, %v169
    %v173 = vadd.f32 %v153, %v169
    %v174 = vadd.f32 %v154, %v169
    %v175 = vadd.f32 %v155, %v169
    %v176 = vadd.f32 %v156, %v169
    %v177 = vadd.f32 %v157, %v169
    %v178 = vadd.f32 %v158, %v169
    %v179 = vadd.f32 %v159, %v169
    %v180 = vadd.f32 %v160, %v169
    %v181 = vadd.f32 %v161, %v169
    %v182 = vadd.f32 %v162, %v169
    %v183 = vadd.f32 %v163, %v169
    %v184 = vadd.f32 %v164, %v169
    %v185 = vadd.f32 %v165, %v169
    %v186 = vadd.f32 %v166, %v169
    %vm187 = vcmask 261120
    %188 = vst.msk [vmem:[#allocation4] sm:$0xff] %vm187, %v171
    %189 = vst.msk [vmem:[#allocation4 + $0x8] sm:$0xff] %vm187, %v172
    %190 = vst.msk [vmem:[#allocation4 + $0x10] sm:$0xff] %vm187, %v173
    %191 = vst.msk [vmem:[#allocation4 + $0x18] sm:$0xff] %vm187, %v174
    %192 = vst.msk [vmem:[#allocation4 + $0x20] sm:$0xff] %vm187, %v175
    %193 = vst.msk [vmem:[#allocation4 + $0x28] sm:$0xff] %vm187, %v176
    %194 = vst.msk [vmem:[#allocation4 + $0x30] sm:$0xff] %vm187, %v177
    %195 = vst.msk [vmem:[#allocation4 + $0x38] sm:$0xff] %vm187, %v178
    %196 = vst.msk [vmem:[#allocation4 + $0x40] sm:$0xff] %vm187, %v179
    %197 = vst.msk [vmem:[#allocation4 + $0x48] sm:$0xff] %vm187, %v180
    %198 = vst.msk [vmem:[#allocation4 + $0x50] sm:$0xff] %vm187, %v181
    %199 = vst.msk [vmem:[#allocation4 + $0x58] sm:$0xff] %vm187, %v182
    %200 = vst.msk [vmem:[#allocation4 + $0x60] sm:$0xff] %vm187, %v183
    %201 = vst.msk [vmem:[#allocation4 + $0x68] sm:$0xff] %vm187, %v184
    %202 = vst.msk [vmem:[#allocation4 + $0x70] sm:$0xff] %vm187, %v185
    %203 = vst.msk [vmem:[#allocation4 + $0x78] sm:$0xff] %vm187, %v186
    %v204 = vmax.f32 %v171, 0.0
    %v205 = vmax.f32 %v172, 0.0
    %v206 = vmax.f32 %v173, 0.0
    %v207 = vmax.f32 %v174, 0.0
    %v208 = vmax.f32 %v175, 0.0
    %v209 = vmax.f32 %v176, 0.0
    %v210 = vmax.f32 %v177, 0.0
    %v211 = vmax.f32 %v178, 0.0
    %v212 = vmax.f32 %v179, 0.0
    %v213 = vmax.f32 %v180, 0.0
    %v214 = vmax.f32 %v181, 0.0
    %v215 = vmax.f32 %v182, 0.0
    %v216 = vmax.f32 %v183, 0.0
    %v217 = vmax.f32 %v184, 0.0
    %v218 = vmax.f32 %v185, 0.0
    %v219 = vmax.f32 %v186, 0.0
    %220 = vst.msk [vmem:[#allocation2] sm:$0xff] %vm187, %v204
    %221 = vst.msk [vmem:[#allocation2 + $0x8] sm:$0xff] %vm187, %v205
    %222 = vst.msk [vmem:[#allocation2 + $0x10] sm:$0xff] %vm187, %v206
    %223 = vst.msk [vmem:[#allocation2 + $0x18] sm:$0xff] %vm187, %v207
    %224 = vst.msk [vmem:[#allocation2 + $0x20] sm:$0xff] %vm187, %v208
    %225 = vst.msk [vmem:[#allocation2 + $0x28] sm:$0xff] %vm187, %v209
    %226 = vst.msk [vmem:[#allocation2 + $0x30] sm:$0xff] %vm187, %v210
    %227 = vst.msk [vmem:[#allocation2 + $0x38] sm:$0xff] %vm187, %v211
    %228 = vst.msk [vmem:[#allocation2 + $0x40] sm:$0xff] %vm187, %v212
    %229 = vst.msk [vmem:[#allocation2 + $0x48] sm:$0xff] %vm187, %v213
    %230 = vst.msk [vmem:[#allocation2 + $0x50] sm:$0xff] %vm187, %v214
    %231 = vst.msk [vmem:[#allocation2 + $0x58] sm:$0xff] %vm187, %v215
    %232 = vst.msk [vmem:[#allocation2 + $0x60] sm:$0xff] %vm187, %v216
    %233 = vst.msk [vmem:[#allocation2 + $0x68] sm:$0xff] %vm187, %v217
    %234 = vst.msk [vmem:[#allocation2 + $0x70] sm:$0xff] %vm187, %v218
    %235 = vst.msk [vmem:[#allocation2 + $0x78] sm:$0xff] %vm187, %v219
    // Predicated region
    $region26: #{bottleneck_forward.9} parent=1 // pred_check
      _
    $region27: #{bottleneck_forward.9} parent=1 // pred_check_branch
      %237 = sbr.rel (0) target = $region29
    $region28: #{bottleneck_forward.9} parent=1 // pred_region
      %239 = vsyncadd [#allocation3], 0
      %s240 = sshll.u32 [#allocation2], 4
      %s241 = int_to_ptr.vmem [resolvable:$true] %s240
      %s242 = sshll.u32 %s6, 4
      %s243 = int_to_ptr.hbm [resolvable:$true] %s242
      %248 = dma.vmem_to_hbm [thread:$0]  %s241, 2048, %s243, [#allocation3], 128, 128, 8
    $region29: #{bottleneck_forward.9} parent=1 // pred_fallthru
      _
    // Predicated region
    $region30: #{bottleneck_forward.9} parent=1 // pred_check
      _
    $region31: #{bottleneck_forward.9} parent=1 // pred_check_branch
      %250 = sbr.rel (0) target = $region33
    $region32: #{bottleneck_forward.9} parent=1 // pred_region
      %252 = vsyncadd [#allocation5], 0
      %s253 = sshll.u32 [#allocation4], 4
      %s254 = int_to_ptr.vmem [resolvable:$true] %s253
      %s255 = sshll.u32 %s7, 4
      %s256 = int_to_ptr.hbm [resolvable:$true] %s255
      %261 = dma.vmem_to_hbm [thread:$0]  %s254, 2048, %s256, [#allocation5], 128, 128, 8
    $region33: #{bottleneck_forward.9} parent=1 // pred_fallthru
      _
    // Predicated region
    $region34: #{bottleneck_forward.9} parent=1 // pred_check
      _
    $region35: #{bottleneck_forward.9} parent=1 // pred_check_branch
      %263 = sbr.rel (0) target = $region37
    $region36: #{bottleneck_forward.9} parent=1 // pred_region
      %265 = dma.done [#allocation3], 2048
    $region37: #{bottleneck_forward.9} parent=1 // pred_fallthru
      _
    // Predicated region
    $region38: #{bottleneck_forward.9} parent=1 // pred_check
      _
    $region39: #{bottleneck_forward.9} parent=1 // pred_check_branch
      %267 = sbr.rel (0) target = $region41
    $region40: #{bottleneck_forward.9} parent=1 // pred_region
      %269 = dma.done [#allocation5], 2048
    $region41: #{bottleneck_forward.9} parent=1 // pred_fallthru
      _
    %270 = vsyncpa [#allocation3], 1
    %271 = vsyncpa [#allocation5], 1

// kernel: bottleneck_forward.6
$region0: #{bottleneck_forward.6}
  #allocation0 [shape = 'u32[]', space=smem, size = 0x4, offset = 0x4, fixed_abs, tag = 'smem constant byte address 0x4 - core index']
  #allocation1 [shape = 'u32[72,128]{1,0:T(1,128)}', space=vmem, size = 0x9000, scoped, tag = 'internal scratch']
  #allocation2 [shape = 'bf16[18,18,8]{2,1,0:T(8,128)(2,1)}', space=vmem, size = 0x1b000, scoped, tag = 'scratch operand']
  %s0 = inlined_call_operand.vmem [shape: bf16[2,16,16,8], index: 0, kind: input, shape index: {}]
  %s1 = inlined_call_operand.vmem [shape: f32[1,8], index: 1, kind: input, shape index: {}]
  %s2 = inlined_call_operand.vmem [shape: f32[1,8], index: 2, kind: input, shape index: {}]
  %s3 = inlined_call_operand.vmem [shape: bf16[3,3,8,8], index: 3, kind: input, shape index: {}]
  %s4 = inlined_call_operand.vmem [shape: bf16[2,64,8], index: 4, kind: output, shape index: {0}]
  %s5 = inlined_call_operand.vmem [shape: f32[16,8], index: 5, kind: output, shape index: {1}]
  %6 = xla_tuple %s4, %s5
  %s7 = sld [smem:[#allocation0]]
  $region57: #{bottleneck_forward.6} parent=0
    _
  %s9 = ssub.s32 1, %s7
  %s10 = scalar_select 0, %s9, %s7
  loop: start=0, step=1, limit=4
  $region2: #{bottleneck_forward.6} parent=0 // loop_pre_header
    _
  $region3: #{bottleneck_forward.6} parent=0 // loop_header
    %s12 = sphi 0, %s16
    %p13 = scmp.ge.s32.totalorder %s12, 4
    %s22 = sphi 0, %s24
    %s25 = sphi 0, %s22
    %s26 = sphi 0, %s25
    %s42 = sphi 0, %s26
    %s46 = sphi 0, %s46
    %s48 = sphi 0, %s46
    %s49 = sphi 0, %s48
    %s63 = sphi 0, %s49
    %s67 = sphi 0, %s67
    %s69 = sphi 0, %s67
    %s70 = sphi 0, %s69
    %s84 = sphi 0, %s70
    %s88 = sphi 0, %s88
    %s90 = sphi 0, %s88
    %s91 = sphi 0, %s90
    %s105 = sphi 0, %s91
    %s111 = sphi 0, %s113
    %s114 = sphi 0, %s111
    %s115 = sphi 0, %s114
    %s131 = sphi 0, %s115
    %s137 = sphi 0, %s139
    %s140 = sphi 0, %s137
    %s141 = sphi 0, %s140
    %s157 = sphi 0, %s141
  $region4: #{bottleneck_forward.6} parent=0 // loop_header_branch
    %15 = sbr.rel (%p13) target = $region8
  $region5: #{bottleneck_forward.6} parent=0 // loop_body
    %s17 = ssub.s32 %s12, 1
    %s18 = ssub.s32 %s12, 2
    %s19 = sadd.s32 %s12, 1
    %s20 = ssub.s32 %s12, %s19
    %p21 = scmp.eq.s32.totalorder %s20, 0
    %s23 = sadd.s32 %s22, 1
    %s24 = scalar_select %p21, %s22, %s23
    %p27 = pneg %p21
    %p28 = scmp.eq.s32.totalorder %s12, 1
    %p29 = por %p27, %p28
    %p30 = scmp.ne.s32.totalorder %s22, %s25
    %p31 = scmp.eq.s32.totalorder %s12, 0
    %p32 = por %p30, %p31
    %p33 = scmp.ne.s32.totalorder %s22, %s25
    %p34 = scmp.eq.s32.totalorder %s17, 1
    %p35 = por %p33, %p34
    %p36 = scmp.ne.s32.totalorder %s25, %s26
    %p37 = scmp.eq.s32.totalorder %s17, 0
    %p38 = por %p36, %p37
    %p39 = scmp.ne.s32.totalorder %s25, %s26
    %p40 = scmp.eq.s32.totalorder %s18, 1
    %p41 = por %p39, %p40
    %p43 = scmp.ne.s32.totalorder %s26, %s42
    %p44 = scmp.eq.s32.totalorder %s18, 0
    %p45 = por %p43, %p44
    %s47 = sadd.s32 %s46, 1
    %p50 = scmp.eq.s32.totalorder %s12, 1
    %p51 = scmp.ne.s32.totalorder %s46, %s48
    %p52 = scmp.eq.s32.totalorder %s12, 0
    %p53 = por %p51, %p52
    %p54 = scmp.ne.s32.totalorder %s46, %s48
    %p55 = scmp.eq.s32.totalorder %s17, 1
    %p56 = por %p54, %p55
    %p57 = scmp.ne.s32.totalorder %s48, %s49
    %p58 = scmp.eq.s32.totalorder %s17, 0
    %p59 = por %p57, %p58
    %p60 = scmp.ne.s32.totalorder %s48, %s49
    %p61 = scmp.eq.s32.totalorder %s18, 1
    %p62 = por %p60, %p61
    %p64 = scmp.ne.s32.totalorder %s49, %s63
    %p65 = scmp.eq.s32.totalorder %s18, 0
    %p66 = por %p64, %p65
    %s68 = sadd.s32 %s67, 1
    %p71 = scmp.eq.s32.totalorder %s12, 1
    %p72 = scmp.ne.s32.totalorder %s67, %s69
    %p73 = scmp.eq.s32.totalorder %s12, 0
    %p74 = por %p72, %p73
    %p75 = scmp.ne.s32.totalorder %s67, %s69
    %p76 = scmp.eq.s32.totalorder %s17, 1
    %p77 = por %p75, %p76
    %p78 = scmp.ne.s32.totalorder %s69, %s70
    %p79 = scmp.eq.s32.totalorder %s17, 0
    %p80 = por %p78, %p79
    %p81 = scmp.ne.s32.totalorder %s69, %s70
    %p82 = scmp.eq.s32.totalorder %s18, 1
    %p83 = por %p81, %p82
    %p85 = scmp.ne.s32.totalorder %s70, %s84
    %p86 = scmp.eq.s32.totalorder %s18, 0
    %p87 = por %p85, %p86
    %s89 = sadd.s32 %s88, 1
    %p92 = scmp.eq.s32.totalorder %s12, 1
    %p93 = scmp.ne.s32.totalorder %s88, %s90
    %p94 = scmp.eq.s32.totalorder %s12, 0
    %p95 = por %p93, %p94
    %p96 = scmp.ne.s32.totalorder %s88, %s90
    %p97 = scmp.eq.s32.totalorder %s17, 1
    %p98 = por %p96, %p97
    %p99 = scmp.ne.s32.totalorder %s90, %s91
    %p100 = scmp.eq.s32.totalorder %s17, 0
    %p101 = por %p99, %p100
    %p102 = scmp.ne.s32.totalorder %s90, %s91
    %p103 = scmp.eq.s32.totalorder %s18, 1
    %p104 = por %p102, %p103
    %p106 = scmp.ne.s32.totalorder %s91, %s105
    %p107 = scmp.eq.s32.totalorder %s18, 0
    %p108 = por %p106, %p107
    %s109 = ssub.s32 %s12, %s19
    %p110 = scmp.eq.s32.totalorder %s109, 0
    %s112 = sadd.s32 %s111, 1
    %s113 = scalar_select %p110, %s111, %s112
    %p116 = pneg %p110
    %p117 = scmp.eq.s32.totalorder %s12, 1
    %p118 = por %p116, %p117
    %p119 = scmp.ne.s32.totalorder %s111, %s114
    %p120 = scmp.eq.s32.totalorder %s12, 0
    %p121 = por %p119, %p120
    %p122 = scmp.ne.s32.totalorder %s111, %s114
    %p123 = scmp.eq.s32.totalorder %s17, 1
    %p124 = por %p122, %p123
    %p125 = scmp.ne.s32.totalorder %s114, %s115
    %p126 = scmp.eq.s32.totalorder %s17, 0
    %p127 = por %p125, %p126
    %p128 = scmp.ne.s32.totalorder %s114, %s115
    %p129 = scmp.eq.s32.totalorder %s18, 1
    %p130 = por %p128, %p129
    %p132 = scmp.ne.s32.totalorder %s115, %s131
    %p133 = scmp.eq.s32.totalorder %s18, 0
    %p134 = por %p132, %p133
    %s135 = ssub.s32 %s12, %s19
    %p136 = scmp.eq.s32.totalorder %s135, 0
    %s138 = sadd.s32 %s137, 1
    %s139 = scalar_select %p136, %s137, %s138
    %p142 = pneg %p136
    %p143 = scmp.eq.s32.totalorder %s12, 1
    %p144 = por %p142, %p143
    %p145 = scmp.ne.s32.totalorder %s137, %s140
    %p146 = scmp.eq.s32.totalorder %s12, 0
    %p147 = por %p145, %p146
    %p148 = scmp.ne.s32.totalorder %s137, %s140
    %p149 = scmp.eq.s32.totalorder %s17, 1
    %p150 = por %p148, %p149
    %p151 = scmp.ne.s32.totalorder %s140, %s141
    %p152 = scmp.eq.s32.totalorder %s17, 0
    %p153 = por %p151, %p152
    %p154 = scmp.ne.s32.totalorder %s140, %s141
    %p155 = scmp.eq.s32.totalorder %s18, 1
    %p156 = por %p154, %p155
    %p158 = scmp.ne.s32.totalorder %s141, %s157
    %p159 = scmp.eq.s32.totalorder %s18, 0
    %p160 = por %p158, %p159
    %p161 = scmp.le.s32.totalorder 1, %s12
    %p162 = scmp.lt.s32.totalorder %s12, 3
    %p163 = pnand %p161, %p162
    %p164 = pneg %p163
    // Predicated region
    $region9: #{bottleneck_forward.6} parent=5 // pred_check
      _
    $region10: #{bottleneck_forward.6} parent=5 // pred_check_branch
      %166 = sbr.rel (%p163) target = $region12
    $region11: #{bottleneck_forward.6} parent=5 // pred_region
      %s167 = ssub.s32 %s12, 1
      // Predicated region
      $region13: #{bottleneck_forward.6} parent=11 // pred_check
        %p168 = pneg %p59
      $region14: #{bottleneck_forward.6} parent=11 // pred_check_branch
        %170 = sbr.rel (%p168) target = $region16
      $region15: #{bottleneck_forward.6} parent=11 // pred_region
        _
      $region16: #{bottleneck_forward.6} parent=11 // pred_fallthru
        _
      // Predicated region
      $region17: #{bottleneck_forward.6} parent=11 // pred_check
        %p171 = pneg %p80
      $region18: #{bottleneck_forward.6} parent=11 // pred_check_branch
        %173 = sbr.rel (%p171) target = $region20
      $region19: #{bottleneck_forward.6} parent=11 // pred_region
        _
      $region20: #{bottleneck_forward.6} parent=11 // pred_fallthru
        _
      // Predicated region
      $region21: #{bottleneck_forward.6} parent=11 // pred_check
        %p174 = pneg %p101
      $region22: #{bottleneck_forward.6} parent=11 // pred_check_branch
        %176 = sbr.rel (%p174) target = $region24
      $region23: #{bottleneck_forward.6} parent=11 // pred_region
        _
      $region24: #{bottleneck_forward.6} parent=11 // pred_fallthru
        _
    $region12: #{bottleneck_forward.6} parent=5 // pred_fallthru
      _
    %p177 = scmp.lt.s32.totalorder %s12, 2
    // Predicated region
    $region25: #{bottleneck_forward.6} parent=5 // pred_check
      %p178 = pneg %p177
    $region26: #{bottleneck_forward.6} parent=5 // pred_check_branch
      %180 = sbr.rel (%p178) target = $region28
    $region27: #{bottleneck_forward.6} parent=5 // pred_region
      // Predicated region
      $region29: #{bottleneck_forward.6} parent=27 // pred_check
        %p181 = pneg %p32
      $region30: #{bottleneck_forward.6} parent=27 // pred_check_branch
        %183 = sbr.rel (%p181) target = $region32
      $region31: #{bottleneck_forward.6} parent=27 // pred_region
        %p184 = scmp.lt.s32.totalorder %s12, 1
        %s185 = scalar_select %p184, %s12, 1
        %s186 = smul.addr %s185, 32
        %s187 = smul.addr %s186, 4
        %s188 = scalar_lea.vmem %s0, %s187
      $region32: #{bottleneck_forward.6} parent=27 // pred_fallthru
        _
    $region28: #{bottleneck_forward.6} parent=5 // pred_fallthru
      _
    %p189 = scmp.le.s32.totalorder 1, %s12
    %p190 = scmp.lt.s32.totalorder %s12, 3
    %p191 = pnand %p189, %p190
    %p192 = pneg %p191
    // Predicated region
    $region33: #{bottleneck_forward.6} parent=5 // pred_check
      _
    $region34: #{bottleneck_forward.6} parent=5 // pred_check_branch
      %194 = sbr.rel (%p191) target = $region36
    $region35: #{bottleneck_forward.6} parent=5 // pred_region
      %s195 = ssub.s32 %s12, 1
      %p196 = scmp.lt.s32.totalorder %s17, 1
      %s197 = scalar_select %p196, %s17, 1
      %s198 = smul.addr %s197, 32
      %s199 = smul.addr %s198, 4
      %s200 = scalar_lea.vmem %s0, %s199
      %p201 = pneg %p38
      %p202 = pneg %p35
      %p203 = pneg %p59
      %p204 = pneg %p56
      %p205 = pneg %p80
      %p206 = pneg %p77
      %p207 = pneg %p101
      %p208 = pneg %p98
      %p209 = pneg %p127
      %p210 = pneg %p124
      %p211 = scmp.lt.s32.totalorder %s17, 1
      %s212 = scalar_select %p211, %s17, 1
      %s213 = smul.addr %s212, 8
      %s214 = smul.addr %s213, 4
      %s215 = scalar_lea.vmem %s4, %s214
      %p216 = pneg %p153
      %p217 = pneg %p150
      %p218 = scmp.lt.s32.totalorder %s17, 1
      %s219 = scalar_select %p218, %s17, 1
      %s220 = smul.addr %s219, 8
      %s221 = scalar_lea.vmem %s5, %s220
      %p222 = scmp.lt.s32.totalorder %s17, 1
      %s223 = scalar_select %p222, %s17, 1
      %s224 = smul.addr %s223, 32
      %s225 = smul.addr %s224, 4
      %s226 = scalar_lea.vmem %s0, %s225
      %p227 = scmp.lt.s32.totalorder %s17, 1
      %s228 = scalar_select %p227, %s17, 1
      %s229 = smul.addr %s228, 8
      %s230 = smul.addr %s229, 4
      %s231 = scalar_lea.vmem %s4, %s230
      %p232 = scmp.lt.s32.totalorder %s17, 1
      %s233 = scalar_select %p232, %s17, 1
      %s234 = smul.addr %s233, 8
      %s235 = scalar_lea.vmem %s5, %s234
      %vm237 = vcmask 60416
      %238 = vst.msk [vmem:[#allocation2] sm:$0xf] %vm237, 0
      %239 = vst.msk [vmem:[#allocation2 + $0x4] sm:$0xf] %vm237, 0
      %vm240 = vcmask 57344
      %241 = vst.msk [vmem:[#allocation2 + $0x8] sm:$0x1] %vm240, 0
      %242 = vst.msk [vmem:[#allocation2 + $0xc] sm:$0xf] %vm237, 0
      %243 = vst.msk [vmem:[#allocation2 + $0x10] sm:$0xf] %vm237, 0
      %244 = vst.msk [vmem:[#allocation2 + $0x14] sm:$0x1] %vm240, 0
      %245 = vst.msk [vmem:[#allocation2 + $0x18] sm:$0xf] %vm237, 0
      %246 = vst.msk [vmem:[#allocation2 + $0x1c] sm:$0xf] %vm237, 0
      %247 = vst.msk [vmem:[#allocation2 + $0x20] sm:$0x1] %vm240, 0
      %248 = vst.msk [vmem:[#allocation2 + $0x24] sm:$0xf] %vm237, 0
      %249 = vst.msk [vmem:[#allocation2 + $0x28] sm:$0xf] %vm237, 0
      %250 = vst.msk [vmem:[#allocation2 + $0x2c] sm:$0x1] %vm240, 0
      %251 = vst.msk [vmem:[#allocation2 + $0x30] sm:$0xf] %vm237, 0
      %252 = vst.msk [vmem:[#allocation2 + $0x34] sm:$0xf] %vm237, 0
      %253 = vst.msk [vmem:[#allocation2 + $0x38] sm:$0x1] %vm240, 0
      %254 = vst.msk [vmem:[#allocation2 + $0x3c] sm:$0xf] %vm237, 0
      %255 = vst.msk [vmem:[#allocation2 + $0x40] sm:$0xf] %vm237, 0
      %256 = vst.msk [vmem:[#allocation2 + $0x44] sm:$0x1] %vm240, 0
      %257 = vst.msk [vmem:[#allocation2 + $0x48] sm:$0xf] %vm237, 0
      %258 = vst.msk [vmem:[#allocation2 + $0x4c] sm:$0xf] %vm237, 0
      %259 = vst.msk [vmem:[#allocation2 + $0x50] sm:$0x1] %vm240, 0
      %260 = vst.msk [vmem:[#allocation2 + $0x54] sm:$0xf] %vm237, 0
      %261 = vst.msk [vmem:[#allocation2 + $0x58] sm:$0xf] %vm237, 0
      %262 = vst.msk [vmem:[#allocation2 + $0x5c] sm:$0x1] %vm240, 0
      %263 = vst.msk [vmem:[#allocation2 + $0x60] sm:$0xf] %vm237, 0
      %264 = vst.msk [vmem:[#allocation2 + $0x64] sm:$0xf] %vm237, 0
      %265 = vst.msk [vmem:[#allocation2 + $0x68] sm:$0x1] %vm240, 0
      %266 = vst.msk [vmem:[#allocation2 + $0x6c] sm:$0xf] %vm237, 0
      %267 = vst.msk [vmem:[#allocation2 + $0x70] sm:$0xf] %vm237, 0
      %268 = vst.msk [vmem:[#allocation2 + $0x74] sm:$0x1] %vm240, 0
      %269 = vst.msk [vmem:[#allocation2 + $0x78] sm:$0xf] %vm237, 0
      %270 = vst.msk [vmem:[#allocation2 + $0x7c] sm:$0xf] %vm237, 0
      %271 = vst.msk [vmem:[#allocation2 + $0x80] sm:$0x1] %vm240, 0
      %272 = vst.msk [vmem:[#allocation2 + $0x84] sm:$0xf] %vm237, 0
      %273 = vst.msk [vmem:[#allocation2 + $0x88] sm:$0xf] %vm237, 0
      %274 = vst.msk [vmem:[#allocation2 + $0x8c] sm:$0x1] %vm240, 0
      %275 = vst.msk [vmem:[#allocation2 + $0x90] sm:$0xf] %vm237, 0
      %276 = vst.msk [vmem:[#allocation2 + $0x94] sm:$0xf] %vm237, 0
      %277 = vst.msk [vmem:[#allocation2 + $0x98] sm:$0x1] %vm240, 0
      %278 = vst.msk [vmem:[#allocation2 + $0x9c] sm:$0xf] %vm237, 0
      %279 = vst.msk [vmem:[#allocation2 + $0xa0] sm:$0xf] %vm237, 0
      %280 = vst.msk [vmem:[#allocation2 + $0xa4] sm:$0x1] %vm240, 0
      %281 = vst.msk [vmem:[#allocation2 + $0xa8] sm:$0xf] %vm237, 0
      %282 = vst.msk [vmem:[#allocation2 + $0xac] sm:$0xf] %vm237, 0
      %283 = vst.msk [vmem:[#allocation2 + $0xb0] sm:$0x1] %vm240, 0
      %284 = vst.msk [vmem:[#allocation2 + $0xb4] sm:$0xf] %vm237, 0
      %285 = vst.msk [vmem:[#allocation2 + $0xb8] sm:$0xf] %vm237, 0
      %286 = vst.msk [vmem:[#allocation2 + $0xbc] sm:$0x1] %vm240, 0
      %287 = vst.msk [vmem:[#allocation2 + $0xc0] sm:$0xf] %vm237, 0
      %288 = vst.msk [vmem:[#allocation2 + $0xc4] sm:$0xf] %vm237, 0
      %289 = vst.msk [vmem:[#allocation2 + $0xc8] sm:$0x1] %vm240, 0
      %290 = vst.msk [vmem:[#allocation2 + $0xcc] sm:$0xf] %vm237, 0
      %291 = vst.msk [vmem:[#allocation2 + $0xd0] sm:$0xf] %vm237, 0
      %292 = vst.msk [vmem:[#allocation2 + $0xd4] sm:$0x1] %vm240, 0
      %v293 = vld [vmem:[%s226] sm:$0xf]
      %v294 = vld [vmem:[%s226 + $0x4] sm:$0xf]
      %v295 = vld [vmem:[%s226 + $0x8] sm:$0xf]
      %v296 = vld [vmem:[%s226 + $0xc] sm:$0xf]
      %v297 = vld [vmem:[%s226 + $0x10] sm:$0xf]
      %v298 = vld [vmem:[%s226 + $0x14] sm:$0xf]
      %v299 = vld [vmem:[%s226 + $0x18] sm:$0xf]
      %v300 = vld [vmem:[%s226 + $0x1c] sm:$0xf]
      %v301 = vld [vmem:[%s226 + $0x20] sm:$0xf]
      %v302 = vld [vmem:[%s226 + $0x24] sm:$0xf]
      %v303 = vld [vmem:[%s226 + $0x28] sm:$0xf]
      %v304 = vld [vmem:[%s226 + $0x2c] sm:$0xf]
      %v305 = vld [vmem:[%s226 + $0x30] sm:$0xf]
      %v306 = vld [vmem:[%s226 + $0x34] sm:$0xf]
      %v307 = vld [vmem:[%s226 + $0x38] sm:$0xf]
      %v308 = vld [vmem:[%s226 + $0x3c] sm:$0xf]
      %v309 = vld [vmem:[%s226 + $0x40] sm:$0xf]
      %v310 = vld [vmem:[%s226 + $0x44] sm:$0xf]
      %v311 = vld [vmem:[%s226 + $0x48] sm:$0xf]
      %v312 = vld [vmem:[%s226 + $0x4c] sm:$0xf]
      %v313 = vld [vmem:[%s226 + $0x50] sm:$0xf]
      %v314 = vld [vmem:[%s226 + $0x54] sm:$0xf]
      %v315 = vld [vmem:[%s226 + $0x58] sm:$0xf]
      %v316 = vld [vmem:[%s226 + $0x5c] sm:$0xf]
      %v317 = vld [vmem:[%s226 + $0x60] sm:$0xf]
      %v318 = vld [vmem:[%s226 + $0x64] sm:$0xf]
      %v319 = vld [vmem:[%s226 + $0x68] sm:$0xf]
      %v320 = vld [vmem:[%s226 + $0x6c] sm:$0xf]
      %v321 = vld [vmem:[%s226 + $0x70] sm:$0xf]
      %v322 = vld [vmem:[%s226 + $0x74] sm:$0xf]
      %v323 = vld [vmem:[%s226 + $0x78] sm:$0xf]
      %v324 = vld [vmem:[%s226 + $0x7c] sm:$0xf]
      %v325 = vld [vmem:[%s1] sm:$0x1]
      %v326 = vunpack.c.l.bf16 %v293
      %v327 = vunpack.c.l.bf16 %v294
      %v328 = vunpack.c.l.bf16 %v295
      %v329 = vunpack.c.l.bf16 %v296
      %v330 = vunpack.c.l.bf16 %v297
      %v331 = vunpack.c.l.bf16 %v298
      %v332 = vunpack.c.l.bf16 %v299
      %v333 = vunpack.c.l.bf16 %v300
      %v334 = vunpack.c.l.bf16 %v301
      %v335 = vunpack.c.l.bf16 %v302
      %v336 = vunpack.c.l.bf16 %v303
      %v337 = vunpack.c.l.bf16 %v304
      %v338 = vunpack.c.l.bf16 %v305
      %v339 = vunpack.c.l.bf16 %v306
      %v340 = vunpack.c.l.bf16 %v307
      %v341 = vunpack.c.l.bf16 %v308
      %v342 = vunpack.c.l.bf16 %v309
      %v343 = vunpack.c.l.bf16 %v310
      %v344 = vunpack.c.l.bf16 %v311
      %v345 = vunpack.c.l.bf16 %v312
      %v346 = vunpack.c.l.bf16 %v313
      %v347 = vunpack.c.l.bf16 %v314
      %v348 = vunpack.c.l.bf16 %v315
      %v349 = vunpack.c.l.bf16 %v316
      %v350 = vunpack.c.l.bf16 %v317
      %v351 = vunpack.c.l.bf16 %v318
      %v352 = vunpack.c.l.bf16 %v319
      %v353 = vunpack.c.l.bf16 %v320
      %v354 = vunpack.c.l.bf16 %v321
      %v355 = vunpack.c.l.bf16 %v322
      %v356 = vunpack.c.l.bf16 %v323
      %v357 = vunpack.c.l.bf16 %v324
      %v359 = vperm.slane %v325, 0
      %v361 = vmul.f32 %v326, %v359
      %v362 = vmul.f32 %v327, %v359
      %v363 = vmul.f32 %v328, %v359
      %v364 = vmul.f32 %v329, %v359
      %v365 = vmul.f32 %v330, %v359
      %v366 = vmul.f32 %v331, %v359
      %v367 = vmul.f32 %v332, %v359
      %v368 = vmul.f32 %v333, %v359
      %v369 = vmul.f32 %v334, %v359
      %v370 = vmul.f32 %v335, %v359
      %v371 = vmul.f32 %v336, %v359
      %v372 = vmul.f32 %v337, %v359
      %v373 = vmul.f32 %v338, %v359
      %v374 = vmul.f32 %v339, %v359
      %v375 = vmul.f32 %v340, %v359
      %v376 = vmul.f32 %v341, %v359
      %v377 = vmul.f32 %v342, %v359
      %v378 = vmul.f32 %v343, %v359
      %v379 = vmul.f32 %v344, %v359
      %v380 = vmul.f32 %v345, %v359
      %v381 = vmul.f32 %v346, %v359
      %v382 = vmul.f32 %v347, %v359
      %v383 = vmul.f32 %v348, %v359
      %v384 = vmul.f32 %v349, %v359
      %v385 = vmul.f32 %v350, %v359
      %v386 = vmul.f32 %v351, %v359
      %v387 = vmul.f32 %v352, %v359
      %v388 = vmul.f32 %v353, %v359
      %v389 = vmul.f32 %v354, %v359
      %v390 = vmul.f32 %v355, %v359
      %v391 = vmul.f32 %v356, %v359
      %v392 = vmul.f32 %v357, %v359
      %v393 = vld [vmem:[%s2] sm:$0x1]
      %v395 = vperm.slane %v393, 0
      %v397 = vadd.f32 %v361, %v395
      %v398 = vadd.f32 %v362, %v395
      %v399 = vadd.f32 %v363, %v395
      %v400 = vadd.f32 %v364, %v395
      %v401 = vadd.f32 %v365, %v395
      %v402 = vadd.f32 %v366, %v395
      %v403 = vadd.f32 %v367, %v395
      %v404 = vadd.f32 %v368, %v395
      %v405 = vadd.f32 %v369, %v395
      %v406 = vadd.f32 %v370, %v395
      %v407 = vadd.f32 %v371, %v395
      %v408 = vadd.f32 %v372, %v395
      %v409 = vadd.f32 %v373, %v395
      %v410 = vadd.f32 %v374, %v395
      %v411 = vadd.f32 %v375, %v395
      %v412 = vadd.f32 %v376, %v395
      %v413 = vadd.f32 %v377, %v395
      %v414 = vadd.f32 %v378, %v395
      %v415 = vadd.f32 %v379, %v395
      %v416 = vadd.f32 %v380, %v395
      %v417 = vadd.f32 %v381, %v395
      %v418 = vadd.f32 %v382, %v395
      %v419 = vadd.f32 %v383, %v395
      %v420 = vadd.f32 %v384, %v395
      %v421 = vadd.f32 %v385, %v395
      %v422 = vadd.f32 %v386, %v395
      %v423 = vadd.f32 %v387, %v395
      %v424 = vadd.f32 %v388, %v395
      %v425 = vadd.f32 %v389, %v395
      %v426 = vadd.f32 %v390, %v395
      %v427 = vadd.f32 %v391, %v395
      %v428 = vadd.f32 %v392, %v395
      %v429 = vmax.f32 %v397, 0.0
      %v430 = vmax.f32 %v398, 0.0
      %v431 = vmax.f32 %v399, 0.0
      %v432 = vmax.f32 %v400, 0.0
      %v433 = vmax.f32 %v401, 0.0
      %v434 = vmax.f32 %v402, 0.0
      %v435 = vmax.f32 %v403, 0.0
      %v436 = vmax.f32 %v404, 0.0
      %v437 = vmax.f32 %v405, 0.0
      %v438 = vmax.f32 %v406, 0.0
      %v439 = vmax.f32 %v407, 0.0
      %v440 = vmax.f32 %v408, 0.0
      %v441 = vmax.f32 %v409, 0.0
      %v442 = vmax.f32 %v410, 0.0
      %v443 = vmax.f32 %v411, 0.0
      %v444 = vmax.f32 %v412, 0.0
      %v445 = vmax.f32 %v413, 0.0
      %v446 = vmax.f32 %v414, 0.0
      %v447 = vmax.f32 %v415, 0.0
      %v448 = vmax.f32 %v416, 0.0
      %v449 = vmax.f32 %v417, 0.0
      %v450 = vmax.f32 %v418, 0.0
      %v451 = vmax.f32 %v419, 0.0
      %v452 = vmax.f32 %v420, 0.0
      %v453 = vmax.f32 %v421, 0.0
      %v454 = vmax.f32 %v422, 0.0
      %v455 = vmax.f32 %v423, 0.0
      %v456 = vmax.f32 %v424, 0.0
      %v457 = vmax.f32 %v425, 0.0
      %v458 = vmax.f32 %v426, 0.0
      %v459 = vmax.f32 %v427, 0.0
      %v460 = vmax.f32 %v428, 0.0
      %v461 = vpack.c.bf16 %v429, %v429
      %v462 = vpack.c.bf16 %v430, %v430
      %v463 = vpack.c.bf16 %v431, %v431
      %v464 = vpack.c.bf16 %v432, %v432
      %v465 = vpack.c.bf16 %v433, %v433
      %v466 = vpack.c.bf16 %v434, %v434
      %v467 = vpack.c.bf16 %v435, %v435
      %v468 = vpack.c.bf16 %v436, %v436
      %v469 = vpack.c.bf16 %v437, %v437
      %v470 = vpack.c.bf16 %v438, %v438
      %v471 = vpack.c.bf16 %v439, %v439
      %v472 = vpack.c.bf16 %v440, %v440
      %v473 = vpack.c.bf16 %v441, %v441
      %v474 = vpack.c.bf16 %v442, %v442
      %v475 = vpack.c.bf16 %v443, %v443
      %v476 = vpack.c.bf16 %v444, %v444
      %v477 = vpack.c.bf16 %v445, %v445
      %v478 = vpack.c.bf16 %v446, %v446
      %v479 = vpack.c.bf16 %v447, %v447
      %v480 = vpack.c.bf16 %v448, %v448
      %v481 = vpack.c.bf16 %v449, %v449
      %v482 = vpack.c.bf16 %v450, %v450
      %v483 = vpack.c.bf16 %v451, %v451
      %v484 = vpack.c.bf16 %v452, %v452
      %v485 = vpack.c.bf16 %v453, %v453
      %v486 = vpack.c.bf16 %v454, %v454
      %v487 = vpack.c.bf16 %v455, %v455
      %v488 = vpack.c.bf16 %v456, %v456
      %v489 = vpack.c.bf16 %v457, %v457
      %v490 = vpack.c.bf16 %v458, %v458
      %v491 = vpack.c.bf16 %v459, %v459
      %v492 = vpack.c.bf16 %v460, %v460
      %vm493 = vsmask.f32 256
      %vm494 = vsmask.f32 4368
      %vm495 = vmor %vm493, %vm494
      %v497 = vshrl.u32 %v461, 16
      %v499 = vrot.slane %v497, 7
      %v500 = vshll.u32 %v461, 16
      %v502 = vor.u32 %v499, %v500
      %v503 = vrot.slane %v499, 4
      %v505 = vshrl.u32 %v462, 16
      %v507 = vrot.slane %v505, 7
      %v508 = vshll.u32 %v462, 16
      %v510 = vor.u32 %v507, %v508
      %v511 = vsel %vm495, %v503, %v510
      %v512 = vrot.slane %v507, 4
      %v514 = vshrl.u32 %v463, 16
      %v516 = vrot.slane %v514, 7
      %v517 = vshll.u32 %v463, 16
      %v519 = vor.u32 %v516, %v517
      %v520 = vrot.slane %v516, 4
      %v522 = vshrl.u32 %v464, 16
      %v524 = vrot.slane %v522, 7
      %v525 = vshll.u32 %v464, 16
      %v527 = vor.u32 %v524, %v525
      %v528 = vsel %vm495, %v520, %v527
      %v529 = vrot.slane %v524, 4
      %v531 = vshrl.u32 %v465, 16
      %v533 = vrot.slane %v531, 7
      %v534 = vshll.u32 %v465, 16
      %v536 = vor.u32 %v533, %v534
      %v537 = vrot.slane %v533, 4
      %v539 = vshrl.u32 %v466, 16
      %v541 = vrot.slane %v539, 7
      %v542 = vshll.u32 %v466, 16
      %v544 = vor.u32 %v541, %v542
      %v545 = vsel %vm495, %v537, %v544
      %v546 = vrot.slane %v541, 4
      %v548 = vshrl.u32 %v467, 16
      %v550 = vrot.slane %v548, 7
      %v551 = vshll.u32 %v467, 16
      %v553 = vor.u32 %v550, %v551
      %v554 = vrot.slane %v550, 4
      %v556 = vshrl.u32 %v468, 16
      %v558 = vrot.slane %v556, 7
      %v559 = vshll.u32 %v468, 16
      %v561 = vor.u32 %v558, %v559
      %v562 = vsel %vm495, %v554, %v561
      %v563 = vrot.slane %v558, 4
      %v565 = vshrl.u32 %v469, 16
      %v567 = vrot.slane %v565, 7
      %v568 = vshll.u32 %v469, 16
      %v570 = vor.u32 %v567, %v568
      %v571 = vrot.slane %v567, 4
      %v573 = vshrl.u32 %v470, 16
      %v575 = vrot.slane %v573, 7
      %v576 = vshll.u32 %v470, 16
      %v578 = vor.u32 %v575, %v576
      %v579 = vsel %vm495, %v571, %v578
      %v580 = vrot.slane %v575, 4
      %v582 = vshrl.u32 %v471, 16
      %v584 = vrot.slane %v582, 7
      %v585 = vshll.u32 %v471, 16
      %v587 = vor.u32 %v584, %v585
      %v588 = vrot.slane %v584, 4
      %v590 = vshrl.u32 %v472, 16
      %v592 = vrot.slane %v590, 7
      %v593 = vshll.u32 %v472, 16
      %v595 = vor.u32 %v592, %v593
      %v596 = vsel %vm495, %v588, %v595
      %v597 = vrot.slane %v592, 4
      %v599 = vshrl.u32 %v473, 16
      %v601 = vrot.slane %v599, 7
      %v602 = vshll.u32 %v473, 16
      %v604 = vor.u32 %v601, %v602
      %v605 = vrot.slane %v601, 4
      %v607 = vshrl.u32 %v474, 16
      %v609 = vrot.slane %v607, 7
      %v610 = vshll.u32 %v474, 16
      %v612 = vor.u32 %v609, %v610
      %v613 = vsel %vm495, %v605, %v612
      %v614 = vrot.slane %v609, 4
      %v616 = vshrl.u32 %v475, 16
      %v618 = vrot.slane %v616, 7
      %v619 = vshll.u32 %v475, 16
      %v621 = vor.u32 %v618, %v619
      %v622 = vrot.slane %v618, 4
      %v624 = vshrl.u32 %v476, 16
      %v626 = vrot.slane %v624, 7
      %v627 = vshll.u32 %v476, 16
      %v629 = vor.u32 %v626, %v627
      %v630 = vsel %vm495, %v622, %v629
      %v631 = vrot.slane %v626, 4
      %v633 = vshrl.u32 %v477, 16
      %v635 = vrot.slane %v633, 7
      %v636 = vshll.u32 %v477, 16
      %v638 = vor.u32 %v635, %v636
      %v639 = vrot.slane %v635, 4
      %v641 = vshrl.u32 %v478, 16
      %v643 = vrot.slane %v641, 7
      %v644 = vshll.u32 %v478, 16
      %v646 = vor.u32 %v643, %v644
      %v647 = vsel %vm495, %v639, %v646
      %v648 = vrot.slane %v643, 4
      %v650 = vshrl.u32 %v479, 16
      %v652 = vrot.slane %v650, 7
      %v653 = vshll.u32 %v479, 16
      %v655 = vor.u32 %v652, %v653
      %v656 = vrot.slane %v652, 4
      %v658 = vshrl.u32 %v480, 16
      %v660 = vrot.slane %v658, 7
      %v661 = vshll.u32 %v480, 16
      %v663 = vor.u32 %v660, %v661
      %v664 = vsel %vm495, %v656, %v663
      %v665 = vrot.slane %v660, 4
      %v667 = vshrl.u32 %v481, 16
      %v669 = vrot.slane %v667, 7
      %v670 = vshll.u32 %v481, 16
      %v672 = vor.u32 %v669, %v670
      %v673 = vrot.slane %v669, 4
      %v675 = vshrl.u32 %v482, 16
      %v677 = vrot.slane %v675, 7
      %v678 = vshll.u32 %v482, 16
      %v680 = vor.u32 %v677, %v678
      %v681 = vsel %vm495, %v673, %v680
      %v682 = vrot.slane %v677, 4
      %v684 = vshrl.u32 %v483, 16
      %v686 = vrot.slane %v684, 7
      %v687 = vshll.u32 %v483, 16
      %v689 = vor.u32 %v686, %v687
      %v690 = vrot.slane %v686, 4
      %v692 = vshrl.u32 %v484, 16
      %v694 = vrot.slane %v692, 7
      %v695 = vshll.u32 %v484, 16
      %v697 = vor.u32 %v694, %v695
      %v698 = vsel %vm495, %v690, %v697
      %v699 = vrot.slane %v694, 4
      %v701 = vshrl.u32 %v485, 16
      %v703 = vrot.slane %v701, 7
      %v704 = vshll.u32 %v485, 16
      %v706 = vor.u32 %v703, %v704
      %v707 = vrot.slane %v703, 4
      %v709 = vshrl.u32 %v486, 16
      %v711 = vrot.slane %v709, 7
      %v712 = vshll.u32 %v486, 16
      %v714 = vor.u32 %v711, %v712
      %v715 = vsel %vm495, %v707, %v714
      %v716 = vrot.slane %v711, 4
      %v718 = vshrl.u32 %v487, 16
      %v720 = vrot.slane %v718, 7
      %v721 = vshll.u32 %v487, 16
      %v723 = vor.u32 %v720, %v721
      %v724 = vrot.slane %v720, 4
      %v726 = vshrl.u32 %v488, 16
      %v728 = vrot.slane %v726, 7
      %v729 = vshll.u32 %v488, 16
      %v731 = vor.u32 %v728, %v729
      %v732 = vsel %vm495, %v724, %v731
      %v733 = vrot.slane %v728, 4
      %v735 = vshrl.u32 %v489, 16
      %v737 = vrot.slane %v735, 7
      %v738 = vshll.u32 %v489, 16
      %v740 = vor.u32 %v737, %v738
      %v741 = vrot.slane %v737, 4
      %v743 = vshrl.u32 %v490, 16
      %v745 = vrot.slane %v743, 7
      %v746 = vshll.u32 %v490, 16
      %v748 = vor.u32 %v745, %v746
      %v749 = vsel %vm495, %v741, %v748
      %v750 = vrot.slane %v745, 4
      %v752 = vshrl.u32 %v491, 16
      %v754 = vrot.slane %v752, 7
      %v755 = vshll.u32 %v491, 16
      %v757 = vor.u32 %v754, %v755
      %v758 = vrot.slane %v754, 4
      %v760 = vshrl.u32 %v492, 16
      %v762 = vrot.slane %v760, 7
      %v763 = vshll.u32 %v492, 16
      %v765 = vor.u32 %v762, %v763
      %v766 = vsel %vm495, %v758, %v765
      %v767 = vrot.slane %v762, 4
      %s816 = scalar_lea.vmem [#allocation2], 12
      %vm817 = vcmask 60416
      %vm818 = vsmask.f32 7938
      %vm819 = vmand %vm817, %vm818
      %v820 = vld [vmem:[%s816] sm:$0xf]
      %v821 = vsel %vm819, %v502, %v820
      %822 = vst [vmem:[%s816] sm:$0xf] %v821
      %823 = vst.msk [vmem:[%s816 + $0x4] sm:$0xf] %vm237, %v511
      %vm824 = vcmask 57344
      %vm825 = vmand %vm824, %vm493
      %v826 = vld [vmem:[%s816 + $0x8] sm:$0x1]
      %v827 = vsel %vm825, %v512, %v826
      %828 = vst [vmem:[%s816 + $0x8] sm:$0x1] %v827
      %v829 = vld [vmem:[%s816 + $0xc] sm:$0xf]
      %v830 = vsel %vm819, %v519, %v829
      %831 = vst [vmem:[%s816 + $0xc] sm:$0xf] %v830
      %832 = vst.msk [vmem:[%s816 + $0x10] sm:$0xf] %vm237, %v528
      %v833 = vld [vmem:[%s816 + $0x14] sm:$0x1]
      %v834 = vsel %vm825, %v529, %v833
      %835 = vst [vmem:[%s816 + $0x14] sm:$0x1] %v834
      %v836 = vld [vmem:[%s816 + $0x18] sm:$0xf]
      %v837 = vsel %vm819, %v536, %v836
      %838 = vst [vmem:[%s816 + $0x18] sm:$0xf] %v837
      %839 = vst.msk [vmem:[%s816 + $0x1c] sm:$0xf] %vm237, %v545
      %v840 = vld [vmem:[%s816 + $0x20] sm:$0x1]
      %v841 = vsel %vm825, %v546, %v840
      %842 = vst [vmem:[%s816 + $0x20] sm:$0x1] %v841
      %v843 = vld [vmem:[%s816 + $0x24] sm:$0xf]
      %v844 = vsel %vm819, %v553, %v843
      %845 = vst [vmem:[%s816 + $0x24] sm:$0xf] %v844
      %846 = vst.msk [vmem:[%s816 + $0x28] sm:$0xf] %vm237, %v562
      %v847 = vld [vmem:[%s816 + $0x2c] sm:$0x1]
      %v848 = vsel %vm825, %v563, %v847
      %849 = vst [vmem:[%s816 + $0x2c] sm:$0x1] %v848
      %v850 = vld [vmem:[%s816 + $0x30] sm:$0xf]
      %v851 = vsel %vm819, %v570, %v850
      %852 = vst [vmem:[%s816 + $0x30] sm:$0xf] %v851
      %853 = vst.msk [vmem:[%s816 + $0x34] sm:$0xf] %vm237, %v579
      %v854 = vld [vmem:[%s816 + $0x38] sm:$0x1]
      %v855 = vsel %vm825, %v580, %v854
      %856 = vst [vmem:[%s816 + $0x38] sm:$0x1] %v855
      %v857 = vld [vmem:[%s816 + $0x3c] sm:$0xf]
      %v858 = vsel %vm819, %v587, %v857
      %859 = vst [vmem:[%s816 + $0x3c] sm:$0xf] %v858
      %860 = vst.msk [vmem:[%s816 + $0x40] sm:$0xf] %vm237, %v596
      %v861 = vld [vmem:[%s816 + $0x44] sm:$0x1]
      %v862 = vsel %vm825, %v597, %v861
      %863 = vst [vmem:[%s816 + $0x44] sm:$0x1] %v862
      %v864 = vld [vmem:[%s816 + $0x48] sm:$0xf]
      %v865 = vsel %vm819, %v604, %v864
      %866 = vst [vmem:[%s816 + $0x48] sm:$0xf] %v865
      %867 = vst.msk [vmem:[%s816 + $0x4c] sm:$0xf] %vm237, %v613
      %v868 = vld [vmem:[%s816 + $0x50] sm:$0x1]
      %v869 = vsel %vm825, %v614, %v868
      %870 = vst [vmem:[%s816 + $0x50] sm:$0x1] %v869
      %v871 = vld [vmem:[%s816 + $0x54] sm:$0xf]
      %v872 = vsel %vm819, %v621, %v871
      %873 = vst [vmem:[%s816 + $0x54] sm:$0xf] %v872
      %874 = vst.msk [vmem:[%s816 + $0x58] sm:$0xf] %vm237, %v630
      %v875 = vld [vmem:[%s816 + $0x5c] sm:$0x1]
      %v876 = vsel %vm825, %v631, %v875
      %877 = vst [vmem:[%s816 + $0x5c] sm:$0x1] %v876
      %v878 = vld [vmem:[%s816 + $0x60] sm:$0xf]
      %v879 = vsel %vm819, %v638, %v878
      %880 = vst [vmem:[%s816 + $0x60] sm:$0xf] %v879
      %881 = vst.msk [vmem:[%s816 + $0x64] sm:$0xf] %vm237, %v647
      %v882 = vld [vmem:[%s816 + $0x68] sm:$0x1]
      %v883 = vsel %vm825, %v648, %v882
      %884 = vst [vmem:[%s816 + $0x68] sm:$0x1] %v883
      %v885 = vld [vmem:[%s816 + $0x6c] sm:$0xf]
      %v886 = vsel %vm819, %v655, %v885
      %887 = vst [vmem:[%s816 + $0x6c] sm:$0xf] %v886
      %888 = vst.msk [vmem:[%s816 + $0x70] sm:$0xf] %vm237, %v664
      %v889 = vld [vmem:[%s816 + $0x74] sm:$0x1]
      %v890 = vsel %vm825, %v665, %v889
      %891 = vst [vmem:[%s816 + $0x74] sm:$0x1] %v890
      %v892 = vld [vmem:[%s816 + $0x78] sm:$0xf]
      %v893 = vsel %vm819, %v672, %v892
      %894 = vst [vmem:[%s816 + $0x78] sm:$0xf] %v893
      %895 = vst.msk [vmem:[%s816 + $0x7c] sm:$0xf] %vm237, %v681
      %v896 = vld [vmem:[%s816 + $0x80] sm:$0x1]
      %v897 = vsel %vm825, %v682, %v896
      %898 = vst [vmem:[%s816 + $0x80] sm:$0x1] %v897
      %v899 = vld [vmem:[%s816 + $0x84] sm:$0xf]
      %v900 = vsel %vm819, %v689, %v899
      %901 = vst [vmem:[%s816 + $0x84] sm:$0xf] %v900
      %902 = vst.msk [vmem:[%s816 + $0x88] sm:$0xf] %vm237, %v698
      %v903 = vld [vmem:[%s816 + $0x8c] sm:$0x1]
      %v904 = vsel %vm825, %v699, %v903
      %905 = vst [vmem:[%s816 + $0x8c] sm:$0x1] %v904
      %v906 = vld [vmem:[%s816 + $0x90] sm:$0xf]
      %v907 = vsel %vm819, %v706, %v906
      %908 = vst [vmem:[%s816 + $0x90] sm:$0xf] %v907
      %909 = vst.msk [vmem:[%s816 + $0x94] sm:$0xf] %vm237, %v715
      %v910 = vld [vmem:[%s816 + $0x98] sm:$0x1]
      %v911 = vsel %vm825, %v716, %v910
      %912 = vst [vmem:[%s816 + $0x98] sm:$0x1] %v911
      %v913 = vld [vmem:[%s816 + $0x9c] sm:$0xf]
      %v914 = vsel %vm819, %v723, %v913
      %915 = vst [vmem:[%s816 + $0x9c] sm:$0xf] %v914
      %916 = vst.msk [vmem:[%s816 + $0xa0] sm:$0xf] %vm237, %v732
      %v917 = vld [vmem:[%s816 + $0xa4] sm:$0x1]
      %v918 = vsel %vm825, %v733, %v917
      %919 = vst [vmem:[%s816 + $0xa4] sm:$0x1] %v918
      %v920 = vld [vmem:[%s816 + $0xa8] sm:$0xf]
      %v921 = vsel %vm819, %v740, %v920
      %922 = vst [vmem:[%s816 + $0xa8] sm:$0xf] %v921
      %923 = vst.msk [vmem:[%s816 + $0xac] sm:$0xf] %vm237, %v749
      %v924 = vld [vmem:[%s816 + $0xb0] sm:$0x1]
      %v925 = vsel %vm825, %v750, %v924
      %926 = vst [vmem:[%s816 + $0xb0] sm:$0x1] %v925
      %v927 = vld [vmem:[%s816 + $0xb4] sm:$0xf]
      %v928 = vsel %vm819, %v757, %v927
      %929 = vst [vmem:[%s816 + $0xb4] sm:$0xf] %v928
      %930 = vst.msk [vmem:[%s816 + $0xb8] sm:$0xf] %vm237, %v766
      %v931 = vld [vmem:[%s816 + $0xbc] sm:$0x1]
      %v932 = vsel %vm825, %v767, %v931
      %933 = vst [vmem:[%s816 + $0xbc] sm:$0x1] %v932
      %v934 = vld [vmem:[#allocation2] sm:$0xf]
      %v935 = vld [vmem:[#allocation2 + $0x4] sm:$0xf]
      %v936 = vld [vmem:[#allocation2 + $0x8] sm:$0x1]
      %v937 = vld [vmem:[#allocation2 + $0xc] sm:$0xf]
      %v938 = vld [vmem:[#allocation2 + $0x10] sm:$0xf]
      %v939 = vld [vmem:[#allocation2 + $0x14] sm:$0x1]
      %v940 = vld [vmem:[#allocation2 + $0x18] sm:$0xf]
      %v941 = vld [vmem:[#allocation2 + $0x1c] sm:$0xf]
      %v942 = vld [vmem:[#allocation2 + $0x20] sm:$0x1]
      %v943 = vld [vmem:[#allocation2 + $0x24] sm:$0xf]
      %v944 = vld [vmem:[#allocation2 + $0x28] sm:$0xf]
      %v945 = vld [vmem:[#allocation2 + $0x2c] sm:$0x1]
      %v946 = vld [vmem:[#allocation2 + $0x30] sm:$0xf]
      %v947 = vld [vmem:[#allocation2 + $0x34] sm:$0xf]
      %v948 = vld [vmem:[#allocation2 + $0x38] sm:$0x1]
      %v949 = vld [vmem:[#allocation2 + $0x3c] sm:$0xf]
      %v950 = vld [vmem:[#allocation2 + $0x40] sm:$0xf]
      %v951 = vld [vmem:[#allocation2 + $0x44] sm:$0x1]
      %v952 = vld [vmem:[#allocation2 + $0x48] sm:$0xf]
      %v953 = vld [vmem:[#allocation2 + $0x4c] sm:$0xf]
      %v954 = vld [vmem:[#allocation2 + $0x50] sm:$0x1]
      %v955 = vld [vmem:[#allocation2 + $0x54] sm:$0xf]
      %v956 = vld [vmem:[#allocation2 + $0x58] sm:$0xf]
      %v957 = vld [vmem:[#allocation2 + $0x5c] sm:$0x1]
      %v958 = vld [vmem:[#allocation2 + $0x60] sm:$0xf]
      %v959 = vld [vmem:[#allocation2 + $0x64] sm:$0xf]
      %v960 = vld [vmem:[#allocation2 + $0x68] sm:$0x1]
      %v961 = vld [vmem:[#allocation2 + $0x6c] sm:$0xf]
      %v962 = vld [vmem:[#allocation2 + $0x70] sm:$0xf]
      %v963 = vld [vmem:[#allocation2 + $0x74] sm:$0x1]
      %v964 = vld [vmem:[#allocation2 + $0x78] sm:$0xf]
      %v965 = vld [vmem:[#allocation2 + $0x7c] sm:$0xf]
      %v966 = vld [vmem:[#allocation2 + $0x80] sm:$0x1]
      %v967 = vld [vmem:[#allocation2 + $0x84] sm:$0xf]
      %v968 = vld [vmem:[#allocation2 + $0x88] sm:$0xf]
      %v969 = vld [vmem:[#allocation2 + $0x8c] sm:$0x1]
      %v970 = vld [vmem:[#allocation2 + $0x90] sm:$0xf]
      %v971 = vld [vmem:[#allocation2 + $0x94] sm:$0xf]
      %v972 = vld [vmem:[#allocation2 + $0x98] sm:$0x1]
      %v973 = vld [vmem:[#allocation2 + $0x9c] sm:$0xf]
      %v974 = vld [vmem:[#allocation2 + $0xa0] sm:$0xf]
      %v975 = vld [vmem:[#allocation2 + $0xa4] sm:$0x1]
      %v976 = vld [vmem:[#allocation2 + $0xa8] sm:$0xf]
      %v977 = vld [vmem:[#allocation2 + $0xac] sm:$0xf]
      %v978 = vld [vmem:[#allocation2 + $0xb0] sm:$0x1]
      %v979 = vld [vmem:[#allocation2 + $0xb4] sm:$0xf]
      %v980 = vld [vmem:[#allocation2 + $0xb8] sm:$0xf]
      %v981 = vld [vmem:[#allocation2 + $0xbc] sm:$0x1]
      %v982 = vld [vmem:[#allocation2 + $0xc0] sm:$0xf]
      %v983 = vld [vmem:[#allocation2 + $0xc4] sm:$0xf]
      %v984 = vld [vmem:[#allocation2 + $0xc8] sm:$0x1]
      %v1009 = vrot.slane %v934, 3
      %v1010 = vrot.slane %v935, 3
      %v1011 = vrot.slane %v936, 3
      %v1012 = vrot.slane %v940, 3
      %v1013 = vrot.slane %v941, 3
      %v1014 = vrot.slane %v942, 3
      %v1015 = vrot.slane %v946, 3
      %v1016 = vrot.slane %v947, 3
      %v1017 = vrot.slane %v948, 3
      %v1018 = vrot.slane %v952, 3
      %v1019 = vrot.slane %v953, 3
      %v1020 = vrot.slane %v954, 3
      %v1021 = vrot.slane %v958, 3
      %v1022 = vrot.slane %v959, 3
      %v1023 = vrot.slane %v960, 3
      %v1024 = vrot.slane %v964, 3
      %v1025 = vrot.slane %v965, 3
      %v1026 = vrot.slane %v966, 3
      %v1027 = vrot.slane %v970, 3
      %v1028 = vrot.slane %v971, 3
      %v1029 = vrot.slane %v972, 3
      %v1030 = vrot.slane %v976, 3
      %v1031 = vrot.slane %v977, 3
      %v1032 = vrot.slane %v978, 3
      %vm1033 = vcmask 1040384
      %v1036 = vsel %vm1033, %v934, %v1009
      %vm1037 = vcmask 1041409
      %v1038 = vsel %vm1037, %v934, %v1009
      %v1040 = vrot.slane %v1038, 1
      %vm1041 = vcmask 1042434
      %v1042 = vsel %vm1041, %v934, %v1009
      %v1044 = vrot.slane %v1042, 2
      %vm1045 = vcmask 1043459
      %v1046 = vsel %vm1045, %v934, %v1009
      %v1048 = vrot.slane %v1046, 3
      %v1051 = vsel %vm1033, %v935, %v1010
      %v1052 = vsel %vm1037, %v935, %v1010
      %v1054 = vrot.slane %v1052, 1
      %v1055 = vsel %vm1041, %v935, %v1010
      %v1057 = vrot.slane %v1055, 2
      %v1058 = vsel %vm1045, %v935, %v1010
      %v1060 = vrot.slane %v1058, 3
      %v1063 = vsel %vm1033, %v936, %v1011
      %v1066 = vsel %vm1033, %v940, %v1012
      %v1067 = vsel %vm1037, %v940, %v1012
      %v1069 = vrot.slane %v1067, 1
      %v1070 = vsel %vm1041, %v940, %v1012
      %v1072 = vrot.slane %v1070, 2
      %v1073 = vsel %vm1045, %v940, %v1012
      %v1075 = vrot.slane %v1073, 3
      %v1078 = vsel %vm1033, %v941, %v1013
      %v1079 = vsel %vm1037, %v941, %v1013
      %v1081 = vrot.slane %v1079, 1
      %v1082 = vsel %vm1041, %v941, %v1013
      %v1084 = vrot.slane %v1082, 2
      %v1085 = vsel %vm1045, %v941, %v1013
      %v1087 = vrot.slane %v1085, 3
      %v1090 = vsel %vm1033, %v942, %v1014
      %v1093 = vsel %vm1033, %v946, %v1015
      %v1094 = vsel %vm1037, %v946, %v1015
      %v1096 = vrot.slane %v1094, 1
      %v1097 = vsel %vm1041, %v946, %v1015
      %v1099 = vrot.slane %v1097, 2
      %v1100 = vsel %vm1045, %v946, %v1015
      %v1102 = vrot.slane %v1100, 3
      %v1105 = vsel %vm1033, %v947, %v1016
      %v1106 = vsel %vm1037, %v947, %v1016
      %v1108 = vrot.slane %v1106, 1
      %v1109 = vsel %vm1041, %v947, %v1016
      %v1111 = vrot.slane %v1109, 2
      %v1112 = vsel %vm1045, %v947, %v1016
      %v1114 = vrot.slane %v1112, 3
      %v1117 = vsel %vm1033, %v948, %v1017
      %v1120 = vsel %vm1033, %v952, %v1018
      %v1121 = vsel %vm1037, %v952, %v1018
      %v1123 = vrot.slane %v1121, 1
      %v1124 = vsel %vm1041, %v952, %v1018
      %v1126 = vrot.slane %v1124, 2
      %v1127 = vsel %vm1045, %v952, %v1018
      %v1129 = vrot.slane %v1127, 3
      %v1132 = vsel %vm1033, %v953, %v1019
      %v1133 = vsel %vm1037, %v953, %v1019
      %v1135 = vrot.slane %v1133, 1
      %v1136 = vsel %vm1041, %v953, %v1019
      %v1138 = vrot.slane %v1136, 2
      %v1139 = vsel %vm1045, %v953, %v1019
      %v1141 = vrot.slane %v1139, 3
      %v1144 = vsel %vm1033, %v954, %v1020
      %v1147 = vsel %vm1033, %v958, %v1021
      %v1148 = vsel %vm1037, %v958, %v1021
      %v1150 = vrot.slane %v1148, 1
      %v1151 = vsel %vm1041, %v958, %v1021
      %v1153 = vrot.slane %v1151, 2
      %v1154 = vsel %vm1045, %v958, %v1021
      %v1156 = vrot.slane %v1154, 3
      %v1159 = vsel %vm1033, %v959, %v1022
      %v1160 = vsel %vm1037, %v959, %v1022
      %v1162 = vrot.slane %v1160, 1
      %v1163 = vsel %vm1041, %v959, %v1022
      %v1165 = vrot.slane %v1163, 2
      %v1166 = vsel %vm1045, %v959, %v1022
      %v1168 = vrot.slane %v1166, 3
      %v1171 = vsel %vm1033, %v960, %v1023
      %v1174 = vsel %vm1033, %v964, %v1024
      %v1175 = vsel %vm1037, %v964, %v1024
      %v1177 = vrot.slane %v1175, 1
      %v1178 = vsel %vm1041, %v964, %v1024
      %v1180 = vrot.slane %v1178, 2
      %v1181 = vsel %vm1045, %v964, %v1024
      %v1183 = vrot.slane %v1181, 3
      %v1186 = vsel %vm1033, %v965, %v1025
      %v1187 = vsel %vm1037, %v965, %v1025
      %v1189 = vrot.slane %v1187, 1
      %v1190 = vsel %vm1041, %v965, %v1025
      %v1192 = vrot.slane %v1190, 2
      %v1193 = vsel %vm1045, %v965, %v1025
      %v1195 = vrot.slane %v1193, 3
      %v1198 = vsel %vm1033, %v966, %v1026
      %v1201 = vsel %vm1033, %v970, %v1027
      %v1202 = vsel %vm1037, %v970, %v1027
      %v1204 = vrot.slane %v1202, 1
      %v1205 = vsel %vm1041, %v970, %v1027
      %v1207 = vrot.slane %v1205, 2
      %v1208 = vsel %vm1045, %v970, %v1027
      %v1210 = vrot.slane %v1208, 3
      %v1213 = vsel %vm1033, %v971, %v1028
      %v1214 = vsel %vm1037, %v971, %v1028
      %v1216 = vrot.slane %v1214, 1
      %v1217 = vsel %vm1041, %v971, %v1028
      %v1219 = vrot.slane %v1217, 2
      %v1220 = vsel %vm1045, %v971, %v1028
      %v1222 = vrot.slane %v1220, 3
      %v1225 = vsel %vm1033, %v972, %v1029
      %v1228 = vsel %vm1033, %v976, %v1030
      %v1229 = vsel %vm1037, %v976, %v1030
      %v1231 = vrot.slane %v1229, 1
      %v1232 = vsel %vm1041, %v976, %v1030
      %v1234 = vrot.slane %v1232, 2
      %v1235 = vsel %vm1045, %v976, %v1030
      %v1237 = vrot.slane %v1235, 3
      %v1240 = vsel %vm1033, %v977, %v1031
      %v1241 = vsel %vm1037, %v977, %v1031
      %v1243 = vrot.slane %v1241, 1
      %v1244 = vsel %vm1041, %v977, %v1031
      %v1246 = vrot.slane %v1244, 2
      %v1247 = vsel %vm1045, %v977, %v1031
      %v1249 = vrot.slane %v1247, 3
      %v1252 = vsel %vm1033, %v978, %v1032
      %v1253 = vld [vmem:[%s3] sm:$0xf]
      %s1254 = scalar_lea.vmem %s3, 4
      %v1255 = vld [vmem:[%s1254] sm:$0xf]
      %1256 = vst [vmem:[#allocation1] ss:$9 sm:$0xff] %v1036
      %v1257 = vld [vmem:[#allocation1] sm:$0xff]
      %1260 = vst [vmem:[#allocation1] ss:$9 sm:$0xff] %v1040
      %v1261 = vld [vmem:[#allocation1] sm:$0xff]
      %1264 = vst [vmem:[#allocation1] ss:$9 sm:$0xff] %v1044
      %v1265 = vld [vmem:[#allocation1] sm:$0xff]
      %1268 = vst [vmem:[#allocation1] ss:$9 sm:$0xff] %v1048
      %v1269 = vld [vmem:[#allocation1] sm:$0xff]
      %1271 = vst [vmem:[#allocation1] ss:$9 sm:$0xff] %v1051
      %v1272 = vld [vmem:[#allocation1] sm:$0xff]
      %1275 = vst [vmem:[#allocation1] ss:$9 sm:$0xff] %v1054
      %v1276 = vld [vmem:[#allocation1] sm:$0xff]
      %1279 = vst [vmem:[#allocation1] ss:$9 sm:$0xff] %v1057
      %v1280 = vld [vmem:[#allocation1] sm:$0xff]
      %1283 = vst [vmem:[#allocation1] ss:$9 sm:$0xff] %v1060
      %v1284 = vld [vmem:[#allocation1] sm:$0xff]
      %1286 = vst [vmem:[#allocation1] ss:$9 sm:$0xff] %v1066
      %v1287 = vld [vmem:[#allocation1] sm:$0xff]
      %1290 = vst [vmem:[#allocation1] ss:$9 sm:$0xff] %v1069
      %v1291 = vld [vmem:[#allocation1] sm:$0xff]
      %1294 = vst [vmem:[#allocation1] ss:$9 sm:$0xff] %v1072
      %v1295 = vld [vmem:[#allocation1] sm:$0xff]
      %1298 = vst [vmem:[#allocation1] ss:$9 sm:$0xff] %v1075
      %v1299 = vld [vmem:[#allocation1] sm:$0xff]
      %1301 = vst [vmem:[#allocation1] ss:$9 sm:$0xff] %v1078
      %v1302 = vld [vmem:[#allocation1] sm:$0xff]
      %1305 = vst [vmem:[#allocation1] ss:$9 sm:$0xff] %v1081
      %v1306 = vld [vmem:[#allocation1] sm:$0xff]
      %1309 = vst [vmem:[#allocation1] ss:$9 sm:$0xff] %v1084
      %v1310 = vld [vmem:[#allocation1] sm:$0xff]
      %1313 = vst [vmem:[#allocation1] ss:$9 sm:$0xff] %v1087
      %v1314 = vld [vmem:[#allocation1] sm:$0xff]
      %1316 = vst [vmem:[#allocation1] ss:$9 sm:$0xff] %v1093
      %v1317 = vld [vmem:[#allocation1] sm:$0xff]
      %1320 = vst [vmem:[#allocation1] ss:$9 sm:$0xff] %v1096
      %v1321 = vld [vmem:[#allocation1] sm:$0xff]
      %1324 = vst [vmem:[#allocation1] ss:$9 sm:$0xff] %v1099
      %v1325 = vld [vmem:[#allocation1] sm:$0xff]
      %1328 = vst [vmem:[#allocation1] ss:$9 sm:$0xff] %v1102
      %v1329 = vld [vmem:[#allocation1] sm:$0xff]
      %1331 = vst [vmem:[#allocation1] ss:$9 sm:$0xff] %v1105
      %v1332 = vld [vmem:[#allocation1] sm:$0xff]
      %1335 = vst [vmem:[#allocation1] ss:$9 sm:$0xff] %v1108
      %v1336 = vld [vmem:[#allocation1] sm:$0xff]
      %1339 = vst [vmem:[#allocation1] ss:$9 sm:$0xff] %v1111
      %v1340 = vld [vmem:[#allocation1] sm:$0xff]
      %1343 = vst [vmem:[#allocation1] ss:$9 sm:$0xff] %v1114
      %v1344 = vld [vmem:[#allocation1] sm:$0xff]
      %1346 = vst [vmem:[#allocation1] ss:$9 sm:$0xff] %v1120
      %v1347 = vld [vmem:[#allocation1] sm:$0xff]
      %1350 = vst [vmem:[#allocation1] ss:$9 sm:$0xff] %v1123
      %v1351 = vld [vmem:[#allocation1] sm:$0xff]
      %1354 = vst [vmem:[#allocation1] ss:$9 sm:$0xff] %v1126
      %v1355 = vld [vmem:[#allocation1] sm:$0xff]
      %1358 = vst [vmem:[#allocation1] ss:$9 sm:$0xff] %v1129
      %v1359 = vld [vmem:[#allocation1] sm:$0xff]
      %1361 = vst [vmem:[#allocation1] ss:$9 sm:$0xff] %v1132
      %v1362 = vld [vmem:[#allocation1] sm:$0xff]
      %1365 = vst [vmem:[#allocation1] ss:$9 sm:$0xff] %v1135
      %v1366 = vld [vmem:[#allocation1] sm:$0xff]
      %1369 = vst [vmem:[#allocation1] ss:$9 sm:$0xff] %v1138
      %v1370 = vld [vmem:[#allocation1] sm:$0xff]
      %1373 = vst [vmem:[#allocation1] ss:$9 sm:$0xff] %v1141
      %v1374 = vld [vmem:[#allocation1] sm:$0xff]
      %1376 = vst [vmem:[#allocation1] ss:$9 sm:$0xff] %v1147
      %v1377 = vld [vmem:[#allocation1] sm:$0xff]
      %1380 = vst [vmem:[#allocation1] ss:$9 sm:$0xff] %v1150
      %v1381 = vld [vmem:[#allocation1] sm:$0xff]
      %1384 = vst [vmem:[#allocation1] ss:$9 sm:$0xff] %v1153
      %v1385 = vld [vmem:[#allocation1] sm:$0xff]
      %1388 = vst [vmem:[#allocation1] ss:$9 sm:$0xff] %v1156
      %v1389 = vld [vmem:[#allocation1] sm:$0xff]
      %1391 = vst [vmem:[#allocation1] ss:$9 sm:$0xff] %v1159
      %v1392 = vld [vmem:[#allocation1] sm:$0xff]
      %1395 = vst [vmem:[#allocation1] ss:$9 sm:$0xff] %v1162
      %v1396 = vld [vmem:[#allocation1] sm:$0xff]
      %1399 = vst [vmem:[#allocation1] ss:$9 sm:$0xff] %v1165
      %v1400 = vld [vmem:[#allocation1] sm:$0xff]
      %1403 = vst [vmem:[#allocation1] ss:$9 sm:$0xff] %v1168
      %v1404 = vld [vmem:[#allocation1] sm:$0xff]
      %1406 = vst [vmem:[#allocation1] ss:$9 sm:$0xff] %v1174
      %v1407 = vld [vmem:[#allocation1] sm:$0xff]
      %1410 = vst [vmem:[#allocation1] ss:$9 sm:$0xff] %v1177
      %v1411 = vld [vmem:[#allocation1] sm:$0xff]
      %1414 = vst [vmem:[#allocation1] ss:$9 sm:$0xff] %v1180
      %v1415 = vld [vmem:[#allocation1] sm:$0xff]
      %1418 = vst [vmem:[#allocation1] ss:$9 sm:$0xff] %v1183
      %v1419 = vld [vmem:[#allocation1] sm:$0xff]
      %1421 = vst [vmem:[#allocation1] ss:$9 sm:$0xff] %v1186
      %v1422 = vld [vmem:[#allocation1] sm:$0xff]
      %1425 = vst [vmem:[#allocation1] ss:$9 sm:$0xff] %v1189
      %v1426 = vld [vmem:[#allocation1] sm:$0xff]
      %1429 = vst [vmem:[#allocation1] ss:$9 sm:$0xff] %v1192
      %v1430 = vld [vmem:[#allocation1] sm:$0xff]
      %1433 = vst [vmem:[#allocation1] ss:$9 sm:$0xff] %v1195
      %v1434 = vld [vmem:[#allocation1] sm:$0xff]
      %1436 = vst [vmem:[#allocation1] ss:$9 sm:$0xff] %v1201
      %v1437 = vld [vmem:[#allocation1] sm:$0xff]
      %1440 = vst [vmem:[#allocation1] ss:$9 sm:$0xff] %v1204
      %v1441 = vld [vmem:[#allocation1] sm:$0xff]
      %1444 = vst [vmem:[#allocation1] ss:$9 sm:$0xff] %v1207
      %v1445 = vld [vmem:[#allocation1] sm:$0xff]
      %1448 = vst [vmem:[#allocation1] ss:$9 sm:$0xff] %v1210
      %v1449 = vld [vmem:[#allocation1] sm:$0xff]
      %1451 = vst [vmem:[#allocation1] ss:$9 sm:$0xff] %v1213
      %v1452 = vld [vmem:[#allocation1] sm:$0xff]
      %1455 = vst [vmem:[#allocation1] ss:$9 sm:$0xff] %v1216
      %v1456 = vld [vmem:[#allocation1] sm:$0xff]
      %1459 = vst [vmem:[#allocation1] ss:$9 sm:$0xff] %v1219
      %v1460 = vld [vmem:[#allocation1] sm:$0xff]
      %1463 = vst [vmem:[#allocation1] ss:$9 sm:$0xff] %v1222
      %v1464 = vld [vmem:[#allocation1] sm:$0xff]
      %1466 = vst [vmem:[#allocation1] ss:$9 sm:$0xff] %v1228
      %v1467 = vld [vmem:[#allocation1] sm:$0xff]
      %1470 = vst [vmem:[#allocation1] ss:$9 sm:$0xff] %v1231
      %v1471 = vld [vmem:[#allocation1] sm:$0xff]
      %1474 = vst [vmem:[#allocation1] ss:$9 sm:$0xff] %v1234
      %v1475 = vld [vmem:[#allocation1] sm:$0xff]
      %1478 = vst [vmem:[#allocation1] ss:$9 sm:$0xff] %v1237
      %v1479 = vld [vmem:[#allocation1] sm:$0xff]
      %1481 = vst [vmem:[#allocation1] ss:$9 sm:$0xff] %v1240
      %v1482 = vld [vmem:[#allocation1] sm:$0xff]
      %1485 = vst [vmem:[#allocation1] ss:$9 sm:$0xff] %v1243
      %v1486 = vld [vmem:[#allocation1] sm:$0xff]
      %1489 = vst [vmem:[#allocation1] ss:$9 sm:$0xff] %v1246
      %v1490 = vld [vmem:[#allocation1] sm:$0xff]
      %1493 = vst [vmem:[#allocation1] ss:$9 sm:$0xff] %v1249
      %v1494 = vld [vmem:[#allocation1] sm:$0xff]
      %v1496 = vunpack.c.l.b16 %v1257
      %v1497 = vunpack.c.l.b16 %v1261
      %v1498 = vunpack.c.l.b16 %v1265
      %v1499 = vunpack.c.l.b16 %v1269
      %v1500 = vunpack.c.l.b16 %v1272
      %v1501 = vunpack.c.l.b16 %v1276
      %v1502 = vunpack.c.l.b16 %v1280
      %v1503 = vunpack.c.l.b16 %v1284
      %v1504 = vunpack.c.l.b16 %v1287
      %v1505 = vunpack.c.l.b16 %v1291
      %v1506 = vunpack.c.l.b16 %v1295
      %v1507 = vunpack.c.l.b16 %v1299
      %v1508 = vunpack.c.l.b16 %v1302
      %v1509 = vunpack.c.l.b16 %v1306
      %v1510 = vunpack.c.l.b16 %v1310
      %v1511 = vunpack.c.l.b16 %v1314
      %v1512 = vunpack.c.l.b16 %v1317
      %v1513 = vunpack.c.l.b16 %v1321
      %v1514 = vunpack.c.l.b16 %v1325
      %v1515 = vunpack.c.l.b16 %v1329
      %v1516 = vunpack.c.l.b16 %v1332
      %v1517 = vunpack.c.l.b16 %v1336
      %v1518 = vunpack.c.l.b16 %v1340
      %v1519 = vunpack.c.l.b16 %v1344
      %v1520 = vunpack.c.l.b16 %v1347
      %v1521 = vunpack.c.l.b16 %v1351
      %v1522 = vunpack.c.l.b16 %v1355
      %v1523 = vunpack.c.l.b16 %v1359
      %v1524 = vunpack.c.l.b16 %v1362
      %v1525 = vunpack.c.l.b16 %v1366
      %v1526 = vunpack.c.l.b16 %v1370
      %v1527 = vunpack.c.l.b16 %v1374
      %v1528 = vunpack.c.l.b16 %v1377
      %v1529 = vunpack.c.l.b16 %v1381
      %v1530 = vunpack.c.l.b16 %v1385
      %v1531 = vunpack.c.l.b16 %v1389
      %v1532 = vunpack.c.l.b16 %v1392
      %v1533 = vunpack.c.l.b16 %v1396
      %v1534 = vunpack.c.l.b16 %v1400
      %v1535 = vunpack.c.l.b16 %v1404
      %v1536 = vunpack.c.l.b16 %v1407
      %v1537 = vunpack.c.l.b16 %v1411
      %v1538 = vunpack.c.l.b16 %v1415
      %v1539 = vunpack.c.l.b16 %v1419
      %v1540 = vunpack.c.l.b16 %v1422
      %v1541 = vunpack.c.l.b16 %v1426
      %v1542 = vunpack.c.l.b16 %v1430
      %v1543 = vunpack.c.l.b16 %v1434
      %v1544 = vunpack.c.l.b16 %v1437
      %v1545 = vunpack.c.l.b16 %v1441
      %v1546 = vunpack.c.l.b16 %v1445
      %v1547 = vunpack.c.l.b16 %v1449
      %v1548 = vunpack.c.l.b16 %v1452
      %v1549 = vunpack.c.l.b16 %v1456
      %v1550 = vunpack.c.l.b16 %v1460
      %v1551 = vunpack.c.l.b16 %v1464
      %v1552 = vunpack.c.l.b16 %v1467
      %v1553 = vunpack.c.l.b16 %v1471
      %v1554 = vunpack.c.l.b16 %v1475
      %v1555 = vunpack.c.l.b16 %v1479
      %v1556 = vunpack.c.l.b16 %v1482
      %v1557 = vunpack.c.l.b16 %v1486
      %v1558 = vunpack.c.l.b16 %v1490
      %v1559 = vunpack.c.l.b16 %v1494
      %v1560 = vrot.slane %v1496, 1
      %v1561 = vsel %vm1037, %v1497, %v1560
      %v1562 = vrot.slane %v1498, 7
      %v1563 = vsel %vm1041, %v1562, %v1561
      %v1564 = vrot.slane %v1499, 6
      %v1565 = vsel %vm1045, %v1564, %v1563
      %v1566 = vrot.slane %v1500, 5
      %vm1567 = vcmask 1044484
      %v1568 = vsel %vm1567, %v1566, %v1565
      %v1569 = vrot.slane %v1501, 4
      %vm1570 = vcmask 1045509
      %v1571 = vsel %vm1570, %v1569, %v1568
      %v1572 = vrot.slane %v1502, 3
      %vm1573 = vcmask 1046534
      %v1574 = vsel %vm1573, %v1572, %v1571
      %v1575 = vrot.slane %v1503, 2
      %vm1576 = vcmask 1047559
      %v1577 = vsel %vm1576, %v1575, %v1574
      %v1578 = vrot.slane %v1504, 1
      %v1579 = vsel %vm1037, %v1505, %v1578
      %v1580 = vrot.slane %v1506, 7
      %v1581 = vsel %vm1041, %v1580, %v1579
      %v1582 = vrot.slane %v1507, 6
      %v1583 = vsel %vm1045, %v1582, %v1581
      %v1584 = vrot.slane %v1508, 5
      %v1585 = vsel %vm1567, %v1584, %v1583
      %v1586 = vrot.slane %v1509, 4
      %v1587 = vsel %vm1570, %v1586, %v1585
      %v1588 = vrot.slane %v1510, 3
      %v1589 = vsel %vm1573, %v1588, %v1587
      %v1590 = vrot.slane %v1511, 2
      %v1591 = vsel %vm1576, %v1590, %v1589
      %v1592 = vrot.slane %v1512, 1
      %v1593 = vsel %vm1037, %v1513, %v1592
      %v1594 = vrot.slane %v1514, 7
      %v1595 = vsel %vm1041, %v1594, %v1593
      %v1596 = vrot.slane %v1515, 6
      %v1597 = vsel %vm1045, %v1596, %v1595
      %v1598 = vrot.slane %v1516, 5
      %v1599 = vsel %vm1567, %v1598, %v1597
      %v1600 = vrot.slane %v1517, 4
      %v1601 = vsel %vm1570, %v1600, %v1599
      %v1602 = vrot.slane %v1518, 3
      %v1603 = vsel %vm1573, %v1602, %v1601
      %v1604 = vrot.slane %v1519, 2
      %v1605 = vsel %vm1576, %v1604, %v1603
      %v1606 = vrot.slane %v1520, 1
      %v1607 = vsel %vm1037, %v1521, %v1606
      %v1608 = vrot.slane %v1522, 7
      %v1609 = vsel %vm1041, %v1608, %v1607
      %v1610 = vrot.slane %v1523, 6
      %v1611 = vsel %vm1045, %v1610, %v1609
      %v1612 = vrot.slane %v1524, 5
      %v1613 = vsel %vm1567, %v1612, %v1611
      %v1614 = vrot.slane %v1525, 4
      %v1615 = vsel %vm1570, %v1614, %v1613
      %v1616 = vrot.slane %v1526, 3
      %v1617 = vsel %vm1573, %v1616, %v1615
      %v1618 = vrot.slane %v1527, 2
      %v1619 = vsel %vm1576, %v1618, %v1617
      %v1620 = vrot.slane %v1528, 1
      %v1621 = vsel %vm1037, %v1529, %v1620
      %v1622 = vrot.slane %v1530, 7
      %v1623 = vsel %vm1041, %v1622, %v1621
      %v1624 = vrot.slane %v1531, 6
      %v1625 = vsel %vm1045, %v1624, %v1623
      %v1626 = vrot.slane %v1532, 5
      %v1627 = vsel %vm1567, %v1626, %v1625
      %v1628 = vrot.slane %v1533, 4
      %v1629 = vsel %vm1570, %v1628, %v1627
      %v1630 = vrot.slane %v1534, 3
      %v1631 = vsel %vm1573, %v1630, %v1629
      %v1632 = vrot.slane %v1535, 2
      %v1633 = vsel %vm1576, %v1632, %v1631
      %v1634 = vrot.slane %v1536, 1
      %v1635 = vsel %vm1037, %v1537, %v1634
      %v1636 = vrot.slane %v1538, 7
      %v1637 = vsel %vm1041, %v1636, %v1635
      %v1638 = vrot.slane %v1539, 6
      %v1639 = vsel %vm1045, %v1638, %v1637
      %v1640 = vrot.slane %v1540, 5
      %v1641 = vsel %vm1567, %v1640, %v1639
      %v1642 = vrot.slane %v1541, 4
      %v1643 = vsel %vm1570, %v1642, %v1641
      %v1644 = vrot.slane %v1542, 3
      %v1645 = vsel %vm1573, %v1644, %v1643
      %v1646 = vrot.slane %v1543, 2
      %v1647 = vsel %vm1576, %v1646, %v1645
      %v1648 = vrot.slane %v1544, 1
      %v1649 = vsel %vm1037, %v1545, %v1648
      %v1650 = vrot.slane %v1546, 7
      %v1651 = vsel %vm1041, %v1650, %v1649
      %v1652 = vrot.slane %v1547, 6
      %v1653 = vsel %vm1045, %v1652, %v1651
      %v1654 = vrot.slane %v1548, 5
      %v1655 = vsel %vm1567, %v1654, %v1653
      %v1656 = vrot.slane %v1549, 4
      %v1657 = vsel %vm1570, %v1656, %v1655
      %v1658 = vrot.slane %v1550, 3
      %v1659 = vsel %vm1573, %v1658, %v1657
      %v1660 = vrot.slane %v1551, 2
      %v1661 = vsel %vm1576, %v1660, %v1659
      %v1662 = vrot.slane %v1552, 1
      %v1663 = vsel %vm1037, %v1553, %v1662
      %v1664 = vrot.slane %v1554, 7
      %v1665 = vsel %vm1041, %v1664, %v1663
      %v1666 = vrot.slane %v1555, 6
      %v1667 = vsel %vm1045, %v1666, %v1665
      %v1668 = vrot.slane %v1556, 5
      %v1669 = vsel %vm1567, %v1668, %v1667
      %v1670 = vrot.slane %v1557, 4
      %v1671 = vsel %vm1570, %v1670, %v1669
      %v1672 = vrot.slane %v1558, 3
      %v1673 = vsel %vm1573, %v1672, %v1671
      %v1674 = vrot.slane %v1559, 2
      %v1675 = vsel %vm1576, %v1674, %v1673
      %v1676 = vpack.c.b16 %v1591, %v1577
      %v1677 = vpack.c.b16 %v1619, %v1605
      %v1678 = vpack.c.b16 %v1647, %v1633
      %v1679 = vpack.c.b16 %v1675, %v1661
      %vm1680 = vcmask 64512
      %v1682 = vsel %vm1680, %v1676, 0
      %v1685 = vsel %vm1680, %v1677, 0
      %v1688 = vsel %vm1680, %v1678, 0
      %v1691 = vsel %vm1680, %v1679, 0
      %vm1693 = vcmask 1043456
      %v1695 = vsel %vm1693, %v1255, 0
      %1697 = vmatpush.bf16.msra.mxu0 0
      %1698 = vmatpush.bf16.msra.mxu0 0
      %1699 = vmatpush.bf16.msra.mxu0 0
      %1700 = vmatpush.bf16.msra.mxu0 0
      %1701 = vmatpush.bf16.msra.mxu0 0
      %1702 = vmatpush.bf16.msra.mxu0 0
      %1703 = vmatpush.bf16.msra.mxu0 0
      %1704 = vmatpush.bf16.msra.mxu0 %v1695
      %1705 = vmatmul.bf16.gmra.mxu0 %v1682
      %v1706 = vpop.f32.mrf.mxu0
      %v1707 = vadd.f32 0.0, %v1706
      %v1708 = vpop.f32.mrf.mxu0
      %v1709 = vadd.f32 0.0, %v1708
      %1710 = vmatmul.bf16.gmra.mxu0 %v1685
      %v1711 = vpop.f32.mrf.mxu0
      %v1712 = vadd.f32 0.0, %v1711
      %v1713 = vpop.f32.mrf.mxu0
      %v1714 = vadd.f32 0.0, %v1713
      %1715 = vmatmul.bf16.gmra.mxu0 %v1688
      %v1716 = vpop.f32.mrf.mxu0
      %v1717 = vadd.f32 0.0, %v1716
      %v1718 = vpop.f32.mrf.mxu0
      %v1719 = vadd.f32 0.0, %v1718
      %1720 = vmatmul.bf16.gmra.mxu0 %v1691
      %v1721 = vpop.f32.mrf.mxu0
      %v1722 = vadd.f32 0.0, %v1721
      %v1723 = vpop.f32.mrf.mxu0
      %v1724 = vadd.f32 0.0, %v1723
      %1725 = vdwg.mxu0
      %1726 = vst [vmem:[#allocation1] ss:$9 sm:$0xff] %v1036
      %v1727 = vld [vmem:[#allocation1] sm:$0xff]
      %1729 = vst [vmem:[#allocation1] ss:$9 sm:$0xff] %v1040
      %v1730 = vld [vmem:[#allocation1] sm:$0xff]
      %1732 = vst [vmem:[#allocation1] ss:$9 sm:$0xff] %v1044
      %v1733 = vld [vmem:[#allocation1] sm:$0xff]
      %1735 = vst [vmem:[#allocation1] ss:$9 sm:$0xff] %v1048
      %v1736 = vld [vmem:[#allocation1] sm:$0xff]
      %1738 = vst [vmem:[#allocation1] ss:$9 sm:$0xff] %v1051
      %v1739 = vld [vmem:[#allocation1] sm:$0xff]
      %1741 = vst [vmem:[#allocation1] ss:$9 sm:$0xff] %v1054
      %v1742 = vld [vmem:[#allocation1] sm:$0xff]
      %1744 = vst [vmem:[#allocation1] ss:$9 sm:$0xff] %v1057
      %v1745 = vld [vmem:[#allocation1] sm:$0xff]
      %1747 = vst [vmem:[#allocation1] ss:$9 sm:$0xff] %v1060
      %v1748 = vld [vmem:[#allocation1] sm:$0xff]
      %1750 = vst [vmem:[#allocation1] ss:$9 sm:$0xff] %v1066
      %v1751 = vld [vmem:[#allocation1] sm:$0xff]
      %1753 = vst [vmem:[#allocation1] ss:$9 sm:$0xff] %v1069
      %v1754 = vld [vmem:[#allocation1] sm:$0xff]
      %1756 = vst [vmem:[#allocation1] ss:$9 sm:$0xff] %v1072
      %v1757 = vld [vmem:[#allocation1] sm:$0xff]
      %1759 = vst [vmem:[#allocation1] ss:$9 sm:$0xff] %v1075
      %v1760 = vld [vmem:[#allocation1] sm:$0xff]
      %1762 = vst [vmem:[#allocation1] ss:$9 sm:$0xff] %v1078
      %v1763 = vld [vmem:[#allocation1] sm:$0xff]
      %1765 = vst [vmem:[#allocation1] ss:$9 sm:$0xff] %v1081
      %v1766 = vld [vmem:[#allocation1] sm:$0xff]
      %1768 = vst [vmem:[#allocation1] ss:$9 sm:$0xff] %v1084
      %v1769 = vld [vmem:[#allocation1] sm:$0xff]
      %1771 = vst [vmem:[#allocation1] ss:$9 sm:$0xff] %v1087
      %v1772 = vld [vmem:[#allocation1] sm:$0xff]
      %1774 = vst [vmem:[#allocation1] ss:$9 sm:$0xff] %v1093
      %v1775 = vld [vmem:[#allocation1] sm:$0xff]
      %1777 = vst [vmem:[#allocation1] ss:$9 sm:$0xff] %v1096
      %v1778 = vld [vmem:[#allocation1] sm:$0xff]
      %1780 = vst [vmem:[#allocation1] ss:$9 sm:$0xff] %v1099
      %v1781 = vld [vmem:[#allocation1] sm:$0xff]
      %1783 = vst [vmem:[#allocation1] ss:$9 sm:$0xff] %v1102
      %v1784 = vld [vmem:[#allocation1] sm:$0xff]
      %1786 = vst [vmem:[#allocation1] ss:$9 sm:$0xff] %v1105
      %v1787 = vld [vmem:[#allocation1] sm:$0xff]
      %1789 = vst [vmem:[#allocation1] ss:$9 sm:$0xff] %v1108
      %v1790 = vld [vmem:[#allocation1] sm:$0xff]
      %1792 = vst [vmem:[#allocation1] ss:$9 sm:$0xff] %v1111
      %v1793 = vld [vmem:[#allocation1] sm:$0xff]
      %1795 = vst [vmem:[#allocation1] ss:$9 sm:$0xff] %v1114
      %v1796 = vld [vmem:[#allocation1] sm:$0xff]
      %1798 = vst [vmem:[#allocation1] ss:$9 sm:$0xff] %v1120
      %v1799 = vld [vmem:[#allocation1] sm:$0xff]
      %1801 = vst [vmem:[#allocation1] ss:$9 sm:$0xff] %v1123
      %v1802 = vld [vmem:[#allocation1] sm:$0xff]
      %1804 = vst [vmem:[#allocation1] ss:$9 sm:$0xff] %v1126
      %v1805 = vld [vmem:[#allocation1] sm:$0xff]
      %1807 = vst [vmem:[#allocation1] ss:$9 sm:$0xff] %v1129
      %v1808 = vld [vmem:[#allocation1] sm:$0xff]
      %1810 = vst [vmem:[#allocation1] ss:$9 sm:$0xff] %v1132
      %v1811 = vld [vmem:[#allocation1] sm:$0xff]
      %1813 = vst [vmem:[#allocation1] ss:$9 sm:$0xff] %v1135
      %v1814 = vld [vmem:[#allocation1] sm:$0xff]
      %1816 = vst [vmem:[#allocation1] ss:$9 sm:$0xff] %v1138
      %v1817 = vld [vmem:[#allocation1] sm:$0xff]
      %1819 = vst [vmem:[#allocation1] ss:$9 sm:$0xff] %v1141
      %v1820 = vld [vmem:[#allocation1] sm:$0xff]
      %1822 = vst [vmem:[#allocation1] ss:$9 sm:$0xff] %v1147
      %v1823 = vld [vmem:[#allocation1] sm:$0xff]
      %1825 = vst [vmem:[#allocation1] ss:$9 sm:$0xff] %v1150
      %v1826 = vld [vmem:[#allocation1] sm:$0xff]
      %1828 = vst [vmem:[#allocation1] ss:$9 sm:$0xff] %v1153
      %v1829 = vld [vmem:[#allocation1] sm:$0xff]
      %1831 = vst [vmem:[#allocation1] ss:$9 sm:$0xff] %v1156
      %v1832 = vld [vmem:[#allocation1] sm:$0xff]
      %1834 = vst [vmem:[#allocation1] ss:$9 sm:$0xff] %v1159
      %v1835 = vld [vmem:[#allocation1] sm:$0xff]
      %1837 = vst [vmem:[#allocation1] ss:$9 sm:$0xff] %v1162
      %v1838 = vld [vmem:[#allocation1] sm:$0xff]
      %1840 = vst [vmem:[#allocation1] ss:$9 sm:$0xff] %v1165
      %v1841 = vld [vmem:[#allocation1] sm:$0xff]
      %1843 = vst [vmem:[#allocation1] ss:$9 sm:$0xff] %v1168
      %v1844 = vld [vmem:[#allocation1] sm:$0xff]
      %1846 = vst [vmem:[#allocation1] ss:$9 sm:$0xff] %v1174
      %v1847 = vld [vmem:[#allocation1] sm:$0xff]
      %1849 = vst [vmem:[#allocation1] ss:$9 sm:$0xff] %v1177
      %v1850 = vld [vmem:[#allocation1] sm:$0xff]
      %1852 = vst [vmem:[#allocation1] ss:$9 sm:$0xff] %v1180
      %v1853 = vld [vmem:[#allocation1] sm:$0xff]
      %1855 = vst [vmem:[#allocation1] ss:$9 sm:$0xff] %v1183
      %v1856 = vld [vmem:[#allocation1] sm:$0xff]
      %1858 = vst [vmem:[#allocation1] ss:$9 sm:$0xff] %v1186
      %v1859 = vld [vmem:[#allocation1] sm:$0xff]
      %1861 = vst [vmem:[#allocation1] ss:$9 sm:$0xff] %v1189
      %v1862 = vld [vmem:[#allocation1] sm:$0xff]
      %1864 = vst [vmem:[#allocation1] ss:$9 sm:$0xff] %v1192
      %v1865 = vld [vmem:[#allocation1] sm:$0xff]
      %1867 = vst [vmem:[#allocation1] ss:$9 sm:$0xff] %v1195
      %v1868 = vld [vmem:[#allocation1] sm:$0xff]
      %1870 = vst [vmem:[#allocation1] ss:$9 sm:$0xff] %v1201
      %v1871 = vld [vmem:[#allocation1] sm:$0xff]
      %1873 = vst [vmem:[#allocation1] ss:$9 sm:$0xff] %v1204
      %v1874 = vld [vmem:[#allocation1] sm:$0xff]
      %1876 = vst [vmem:[#allocation1] ss:$9 sm:$0xff] %v1207
      %v1877 = vld [vmem:[#allocation1] sm:$0xff]
      %1879 = vst [vmem:[#allocation1] ss:$9 sm:$0xff] %v1210
      %v1880 = vld [vmem:[#allocation1] sm:$0xff]
      %1882 = vst [vmem:[#allocation1] ss:$9 sm:$0xff] %v1213
      %v1883 = vld [vmem:[#allocation1] sm:$0xff]
      %1885 = vst [vmem:[#allocation1] ss:$9 sm:$0xff] %v1216
      %v1886 = vld [vmem:[#allocation1] sm:$0xff]
      %1888 = vst [vmem:[#allocation1] ss:$9 sm:$0xff] %v1219
      %v1889 = vld [vmem:[#allocation1] sm:$0xff]
      %1891 = vst [vmem:[#allocation1] ss:$9 sm:$0xff] %v1222
      %v1892 = vld [vmem:[#allocation1] sm:$0xff]
      %1894 = vst [vmem:[#allocation1] ss:$9 sm:$0xff] %v1228
      %v1895 = vld [vmem:[#allocation1] sm:$0xff]
      %1897 = vst [vmem:[#allocation1] ss:$9 sm:$0xff] %v1231
      %v1898 = vld [vmem:[#allocation1] sm:$0xff]
      %1900 = vst [vmem:[#allocation1] ss:$9 sm:$0xff] %v1234
      %v1901 = vld [vmem:[#allocation1] sm:$0xff]
      %1903 = vst [vmem:[#allocation1] ss:$9 sm:$0xff] %v1237
      %v1904 = vld [vmem:[#allocation1] sm:$0xff]
      %1906 = vst [vmem:[#allocation1] ss:$9 sm:$0xff] %v1240
      %v1907 = vld [vmem:[#allocation1] sm:$0xff]
      %1909 = vst [vmem:[#allocation1] ss:$9 sm:$0xff] %v1243
      %v1910 = vld [vmem:[#allocation1] sm:$0xff]
      %1912 = vst [vmem:[#allocation1] ss:$9 sm:$0xff] %v1246
      %v1913 = vld [vmem:[#allocation1] sm:$0xff]
      %1915 = vst [vmem:[#allocation1] ss:$9 sm:$0xff] %v1249
      %v1916 = vld [vmem:[#allocation1] sm:$0xff]
      %v1918 = vunpack.c.l.b16 %v1727
      %v1919 = vunpack.c.l.b16 %v1730
      %v1920 = vunpack.c.l.b16 %v1733
      %v1921 = vunpack.c.l.b16 %v1736
      %v1922 = vunpack.c.l.b16 %v1739
      %v1923 = vunpack.c.l.b16 %v1742
      %v1924 = vunpack.c.l.b16 %v1745
      %v1925 = vunpack.c.l.b16 %v1748
      %v1926 = vunpack.c.l.b16 %v1751
      %v1927 = vunpack.c.l.b16 %v1754
      %v1928 = vunpack.c.l.b16 %v1757
      %v1929 = vunpack.c.l.b16 %v1760
      %v1930 = vunpack.c.l.b16 %v1763
      %v1931 = vunpack.c.l.b16 %v1766
      %v1932 = vunpack.c.l.b16 %v1769
      %v1933 = vunpack.c.l.b16 %v1772
      %v1934 = vunpack.c.l.b16 %v1775
      %v1935 = vunpack.c.l.b16 %v1778
      %v1936 = vunpack.c.l.b16 %v1781
      %v1937 = vunpack.c.l.b16 %v1784
      %v1938 = vunpack.c.l.b16 %v1787
      %v1939 = vunpack.c.l.b16 %v1790
      %v1940 = vunpack.c.l.b16 %v1793
      %v1941 = vunpack.c.l.b16 %v1796
      %v1942 = vunpack.c.l.b16 %v1799
      %v1943 = vunpack.c.l.b16 %v1802
      %v1944 = vunpack.c.l.b16 %v1805
      %v1945 = vunpack.c.l.b16 %v1808
      %v1946 = vunpack.c.l.b16 %v1811
      %v1947 = vunpack.c.l.b16 %v1814
      %v1948 = vunpack.c.l.b16 %v1817
      %v1949 = vunpack.c.l.b16 %v1820
      %v1950 = vunpack.c.l.b16 %v1823
      %v1951 = vunpack.c.l.b16 %v1826
      %v1952 = vunpack.c.l.b16 %v1829
      %v1953 = vunpack.c.l.b16 %v1832
      %v1954 = vunpack.c.l.b16 %v1835
      %v1955 = vunpack.c.l.b16 %v1838
      %v1956 = vunpack.c.l.b16 %v1841
      %v1957 = vunpack.c.l.b16 %v1844
      %v1958 = vunpack.c.l.b16 %v1847
      %v1959 = vunpack.c.l.b16 %v1850
      %v1960 = vunpack.c.l.b16 %v1853
      %v1961 = vunpack.c.l.b16 %v1856
      %v1962 = vunpack.c.l.b16 %v1859
      %v1963 = vunpack.c.l.b16 %v1862
      %v1964 = vunpack.c.l.b16 %v1865
      %v1965 = vunpack.c.l.b16 %v1868
      %v1966 = vunpack.c.l.b16 %v1871
      %v1967 = vunpack.c.l.b16 %v1874
      %v1968 = vunpack.c.l.b16 %v1877
      %v1969 = vunpack.c.l.b16 %v1880
      %v1970 = vunpack.c.l.b16 %v1883
      %v1971 = vunpack.c.l.b16 %v1886
      %v1972 = vunpack.c.l.b16 %v1889
      %v1973 = vunpack.c.l.b16 %v1892
      %v1974 = vunpack.c.l.b16 %v1895
      %v1975 = vunpack.c.l.b16 %v1898
      %v1976 = vunpack.c.l.b16 %v1901
      %v1977 = vunpack.c.l.b16 %v1904
      %v1978 = vunpack.c.l.b16 %v1907
      %v1979 = vunpack.c.l.b16 %v1910
      %v1980 = vunpack.c.l.b16 %v1913
      %v1981 = vunpack.c.l.b16 %v1916
      %v1982 = vrot.slane %v1919, 7
      %v1983 = vsel %vm1037, %v1982, %v1918
      %v1984 = vrot.slane %v1920, 6
      %v1985 = vsel %vm1041, %v1984, %v1983
      %v1986 = vrot.slane %v1921, 5
      %v1987 = vsel %vm1045, %v1986, %v1985
      %v1988 = vrot.slane %v1922, 4
      %v1989 = vsel %vm1567, %v1988, %v1987
      %v1990 = vrot.slane %v1923, 3
      %v1991 = vsel %vm1570, %v1990, %v1989
      %v1992 = vrot.slane %v1924, 2
      %v1993 = vsel %vm1573, %v1992, %v1991
      %v1994 = vrot.slane %v1925, 1
      %v1995 = vsel %vm1576, %v1994, %v1993
      %v1996 = vrot.slane %v1927, 7
      %v1997 = vsel %vm1037, %v1996, %v1926
      %v1998 = vrot.slane %v1928, 6
      %v1999 = vsel %vm1041, %v1998, %v1997
      %v2000 = vrot.slane %v1929, 5
      %v2001 = vsel %vm1045, %v2000, %v1999
      %v2002 = vrot.slane %v1930, 4
      %v2003 = vsel %vm1567, %v2002, %v2001
      %v2004 = vrot.slane %v1931, 3
      %v2005 = vsel %vm1570, %v2004, %v2003
      %v2006 = vrot.slane %v1932, 2
      %v2007 = vsel %vm1573, %v2006, %v2005
      %v2008 = vrot.slane %v1933, 1
      %v2009 = vsel %vm1576, %v2008, %v2007
      %v2010 = vrot.slane %v1935, 7
      %v2011 = vsel %vm1037, %v2010, %v1934
      %v2012 = vrot.slane %v1936, 6
      %v2013 = vsel %vm1041, %v2012, %v2011
      %v2014 = vrot.slane %v1937, 5
      %v2015 = vsel %vm1045, %v2014, %v2013
      %v2016 = vrot.slane %v1938, 4
      %v2017 = vsel %vm1567, %v2016, %v2015
      %v2018 = vrot.slane %v1939, 3
      %v2019 = vsel %vm1570, %v2018, %v2017
      %v2020 = vrot.slane %v1940, 2
      %v2021 = vsel %vm1573, %v2020, %v2019
      %v2022 = vrot.slane %v1941, 1
      %v2023 = vsel %vm1576, %v2022, %v2021
      %v2024 = vrot.slane %v1943, 7
      %v2025 = vsel %vm1037, %v2024, %v1942
      %v2026 = vrot.slane %v1944, 6
      %v2027 = vsel %vm1041, %v2026, %v2025
      %v2028 = vrot.slane %v1945, 5
      %v2029 = vsel %vm1045, %v2028, %v2027
      %v2030 = vrot.slane %v1946, 4
      %v2031 = vsel %vm1567, %v2030, %v2029
      %v2032 = vrot.slane %v1947, 3
      %v2033 = vsel %vm1570, %v2032, %v2031
      %v2034 = vrot.slane %v1948, 2
      %v2035 = vsel %vm1573, %v2034, %v2033
      %v2036 = vrot.slane %v1949, 1
      %v2037 = vsel %vm1576, %v2036, %v2035
      %v2038 = vrot.slane %v1951, 7
      %v2039 = vsel %vm1037, %v2038, %v1950
      %v2040 = vrot.slane %v1952, 6
      %v2041 = vsel %vm1041, %v2040, %v2039
      %v2042 = vrot.slane %v1953, 5
      %v2043 = vsel %vm1045, %v2042, %v2041
      %v2044 = vrot.slane %v1954, 4
      %v2045 = vsel %vm1567, %v2044, %v2043
      %v2046 = vrot.slane %v1955, 3
      %v2047 = vsel %vm1570, %v2046, %v2045
      %v2048 = vrot.slane %v1956, 2
      %v2049 = vsel %vm1573, %v2048, %v2047
      %v2050 = vrot.slane %v1957, 1
      %v2051 = vsel %vm1576, %v2050, %v2049
      %v2052 = vrot.slane %v1959, 7
      %v2053 = vsel %vm1037, %v2052, %v1958
      %v2054 = vrot.slane %v1960, 6
      %v2055 = vsel %vm1041, %v2054, %v2053
      %v2056 = vrot.slane %v1961, 5
      %v2057 = vsel %vm1045, %v2056, %v2055
      %v2058 = vrot.slane %v1962, 4
      %v2059 = vsel %vm1567, %v2058, %v2057
      %v2060 = vrot.slane %v1963, 3
      %v2061 = vsel %vm1570, %v2060, %v2059
      %v2062 = vrot.slane %v1964, 2
      %v2063 = vsel %vm1573, %v2062, %v2061
      %v2064 = vrot.slane %v1965, 1
      %v2065 = vsel %vm1576, %v2064, %v2063
      %v2066 = vrot.slane %v1967, 7
      %v2067 = vsel %vm1037, %v2066, %v1966
      %v2068 = vrot.slane %v1968, 6
      %v2069 = vsel %vm1041, %v2068, %v2067
      %v2070 = vrot.slane %v1969, 5
      %v2071 = vsel %vm1045, %v2070, %v2069
      %v2072 = vrot.slane %v1970, 4
      %v2073 = vsel %vm1567, %v2072, %v2071
      %v2074 = vrot.slane %v1971, 3
      %v2075 = vsel %vm1570, %v2074, %v2073
      %v2076 = vrot.slane %v1972, 2
      %v2077 = vsel %vm1573, %v2076, %v2075
      %v2078 = vrot.slane %v1973, 1
      %v2079 = vsel %vm1576, %v2078, %v2077
      %v2080 = vrot.slane %v1975, 7
      %v2081 = vsel %vm1037, %v2080, %v1974
      %v2082 = vrot.slane %v1976, 6
      %v2083 = vsel %vm1041, %v2082, %v2081
      %v2084 = vrot.slane %v1977, 5
      %v2085 = vsel %vm1045, %v2084, %v2083
      %v2086 = vrot.slane %v1978, 4
      %v2087 = vsel %vm1567, %v2086, %v2085
      %v2088 = vrot.slane %v1979, 3
      %v2089 = vsel %vm1570, %v2088, %v2087
      %v2090 = vrot.slane %v1980, 2
      %v2091 = vsel %vm1573, %v2090, %v2089
      %v2092 = vrot.slane %v1981, 1
      %v2093 = vsel %vm1576, %v2092, %v2091
      %v2094 = vpack.c.b16 %v2009, %v1995
      %v2095 = vpack.c.b16 %v2037, %v2023
      %v2096 = vpack.c.b16 %v2065, %v2051
      %v2097 = vpack.c.b16 %v2093, %v2079
      %v2099 = vsel %vm1680, %v2094, 0
      %v2102 = vsel %vm1680, %v2095, 0
      %v2105 = vsel %vm1680, %v2096, 0
      %v2108 = vsel %vm1680, %v2097, 0
      %v2111 = vsel %vm1693, %v1253, 0
      %2113 = vmatpush.bf16.msra.mxu0 0
      %2114 = vmatpush.bf16.msra.mxu0 0
      %2115 = vmatpush.bf16.msra.mxu0 0
      %2116 = vmatpush.bf16.msra.mxu0 0
      %2117 = vmatpush.bf16.msra.mxu0 0
      %2118 = vmatpush.bf16.msra.mxu0 0
      %2119 = vmatpush.bf16.msra.mxu0 0
      %2120 = vmatpush.bf16.msra.mxu0 %v2111
      %2121 = vmatmul.bf16.gmra.mxu0 %v2099
      %v2122 = vpop.f32.mrf.mxu0
      %v2123 = vadd.f32 %v1707, %v2122
      %v2124 = vpop.f32.mrf.mxu0
      %v2125 = vadd.f32 %v1709, %v2124
      %2126 = vmatmul.bf16.gmra.mxu0 %v2102
      %v2127 = vpop.f32.mrf.mxu0
      %v2128 = vadd.f32 %v1712, %v2127
      %v2129 = vpop.f32.mrf.mxu0
      %v2130 = vadd.f32 %v1714, %v2129
      %2131 = vmatmul.bf16.gmra.mxu0 %v2105
      %v2132 = vpop.f32.mrf.mxu0
      %v2133 = vadd.f32 %v1717, %v2132
      %v2134 = vpop.f32.mrf.mxu0
      %v2135 = vadd.f32 %v1719, %v2134
      %2136 = vmatmul.bf16.gmra.mxu0 %v2108
      %v2137 = vpop.f32.mrf.mxu0
      %v2138 = vadd.f32 %v1722, %v2137
      %v2139 = vpop.f32.mrf.mxu0
      %v2140 = vadd.f32 %v1724, %v2139
      %2141 = vdwg.mxu0
      %s2142 = scalar_lea.vmem %s3, 8
      %v2143 = vld [vmem:[%s2142] sm:$0xf]
      %2144 = vst [vmem:[#allocation1] ss:$9 sm:$0xff] %v1040
      %v2145 = vld [vmem:[#allocation1] sm:$0xff]
      %2147 = vst [vmem:[#allocation1] ss:$9 sm:$0xff] %v1044
      %v2148 = vld [vmem:[#allocation1] sm:$0xff]
      %2150 = vst [vmem:[#allocation1] ss:$9 sm:$0xff] %v1048
      %v2151 = vld [vmem:[#allocation1] sm:$0xff]
      %2153 = vst [vmem:[#allocation1] ss:$9 sm:$0xff] %v1051
      %v2154 = vld [vmem:[#allocation1] sm:$0xff]
      %2156 = vst [vmem:[#allocation1] ss:$9 sm:$0xff] %v1054
      %v2157 = vld [vmem:[#allocation1] sm:$0xff]
      %2159 = vst [vmem:[#allocation1] ss:$9 sm:$0xff] %v1057
      %v2160 = vld [vmem:[#allocation1] sm:$0xff]
      %2162 = vst [vmem:[#allocation1] ss:$9 sm:$0xff] %v1060
      %v2163 = vld [vmem:[#allocation1] sm:$0xff]
      %2165 = vst [vmem:[#allocation1] ss:$9 sm:$0xff] %v1063
      %v2166 = vld [vmem:[#allocation1] sm:$0xff]
      %2168 = vst [vmem:[#allocation1] ss:$9 sm:$0xff] %v1069
      %v2169 = vld [vmem:[#allocation1] sm:$0xff]
      %2171 = vst [vmem:[#allocation1] ss:$9 sm:$0xff] %v1072
      %v2172 = vld [vmem:[#allocation1] sm:$0xff]
      %2174 = vst [vmem:[#allocation1] ss:$9 sm:$0xff] %v1075
      %v2175 = vld [vmem:[#allocation1] sm:$0xff]
      %2177 = vst [vmem:[#allocation1] ss:$9 sm:$0xff] %v1078
      %v2178 = vld [vmem:[#allocation1] sm:$0xff]
      %2180 = vst [vmem:[#allocation1] ss:$9 sm:$0xff] %v1081
      %v2181 = vld [vmem:[#allocation1] sm:$0xff]
      %2183 = vst [vmem:[#allocation1] ss:$9 sm:$0xff] %v1084
      %v2184 = vld [vmem:[#allocation1] sm:$0xff]
      %2186 = vst [vmem:[#allocation1] ss:$9 sm:$0xff] %v1087
      %v2187 = vld [vmem:[#allocation1] sm:$0xff]
      %2189 = vst [vmem:[#allocation1] ss:$9 sm:$0xff] %v1090
      %v2190 = vld [vmem:[#allocation1] sm:$0xff]
      %2192 = vst [vmem:[#allocation1] ss:$9 sm:$0xff] %v1096
      %v2193 = vld [vmem:[#allocation1] sm:$0xff]
      %2195 = vst [vmem:[#allocation1] ss:$9 sm:$0xff] %v1099
      %v2196 = vld [vmem:[#allocation1] sm:$0xff]
      %2198 = vst [vmem:[#allocation1] ss:$9 sm:$0xff] %v1102
      %v2199 = vld [vmem:[#allocation1] sm:$0xff]
      %2201 = vst [vmem:[#allocation1] ss:$9 sm:$0xff] %v1105
      %v2202 = vld [vmem:[#allocation1] sm:$0xff]
      %2204 = vst [vmem:[#allocation1] ss:$9 sm:$0xff] %v1108
      %v2205 = vld [vmem:[#allocation1] sm:$0xff]
      %2207 = vst [vmem:[#allocation1] ss:$9 sm:$0xff] %v1111
      %v2208 = vld [vmem:[#allocation1] sm:$0xff]
      %2210 = vst [vmem:[#allocation1] ss:$9 sm:$0xff] %v1114
      %v2211 = vld [vmem:[#allocation1] sm:$0xff]
      %2213 = vst [vmem:[#allocation1] ss:$9 sm:$0xff] %v1117
      %v2214 = vld [vmem:[#allocation1] sm:$0xff]
      %2216 = vst [vmem:[#allocation1] ss:$9 sm:$0xff] %v1123
      %v2217 = vld [vmem:[#allocation1] sm:$0xff]
      %2219 = vst [vmem:[#allocation1] ss:$9 sm:$0xff] %v1126
      %v2220 = vld [vmem:[#allocation1] sm:$0xff]
      %2222 = vst [vmem:[#allocation1] ss:$9 sm:$0xff] %v1129
      %v2223 = vld [vmem:[#allocation1] sm:$0xff]
      %2225 = vst [vmem:[#allocation1] ss:$9 sm:$0xff] %v1132
      %v2226 = vld [vmem:[#allocation1] sm:$0xff]
      %2228 = vst [vmem:[#allocation1] ss:$9 sm:$0xff] %v1135
      %v2229 = vld [vmem:[#allocation1] sm:$0xff]
      %2231 = vst [vmem:[#allocation1] ss:$9 sm:$0xff] %v1138
      %v2232 = vld [vmem:[#allocation1] sm:$0xff]
      %2234 = vst [vmem:[#allocation1] ss:$9 sm:$0xff] %v1141
      %v2235 = vld [vmem:[#allocation1] sm:$0xff]
      %2237 = vst [vmem:[#allocation1] ss:$9 sm:$0xff] %v1144
      %v2238 = vld [vmem:[#allocation1] sm:$0xff]
      %2240 = vst [vmem:[#allocation1] ss:$9 sm:$0xff] %v1150
      %v2241 = vld [vmem:[#allocation1] sm:$0xff]
      %2243 = vst [vmem:[#allocation1] ss:$9 sm:$0xff] %v1153
      %v2244 = vld [vmem:[#allocation1] sm:$0xff]
      %2246 = vst [vmem:[#allocation1] ss:$9 sm:$0xff] %v1156
      %v2247 = vld [vmem:[#allocation1] sm:$0xff]
      %2249 = vst [vmem:[#allocation1] ss:$9 sm:$0xff] %v1159
      %v2250 = vld [vmem:[#allocation1] sm:$0xff]
      %2252 = vst [vmem:[#allocation1] ss:$9 sm:$0xff] %v1162
      %v2253 = vld [vmem:[#allocation1] sm:$0xff]
      %2255 = vst [vmem:[#allocation1] ss:$9 sm:$0xff] %v1165
      %v2256 = vld [vmem:[#allocation1] sm:$0xff]
      %2258 = vst [vmem:[#allocation1] ss:$9 sm:$0xff] %v1168
      %v2259 = vld [vmem:[#allocation1] sm:$0xff]
      %2261 = vst [vmem:[#allocation1] ss:$9 sm:$0xff] %v1171
      %v2262 = vld [vmem:[#allocation1] sm:$0xff]
      %2264 = vst [vmem:[#allocation1] ss:$9 sm:$0xff] %v1177
      %v2265 = vld [vmem:[#allocation1] sm:$0xff]
      %2267 = vst [vmem:[#allocation1] ss:$9 sm:$0xff] %v1180
      %v2268 = vld [vmem:[#allocation1] sm:$0xff]
      %2270 = vst [vmem:[#allocation1] ss:$9 sm:$0xff] %v1183
      %v2271 = vld [vmem:[#allocation1] sm:$0xff]
      %2273 = vst [vmem:[#allocation1] ss:$9 sm:$0xff] %v1186
      %v2274 = vld [vmem:[#allocation1] sm:$0xff]
      %2276 = vst [vmem:[#allocation1] ss:$9 sm:$0xff] %v1189
      %v2277 = vld [vmem:[#allocation1] sm:$0xff]
      %2279 = vst [vmem:[#allocation1] ss:$9 sm:$0xff] %v1192
      %v2280 = vld [vmem:[#allocation1] sm:$0xff]
      %2282 = vst [vmem:[#allocation1] ss:$9 sm:$0xff] %v1195
      %v2283 = vld [vmem:[#allocation1] sm:$0xff]
      %2285 = vst [vmem:[#allocation1] ss:$9 sm:$0xff] %v1198
      %v2286 = vld [vmem:[#allocation1] sm:$0xff]
      %2288 = vst [vmem:[#allocation1] ss:$9 sm:$0xff] %v1204
      %v2289 = vld [vmem:[#allocation1] sm:$0xff]
      %2291 = vst [vmem:[#allocation1] ss:$9 sm:$0xff] %v1207
      %v2292 = vld [vmem:[#allocation1] sm:$0xff]
      %2294 = vst [vmem:[#allocation1] ss:$9 sm:$0xff] %v1210
      %v2295 = vld [vmem:[#allocation1] sm:$0xff]
      %2297 = vst [vmem:[#allocation1] ss:$9 sm:$0xff] %v1213
      %v2298 = vld [vmem:[#allocation1] sm:$0xff]
      %2300 = vst [vmem:[#allocation1] ss:$9 sm:$0xff] %v1216
      %v2301 = vld [vmem:[#allocation1] sm:$0xff]
      %2303 = vst [vmem:[#allocation1] ss:$9 sm:$0xff] %v1219
      %v2304 = vld [vmem:[#allocation1] sm:$0xff]
      %2306 = vst [vmem:[#allocation1] ss:$9 sm:$0xff] %v1222
      %v2307 = vld [vmem:[#allocation1] sm:$0xff]
      %2309 = vst [vmem:[#allocation1] ss:$9 sm:$0xff] %v1225
      %v2310 = vld [vmem:[#allocation1] sm:$0xff]
      %2312 = vst [vmem:[#allocation1] ss:$9 sm:$0xff] %v1231
      %v2313 = vld [vmem:[#allocation1] sm:$0xff]
      %2315 = vst [vmem:[#allocation1] ss:$9 sm:$0xff] %v1234
      %v2316 = vld [vmem:[#allocation1] sm:$0xff]
      %2318 = vst [vmem:[#allocation1] ss:$9 sm:$0xff] %v1237
      %v2319 = vld [vmem:[#allocation1] sm:$0xff]
      %2321 = vst [vmem:[#allocation1] ss:$9 sm:$0xff] %v1240
      %v2322 = vld [vmem:[#allocation1] sm:$0xff]
      %2324 = vst [vmem:[#allocation1] ss:$9 sm:$0xff] %v1243
      %v2325 = vld [vmem:[#allocation1] sm:$0xff]
      %2327 = vst [vmem:[#allocation1] ss:$9 sm:$0xff] %v1246
      %v2328 = vld [vmem:[#allocation1] sm:$0xff]
      %2330 = vst [vmem:[#allocation1] ss:$9 sm:$0xff] %v1249
      %v2331 = vld [vmem:[#allocation1] sm:$0xff]
      %2333 = vst [vmem:[#allocation1] ss:$9 sm:$0xff] %v1252
      %v2334 = vld [vmem:[#allocation1] sm:$0xff]
      %v2336 = vunpack.c.l.b16 %v2145
      %v2337 = vunpack.c.l.b16 %v2148
      %v2338 = vunpack.c.l.b16 %v2151
      %v2339 = vunpack.c.l.b16 %v2154
      %v2340 = vunpack.c.l.b16 %v2157
      %v2341 = vunpack.c.l.b16 %v2160
      %v2342 = vunpack.c.l.b16 %v2163
      %v2343 = vunpack.c.l.b16 %v2166
      %v2344 = vunpack.c.l.b16 %v2169
      %v2345 = vunpack.c.l.b16 %v2172
      %v2346 = vunpack.c.l.b16 %v2175
      %v2347 = vunpack.c.l.b16 %v2178
      %v2348 = vunpack.c.l.b16 %v2181
      %v2349 = vunpack.c.l.b16 %v2184
      %v2350 = vunpack.c.l.b16 %v2187
      %v2351 = vunpack.c.l.b16 %v2190
      %v2352 = vunpack.c.l.b16 %v2193
      %v2353 = vunpack.c.l.b16 %v2196
      %v2354 = vunpack.c.l.b16 %v2199
      %v2355 = vunpack.c.l.b16 %v2202
      %v2356 = vunpack.c.l.b16 %v2205
      %v2357 = vunpack.c.l.b16 %v2208
      %v2358 = vunpack.c.l.b16 %v2211
      %v2359 = vunpack.c.l.b16 %v2214
      %v2360 = vunpack.c.l.b16 %v2217
      %v2361 = vunpack.c.l.b16 %v2220
      %v2362 = vunpack.c.l.b16 %v2223
      %v2363 = vunpack.c.l.b16 %v2226
      %v2364 = vunpack.c.l.b16 %v2229
      %v2365 = vunpack.c.l.b16 %v2232
      %v2366 = vunpack.c.l.b16 %v2235
      %v2367 = vunpack.c.l.b16 %v2238
      %v2368 = vunpack.c.l.b16 %v2241
      %v2369 = vunpack.c.l.b16 %v2244
      %v2370 = vunpack.c.l.b16 %v2247
      %v2371 = vunpack.c.l.b16 %v2250
      %v2372 = vunpack.c.l.b16 %v2253
      %v2373 = vunpack.c.l.b16 %v2256
      %v2374 = vunpack.c.l.b16 %v2259
      %v2375 = vunpack.c.l.b16 %v2262
      %v2376 = vunpack.c.l.b16 %v2265
      %v2377 = vunpack.c.l.b16 %v2268
      %v2378 = vunpack.c.l.b16 %v2271
      %v2379 = vunpack.c.l.b16 %v2274
      %v2380 = vunpack.c.l.b16 %v2277
      %v2381 = vunpack.c.l.b16 %v2280
      %v2382 = vunpack.c.l.b16 %v2283
      %v2383 = vunpack.c.l.b16 %v2286
      %v2384 = vunpack.c.l.b16 %v2289
      %v2385 = vunpack.c.l.b16 %v2292
      %v2386 = vunpack.c.l.b16 %v2295
      %v2387 = vunpack.c.l.b16 %v2298
      %v2388 = vunpack.c.l.b16 %v2301
      %v2389 = vunpack.c.l.b16 %v2304
      %v2390 = vunpack.c.l.b16 %v2307
      %v2391 = vunpack.c.l.b16 %v2310
      %v2392 = vunpack.c.l.b16 %v2313
      %v2393 = vunpack.c.l.b16 %v2316
      %v2394 = vunpack.c.l.b16 %v2319
      %v2395 = vunpack.c.l.b16 %v2322
      %v2396 = vunpack.c.l.b16 %v2325
      %v2397 = vunpack.c.l.b16 %v2328
      %v2398 = vunpack.c.l.b16 %v2331
      %v2399 = vunpack.c.l.b16 %v2334
      %v2400 = vrot.slane %v2337, 7
      %v2401 = vsel %vm1037, %v2400, %v2336
      %v2402 = vrot.slane %v2338, 6
      %v2403 = vsel %vm1041, %v2402, %v2401
      %v2404 = vrot.slane %v2339, 5
      %v2405 = vsel %vm1045, %v2404, %v2403
      %v2406 = vrot.slane %v2340, 4
      %v2407 = vsel %vm1567, %v2406, %v2405
      %v2408 = vrot.slane %v2341, 3
      %v2409 = vsel %vm1570, %v2408, %v2407
      %v2410 = vrot.slane %v2342, 2
      %v2411 = vsel %vm1573, %v2410, %v2409
      %v2412 = vrot.slane %v2343, 1
      %v2413 = vsel %vm1576, %v2412, %v2411
      %v2414 = vrot.slane %v2345, 7
      %v2415 = vsel %vm1037, %v2414, %v2344
      %v2416 = vrot.slane %v2346, 6
      %v2417 = vsel %vm1041, %v2416, %v2415
      %v2418 = vrot.slane %v2347, 5
      %v2419 = vsel %vm1045, %v2418, %v2417
      %v2420 = vrot.slane %v2348, 4
      %v2421 = vsel %vm1567, %v2420, %v2419
      %v2422 = vrot.slane %v2349, 3
      %v2423 = vsel %vm1570, %v2422, %v2421
      %v2424 = vrot.slane %v2350, 2
      %v2425 = vsel %vm1573, %v2424, %v2423
      %v2426 = vrot.slane %v2351, 1
      %v2427 = vsel %vm1576, %v2426, %v2425
      %v2428 = vrot.slane %v2353, 7
      %v2429 = vsel %vm1037, %v2428, %v2352
      %v2430 = vrot.slane %v2354, 6
      %v2431 = vsel %vm1041, %v2430, %v2429
      %v2432 = vrot.slane %v2355, 5
      %v2433 = vsel %vm1045, %v2432, %v2431
      %v2434 = vrot.slane %v2356, 4
      %v2435 = vsel %vm1567, %v2434, %v2433
      %v2436 = vrot.slane %v2357, 3
      %v2437 = vsel %vm1570, %v2436, %v2435
      %v2438 = vrot.slane %v2358, 2
      %v2439 = vsel %vm1573, %v2438, %v2437
      %v2440 = vrot.slane %v2359, 1
      %v2441 = vsel %vm1576, %v2440, %v2439
      %v2442 = vrot.slane %v2361, 7
      %v2443 = vsel %vm1037, %v2442, %v2360
      %v2444 = vrot.slane %v2362, 6
      %v2445 = vsel %vm1041, %v2444, %v2443
      %v2446 = vrot.slane %v2363, 5
      %v2447 = vsel %vm1045, %v2446, %v2445
      %v2448 = vrot.slane %v2364, 4
      %v2449 = vsel %vm1567, %v2448, %v2447
      %v2450 = vrot.slane %v2365, 3
      %v2451 = vsel %vm1570, %v2450, %v2449
      %v2452 = vrot.slane %v2366, 2
      %v2453 = vsel %vm1573, %v2452, %v2451
      %v2454 = vrot.slane %v2367, 1
      %v2455 = vsel %vm1576, %v2454, %v2453
      %v2456 = vrot.slane %v2369, 7
      %v2457 = vsel %vm1037, %v2456, %v2368
      %v2458 = vrot.slane %v2370, 6
      %v2459 = vsel %vm1041, %v2458, %v2457
      %v2460 = vrot.slane %v2371, 5
      %v2461 = vsel %vm1045, %v2460, %v2459
      %v2462 = vrot.slane %v2372, 4
      %v2463 = vsel %vm1567, %v2462, %v2461
      %v2464 = vrot.slane %v2373, 3
      %v2465 = vsel %vm1570, %v2464, %v2463
      %v2466 = vrot.slane %v2374, 2
      %v2467 = vsel %vm1573, %v2466, %v2465
      %v2468 = vrot.slane %v2375, 1
      %v2469 = vsel %vm1576, %v2468, %v2467
      %v2470 = vrot.slane %v2377, 7
      %v2471 = vsel %vm1037, %v2470, %v2376
      %v2472 = vrot.slane %v2378, 6
      %v2473 = vsel %vm1041, %v2472, %v2471
      %v2474 = vrot.slane %v2379, 5
      %v2475 = vsel %vm1045, %v2474, %v2473
      %v2476 = vrot.slane %v2380, 4
      %v2477 = vsel %vm1567, %v2476, %v2475
      %v2478 = vrot.slane %v2381, 3
      %v2479 = vsel %vm1570, %v2478, %v2477
      %v2480 = vrot.slane %v2382, 2
      %v2481 = vsel %vm1573, %v2480, %v2479
      %v2482 = vrot.slane %v2383, 1
      %v2483 = vsel %vm1576, %v2482, %v2481
      %v2484 = vrot.slane %v2385, 7
      %v2485 = vsel %vm1037, %v2484, %v2384
      %v2486 = vrot.slane %v2386, 6
      %v2487 = vsel %vm1041, %v2486, %v2485
      %v2488 = vrot.slane %v2387, 5
      %v2489 = vsel %vm1045, %v2488, %v2487
      %v2490 = vrot.slane %v2388, 4
      %v2491 = vsel %vm1567, %v2490, %v2489
      %v2492 = vrot.slane %v2389, 3
      %v2493 = vsel %vm1570, %v2492, %v2491
      %v2494 = vrot.slane %v2390, 2
      %v2495 = vsel %vm1573, %v2494, %v2493
      %v2496 = vrot.slane %v2391, 1
      %v2497 = vsel %vm1576, %v2496, %v2495
      %v2498 = vrot.slane %v2393, 7
      %v2499 = vsel %vm1037, %v2498, %v2392
      %v2500 = vrot.slane %v2394, 6
      %v2501 = vsel %vm1041, %v2500, %v2499
      %v2502 = vrot.slane %v2395, 5
      %v2503 = vsel %vm1045, %v2502, %v2501
      %v2504 = vrot.slane %v2396, 4
      %v2505 = vsel %vm1567, %v2504, %v2503
      %v2506 = vrot.slane %v2397, 3
      %v2507 = vsel %vm1570, %v2506, %v2505
      %v2508 = vrot.slane %v2398, 2
      %v2509 = vsel %vm1573, %v2508, %v2507
      %v2510 = vrot.slane %v2399, 1
      %v2511 = vsel %vm1576, %v2510, %v2509
      %v2512 = vpack.c.b16 %v2427, %v2413
      %v2513 = vpack.c.b16 %v2455, %v2441
      %v2514 = vpack.c.b16 %v2483, %v2469
      %v2515 = vpack.c.b16 %v2511, %v2497
      %v2517 = vsel %vm1680, %v2512, 0
      %v2520 = vsel %vm1680, %v2513, 0
      %v2523 = vsel %vm1680, %v2514, 0
      %v2526 = vsel %vm1680, %v2515, 0
      %v2529 = vsel %vm1693, %v2143, 0
      %2531 = vmatpush.bf16.msra.mxu0 0
      %2532 = vmatpush.bf16.msra.mxu0 0
      %2533 = vmatpush.bf16.msra.mxu0 0
      %2534 = vmatpush.bf16.msra.mxu0 0
      %2535 = vmatpush.bf16.msra.mxu0 0
      %2536 = vmatpush.bf16.msra.mxu0 0
      %2537 = vmatpush.bf16.msra.mxu0 0
      %2538 = vmatpush.bf16.msra.mxu0 %v2529
      %2539 = vmatmul.bf16.gmra.mxu0 %v2517
      %v2540 = vpop.f32.mrf.mxu0
      %v2541 = vadd.f32 0.0, %v2540
      %v2542 = vpop.f32.mrf.mxu0
      %v2543 = vadd.f32 0.0, %v2542
      %2544 = vmatmul.bf16.gmra.mxu0 %v2520
      %v2545 = vpop.f32.mrf.mxu0
      %v2546 = vadd.f32 0.0, %v2545
      %v2547 = vpop.f32.mrf.mxu0
      %v2548 = vadd.f32 0.0, %v2547
      %2549 = vmatmul.bf16.gmra.mxu0 %v2523
      %v2550 = vpop.f32.mrf.mxu0
      %v2551 = vadd.f32 0.0, %v2550
      %v2552 = vpop.f32.mrf.mxu0
      %v2553 = vadd.f32 0.0, %v2552
      %2554 = vmatmul.bf16.gmra.mxu0 %v2526
      %v2555 = vpop.f32.mrf.mxu0
      %v2556 = vadd.f32 0.0, %v2555
      %v2557 = vpop.f32.mrf.mxu0
      %v2558 = vadd.f32 0.0, %v2557
      %2559 = vdwg.mxu0
      %v2560 = vadd.f32 %v2123, %v2541
      %v2561 = vadd.f32 %v2125, %v2543
      %v2562 = vadd.f32 %v2128, %v2546
      %v2563 = vadd.f32 %v2130, %v2548
      %v2564 = vadd.f32 %v2133, %v2551
      %v2565 = vadd.f32 %v2135, %v2553
      %v2566 = vadd.f32 %v2138, %v2556
      %v2567 = vadd.f32 %v2140, %v2558
      %v2592 = vrot.slane %v937, 3
      %v2593 = vrot.slane %v938, 3
      %v2594 = vrot.slane %v939, 3
      %v2595 = vrot.slane %v943, 3
      %v2596 = vrot.slane %v944, 3
      %v2597 = vrot.slane %v945, 3
      %v2598 = vrot.slane %v949, 3
      %v2599 = vrot.slane %v950, 3
      %v2600 = vrot.slane %v951, 3
      %v2601 = vrot.slane %v955, 3
      %v2602 = vrot.slane %v956, 3
      %v2603 = vrot.slane %v957, 3
      %v2604 = vrot.slane %v961, 3
      %v2605 = vrot.slane %v962, 3
      %v2606 = vrot.slane %v963, 3
      %v2607 = vrot.slane %v967, 3
      %v2608 = vrot.slane %v968, 3
      %v2609 = vrot.slane %v969, 3
      %v2610 = vrot.slane %v973, 3
      %v2611 = vrot.slane %v974, 3
      %v2612 = vrot.slane %v975, 3
      %v2613 = vrot.slane %v979, 3
      %v2614 = vrot.slane %v980, 3
      %v2615 = vrot.slane %v981, 3
      %v2618 = vsel %vm1033, %v937, %v2592
      %v2619 = vsel %vm1037, %v937, %v2592
      %v2621 = vrot.slane %v2619, 1
      %v2622 = vsel %vm1041, %v937, %v2592
      %v2624 = vrot.slane %v2622, 2
      %v2625 = vsel %vm1045, %v937, %v2592
      %v2627 = vrot.slane %v2625, 3
      %v2630 = vsel %vm1033, %v938, %v2593
      %v2631 = vsel %vm1037, %v938, %v2593
      %v2633 = vrot.slane %v2631, 1
      %v2634 = vsel %vm1041, %v938, %v2593
      %v2636 = vrot.slane %v2634, 2
      %v2637 = vsel %vm1045, %v938, %v2593
      %v2639 = vrot.slane %v2637, 3
      %v2642 = vsel %vm1033, %v939, %v2594
      %v2645 = vsel %vm1033, %v943, %v2595
      %v2646 = vsel %vm1037, %v943, %v2595
      %v2648 = vrot.slane %v2646, 1
      %v2649 = vsel %vm1041, %v943, %v2595
      %v2651 = vrot.slane %v2649, 2
      %v2652 = vsel %vm1045, %v943, %v2595
      %v2654 = vrot.slane %v2652, 3
      %v2657 = vsel %vm1033, %v944, %v2596
      %v2658 = vsel %vm1037, %v944, %v2596
      %v2660 = vrot.slane %v2658, 1
      %v2661 = vsel %vm1041, %v944, %v2596
      %v2663 = vrot.slane %v2661, 2
      %v2664 = vsel %vm1045, %v944, %v2596
      %v2666 = vrot.slane %v2664, 3
      %v2669 = vsel %vm1033, %v945, %v2597
      %v2672 = vsel %vm1033, %v949, %v2598
      %v2673 = vsel %vm1037, %v949, %v2598
      %v2675 = vrot.slane %v2673, 1
      %v2676 = vsel %vm1041, %v949, %v2598
      %v2678 = vrot.slane %v2676, 2
      %v2679 = vsel %vm1045, %v949, %v2598
      %v2681 = vrot.slane %v2679, 3
      %v2684 = vsel %vm1033, %v950, %v2599
      %v2685 = vsel %vm1037, %v950, %v2599
      %v2687 = vrot.slane %v2685, 1
      %v2688 = vsel %vm1041, %v950, %v2599
      %v2690 = vrot.slane %v2688, 2
      %v2691 = vsel %vm1045, %v950, %v2599
      %v2693 = vrot.slane %v2691, 3
      %v2696 = vsel %vm1033, %v951, %v2600
      %v2699 = vsel %vm1033, %v955, %v2601
      %v2700 = vsel %vm1037, %v955, %v2601
      %v2702 = vrot.slane %v2700, 1
      %v2703 = vsel %vm1041, %v955, %v2601
      %v2705 = vrot.slane %v2703, 2
      %v2706 = vsel %vm1045, %v955, %v2601
      %v2708 = vrot.slane %v2706, 3
      %v2711 = vsel %vm1033, %v956, %v2602
      %v2712 = vsel %vm1037, %v956, %v2602
      %v2714 = vrot.slane %v2712, 1
      %v2715 = vsel %vm1041, %v956, %v2602
      %v2717 = vrot.slane %v2715, 2
      %v2718 = vsel %vm1045, %v956, %v2602
      %v2720 = vrot.slane %v2718, 3
      %v2723 = vsel %vm1033, %v957, %v2603
      %v2726 = vsel %vm1033, %v961, %v2604
      %v2727 = vsel %vm1037, %v961, %v2604
      %v2729 = vrot.slane %v2727, 1
      %v2730 = vsel %vm1041, %v961, %v2604
      %v2732 = vrot.slane %v2730, 2
      %v2733 = vsel %vm1045, %v961, %v2604
      %v2735 = vrot.slane %v2733, 3
      %v2738 = vsel %vm1033, %v962, %v2605
      %v2739 = vsel %vm1037, %v962, %v2605
      %v2741 = vrot.slane %v2739, 1
      %v2742 = vsel %vm1041, %v962, %v2605
      %v2744 = vrot.slane %v2742, 2
      %v2745 = vsel %vm1045, %v962, %v2605
      %v2747 = vrot.slane %v2745, 3
      %v2750 = vsel %vm1033, %v963, %v2606
      %v2753 = vsel %vm1033, %v967, %v2607
      %v2754 = vsel %vm1037, %v967, %v2607
      %v2756 = vrot.slane %v2754, 1
      %v2757 = vsel %vm1041, %v967, %v2607
      %v2759 = vrot.slane %v2757, 2
      %v2760 = vsel %vm1045, %v967, %v2607
      %v2762 = vrot.slane %v2760, 3
      %v2765 = vsel %vm1033, %v968, %v2608
      %v2766 = vsel %vm1037, %v968, %v2608
      %v2768 = vrot.slane %v2766, 1
      %v2769 = vsel %vm1041, %v968, %v2608
      %v2771 = vrot.slane %v2769, 2
      %v2772 = vsel %vm1045, %v968, %v2608
      %v2774 = vrot.slane %v2772, 3
      %v2777 = vsel %vm1033, %v969, %v2609
      %v2780 = vsel %vm1033, %v973, %v2610
      %v2781 = vsel %vm1037, %v973, %v2610
      %v2783 = vrot.slane %v2781, 1
      %v2784 = vsel %vm1041, %v973, %v2610
      %v2786 = vrot.slane %v2784, 2
      %v2787 = vsel %vm1045, %v973, %v2610
      %v2789 = vrot.slane %v2787, 3
      %v2792 = vsel %vm1033, %v974, %v2611
      %v2793 = vsel %vm1037, %v974, %v2611
      %v2795 = vrot.slane %v2793, 1
      %v2796 = vsel %vm1041, %v974, %v2611
      %v2798 = vrot.slane %v2796, 2
      %v2799 = vsel %vm1045, %v974, %v2611
      %v2801 = vrot.slane %v2799, 3
      %v2804 = vsel %vm1033, %v975, %v2612
      %v2807 = vsel %vm1033, %v979, %v2613
      %v2808 = vsel %vm1037, %v979, %v2613
      %v2810 = vrot.slane %v2808, 1
      %v2811 = vsel %vm1041, %v979, %v2613
      %v2813 = vrot.slane %v2811, 2
      %v2814 = vsel %vm1045, %v979, %v2613
      %v2816 = vrot.slane %v2814, 3
      %v2819 = vsel %vm1033, %v980, %v2614
      %v2820 = vsel %vm1037, %v980, %v2614
      %v2822 = vrot.slane %v2820, 1
      %v2823 = vsel %vm1041, %v980, %v2614
      %v2825 = vrot.slane %v2823, 2
      %v2826 = vsel %vm1045, %v980, %v2614
      %v2828 = vrot.slane %v2826, 3
      %v2831 = vsel %vm1033, %v981, %v2615
      %s2832 = scalar_lea.vmem %s3, 12
      %v2833 = vld [vmem:[%s2832] sm:$0xf]
      %2834 = vst [vmem:[#allocation1] ss:$9 sm:$0xff] %v2618
      %v2835 = vld [vmem:[#allocation1] sm:$0xff]
      %2838 = vst [vmem:[#allocation1] ss:$9 sm:$0xff] %v2621
      %v2839 = vld [vmem:[#allocation1] sm:$0xff]
      %2842 = vst [vmem:[#allocation1] ss:$9 sm:$0xff] %v2624
      %v2843 = vld [vmem:[#allocation1] sm:$0xff]
      %2846 = vst [vmem:[#allocation1] ss:$9 sm:$0xff] %v2627
      %v2847 = vld [vmem:[#allocation1] sm:$0xff]
      %2849 = vst [vmem:[#allocation1] ss:$9 sm:$0xff] %v2630
      %v2850 = vld [vmem:[#allocation1] sm:$0xff]
      %2853 = vst [vmem:[#allocation1] ss:$9 sm:$0xff] %v2633
      %v2854 = vld [vmem:[#allocation1] sm:$0xff]
      %2857 = vst [vmem:[#allocation1] ss:$9 sm:$0xff] %v2636
      %v2858 = vld [vmem:[#allocation1] sm:$0xff]
      %2861 = vst [vmem:[#allocation1] ss:$9 sm:$0xff] %v2639
      %v2862 = vld [vmem:[#allocation1] sm:$0xff]
      %2864 = vst [vmem:[#allocation1] ss:$9 sm:$0xff] %v2645
      %v2865 = vld [vmem:[#allocation1] sm:$0xff]
      %2868 = vst [vmem:[#allocation1] ss:$9 sm:$0xff] %v2648
      %v2869 = vld [vmem:[#allocation1] sm:$0xff]
      %2872 = vst [vmem:[#allocation1] ss:$9 sm:$0xff] %v2651
      %v2873 = vld [vmem:[#allocation1] sm:$0xff]
      %2876 = vst [vmem:[#allocation1] ss:$9 sm:$0xff] %v2654
      %v2877 = vld [vmem:[#allocation1] sm:$0xff]
      %2879 = vst [vmem:[#allocation1] ss:$9 sm:$0xff] %v2657
      %v2880 = vld [vmem:[#allocation1] sm:$0xff]
      %2883 = vst [vmem:[#allocation1] ss:$9 sm:$0xff] %v2660
      %v2884 = vld [vmem:[#allocation1] sm:$0xff]
      %2887 = vst [vmem:[#allocation1] ss:$9 sm:$0xff] %v2663
      %v2888 = vld [vmem:[#allocation1] sm:$0xff]
      %2891 = vst [vmem:[#allocation1] ss:$9 sm:$0xff] %v2666
      %v2892 = vld [vmem:[#allocation1] sm:$0xff]
      %2894 = vst [vmem:[#allocation1] ss:$9 sm:$0xff] %v2672
      %v2895 = vld [vmem:[#allocation1] sm:$0xff]
      %2898 = vst [vmem:[#allocation1] ss:$9 sm:$0xff] %v2675
      %v2899 = vld [vmem:[#allocation1] sm:$0xff]
      %2902 = vst [vmem:[#allocation1] ss:$9 sm:$0xff] %v2678
      %v2903 = vld [vmem:[#allocation1] sm:$0xff]
      %2906 = vst [vmem:[#allocation1] ss:$9 sm:$0xff] %v2681
      %v2907 = vld [vmem:[#allocation1] sm:$0xff]
      %2909 = vst [vmem:[#allocation1] ss:$9 sm:$0xff] %v2684
      %v2910 = vld [vmem:[#allocation1] sm:$0xff]
      %2913 = vst [vmem:[#allocation1] ss:$9 sm:$0xff] %v2687
      %v2914 = vld [vmem:[#allocation1] sm:$0xff]
      %2917 = vst [vmem:[#allocation1] ss:$9 sm:$0xff] %v2690
      %v2918 = vld [vmem:[#allocation1] sm:$0xff]
      %2921 = vst [vmem:[#allocation1] ss:$9 sm:$0xff] %v2693
      %v2922 = vld [vmem:[#allocation1] sm:$0xff]
      %2924 = vst [vmem:[#allocation1] ss:$9 sm:$0xff] %v2699
      %v2925 = vld [vmem:[#allocation1] sm:$0xff]
      %2928 = vst [vmem:[#allocation1] ss:$9 sm:$0xff] %v2702
      %v2929 = vld [vmem:[#allocation1] sm:$0xff]
      %2932 = vst [vmem:[#allocation1] ss:$9 sm:$0xff] %v2705
      %v2933 = vld [vmem:[#allocation1] sm:$0xff]
      %2936 = vst [vmem:[#allocation1] ss:$9 sm:$0xff] %v2708
      %v2937 = vld [vmem:[#allocation1] sm:$0xff]
      %2939 = vst [vmem:[#allocation1] ss:$9 sm:$0xff] %v2711
      %v2940 = vld [vmem:[#allocation1] sm:$0xff]
      %2943 = vst [vmem:[#allocation1] ss:$9 sm:$0xff] %v2714
      %v2944 = vld [vmem:[#allocation1] sm:$0xff]
      %2947 = vst [vmem:[#allocation1] ss:$9 sm:$0xff] %v2717
      %v2948 = vld [vmem:[#allocation1] sm:$0xff]
      %2951 = vst [vmem:[#allocation1] ss:$9 sm:$0xff] %v2720
      %v2952 = vld [vmem:[#allocation1] sm:$0xff]
      %2954 = vst [vmem:[#allocation1] ss:$9 sm:$0xff] %v2726
      %v2955 = vld [vmem:[#allocation1] sm:$0xff]
      %2958 = vst [vmem:[#allocation1] ss:$9 sm:$0xff] %v2729
      %v2959 = vld [vmem:[#allocation1] sm:$0xff]
      %2962 = vst [vmem:[#allocation1] ss:$9 sm:$0xff] %v2732
      %v2963 = vld [vmem:[#allocation1] sm:$0xff]
      %2966 = vst [vmem:[#allocation1] ss:$9 sm:$0xff] %v2735
      %v2967 = vld [vmem:[#allocation1] sm:$0xff]
      %2969 = vst [vmem:[#allocation1] ss:$9 sm:$0xff] %v2738
      %v2970 = vld [vmem:[#allocation1] sm:$0xff]
      %2973 = vst [vmem:[#allocation1] ss:$9 sm:$0xff] %v2741
      %v2974 = vld [vmem:[#allocation1] sm:$0xff]
      %2977 = vst [vmem:[#allocation1] ss:$9 sm:$0xff] %v2744
      %v2978 = vld [vmem:[#allocation1] sm:$0xff]
      %2981 = vst [vmem:[#allocation1] ss:$9 sm:$0xff] %v2747
      %v2982 = vld [vmem:[#allocation1] sm:$0xff]
      %2984 = vst [vmem:[#allocation1] ss:$9 sm:$0xff] %v2753
      %v2985 = vld [vmem:[#allocation1] sm:$0xff]
      %2988 = vst [vmem:[#allocation1] ss:$9 sm:$0xff] %v2756
      %v2989 = vld [vmem:[#allocation1] sm:$0xff]
      %2992 = vst [vmem:[#allocation1] ss:$9 sm:$0xff] %v2759
      %v2993 = vld [vmem:[#allocation1] sm:$0xff]
      %2996 = vst [vmem:[#allocation1] ss:$9 sm:$0xff] %v2762
      %v2997 = vld [vmem:[#allocation1] sm:$0xff]
      %2999 = vst [vmem:[#allocation1] ss:$9 sm:$0xff] %v2765
      %v3000 = vld [vmem:[#allocation1] sm:$0xff]
      %3003 = vst [vmem:[#allocation1] ss:$9 sm:$0xff] %v2768
      %v3004 = vld [vmem:[#allocation1] sm:$0xff]
      %3007 = vst [vmem:[#allocation1] ss:$9 sm:$0xff] %v2771
      %v3008 = vld [vmem:[#allocation1] sm:$0xff]
      %3011 = vst [vmem:[#allocation1] ss:$9 sm:$0xff] %v2774
      %v3012 = vld [vmem:[#allocation1] sm:$0xff]
      %3014 = vst [vmem:[#allocation1] ss:$9 sm:$0xff] %v2780
      %v3015 = vld [vmem:[#allocation1] sm:$0xff]
      %3018 = vst [vmem:[#allocation1] ss:$9 sm:$0xff] %v2783
      %v3019 = vld [vmem:[#allocation1] sm:$0xff]
      %3022 = vst [vmem:[#allocation1] ss:$9 sm:$0xff] %v2786
      %v3023 = vld [vmem:[#allocation1] sm:$0xff]
      %3026 = vst [vmem:[#allocation1] ss:$9 sm:$0xff] %v2789
      %v3027 = vld [vmem:[#allocation1] sm:$0xff]
      %3029 = vst [vmem:[#allocation1] ss:$9 sm:$0xff] %v2792
      %v3030 = vld [vmem:[#allocation1] sm:$0xff]
      %3033 = vst [vmem:[#allocation1] ss:$9 sm:$0xff] %v2795
      %v3034 = vld [vmem:[#allocation1] sm:$0xff]
      %3037 = vst [vmem:[#allocation1] ss:$9 sm:$0xff] %v2798
      %v3038 = vld [vmem:[#allocation1] sm:$0xff]
      %3041 = vst [vmem:[#allocation1] ss:$9 sm:$0xff] %v2801
      %v3042 = vld [vmem:[#allocation1] sm:$0xff]
      %3044 = vst [vmem:[#allocation1] ss:$9 sm:$0xff] %v2807
      %v3045 = vld [vmem:[#allocation1] sm:$0xff]
      %3048 = vst [vmem:[#allocation1] ss:$9 sm:$0xff] %v2810
      %v3049 = vld [vmem:[#allocation1] sm:$0xff]
      %3052 = vst [vmem:[#allocation1] ss:$9 sm:$0xff] %v2813
      %v3053 = vld [vmem:[#allocation1] sm:$0xff]
      %3056 = vst [vmem:[#allocation1] ss:$9 sm:$0xff] %v2816
      %v3057 = vld [vmem:[#allocation1] sm:$0xff]
      %3059 = vst [vmem:[#allocation1] ss:$9 sm:$0xff] %v2819
      %v3060 = vld [vmem:[#allocation1] sm:$0xff]
      %3063 = vst [vmem:[#allocation1] ss:$9 sm:$0xff] %v2822
      %v3064 = vld [vmem:[#allocation1] sm:$0xff]
      %3067 = vst [vmem:[#allocation1] ss:$9 sm:$0xff] %v2825
      %v3068 = vld [vmem:[#allocation1] sm:$0xff]
      %3071 = vst [vmem:[#allocation1] ss:$9 sm:$0xff] %v2828
      %v3072 = vld [vmem:[#allocation1] sm:$0xff]
      %v3074 = vunpack.c.l.b16 %v2835
      %v3075 = vunpack.c.l.b16 %v2839
      %v3076 = vunpack.c.l.b16 %v2843
      %v3077 = vunpack.c.l.b16 %v2847
      %v3078 = vunpack.c.l.b16 %v2850
      %v3079 = vunpack.c.l.b16 %v2854
      %v3080 = vunpack.c.l.b16 %v2858
      %v3081 = vunpack.c.l.b16 %v2862
      %v3082 = vunpack.c.l.b16 %v2865
      %v3083 = vunpack.c.l.b16 %v2869
      %v3084 = vunpack.c.l.b16 %v2873
      %v3085 = vunpack.c.l.b16 %v2877
      %v3086 = vunpack.c.l.b16 %v2880
      %v3087 = vunpack.c.l.b16 %v2884
      %v3088 = vunpack.c.l.b16 %v2888
      %v3089 = vunpack.c.l.b16 %v2892
      %v3090 = vunpack.c.l.b16 %v2895
      %v3091 = vunpack.c.l.b16 %v2899
      %v3092 = vunpack.c.l.b16 %v2903
      %v3093 = vunpack.c.l.b16 %v2907
      %v3094 = vunpack.c.l.b16 %v2910
      %v3095 = vunpack.c.l.b16 %v2914
      %v3096 = vunpack.c.l.b16 %v2918
      %v3097 = vunpack.c.l.b16 %v2922
      %v3098 = vunpack.c.l.b16 %v2925
      %v3099 = vunpack.c.l.b16 %v2929
      %v3100 = vunpack.c.l.b16 %v2933
      %v3101 = vunpack.c.l.b16 %v2937
      %v3102 = vunpack.c.l.b16 %v2940
      %v3103 = vunpack.c.l.b16 %v2944
      %v3104 = vunpack.c.l.b16 %v2948
      %v3105 = vunpack.c.l.b16 %v2952
      %v3106 = vunpack.c.l.b16 %v2955
      %v3107 = vunpack.c.l.b16 %v2959
      %v3108 = vunpack.c.l.b16 %v2963
      %v3109 = vunpack.c.l.b16 %v2967
      %v3110 = vunpack.c.l.b16 %v2970
      %v3111 = vunpack.c.l.b16 %v2974
      %v3112 = vunpack.c.l.b16 %v2978
      %v3113 = vunpack.c.l.b16 %v2982
      %v3114 = vunpack.c.l.b16 %v2985
      %v3115 = vunpack.c.l.b16 %v2989
      %v3116 = vunpack.c.l.b16 %v2993
      %v3117 = vunpack.c.l.b16 %v2997
      %v3118 = vunpack.c.l.b16 %v3000
      %v3119 = vunpack.c.l.b16 %v3004
      %v3120 = vunpack.c.l.b16 %v3008
      %v3121 = vunpack.c.l.b16 %v3012
      %v3122 = vunpack.c.l.b16 %v3015
      %v3123 = vunpack.c.l.b16 %v3019
      %v3124 = vunpack.c.l.b16 %v3023
      %v3125 = vunpack.c.l.b16 %v3027
      %v3126 = vunpack.c.l.b16 %v3030
      %v3127 = vunpack.c.l.b16 %v3034
      %v3128 = vunpack.c.l.b16 %v3038
      %v3129 = vunpack.c.l.b16 %v3042
      %v3130 = vunpack.c.l.b16 %v3045
      %v3131 = vunpack.c.l.b16 %v3049
      %v3132 = vunpack.c.l.b16 %v3053
      %v3133 = vunpack.c.l.b16 %v3057
      %v3134 = vunpack.c.l.b16 %v3060
      %v3135 = vunpack.c.l.b16 %v3064
      %v3136 = vunpack.c.l.b16 %v3068
      %v3137 = vunpack.c.l.b16 %v3072
      %v3138 = vrot.slane %v3075, 7
      %v3139 = vsel %vm1037, %v3138, %v3074
      %v3140 = vrot.slane %v3076, 6
      %v3141 = vsel %vm1041, %v3140, %v3139
      %v3142 = vrot.slane %v3077, 5
      %v3143 = vsel %vm1045, %v3142, %v3141
      %v3144 = vrot.slane %v3078, 4
      %v3145 = vsel %vm1567, %v3144, %v3143
      %v3146 = vrot.slane %v3079, 3
      %v3147 = vsel %vm1570, %v3146, %v3145
      %v3148 = vrot.slane %v3080, 2
      %v3149 = vsel %vm1573, %v3148, %v3147
      %v3150 = vrot.slane %v3081, 1
      %v3151 = vsel %vm1576, %v3150, %v3149
      %v3152 = vrot.slane %v3083, 7
      %v3153 = vsel %vm1037, %v3152, %v3082
      %v3154 = vrot.slane %v3084, 6
      %v3155 = vsel %vm1041, %v3154, %v3153
      %v3156 = vrot.slane %v3085, 5
      %v3157 = vsel %vm1045, %v3156, %v3155
      %v3158 = vrot.slane %v3086, 4
      %v3159 = vsel %vm1567, %v3158, %v3157
      %v3160 = vrot.slane %v3087, 3
      %v3161 = vsel %vm1570, %v3160, %v3159
      %v3162 = vrot.slane %v3088, 2
      %v3163 = vsel %vm1573, %v3162, %v3161
      %v3164 = vrot.slane %v3089, 1
      %v3165 = vsel %vm1576, %v3164, %v3163
      %v3166 = vrot.slane %v3091, 7
      %v3167 = vsel %vm1037, %v3166, %v3090
      %v3168 = vrot.slane %v3092, 6
      %v3169 = vsel %vm1041, %v3168, %v3167
      %v3170 = vrot.slane %v3093, 5
      %v3171 = vsel %vm1045, %v3170, %v3169
      %v3172 = vrot.slane %v3094, 4
      %v3173 = vsel %vm1567, %v3172, %v3171
      %v3174 = vrot.slane %v3095, 3
      %v3175 = vsel %vm1570, %v3174, %v3173
      %v3176 = vrot.slane %v3096, 2
      %v3177 = vsel %vm1573, %v3176, %v3175
      %v3178 = vrot.slane %v3097, 1
      %v3179 = vsel %vm1576, %v3178, %v3177
      %v3180 = vrot.slane %v3099, 7
      %v3181 = vsel %vm1037, %v3180, %v3098
      %v3182 = vrot.slane %v3100, 6
      %v3183 = vsel %vm1041, %v3182, %v3181
      %v3184 = vrot.slane %v3101, 5
      %v3185 = vsel %vm1045, %v3184, %v3183
      %v3186 = vrot.slane %v3102, 4
      %v3187 = vsel %vm1567, %v3186, %v3185
      %v3188 = vrot.slane %v3103, 3
      %v3189 = vsel %vm1570, %v3188, %v3187
      %v3190 = vrot.slane %v3104, 2
      %v3191 = vsel %vm1573, %v3190, %v3189
      %v3192 = vrot.slane %v3105, 1
      %v3193 = vsel %vm1576, %v3192, %v3191
      %v3194 = vrot.slane %v3107, 7
      %v3195 = vsel %vm1037, %v3194, %v3106
      %v3196 = vrot.slane %v3108, 6
      %v3197 = vsel %vm1041, %v3196, %v3195
      %v3198 = vrot.slane %v3109, 5
      %v3199 = vsel %vm1045, %v3198, %v3197
      %v3200 = vrot.slane %v3110, 4
      %v3201 = vsel %vm1567, %v3200, %v3199
      %v3202 = vrot.slane %v3111, 3
      %v3203 = vsel %vm1570, %v3202, %v3201
      %v3204 = vrot.slane %v3112, 2
      %v3205 = vsel %vm1573, %v3204, %v3203
      %v3206 = vrot.slane %v3113, 1
      %v3207 = vsel %vm1576, %v3206, %v3205
      %v3208 = vrot.slane %v3115, 7
      %v3209 = vsel %vm1037, %v3208, %v3114
      %v3210 = vrot.slane %v3116, 6
      %v3211 = vsel %vm1041, %v3210, %v3209
      %v3212 = vrot.slane %v3117, 5
      %v3213 = vsel %vm1045, %v3212, %v3211
      %v3214 = vrot.slane %v3118, 4
      %v3215 = vsel %vm1567, %v3214, %v3213
      %v3216 = vrot.slane %v3119, 3
      %v3217 = vsel %vm1570, %v3216, %v3215
      %v3218 = vrot.slane %v3120, 2
      %v3219 = vsel %vm1573, %v3218, %v3217
      %v3220 = vrot.slane %v3121, 1
      %v3221 = vsel %vm1576, %v3220, %v3219
      %v3222 = vrot.slane %v3123, 7
      %v3223 = vsel %vm1037, %v3222, %v3122
      %v3224 = vrot.slane %v3124, 6
      %v3225 = vsel %vm1041, %v3224, %v3223
      %v3226 = vrot.slane %v3125, 5
      %v3227 = vsel %vm1045, %v3226, %v3225
      %v3228 = vrot.slane %v3126, 4
      %v3229 = vsel %vm1567, %v3228, %v3227
      %v3230 = vrot.slane %v3127, 3
      %v3231 = vsel %vm1570, %v3230, %v3229
      %v3232 = vrot.slane %v3128, 2
      %v3233 = vsel %vm1573, %v3232, %v3231
      %v3234 = vrot.slane %v3129, 1
      %v3235 = vsel %vm1576, %v3234, %v3233
      %v3236 = vrot.slane %v3131, 7
      %v3237 = vsel %vm1037, %v3236, %v3130
      %v3238 = vrot.slane %v3132, 6
      %v3239 = vsel %vm1041, %v3238, %v3237
      %v3240 = vrot.slane %v3133, 5
      %v3241 = vsel %vm1045, %v3240, %v3239
      %v3242 = vrot.slane %v3134, 4
      %v3243 = vsel %vm1567, %v3242, %v3241
      %v3244 = vrot.slane %v3135, 3
      %v3245 = vsel %vm1570, %v3244, %v3243
      %v3246 = vrot.slane %v3136, 2
      %v3247 = vsel %vm1573, %v3246, %v3245
      %v3248 = vrot.slane %v3137, 1
      %v3249 = vsel %vm1576, %v3248, %v3247
      %v3250 = vpack.c.b16 %v3165, %v3151
      %v3251 = vpack.c.b16 %v3193, %v3179
      %v3252 = vpack.c.b16 %v3221, %v3207
      %v3253 = vpack.c.b16 %v3249, %v3235
      %v3255 = vsel %vm1680, %v3250, 0
      %v3258 = vsel %vm1680, %v3251, 0
      %v3261 = vsel %vm1680, %v3252, 0
      %v3264 = vsel %vm1680, %v3253, 0
      %v3267 = vsel %vm1693, %v2833, 0
      %3269 = vmatpush.bf16.msra.mxu0 0
      %3270 = vmatpush.bf16.msra.mxu0 0
      %3271 = vmatpush.bf16.msra.mxu0 0
      %3272 = vmatpush.bf16.msra.mxu0 0
      %3273 = vmatpush.bf16.msra.mxu0 0
      %3274 = vmatpush.bf16.msra.mxu0 0
      %3275 = vmatpush.bf16.msra.mxu0 0
      %3276 = vmatpush.bf16.msra.mxu0 %v3267
      %3277 = vmatmul.bf16.gmra.mxu0 %v3255
      %v3278 = vpop.f32.mrf.mxu0
      %v3279 = vadd.f32 0.0, %v3278
      %v3280 = vpop.f32.mrf.mxu0
      %v3281 = vadd.f32 0.0, %v3280
      %3282 = vmatmul.bf16.gmra.mxu0 %v3258
      %v3283 = vpop.f32.mrf.mxu0
      %v3284 = vadd.f32 0.0, %v3283
      %v3285 = vpop.f32.mrf.mxu0
      %v3286 = vadd.f32 0.0, %v3285
      %3287 = vmatmul.bf16.gmra.mxu0 %v3261
      %v3288 = vpop.f32.mrf.mxu0
      %v3289 = vadd.f32 0.0, %v3288
      %v3290 = vpop.f32.mrf.mxu0
      %v3291 = vadd.f32 0.0, %v3290
      %3292 = vmatmul.bf16.gmra.mxu0 %v3264
      %v3293 = vpop.f32.mrf.mxu0
      %v3294 = vadd.f32 0.0, %v3293
      %v3295 = vpop.f32.mrf.mxu0
      %v3296 = vadd.f32 0.0, %v3295
      %3297 = vdwg.mxu0
      %v3298 = vadd.f32 %v2560, %v3279
      %v3299 = vadd.f32 %v2561, %v3281
      %v3300 = vadd.f32 %v2562, %v3284
      %v3301 = vadd.f32 %v2563, %v3286
      %v3302 = vadd.f32 %v2564, %v3289
      %v3303 = vadd.f32 %v2565, %v3291
      %v3304 = vadd.f32 %v2566, %v3294
      %v3305 = vadd.f32 %v2567, %v3296
      %s3306 = scalar_lea.vmem %s3, 16
      %v3307 = vld [vmem:[%s3306] sm:$0xf]
      %3308 = vst [vmem:[#allocation1] ss:$9 sm:$0xff] %v2618
      %v3309 = vld [vmem:[#allocation1] sm:$0xff]
      %3311 = vst [vmem:[#allocation1] ss:$9 sm:$0xff] %v2621
      %v3312 = vld [vmem:[#allocation1] sm:$0xff]
      %3314 = vst [vmem:[#allocation1] ss:$9 sm:$0xff] %v2624
      %v3315 = vld [vmem:[#allocation1] sm:$0xff]
      %3317 = vst [vmem:[#allocation1] ss:$9 sm:$0xff] %v2627
      %v3318 = vld [vmem:[#allocation1] sm:$0xff]
      %3320 = vst [vmem:[#allocation1] ss:$9 sm:$0xff] %v2630
      %v3321 = vld [vmem:[#allocation1] sm:$0xff]
      %3323 = vst [vmem:[#allocation1] ss:$9 sm:$0xff] %v2633
      %v3324 = vld [vmem:[#allocation1] sm:$0xff]
      %3326 = vst [vmem:[#allocation1] ss:$9 sm:$0xff] %v2636
      %v3327 = vld [vmem:[#allocation1] sm:$0xff]
      %3329 = vst [vmem:[#allocation1] ss:$9 sm:$0xff] %v2639
      %v3330 = vld [vmem:[#allocation1] sm:$0xff]
      %3332 = vst [vmem:[#allocation1] ss:$9 sm:$0xff] %v2645
      %v3333 = vld [vmem:[#allocation1] sm:$0xff]
      %3335 = vst [vmem:[#allocation1] ss:$9 sm:$0xff] %v2648
      %v3336 = vld [vmem:[#allocation1] sm:$0xff]
      %3338 = vst [vmem:[#allocation1] ss:$9 sm:$0xff] %v2651
      %v3339 = vld [vmem:[#allocation1] sm:$0xff]
      %3341 = vst [vmem:[#allocation1] ss:$9 sm:$0xff] %v2654
      %v3342 = vld [vmem:[#allocation1] sm:$0xff]
      %3344 = vst [vmem:[#allocation1] ss:$9 sm:$0xff] %v2657
      %v3345 = vld [vmem:[#allocation1] sm:$0xff]
      %3347 = vst [vmem:[#allocation1] ss:$9 sm:$0xff] %v2660
      %v3348 = vld [vmem:[#allocation1] sm:$0xff]
      %3350 = vst [vmem:[#allocation1] ss:$9 sm:$0xff] %v2663
      %v3351 = vld [vmem:[#allocation1] sm:$0xff]
      %3353 = vst [vmem:[#allocation1] ss:$9 sm:$0xff] %v2666
      %v3354 = vld [vmem:[#allocation1] sm:$0xff]
      %3356 = vst [vmem:[#allocation1] ss:$9 sm:$0xff] %v2672
      %v3357 = vld [vmem:[#allocation1] sm:$0xff]
      %3359 = vst [vmem:[#allocation1] ss:$9 sm:$0xff] %v2675
      %v3360 = vld [vmem:[#allocation1] sm:$0xff]
      %3362 = vst [vmem:[#allocation1] ss:$9 sm:$0xff] %v2678
      %v3363 = vld [vmem:[#allocation1] sm:$0xff]
      %3365 = vst [vmem:[#allocation1] ss:$9 sm:$0xff] %v2681
      %v3366 = vld [vmem:[#allocation1] sm:$0xff]
      %3368 = vst [vmem:[#allocation1] ss:$9 sm:$0xff] %v2684
      %v3369 = vld [vmem:[#allocation1] sm:$0xff]
      %3371 = vst [vmem:[#allocation1] ss:$9 sm:$0xff] %v2687
      %v3372 = vld [vmem:[#allocation1] sm:$0xff]
      %3374 = vst [vmem:[#allocation1] ss:$9 sm:$0xff] %v2690
      %v3375 = vld [vmem:[#allocation1] sm:$0xff]
      %3377 = vst [vmem:[#allocation1] ss:$9 sm:$0xff] %v2693
      %v3378 = vld [vmem:[#allocation1] sm:$0xff]
      %3380 = vst [vmem:[#allocation1] ss:$9 sm:$0xff] %v2699
      %v3381 = vld [vmem:[#allocation1] sm:$0xff]
      %3383 = vst [vmem:[#allocation1] ss:$9 sm:$0xff] %v2702
      %v3384 = vld [vmem:[#allocation1] sm:$0xff]
      %3386 = vst [vmem:[#allocation1] ss:$9 sm:$0xff] %v2705
      %v3387 = vld [vmem:[#allocation1] sm:$0xff]
      %3389 = vst [vmem:[#allocation1] ss:$9 sm:$0xff] %v2708
      %v3390 = vld [vmem:[#allocation1] sm:$0xff]
      %3392 = vst [vmem:[#allocation1] ss:$9 sm:$0xff] %v2711
      %v3393 = vld [vmem:[#allocation1] sm:$0xff]
      %3395 = vst [vmem:[#allocation1] ss:$9 sm:$0xff] %v2714
      %v3396 = vld [vmem:[#allocation1] sm:$0xff]
      %3398 = vst [vmem:[#allocation1] ss:$9 sm:$0xff] %v2717
      %v3399 = vld [vmem:[#allocation1] sm:$0xff]
      %3401 = vst [vmem:[#allocation1] ss:$9 sm:$0xff] %v2720
      %v3402 = vld [vmem:[#allocation1] sm:$0xff]
      %3404 = vst [vmem:[#allocation1] ss:$9 sm:$0xff] %v2726
      %v3405 = vld [vmem:[#allocation1] sm:$0xff]
      %3407 = vst [vmem:[#allocation1] ss:$9 sm:$0xff] %v2729
      %v3408 = vld [vmem:[#allocation1] sm:$0xff]
      %3410 = vst [vmem:[#allocation1] ss:$9 sm:$0xff] %v2732
      %v3411 = vld [vmem:[#allocation1] sm:$0xff]
      %3413 = vst [vmem:[#allocation1] ss:$9 sm:$0xff] %v2735
      %v3414 = vld [vmem:[#allocation1] sm:$0xff]
      %3416 = vst [vmem:[#allocation1] ss:$9 sm:$0xff] %v2738
      %v3417 = vld [vmem:[#allocation1] sm:$0xff]
      %3419 = vst [vmem:[#allocation1] ss:$9 sm:$0xff] %v2741
      %v3420 = vld [vmem:[#allocation1] sm:$0xff]
      %3422 = vst [vmem:[#allocation1] ss:$9 sm:$0xff] %v2744
      %v3423 = vld [vmem:[#allocation1] sm:$0xff]
      %3425 = vst [vmem:[#allocation1] ss:$9 sm:$0xff] %v2747
      %v3426 = vld [vmem:[#allocation1] sm:$0xff]
      %3428 = vst [vmem:[#allocation1] ss:$9 sm:$0xff] %v2753
      %v3429 = vld [vmem:[#allocation1] sm:$0xff]
      %3431 = vst [vmem:[#allocation1] ss:$9 sm:$0xff] %v2756
      %v3432 = vld [vmem:[#allocation1] sm:$0xff]
      %3434 = vst [vmem:[#allocation1] ss:$9 sm:$0xff] %v2759
      %v3435 = vld [vmem:[#allocation1] sm:$0xff]
      %3437 = vst [vmem:[#allocation1] ss:$9 sm:$0xff] %v2762
      %v3438 = vld [vmem:[#allocation1] sm:$0xff]
      %3440 = vst [vmem:[#allocation1] ss:$9 sm:$0xff] %v2765
      %v3441 = vld [vmem:[#allocation1] sm:$0xff]
      %3443 = vst [vmem:[#allocation1] ss:$9 sm:$0xff] %v2768
      %v3444 = vld [vmem:[#allocation1] sm:$0xff]
      %3446 = vst [vmem:[#allocation1] ss:$9 sm:$0xff] %v2771
      %v3447 = vld [vmem:[#allocation1] sm:$0xff]
      %3449 = vst [vmem:[#allocation1] ss:$9 sm:$0xff] %v2774
      %v3450 = vld [vmem:[#allocation1] sm:$0xff]
      %3452 = vst [vmem:[#allocation1] ss:$9 sm:$0xff] %v2780
      %v3453 = vld [vmem:[#allocation1] sm:$0xff]
      %3455 = vst [vmem:[#allocation1] ss:$9 sm:$0xff] %v2783
      %v3456 = vld [vmem:[#allocation1] sm:$0xff]
      %3458 = vst [vmem:[#allocation1] ss:$9 sm:$0xff] %v2786
      %v3459 = vld [vmem:[#allocation1] sm:$0xff]
      %3461 = vst [vmem:[#allocation1] ss:$9 sm:$0xff] %v2789
      %v3462 = vld [vmem:[#allocation1] sm:$0xff]
      %3464 = vst [vmem:[#allocation1] ss:$9 sm:$0xff] %v2792
      %v3465 = vld [vmem:[#allocation1] sm:$0xff]
      %3467 = vst [vmem:[#allocation1] ss:$9 sm:$0xff] %v2795
      %v3468 = vld [vmem:[#allocation1] sm:$0xff]
      %3470 = vst [vmem:[#allocation1] ss:$9 sm:$0xff] %v2798
      %v3471 = vld [vmem:[#allocation1] sm:$0xff]
      %3473 = vst [vmem:[#allocation1] ss:$9 sm:$0xff] %v2801
      %v3474 = vld [vmem:[#allocation1] sm:$0xff]
      %3476 = vst [vmem:[#allocation1] ss:$9 sm:$0xff] %v2807
      %v3477 = vld [vmem:[#allocation1] sm:$0xff]
      %3479 = vst [vmem:[#allocation1] ss:$9 sm:$0xff] %v2810
      %v3480 = vld [vmem:[#allocation1] sm:$0xff]
      %3482 = vst [vmem:[#allocation1] ss:$9 sm:$0xff] %v2813
      %v3483 = vld [vmem:[#allocation1] sm:$0xff]
      %3485 = vst [vmem:[#allocation1] ss:$9 sm:$0xff] %v2816
      %v3486 = vld [vmem:[#allocation1] sm:$0xff]
      %3488 = vst [vmem:[#allocation1] ss:$9 sm:$0xff] %v2819
      %v3489 = vld [vmem:[#allocation1] sm:$0xff]
      %3491 = vst [vmem:[#allocation1] ss:$9 sm:$0xff] %v2822
      %v3492 = vld [vmem:[#allocation1] sm:$0xff]
      %3494 = vst [vmem:[#allocation1] ss:$9 sm:$0xff] %v2825
      %v3495 = vld [vmem:[#allocation1] sm:$0xff]
      %3497 = vst [vmem:[#allocation1] ss:$9 sm:$0xff] %v2828
      %v3498 = vld [vmem:[#allocation1] sm:$0xff]
      %v3500 = vunpack.c.l.b16 %v3309
      %v3501 = vunpack.c.l.b16 %v3312
      %v3502 = vunpack.c.l.b16 %v3315
      %v3503 = vunpack.c.l.b16 %v3318
      %v3504 = vunpack.c.l.b16 %v3321
      %v3505 = vunpack.c.l.b16 %v3324
      %v3506 = vunpack.c.l.b16 %v3327
      %v3507 = vunpack.c.l.b16 %v3330
      %v3508 = vunpack.c.l.b16 %v3333
      %v3509 = vunpack.c.l.b16 %v3336
      %v3510 = vunpack.c.l.b16 %v3339
      %v3511 = vunpack.c.l.b16 %v3342
      %v3512 = vunpack.c.l.b16 %v3345
      %v3513 = vunpack.c.l.b16 %v3348
      %v3514 = vunpack.c.l.b16 %v3351
      %v3515 = vunpack.c.l.b16 %v3354
      %v3516 = vunpack.c.l.b16 %v3357
      %v3517 = vunpack.c.l.b16 %v3360
      %v3518 = vunpack.c.l.b16 %v3363
      %v3519 = vunpack.c.l.b16 %v3366
      %v3520 = vunpack.c.l.b16 %v3369
      %v3521 = vunpack.c.l.b16 %v3372
      %v3522 = vunpack.c.l.b16 %v3375
      %v3523 = vunpack.c.l.b16 %v3378
      %v3524 = vunpack.c.l.b16 %v3381
      %v3525 = vunpack.c.l.b16 %v3384
      %v3526 = vunpack.c.l.b16 %v3387
      %v3527 = vunpack.c.l.b16 %v3390
      %v3528 = vunpack.c.l.b16 %v3393
      %v3529 = vunpack.c.l.b16 %v3396
      %v3530 = vunpack.c.l.b16 %v3399
      %v3531 = vunpack.c.l.b16 %v3402
      %v3532 = vunpack.c.l.b16 %v3405
      %v3533 = vunpack.c.l.b16 %v3408
      %v3534 = vunpack.c.l.b16 %v3411
      %v3535 = vunpack.c.l.b16 %v3414
      %v3536 = vunpack.c.l.b16 %v3417
      %v3537 = vunpack.c.l.b16 %v3420
      %v3538 = vunpack.c.l.b16 %v3423
      %v3539 = vunpack.c.l.b16 %v3426
      %v3540 = vunpack.c.l.b16 %v3429
      %v3541 = vunpack.c.l.b16 %v3432
      %v3542 = vunpack.c.l.b16 %v3435
      %v3543 = vunpack.c.l.b16 %v3438
      %v3544 = vunpack.c.l.b16 %v3441
      %v3545 = vunpack.c.l.b16 %v3444
      %v3546 = vunpack.c.l.b16 %v3447
      %v3547 = vunpack.c.l.b16 %v3450
      %v3548 = vunpack.c.l.b16 %v3453
      %v3549 = vunpack.c.l.b16 %v3456
      %v3550 = vunpack.c.l.b16 %v3459
      %v3551 = vunpack.c.l.b16 %v3462
      %v3552 = vunpack.c.l.b16 %v3465
      %v3553 = vunpack.c.l.b16 %v3468
      %v3554 = vunpack.c.l.b16 %v3471
      %v3555 = vunpack.c.l.b16 %v3474
      %v3556 = vunpack.c.l.b16 %v3477
      %v3557 = vunpack.c.l.b16 %v3480
      %v3558 = vunpack.c.l.b16 %v3483
      %v3559 = vunpack.c.l.b16 %v3486
      %v3560 = vunpack.c.l.b16 %v3489
      %v3561 = vunpack.c.l.b16 %v3492
      %v3562 = vunpack.c.l.b16 %v3495
      %v3563 = vunpack.c.l.b16 %v3498
      %v3564 = vrot.slane %v3500, 1
      %v3565 = vsel %vm1037, %v3501, %v3564
      %v3566 = vrot.slane %v3502, 7
      %v3567 = vsel %vm1041, %v3566, %v3565
      %v3568 = vrot.slane %v3503, 6
      %v3569 = vsel %vm1045, %v3568, %v3567
      %v3570 = vrot.slane %v3504, 5
      %v3571 = vsel %vm1567, %v3570, %v3569
      %v3572 = vrot.slane %v3505, 4
      %v3573 = vsel %vm1570, %v3572, %v3571
      %v3574 = vrot.slane %v3506, 3
      %v3575 = vsel %vm1573, %v3574, %v3573
      %v3576 = vrot.slane %v3507, 2
      %v3577 = vsel %vm1576, %v3576, %v3575
      %v3578 = vrot.slane %v3508, 1
      %v3579 = vsel %vm1037, %v3509, %v3578
      %v3580 = vrot.slane %v3510, 7
      %v3581 = vsel %vm1041, %v3580, %v3579
      %v3582 = vrot.slane %v3511, 6
      %v3583 = vsel %vm1045, %v3582, %v3581
      %v3584 = vrot.slane %v3512, 5
      %v3585 = vsel %vm1567, %v3584, %v3583
      %v3586 = vrot.slane %v3513, 4
      %v3587 = vsel %vm1570, %v3586, %v3585
      %v3588 = vrot.slane %v3514, 3
      %v3589 = vsel %vm1573, %v3588, %v3587
      %v3590 = vrot.slane %v3515, 2
      %v3591 = vsel %vm1576, %v3590, %v3589
      %v3592 = vrot.slane %v3516, 1
      %v3593 = vsel %vm1037, %v3517, %v3592
      %v3594 = vrot.slane %v3518, 7
      %v3595 = vsel %vm1041, %v3594, %v3593
      %v3596 = vrot.slane %v3519, 6
      %v3597 = vsel %vm1045, %v3596, %v3595
      %v3598 = vrot.slane %v3520, 5
      %v3599 = vsel %vm1567, %v3598, %v3597
      %v3600 = vrot.slane %v3521, 4
      %v3601 = vsel %vm1570, %v3600, %v3599
      %v3602 = vrot.slane %v3522, 3
      %v3603 = vsel %vm1573, %v3602, %v3601
      %v3604 = vrot.slane %v3523, 2
      %v3605 = vsel %vm1576, %v3604, %v3603
      %v3606 = vrot.slane %v3524, 1
      %v3607 = vsel %vm1037, %v3525, %v3606
      %v3608 = vrot.slane %v3526, 7
      %v3609 = vsel %vm1041, %v3608, %v3607
      %v3610 = vrot.slane %v3527, 6
      %v3611 = vsel %vm1045, %v3610, %v3609
      %v3612 = vrot.slane %v3528, 5
      %v3613 = vsel %vm1567, %v3612, %v3611
      %v3614 = vrot.slane %v3529, 4
      %v3615 = vsel %vm1570, %v3614, %v3613
      %v3616 = vrot.slane %v3530, 3
      %v3617 = vsel %vm1573, %v3616, %v3615
      %v3618 = vrot.slane %v3531, 2
      %v3619 = vsel %vm1576, %v3618, %v3617
      %v3620 = vrot.slane %v3532, 1
      %v3621 = vsel %vm1037, %v3533, %v3620
      %v3622 = vrot.slane %v3534, 7
      %v3623 = vsel %vm1041, %v3622, %v3621
      %v3624 = vrot.slane %v3535, 6
      %v3625 = vsel %vm1045, %v3624, %v3623
      %v3626 = vrot.slane %v3536, 5
      %v3627 = vsel %vm1567, %v3626, %v3625
      %v3628 = vrot.slane %v3537, 4
      %v3629 = vsel %vm1570, %v3628, %v3627
      %v3630 = vrot.slane %v3538, 3
      %v3631 = vsel %vm1573, %v3630, %v3629
      %v3632 = vrot.slane %v3539, 2
      %v3633 = vsel %vm1576, %v3632, %v3631
      %v3634 = vrot.slane %v3540, 1
      %v3635 = vsel %vm1037, %v3541, %v3634
      %v3636 = vrot.slane %v3542, 7
      %v3637 = vsel %vm1041, %v3636, %v3635
      %v3638 = vrot.slane %v3543, 6
      %v3639 = vsel %vm1045, %v3638, %v3637
      %v3640 = vrot.slane %v3544, 5
      %v3641 = vsel %vm1567, %v3640, %v3639
      %v3642 = vrot.slane %v3545, 4
      %v3643 = vsel %vm1570, %v3642, %v3641
      %v3644 = vrot.slane %v3546, 3
      %v3645 = vsel %vm1573, %v3644, %v3643
      %v3646 = vrot.slane %v3547, 2
      %v3647 = vsel %vm1576, %v3646, %v3645
      %v3648 = vrot.slane %v3548, 1
      %v3649 = vsel %vm1037, %v3549, %v3648
      %v3650 = vrot.slane %v3550, 7
      %v3651 = vsel %vm1041, %v3650, %v3649
      %v3652 = vrot.slane %v3551, 6
      %v3653 = vsel %vm1045, %v3652, %v3651
      %v3654 = vrot.slane %v3552, 5
      %v3655 = vsel %vm1567, %v3654, %v3653
      %v3656 = vrot.slane %v3553, 4
      %v3657 = vsel %vm1570, %v3656, %v3655
      %v3658 = vrot.slane %v3554, 3
      %v3659 = vsel %vm1573, %v3658, %v3657
      %v3660 = vrot.slane %v3555, 2
      %v3661 = vsel %vm1576, %v3660, %v3659
      %v3662 = vrot.slane %v3556, 1
      %v3663 = vsel %vm1037, %v3557, %v3662
      %v3664 = vrot.slane %v3558, 7
      %v3665 = vsel %vm1041, %v3664, %v3663
      %v3666 = vrot.slane %v3559, 6
      %v3667 = vsel %vm1045, %v3666, %v3665
      %v3668 = vrot.slane %v3560, 5
      %v3669 = vsel %vm1567, %v3668, %v3667
      %v3670 = vrot.slane %v3561, 4
      %v3671 = vsel %vm1570, %v3670, %v3669
      %v3672 = vrot.slane %v3562, 3
      %v3673 = vsel %vm1573, %v3672, %v3671
      %v3674 = vrot.slane %v3563, 2
      %v3675 = vsel %vm1576, %v3674, %v3673
      %v3676 = vpack.c.b16 %v3591, %v3577
      %v3677 = vpack.c.b16 %v3619, %v3605
      %v3678 = vpack.c.b16 %v3647, %v3633
      %v3679 = vpack.c.b16 %v3675, %v3661
      %v3681 = vsel %vm1680, %v3676, 0
      %v3684 = vsel %vm1680, %v3677, 0
      %v3687 = vsel %vm1680, %v3678, 0
      %v3690 = vsel %vm1680, %v3679, 0
      %v3693 = vsel %vm1693, %v3307, 0
      %3695 = vmatpush.bf16.msra.mxu0 0
      %3696 = vmatpush.bf16.msra.mxu0 0
      %3697 = vmatpush.bf16.msra.mxu0 0
      %3698 = vmatpush.bf16.msra.mxu0 0
      %3699 = vmatpush.bf16.msra.mxu0 0
      %3700 = vmatpush.bf16.msra.mxu0 0
      %3701 = vmatpush.bf16.msra.mxu0 0
      %3702 = vmatpush.bf16.msra.mxu0 %v3693
      %3703 = vmatmul.bf16.gmra.mxu0 %v3681
      %v3704 = vpop.f32.mrf.mxu0
      %v3705 = vadd.f32 0.0, %v3704
      %v3706 = vpop.f32.mrf.mxu0
      %v3707 = vadd.f32 0.0, %v3706
      %3708 = vmatmul.bf16.gmra.mxu0 %v3684
      %v3709 = vpop.f32.mrf.mxu0
      %v3710 = vadd.f32 0.0, %v3709
      %v3711 = vpop.f32.mrf.mxu0
      %v3712 = vadd.f32 0.0, %v3711
      %3713 = vmatmul.bf16.gmra.mxu0 %v3687
      %v3714 = vpop.f32.mrf.mxu0
      %v3715 = vadd.f32 0.0, %v3714
      %v3716 = vpop.f32.mrf.mxu0
      %v3717 = vadd.f32 0.0, %v3716
      %3718 = vmatmul.bf16.gmra.mxu0 %v3690
      %v3719 = vpop.f32.mrf.mxu0
      %v3720 = vadd.f32 0.0, %v3719
      %v3721 = vpop.f32.mrf.mxu0
      %v3722 = vadd.f32 0.0, %v3721
      %3723 = vdwg.mxu0
      %v3724 = vadd.f32 %v3298, %v3705
      %v3725 = vadd.f32 %v3299, %v3707
      %v3726 = vadd.f32 %v3300, %v3710
      %v3727 = vadd.f32 %v3301, %v3712
      %v3728 = vadd.f32 %v3302, %v3715
      %v3729 = vadd.f32 %v3303, %v3717
      %v3730 = vadd.f32 %v3304, %v3720
      %v3731 = vadd.f32 %v3305, %v3722
      %s3732 = scalar_lea.vmem %s3, 20
      %v3733 = vld [vmem:[%s3732] sm:$0xf]
      %3734 = vst [vmem:[#allocation1] ss:$9 sm:$0xff] %v2621
      %v3735 = vld [vmem:[#allocation1] sm:$0xff]
      %3737 = vst [vmem:[#allocation1] ss:$9 sm:$0xff] %v2624
      %v3738 = vld [vmem:[#allocation1] sm:$0xff]
      %3740 = vst [vmem:[#allocation1] ss:$9 sm:$0xff] %v2627
      %v3741 = vld [vmem:[#allocation1] sm:$0xff]
      %3743 = vst [vmem:[#allocation1] ss:$9 sm:$0xff] %v2630
      %v3744 = vld [vmem:[#allocation1] sm:$0xff]
      %3746 = vst [vmem:[#allocation1] ss:$9 sm:$0xff] %v2633
      %v3747 = vld [vmem:[#allocation1] sm:$0xff]
      %3749 = vst [vmem:[#allocation1] ss:$9 sm:$0xff] %v2636
      %v3750 = vld [vmem:[#allocation1] sm:$0xff]
      %3752 = vst [vmem:[#allocation1] ss:$9 sm:$0xff] %v2639
      %v3753 = vld [vmem:[#allocation1] sm:$0xff]
      %3755 = vst [vmem:[#allocation1] ss:$9 sm:$0xff] %v2642
      %v3756 = vld [vmem:[#allocation1] sm:$0xff]
      %3758 = vst [vmem:[#allocation1] ss:$9 sm:$0xff] %v2648
      %v3759 = vld [vmem:[#allocation1] sm:$0xff]
      %3761 = vst [vmem:[#allocation1] ss:$9 sm:$0xff] %v2651
      %v3762 = vld [vmem:[#allocation1] sm:$0xff]
      %3764 = vst [vmem:[#allocation1] ss:$9 sm:$0xff] %v2654
      %v3765 = vld [vmem:[#allocation1] sm:$0xff]
      %3767 = vst [vmem:[#allocation1] ss:$9 sm:$0xff] %v2657
      %v3768 = vld [vmem:[#allocation1] sm:$0xff]
      %3770 = vst [vmem:[#allocation1] ss:$9 sm:$0xff] %v2660
      %v3771 = vld [vmem:[#allocation1] sm:$0xff]
      %3773 = vst [vmem:[#allocation1] ss:$9 sm:$0xff] %v2663
      %v3774 = vld [vmem:[#allocation1] sm:$0xff]
      %3776 = vst [vmem:[#allocation1] ss:$9 sm:$0xff] %v2666
      %v3777 = vld [vmem:[#allocation1] sm:$0xff]
      %3779 = vst [vmem:[#allocation1] ss:$9 sm:$0xff] %v2669
      %v3780 = vld [vmem:[#allocation1] sm:$0xff]
      %3782 = vst [vmem:[#allocation1] ss:$9 sm:$0xff] %v2675
      %v3783 = vld [vmem:[#allocation1] sm:$0xff]
      %3785 = vst [vmem:[#allocation1] ss:$9 sm:$0xff] %v2678
      %v3786 = vld [vmem:[#allocation1] sm:$0xff]
      %3788 = vst [vmem:[#allocation1] ss:$9 sm:$0xff] %v2681
      %v3789 = vld [vmem:[#allocation1] sm:$0xff]
      %3791 = vst [vmem:[#allocation1] ss:$9 sm:$0xff] %v2684
      %v3792 = vld [vmem:[#allocation1] sm:$0xff]
      %3794 = vst [vmem:[#allocation1] ss:$9 sm:$0xff] %v2687
      %v3795 = vld [vmem:[#allocation1] sm:$0xff]
      %3797 = vst [vmem:[#allocation1] ss:$9 sm:$0xff] %v2690
      %v3798 = vld [vmem:[#allocation1] sm:$0xff]
      %3800 = vst [vmem:[#allocation1] ss:$9 sm:$0xff] %v2693
      %v3801 = vld [vmem:[#allocation1] sm:$0xff]
      %3803 = vst [vmem:[#allocation1] ss:$9 sm:$0xff] %v2696
      %v3804 = vld [vmem:[#allocation1] sm:$0xff]
      %3806 = vst [vmem:[#allocation1] ss:$9 sm:$0xff] %v2702
      %v3807 = vld [vmem:[#allocation1] sm:$0xff]
      %3809 = vst [vmem:[#allocation1] ss:$9 sm:$0xff] %v2705
      %v3810 = vld [vmem:[#allocation1] sm:$0xff]
      %3812 = vst [vmem:[#allocation1] ss:$9 sm:$0xff] %v2708
      %v3813 = vld [vmem:[#allocation1] sm:$0xff]
      %3815 = vst [vmem:[#allocation1] ss:$9 sm:$0xff] %v2711
      %v3816 = vld [vmem:[#allocation1] sm:$0xff]
      %3818 = vst [vmem:[#allocation1] ss:$9 sm:$0xff] %v2714
      %v3819 = vld [vmem:[#allocation1] sm:$0xff]
      %3821 = vst [vmem:[#allocation1] ss:$9 sm:$0xff] %v2717
      %v3822 = vld [vmem:[#allocation1] sm:$0xff]
      %3824 = vst [vmem:[#allocation1] ss:$9 sm:$0xff] %v2720
      %v3825 = vld [vmem:[#allocation1] sm:$0xff]
      %3827 = vst [vmem:[#allocation1] ss:$9 sm:$0xff] %v2723
      %v3828 = vld [vmem:[#allocation1] sm:$0xff]
      %3830 = vst [vmem:[#allocation1] ss:$9 sm:$0xff] %v2729
      %v3831 = vld [vmem:[#allocation1] sm:$0xff]
      %3833 = vst [vmem:[#allocation1] ss:$9 sm:$0xff] %v2732
      %v3834 = vld [vmem:[#allocation1] sm:$0xff]
      %3836 = vst [vmem:[#allocation1] ss:$9 sm:$0xff] %v2735
      %v3837 = vld [vmem:[#allocation1] sm:$0xff]
      %3839 = vst [vmem:[#allocation1] ss:$9 sm:$0xff] %v2738
      %v3840 = vld [vmem:[#allocation1] sm:$0xff]
      %3842 = vst [vmem:[#allocation1] ss:$9 sm:$0xff] %v2741
      %v3843 = vld [vmem:[#allocation1] sm:$0xff]
      %3845 = vst [vmem:[#allocation1] ss:$9 sm:$0xff] %v2744
      %v3846 = vld [vmem:[#allocation1] sm:$0xff]
      %3848 = vst [vmem:[#allocation1] ss:$9 sm:$0xff] %v2747
      %v3849 = vld [vmem:[#allocation1] sm:$0xff]
      %3851 = vst [vmem:[#allocation1] ss:$9 sm:$0xff] %v2750
      %v3852 = vld [vmem:[#allocation1] sm:$0xff]
      %3854 = vst [vmem:[#allocation1] ss:$9 sm:$0xff] %v2756
      %v3855 = vld [vmem:[#allocation1] sm:$0xff]
      %3857 = vst [vmem:[#allocation1] ss:$9 sm:$0xff] %v2759
      %v3858 = vld [vmem:[#allocation1] sm:$0xff]
      %3860 = vst [vmem:[#allocation1] ss:$9 sm:$0xff] %v2762
      %v3861 = vld [vmem:[#allocation1] sm:$0xff]
      %3863 = vst [vmem:[#allocation1] ss:$9 sm:$0xff] %v2765
      %v3864 = vld [vmem:[#allocation1] sm:$0xff]
      %3866 = vst [vmem:[#allocation1] ss:$9 sm:$0xff] %v2768
      %v3867 = vld [vmem:[#allocation1] sm:$0xff]
      %3869 = vst [vmem:[#allocation1] ss:$9 sm:$0xff] %v2771
      %v3870 = vld [vmem:[#allocation1] sm:$0xff]
      %3872 = vst [vmem:[#allocation1] ss:$9 sm:$0xff] %v2774
      %v3873 = vld [vmem:[#allocation1] sm:$0xff]
      %3875 = vst [vmem:[#allocation1] ss:$9 sm:$0xff] %v2777
      %v3876 = vld [vmem:[#allocation1] sm:$0xff]
      %3878 = vst [vmem:[#allocation1] ss:$9 sm:$0xff] %v2783
      %v3879 = vld [vmem:[#allocation1] sm:$0xff]
      %3881 = vst [vmem:[#allocation1] ss:$9 sm:$0xff] %v2786
      %v3882 = vld [vmem:[#allocation1] sm:$0xff]
      %3884 = vst [vmem:[#allocation1] ss:$9 sm:$0xff] %v2789
      %v3885 = vld [vmem:[#allocation1] sm:$0xff]
      %3887 = vst [vmem:[#allocation1] ss:$9 sm:$0xff] %v2792
      %v3888 = vld [vmem:[#allocation1] sm:$0xff]
      %3890 = vst [vmem:[#allocation1] ss:$9 sm:$0xff] %v2795
      %v3891 = vld [vmem:[#allocation1] sm:$0xff]
      %3893 = vst [vmem:[#allocation1] ss:$9 sm:$0xff] %v2798
      %v3894 = vld [vmem:[#allocation1] sm:$0xff]
      %3896 = vst [vmem:[#allocation1] ss:$9 sm:$0xff] %v2801
      %v3897 = vld [vmem:[#allocation1] sm:$0xff]
      %3899 = vst [vmem:[#allocation1] ss:$9 sm:$0xff] %v2804
      %v3900 = vld [vmem:[#allocation1] sm:$0xff]
      %3902 = vst [vmem:[#allocation1] ss:$9 sm:$0xff] %v2810
      %v3903 = vld [vmem:[#allocation1] sm:$0xff]
      %3905 = vst [vmem:[#allocation1] ss:$9 sm:$0xff] %v2813
      %v3906 = vld [vmem:[#allocation1] sm:$0xff]
      %3908 = vst [vmem:[#allocation1] ss:$9 sm:$0xff] %v2816
      %v3909 = vld [vmem:[#allocation1] sm:$0xff]
      %3911 = vst [vmem:[#allocation1] ss:$9 sm:$0xff] %v2819
      %v3912 = vld [vmem:[#allocation1] sm:$0xff]
      %3914 = vst [vmem:[#allocation1] ss:$9 sm:$0xff] %v2822
      %v3915 = vld [vmem:[#allocation1] sm:$0xff]
      %3917 = vst [vmem:[#allocation1] ss:$9 sm:$0xff] %v2825
      %v3918 = vld [vmem:[#allocation1] sm:$0xff]
      %3920 = vst [vmem:[#allocation1] ss:$9 sm:$0xff] %v2828
      %v3921 = vld [vmem:[#allocation1] sm:$0xff]
      %3923 = vst [vmem:[#allocation1] ss:$9 sm:$0xff] %v2831
      %v3924 = vld [vmem:[#allocation1] sm:$0xff]
      %v3926 = vunpack.c.l.b16 %v3735
      %v3927 = vunpack.c.l.b16 %v3738
      %v3928 = vunpack.c.l.b16 %v3741
      %v3929 = vunpack.c.l.b16 %v3744
      %v3930 = vunpack.c.l.b16 %v3747
      %v3931 = vunpack.c.l.b16 %v3750
      %v3932 = vunpack.c.l.b16 %v3753
      %v3933 = vunpack.c.l.b16 %v3756
      %v3934 = vunpack.c.l.b16 %v3759
      %v3935 = vunpack.c.l.b16 %v3762
      %v3936 = vunpack.c.l.b16 %v3765
      %v3937 = vunpack.c.l.b16 %v3768
      %v3938 = vunpack.c.l.b16 %v3771
      %v3939 = vunpack.c.l.b16 %v3774
      %v3940 = vunpack.c.l.b16 %v3777
      %v3941 = vunpack.c.l.b16 %v3780
      %v3942 = vunpack.c.l.b16 %v3783
      %v3943 = vunpack.c.l.b16 %v3786
      %v3944 = vunpack.c.l.b16 %v3789
      %v3945 = vunpack.c.l.b16 %v3792
      %v3946 = vunpack.c.l.b16 %v3795
      %v3947 = vunpack.c.l.b16 %v3798
      %v3948 = vunpack.c.l.b16 %v3801
      %v3949 = vunpack.c.l.b16 %v3804
      %v3950 = vunpack.c.l.b16 %v3807
      %v3951 = vunpack.c.l.b16 %v3810
      %v3952 = vunpack.c.l.b16 %v3813
      %v3953 = vunpack.c.l.b16 %v3816
      %v3954 = vunpack.c.l.b16 %v3819
      %v3955 = vunpack.c.l.b16 %v3822
      %v3956 = vunpack.c.l.b16 %v3825
      %v3957 = vunpack.c.l.b16 %v3828
      %v3958 = vunpack.c.l.b16 %v3831
      %v3959 = vunpack.c.l.b16 %v3834
      %v3960 = vunpack.c.l.b16 %v3837
      %v3961 = vunpack.c.l.b16 %v3840
      %v3962 = vunpack.c.l.b16 %v3843
      %v3963 = vunpack.c.l.b16 %v3846
      %v3964 = vunpack.c.l.b16 %v3849
      %v3965 = vunpack.c.l.b16 %v3852
      %v3966 = vunpack.c.l.b16 %v3855
      %v3967 = vunpack.c.l.b16 %v3858
      %v3968 = vunpack.c.l.b16 %v3861
      %v3969 = vunpack.c.l.b16 %v3864
      %v3970 = vunpack.c.l.b16 %v3867
      %v3971 = vunpack.c.l.b16 %v3870
      %v3972 = vunpack.c.l.b16 %v3873
      %v3973 = vunpack.c.l.b16 %v3876
      %v3974 = vunpack.c.l.b16 %v3879
      %v3975 = vunpack.c.l.b16 %v3882
      %v3976 = vunpack.c.l.b16 %v3885
      %v3977 = vunpack.c.l.b16 %v3888
      %v3978 = vunpack.c.l.b16 %v3891
      %v3979 = vunpack.c.l.b16 %v3894
      %v3980 = vunpack.c.l.b16 %v3897
      %v3981 = vunpack.c.l.b16 %v3900
      %v3982 = vunpack.c.l.b16 %v3903
      %v3983 = vunpack.c.l.b16 %v3906
      %v3984 = vunpack.c.l.b16 %v3909
      %v3985 = vunpack.c.l.b16 %v3912
      %v3986 = vunpack.c.l.b16 %v3915
      %v3987 = vunpack.c.l.b16 %v3918
      %v3988 = vunpack.c.l.b16 %v3921
      %v3989 = vunpack.c.l.b16 %v3924
      %v3990 = vrot.slane %v3927, 7
      %v3991 = vsel %vm1037, %v3990, %v3926
      %v3992 = vrot.slane %v3928, 6
      %v3993 = vsel %vm1041, %v3992, %v3991
      %v3994 = vrot.slane %v3929, 5
      %v3995 = vsel %vm1045, %v3994, %v3993
      %v3996 = vrot.slane %v3930, 4
      %v3997 = vsel %vm1567, %v3996, %v3995
      %v3998 = vrot.slane %v3931, 3
      %v3999 = vsel %vm1570, %v3998, %v3997
      %v4000 = vrot.slane %v3932, 2
      %v4001 = vsel %vm1573, %v4000, %v3999
      %v4002 = vrot.slane %v3933, 1
      %v4003 = vsel %vm1576, %v4002, %v4001
      %v4004 = vrot.slane %v3935, 7
      %v4005 = vsel %vm1037, %v4004, %v3934
      %v4006 = vrot.slane %v3936, 6
      %v4007 = vsel %vm1041, %v4006, %v4005
      %v4008 = vrot.slane %v3937, 5
      %v4009 = vsel %vm1045, %v4008, %v4007
      %v4010 = vrot.slane %v3938, 4
      %v4011 = vsel %vm1567, %v4010, %v4009
      %v4012 = vrot.slane %v3939, 3
      %v4013 = vsel %vm1570, %v4012, %v4011
      %v4014 = vrot.slane %v3940, 2
      %v4015 = vsel %vm1573, %v4014, %v4013
      %v4016 = vrot.slane %v3941, 1
      %v4017 = vsel %vm1576, %v4016, %v4015
      %v4018 = vrot.slane %v3943, 7
      %v4019 = vsel %vm1037, %v4018, %v3942
      %v4020 = vrot.slane %v3944, 6
      %v4021 = vsel %vm1041, %v4020, %v4019
      %v4022 = vrot.slane %v3945, 5
      %v4023 = vsel %vm1045, %v4022, %v4021
      %v4024 = vrot.slane %v3946, 4
      %v4025 = vsel %vm1567, %v4024, %v4023
      %v4026 = vrot.slane %v3947, 3
      %v4027 = vsel %vm1570, %v4026, %v4025
      %v4028 = vrot.slane %v3948, 2
      %v4029 = vsel %vm1573, %v4028, %v4027
      %v4030 = vrot.slane %v3949, 1
      %v4031 = vsel %vm1576, %v4030, %v4029
      %v4032 = vrot.slane %v3951, 7
      %v4033 = vsel %vm1037, %v4032, %v3950
      %v4034 = vrot.slane %v3952, 6
      %v4035 = vsel %vm1041, %v4034, %v4033
      %v4036 = vrot.slane %v3953, 5
      %v4037 = vsel %vm1045, %v4036, %v4035
      %v4038 = vrot.slane %v3954, 4
      %v4039 = vsel %vm1567, %v4038, %v4037
      %v4040 = vrot.slane %v3955, 3
      %v4041 = vsel %vm1570, %v4040, %v4039
      %v4042 = vrot.slane %v3956, 2
      %v4043 = vsel %vm1573, %v4042, %v4041
      %v4044 = vrot.slane %v3957, 1
      %v4045 = vsel %vm1576, %v4044, %v4043
      %v4046 = vrot.slane %v3959, 7
      %v4047 = vsel %vm1037, %v4046, %v3958
      %v4048 = vrot.slane %v3960, 6
      %v4049 = vsel %vm1041, %v4048, %v4047
      %v4050 = vrot.slane %v3961, 5
      %v4051 = vsel %vm1045, %v4050, %v4049
      %v4052 = vrot.slane %v3962, 4
      %v4053 = vsel %vm1567, %v4052, %v4051
      %v4054 = vrot.slane %v3963, 3
      %v4055 = vsel %vm1570, %v4054, %v4053
      %v4056 = vrot.slane %v3964, 2
      %v4057 = vsel %vm1573, %v4056, %v4055
      %v4058 = vrot.slane %v3965, 1
      %v4059 = vsel %vm1576, %v4058, %v4057
      %v4060 = vrot.slane %v3967, 7
      %v4061 = vsel %vm1037, %v4060, %v3966
      %v4062 = vrot.slane %v3968, 6
      %v4063 = vsel %vm1041, %v4062, %v4061
      %v4064 = vrot.slane %v3969, 5
      %v4065 = vsel %vm1045, %v4064, %v4063
      %v4066 = vrot.slane %v3970, 4
      %v4067 = vsel %vm1567, %v4066, %v4065
      %v4068 = vrot.slane %v3971, 3
      %v4069 = vsel %vm1570, %v4068, %v4067
      %v4070 = vrot.slane %v3972, 2
      %v4071 = vsel %vm1573, %v4070, %v4069
      %v4072 = vrot.slane %v3973, 1
      %v4073 = vsel %vm1576, %v4072, %v4071
      %v4074 = vrot.slane %v3975, 7
      %v4075 = vsel %vm1037, %v4074, %v3974
      %v4076 = vrot.slane %v3976, 6
      %v4077 = vsel %vm1041, %v4076, %v4075
      %v4078 = vrot.slane %v3977, 5
      %v4079 = vsel %vm1045, %v4078, %v4077
      %v4080 = vrot.slane %v3978, 4
      %v4081 = vsel %vm1567, %v4080, %v4079
      %v4082 = vrot.slane %v3979, 3
      %v4083 = vsel %vm1570, %v4082, %v4081
      %v4084 = vrot.slane %v3980, 2
      %v4085 = vsel %vm1573, %v4084, %v4083
      %v4086 = vrot.slane %v3981, 1
      %v4087 = vsel %vm1576, %v4086, %v4085
      %v4088 = vrot.slane %v3983, 7
      %v4089 = vsel %vm1037, %v4088, %v3982
      %v4090 = vrot.slane %v3984, 6
      %v4091 = vsel %vm1041, %v4090, %v4089
      %v4092 = vrot.slane %v3985, 5
      %v4093 = vsel %vm1045, %v4092, %v4091
      %v4094 = vrot.slane %v3986, 4
      %v4095 = vsel %vm1567, %v4094, %v4093
      %v4096 = vrot.slane %v3987, 3
      %v4097 = vsel %vm1570, %v4096, %v4095
      %v4098 = vrot.slane %v3988, 2
      %v4099 = vsel %vm1573, %v4098, %v4097
      %v4100 = vrot.slane %v3989, 1
      %v4101 = vsel %vm1576, %v4100, %v4099
      %v4102 = vpack.c.b16 %v4017, %v4003
      %v4103 = vpack.c.b16 %v4045, %v4031
      %v4104 = vpack.c.b16 %v4073, %v4059
      %v4105 = vpack.c.b16 %v4101, %v4087
      %v4107 = vsel %vm1680, %v4102, 0
      %v4110 = vsel %vm1680, %v4103, 0
      %v4113 = vsel %vm1680, %v4104, 0
      %v4116 = vsel %vm1680, %v4105, 0
      %v4119 = vsel %vm1693, %v3733, 0
      %4121 = vmatpush.bf16.msra.mxu0 0
      %4122 = vmatpush.bf16.msra.mxu0 0
      %4123 = vmatpush.bf16.msra.mxu0 0
      %4124 = vmatpush.bf16.msra.mxu0 0
      %4125 = vmatpush.bf16.msra.mxu0 0
      %4126 = vmatpush.bf16.msra.mxu0 0
      %4127 = vmatpush.bf16.msra.mxu0 0
      %4128 = vmatpush.bf16.msra.mxu0 %v4119
      %4129 = vmatmul.bf16.gmra.mxu0 %v4107
      %v4130 = vpop.f32.mrf.mxu0
      %v4131 = vadd.f32 0.0, %v4130
      %v4132 = vpop.f32.mrf.mxu0
      %v4133 = vadd.f32 0.0, %v4132
      %4134 = vmatmul.bf16.gmra.mxu0 %v4110
      %v4135 = vpop.f32.mrf.mxu0
      %v4136 = vadd.f32 0.0, %v4135
      %v4137 = vpop.f32.mrf.mxu0
      %v4138 = vadd.f32 0.0, %v4137
      %4139 = vmatmul.bf16.gmra.mxu0 %v4113
      %v4140 = vpop.f32.mrf.mxu0
      %v4141 = vadd.f32 0.0, %v4140
      %v4142 = vpop.f32.mrf.mxu0
      %v4143 = vadd.f32 0.0, %v4142
      %4144 = vmatmul.bf16.gmra.mxu0 %v4116
      %v4145 = vpop.f32.mrf.mxu0
      %v4146 = vadd.f32 0.0, %v4145
      %v4147 = vpop.f32.mrf.mxu0
      %v4148 = vadd.f32 0.0, %v4147
      %4149 = vdwg.mxu0
      %v4150 = vadd.f32 %v3724, %v4131
      %v4151 = vadd.f32 %v3725, %v4133
      %v4152 = vadd.f32 %v3726, %v4136
      %v4153 = vadd.f32 %v3727, %v4138
      %v4154 = vadd.f32 %v3728, %v4141
      %v4155 = vadd.f32 %v3729, %v4143
      %v4156 = vadd.f32 %v3730, %v4146
      %v4157 = vadd.f32 %v3731, %v4148
      %v4161 = vrot.slane %v982, 3
      %v4162 = vrot.slane %v983, 3
      %v4163 = vrot.slane %v984, 3
      %v4166 = vsel %vm1033, %v982, %v4161
      %v4167 = vsel %vm1037, %v982, %v4161
      %v4169 = vrot.slane %v4167, 1
      %v4170 = vsel %vm1041, %v982, %v4161
      %v4172 = vrot.slane %v4170, 2
      %v4173 = vsel %vm1045, %v982, %v4161
      %v4175 = vrot.slane %v4173, 3
      %v4178 = vsel %vm1033, %v983, %v4162
      %v4179 = vsel %vm1037, %v983, %v4162
      %v4181 = vrot.slane %v4179, 1
      %v4182 = vsel %vm1041, %v983, %v4162
      %v4184 = vrot.slane %v4182, 2
      %v4185 = vsel %vm1045, %v983, %v4162
      %v4187 = vrot.slane %v4185, 3
      %v4190 = vsel %vm1033, %v984, %v4163
      %s4191 = scalar_lea.vmem %s3, 24
      %v4192 = vld [vmem:[%s4191] sm:$0xf]
      %4193 = vst [vmem:[#allocation1] ss:$9 sm:$0xff] %v1066
      %v4194 = vld [vmem:[#allocation1] sm:$0xff]
      %4196 = vst [vmem:[#allocation1] ss:$9 sm:$0xff] %v1069
      %v4197 = vld [vmem:[#allocation1] sm:$0xff]
      %4199 = vst [vmem:[#allocation1] ss:$9 sm:$0xff] %v1072
      %v4200 = vld [vmem:[#allocation1] sm:$0xff]
      %4202 = vst [vmem:[#allocation1] ss:$9 sm:$0xff] %v1075
      %v4203 = vld [vmem:[#allocation1] sm:$0xff]
      %4205 = vst [vmem:[#allocation1] ss:$9 sm:$0xff] %v1078
      %v4206 = vld [vmem:[#allocation1] sm:$0xff]
      %4208 = vst [vmem:[#allocation1] ss:$9 sm:$0xff] %v1081
      %v4209 = vld [vmem:[#allocation1] sm:$0xff]
      %4211 = vst [vmem:[#allocation1] ss:$9 sm:$0xff] %v1084
      %v4212 = vld [vmem:[#allocation1] sm:$0xff]
      %4214 = vst [vmem:[#allocation1] ss:$9 sm:$0xff] %v1087
      %v4215 = vld [vmem:[#allocation1] sm:$0xff]
      %4217 = vst [vmem:[#allocation1] ss:$9 sm:$0xff] %v1093
      %v4218 = vld [vmem:[#allocation1] sm:$0xff]
      %4220 = vst [vmem:[#allocation1] ss:$9 sm:$0xff] %v1096
      %v4221 = vld [vmem:[#allocation1] sm:$0xff]
      %4223 = vst [vmem:[#allocation1] ss:$9 sm:$0xff] %v1099
      %v4224 = vld [vmem:[#allocation1] sm:$0xff]
      %4226 = vst [vmem:[#allocation1] ss:$9 sm:$0xff] %v1102
      %v4227 = vld [vmem:[#allocation1] sm:$0xff]
      %4229 = vst [vmem:[#allocation1] ss:$9 sm:$0xff] %v1105
      %v4230 = vld [vmem:[#allocation1] sm:$0xff]
      %4232 = vst [vmem:[#allocation1] ss:$9 sm:$0xff] %v1108
      %v4233 = vld [vmem:[#allocation1] sm:$0xff]
      %4235 = vst [vmem:[#allocation1] ss:$9 sm:$0xff] %v1111
      %v4236 = vld [vmem:[#allocation1] sm:$0xff]
      %4238 = vst [vmem:[#allocation1] ss:$9 sm:$0xff] %v1114
      %v4239 = vld [vmem:[#allocation1] sm:$0xff]
      %4241 = vst [vmem:[#allocation1] ss:$9 sm:$0xff] %v1120
      %v4242 = vld [vmem:[#allocation1] sm:$0xff]
      %4244 = vst [vmem:[#allocation1] ss:$9 sm:$0xff] %v1123
      %v4245 = vld [vmem:[#allocation1] sm:$0xff]
      %4247 = vst [vmem:[#allocation1] ss:$9 sm:$0xff] %v1126
      %v4248 = vld [vmem:[#allocation1] sm:$0xff]
      %4250 = vst [vmem:[#allocation1] ss:$9 sm:$0xff] %v1129
      %v4251 = vld [vmem:[#allocation1] sm:$0xff]
      %4253 = vst [vmem:[#allocation1] ss:$9 sm:$0xff] %v1132
      %v4254 = vld [vmem:[#allocation1] sm:$0xff]
      %4256 = vst [vmem:[#allocation1] ss:$9 sm:$0xff] %v1135
      %v4257 = vld [vmem:[#allocation1] sm:$0xff]
      %4259 = vst [vmem:[#allocation1] ss:$9 sm:$0xff] %v1138
      %v4260 = vld [vmem:[#allocation1] sm:$0xff]
      %4262 = vst [vmem:[#allocation1] ss:$9 sm:$0xff] %v1141
      %v4263 = vld [vmem:[#allocation1] sm:$0xff]
      %4265 = vst [vmem:[#allocation1] ss:$9 sm:$0xff] %v1147
      %v4266 = vld [vmem:[#allocation1] sm:$0xff]
      %4268 = vst [vmem:[#allocation1] ss:$9 sm:$0xff] %v1150
      %v4269 = vld [vmem:[#allocation1] sm:$0xff]
      %4271 = vst [vmem:[#allocation1] ss:$9 sm:$0xff] %v1153
      %v4272 = vld [vmem:[#allocation1] sm:$0xff]
      %4274 = vst [vmem:[#allocation1] ss:$9 sm:$0xff] %v1156
      %v4275 = vld [vmem:[#allocation1] sm:$0xff]
      %4277 = vst [vmem:[#allocation1] ss:$9 sm:$0xff] %v1159
      %v4278 = vld [vmem:[#allocation1] sm:$0xff]
      %4280 = vst [vmem:[#allocation1] ss:$9 sm:$0xff] %v1162
      %v4281 = vld [vmem:[#allocation1] sm:$0xff]
      %4283 = vst [vmem:[#allocation1] ss:$9 sm:$0xff] %v1165
      %v4284 = vld [vmem:[#allocation1] sm:$0xff]
      %4286 = vst [vmem:[#allocation1] ss:$9 sm:$0xff] %v1168
      %v4287 = vld [vmem:[#allocation1] sm:$0xff]
      %4289 = vst [vmem:[#allocation1] ss:$9 sm:$0xff] %v1174
      %v4290 = vld [vmem:[#allocation1] sm:$0xff]
      %4292 = vst [vmem:[#allocation1] ss:$9 sm:$0xff] %v1177
      %v4293 = vld [vmem:[#allocation1] sm:$0xff]
      %4295 = vst [vmem:[#allocation1] ss:$9 sm:$0xff] %v1180
      %v4296 = vld [vmem:[#allocation1] sm:$0xff]
      %4298 = vst [vmem:[#allocation1] ss:$9 sm:$0xff] %v1183
      %v4299 = vld [vmem:[#allocation1] sm:$0xff]
      %4301 = vst [vmem:[#allocation1] ss:$9 sm:$0xff] %v1186
      %v4302 = vld [vmem:[#allocation1] sm:$0xff]
      %4304 = vst [vmem:[#allocation1] ss:$9 sm:$0xff] %v1189
      %v4305 = vld [vmem:[#allocation1] sm:$0xff]
      %4307 = vst [vmem:[#allocation1] ss:$9 sm:$0xff] %v1192
      %v4308 = vld [vmem:[#allocation1] sm:$0xff]
      %4310 = vst [vmem:[#allocation1] ss:$9 sm:$0xff] %v1195
      %v4311 = vld [vmem:[#allocation1] sm:$0xff]
      %4313 = vst [vmem:[#allocation1] ss:$9 sm:$0xff] %v1201
      %v4314 = vld [vmem:[#allocation1] sm:$0xff]
      %4316 = vst [vmem:[#allocation1] ss:$9 sm:$0xff] %v1204
      %v4317 = vld [vmem:[#allocation1] sm:$0xff]
      %4319 = vst [vmem:[#allocation1] ss:$9 sm:$0xff] %v1207
      %v4320 = vld [vmem:[#allocation1] sm:$0xff]
      %4322 = vst [vmem:[#allocation1] ss:$9 sm:$0xff] %v1210
      %v4323 = vld [vmem:[#allocation1] sm:$0xff]
      %4325 = vst [vmem:[#allocation1] ss:$9 sm:$0xff] %v1213
      %v4326 = vld [vmem:[#allocation1] sm:$0xff]
      %4328 = vst [vmem:[#allocation1] ss:$9 sm:$0xff] %v1216
      %v4329 = vld [vmem:[#allocation1] sm:$0xff]
      %4331 = vst [vmem:[#allocation1] ss:$9 sm:$0xff] %v1219
      %v4332 = vld [vmem:[#allocation1] sm:$0xff]
      %4334 = vst [vmem:[#allocation1] ss:$9 sm:$0xff] %v1222
      %v4335 = vld [vmem:[#allocation1] sm:$0xff]
      %4337 = vst [vmem:[#allocation1] ss:$9 sm:$0xff] %v1228
      %v4338 = vld [vmem:[#allocation1] sm:$0xff]
      %4340 = vst [vmem:[#allocation1] ss:$9 sm:$0xff] %v1231
      %v4341 = vld [vmem:[#allocation1] sm:$0xff]
      %4343 = vst [vmem:[#allocation1] ss:$9 sm:$0xff] %v1234
      %v4344 = vld [vmem:[#allocation1] sm:$0xff]
      %4346 = vst [vmem:[#allocation1] ss:$9 sm:$0xff] %v1237
      %v4347 = vld [vmem:[#allocation1] sm:$0xff]
      %4349 = vst [vmem:[#allocation1] ss:$9 sm:$0xff] %v1240
      %v4350 = vld [vmem:[#allocation1] sm:$0xff]
      %4352 = vst [vmem:[#allocation1] ss:$9 sm:$0xff] %v1243
      %v4353 = vld [vmem:[#allocation1] sm:$0xff]
      %4355 = vst [vmem:[#allocation1] ss:$9 sm:$0xff] %v1246
      %v4356 = vld [vmem:[#allocation1] sm:$0xff]
      %4358 = vst [vmem:[#allocation1] ss:$9 sm:$0xff] %v1249
      %v4359 = vld [vmem:[#allocation1] sm:$0xff]
      %4361 = vst [vmem:[#allocation1] ss:$9 sm:$0xff] %v4166
      %v4362 = vld [vmem:[#allocation1] sm:$0xff]
      %4365 = vst [vmem:[#allocation1] ss:$9 sm:$0xff] %v4169
      %v4366 = vld [vmem:[#allocation1] sm:$0xff]
      %4369 = vst [vmem:[#allocation1] ss:$9 sm:$0xff] %v4172
      %v4370 = vld [vmem:[#allocation1] sm:$0xff]
      %4373 = vst [vmem:[#allocation1] ss:$9 sm:$0xff] %v4175
      %v4374 = vld [vmem:[#allocation1] sm:$0xff]
      %4376 = vst [vmem:[#allocation1] ss:$9 sm:$0xff] %v4178
      %v4377 = vld [vmem:[#allocation1] sm:$0xff]
      %4380 = vst [vmem:[#allocation1] ss:$9 sm:$0xff] %v4181
      %v4381 = vld [vmem:[#allocation1] sm:$0xff]
      %4384 = vst [vmem:[#allocation1] ss:$9 sm:$0xff] %v4184
      %v4385 = vld [vmem:[#allocation1] sm:$0xff]
      %4388 = vst [vmem:[#allocation1] ss:$9 sm:$0xff] %v4187
      %v4389 = vld [vmem:[#allocation1] sm:$0xff]
      %v4391 = vunpack.c.l.b16 %v4194
      %v4392 = vunpack.c.l.b16 %v4197
      %v4393 = vunpack.c.l.b16 %v4200
      %v4394 = vunpack.c.l.b16 %v4203
      %v4395 = vunpack.c.l.b16 %v4206
      %v4396 = vunpack.c.l.b16 %v4209
      %v4397 = vunpack.c.l.b16 %v4212
      %v4398 = vunpack.c.l.b16 %v4215
      %v4399 = vunpack.c.l.b16 %v4218
      %v4400 = vunpack.c.l.b16 %v4221
      %v4401 = vunpack.c.l.b16 %v4224
      %v4402 = vunpack.c.l.b16 %v4227
      %v4403 = vunpack.c.l.b16 %v4230
      %v4404 = vunpack.c.l.b16 %v4233
      %v4405 = vunpack.c.l.b16 %v4236
      %v4406 = vunpack.c.l.b16 %v4239
      %v4407 = vunpack.c.l.b16 %v4242
      %v4408 = vunpack.c.l.b16 %v4245
      %v4409 = vunpack.c.l.b16 %v4248
      %v4410 = vunpack.c.l.b16 %v4251
      %v4411 = vunpack.c.l.b16 %v4254
      %v4412 = vunpack.c.l.b16 %v4257
      %v4413 = vunpack.c.l.b16 %v4260
      %v4414 = vunpack.c.l.b16 %v4263
      %v4415 = vunpack.c.l.b16 %v4266
      %v4416 = vunpack.c.l.b16 %v4269
      %v4417 = vunpack.c.l.b16 %v4272
      %v4418 = vunpack.c.l.b16 %v4275
      %v4419 = vunpack.c.l.b16 %v4278
      %v4420 = vunpack.c.l.b16 %v4281
      %v4421 = vunpack.c.l.b16 %v4284
      %v4422 = vunpack.c.l.b16 %v4287
      %v4423 = vunpack.c.l.b16 %v4290
      %v4424 = vunpack.c.l.b16 %v4293
      %v4425 = vunpack.c.l.b16 %v4296
      %v4426 = vunpack.c.l.b16 %v4299
      %v4427 = vunpack.c.l.b16 %v4302
      %v4428 = vunpack.c.l.b16 %v4305
      %v4429 = vunpack.c.l.b16 %v4308
      %v4430 = vunpack.c.l.b16 %v4311
      %v4431 = vunpack.c.l.b16 %v4314
      %v4432 = vunpack.c.l.b16 %v4317
      %v4433 = vunpack.c.l.b16 %v4320
      %v4434 = vunpack.c.l.b16 %v4323
      %v4435 = vunpack.c.l.b16 %v4326
      %v4436 = vunpack.c.l.b16 %v4329
      %v4437 = vunpack.c.l.b16 %v4332
      %v4438 = vunpack.c.l.b16 %v4335
      %v4439 = vunpack.c.l.b16 %v4338
      %v4440 = vunpack.c.l.b16 %v4341
      %v4441 = vunpack.c.l.b16 %v4344
      %v4442 = vunpack.c.l.b16 %v4347
      %v4443 = vunpack.c.l.b16 %v4350
      %v4444 = vunpack.c.l.b16 %v4353
      %v4445 = vunpack.c.l.b16 %v4356
      %v4446 = vunpack.c.l.b16 %v4359
      %v4447 = vunpack.c.l.b16 %v4362
      %v4448 = vunpack.c.l.b16 %v4366
      %v4449 = vunpack.c.l.b16 %v4370
      %v4450 = vunpack.c.l.b16 %v4374
      %v4451 = vunpack.c.l.b16 %v4377
      %v4452 = vunpack.c.l.b16 %v4381
      %v4453 = vunpack.c.l.b16 %v4385
      %v4454 = vunpack.c.l.b16 %v4389
      %v4455 = vrot.slane %v4392, 7
      %v4456 = vsel %vm1037, %v4455, %v4391
      %v4457 = vrot.slane %v4393, 6
      %v4458 = vsel %vm1041, %v4457, %v4456
      %v4459 = vrot.slane %v4394, 5
      %v4460 = vsel %vm1045, %v4459, %v4458
      %v4461 = vrot.slane %v4395, 4
      %v4462 = vsel %vm1567, %v4461, %v4460
      %v4463 = vrot.slane %v4396, 3
      %v4464 = vsel %vm1570, %v4463, %v4462
      %v4465 = vrot.slane %v4397, 2
      %v4466 = vsel %vm1573, %v4465, %v4464
      %v4467 = vrot.slane %v4398, 1
      %v4468 = vsel %vm1576, %v4467, %v4466
      %v4469 = vrot.slane %v4400, 7
      %v4470 = vsel %vm1037, %v4469, %v4399
      %v4471 = vrot.slane %v4401, 6
      %v4472 = vsel %vm1041, %v4471, %v4470
      %v4473 = vrot.slane %v4402, 5
      %v4474 = vsel %vm1045, %v4473, %v4472
      %v4475 = vrot.slane %v4403, 4
      %v4476 = vsel %vm1567, %v4475, %v4474
      %v4477 = vrot.slane %v4404, 3
      %v4478 = vsel %vm1570, %v4477, %v4476
      %v4479 = vrot.slane %v4405, 2
      %v4480 = vsel %vm1573, %v4479, %v4478
      %v4481 = vrot.slane %v4406, 1
      %v4482 = vsel %vm1576, %v4481, %v4480
      %v4483 = vrot.slane %v4408, 7
      %v4484 = vsel %vm1037, %v4483, %v4407
      %v4485 = vrot.slane %v4409, 6
      %v4486 = vsel %vm1041, %v4485, %v4484
      %v4487 = vrot.slane %v4410, 5
      %v4488 = vsel %vm1045, %v4487, %v4486
      %v4489 = vrot.slane %v4411, 4
      %v4490 = vsel %vm1567, %v4489, %v4488
      %v4491 = vrot.slane %v4412, 3
      %v4492 = vsel %vm1570, %v4491, %v4490
      %v4493 = vrot.slane %v4413, 2
      %v4494 = vsel %vm1573, %v4493, %v4492
      %v4495 = vrot.slane %v4414, 1
      %v4496 = vsel %vm1576, %v4495, %v4494
      %v4497 = vrot.slane %v4416, 7
      %v4498 = vsel %vm1037, %v4497, %v4415
      %v4499 = vrot.slane %v4417, 6
      %v4500 = vsel %vm1041, %v4499, %v4498
      %v4501 = vrot.slane %v4418, 5
      %v4502 = vsel %vm1045, %v4501, %v4500
      %v4503 = vrot.slane %v4419, 4
      %v4504 = vsel %vm1567, %v4503, %v4502
      %v4505 = vrot.slane %v4420, 3
      %v4506 = vsel %vm1570, %v4505, %v4504
      %v4507 = vrot.slane %v4421, 2
      %v4508 = vsel %vm1573, %v4507, %v4506
      %v4509 = vrot.slane %v4422, 1
      %v4510 = vsel %vm1576, %v4509, %v4508
      %v4511 = vrot.slane %v4424, 7
      %v4512 = vsel %vm1037, %v4511, %v4423
      %v4513 = vrot.slane %v4425, 6
      %v4514 = vsel %vm1041, %v4513, %v4512
      %v4515 = vrot.slane %v4426, 5
      %v4516 = vsel %vm1045, %v4515, %v4514
      %v4517 = vrot.slane %v4427, 4
      %v4518 = vsel %vm1567, %v4517, %v4516
      %v4519 = vrot.slane %v4428, 3
      %v4520 = vsel %vm1570, %v4519, %v4518
      %v4521 = vrot.slane %v4429, 2
      %v4522 = vsel %vm1573, %v4521, %v4520
      %v4523 = vrot.slane %v4430, 1
      %v4524 = vsel %vm1576, %v4523, %v4522
      %v4525 = vrot.slane %v4432, 7
      %v4526 = vsel %vm1037, %v4525, %v4431
      %v4527 = vrot.slane %v4433, 6
      %v4528 = vsel %vm1041, %v4527, %v4526
      %v4529 = vrot.slane %v4434, 5
      %v4530 = vsel %vm1045, %v4529, %v4528
      %v4531 = vrot.slane %v4435, 4
      %v4532 = vsel %vm1567, %v4531, %v4530
      %v4533 = vrot.slane %v4436, 3
      %v4534 = vsel %vm1570, %v4533, %v4532
      %v4535 = vrot.slane %v4437, 2
      %v4536 = vsel %vm1573, %v4535, %v4534
      %v4537 = vrot.slane %v4438, 1
      %v4538 = vsel %vm1576, %v4537, %v4536
      %v4539 = vrot.slane %v4440, 7
      %v4540 = vsel %vm1037, %v4539, %v4439
      %v4541 = vrot.slane %v4441, 6
      %v4542 = vsel %vm1041, %v4541, %v4540
      %v4543 = vrot.slane %v4442, 5
      %v4544 = vsel %vm1045, %v4543, %v4542
      %v4545 = vrot.slane %v4443, 4
      %v4546 = vsel %vm1567, %v4545, %v4544
      %v4547 = vrot.slane %v4444, 3
      %v4548 = vsel %vm1570, %v4547, %v4546
      %v4549 = vrot.slane %v4445, 2
      %v4550 = vsel %vm1573, %v4549, %v4548
      %v4551 = vrot.slane %v4446, 1
      %v4552 = vsel %vm1576, %v4551, %v4550
      %v4553 = vrot.slane %v4448, 7
      %v4554 = vsel %vm1037, %v4553, %v4447
      %v4555 = vrot.slane %v4449, 6
      %v4556 = vsel %vm1041, %v4555, %v4554
      %v4557 = vrot.slane %v4450, 5
      %v4558 = vsel %vm1045, %v4557, %v4556
      %v4559 = vrot.slane %v4451, 4
      %v4560 = vsel %vm1567, %v4559, %v4558
      %v4561 = vrot.slane %v4452, 3
      %v4562 = vsel %vm1570, %v4561, %v4560
      %v4563 = vrot.slane %v4453, 2
      %v4564 = vsel %vm1573, %v4563, %v4562
      %v4565 = vrot.slane %v4454, 1
      %v4566 = vsel %vm1576, %v4565, %v4564
      %v4567 = vpack.c.b16 %v4482, %v4468
      %v4568 = vpack.c.b16 %v4510, %v4496
      %v4569 = vpack.c.b16 %v4538, %v4524
      %v4570 = vpack.c.b16 %v4566, %v4552
      %v4572 = vsel %vm1680, %v4567, 0
      %v4575 = vsel %vm1680, %v4568, 0
      %v4578 = vsel %vm1680, %v4569, 0
      %v4581 = vsel %vm1680, %v4570, 0
      %v4584 = vsel %vm1693, %v4192, 0
      %4586 = vmatpush.bf16.msra.mxu0 0
      %4587 = vmatpush.bf16.msra.mxu0 0
      %4588 = vmatpush.bf16.msra.mxu0 0
      %4589 = vmatpush.bf16.msra.mxu0 0
      %4590 = vmatpush.bf16.msra.mxu0 0
      %4591 = vmatpush.bf16.msra.mxu0 0
      %4592 = vmatpush.bf16.msra.mxu0 0
      %4593 = vmatpush.bf16.msra.mxu0 %v4584
      %4594 = vmatmul.bf16.gmra.mxu0 %v4572
      %v4595 = vpop.f32.mrf.mxu0
      %v4596 = vadd.f32 0.0, %v4595
      %v4597 = vpop.f32.mrf.mxu0
      %v4598 = vadd.f32 0.0, %v4597
      %4599 = vmatmul.bf16.gmra.mxu0 %v4575
      %v4600 = vpop.f32.mrf.mxu0
      %v4601 = vadd.f32 0.0, %v4600
      %v4602 = vpop.f32.mrf.mxu0
      %v4603 = vadd.f32 0.0, %v4602
      %4604 = vmatmul.bf16.gmra.mxu0 %v4578
      %v4605 = vpop.f32.mrf.mxu0
      %v4606 = vadd.f32 0.0, %v4605
      %v4607 = vpop.f32.mrf.mxu0
      %v4608 = vadd.f32 0.0, %v4607
      %4609 = vmatmul.bf16.gmra.mxu0 %v4581
      %v4610 = vpop.f32.mrf.mxu0
      %v4611 = vadd.f32 0.0, %v4610
      %v4612 = vpop.f32.mrf.mxu0
      %v4613 = vadd.f32 0.0, %v4612
      %4614 = vdwg.mxu0
      %v4615 = vadd.f32 %v4150, %v4596
      %v4616 = vadd.f32 %v4151, %v4598
      %v4617 = vadd.f32 %v4152, %v4601
      %v4618 = vadd.f32 %v4153, %v4603
      %v4619 = vadd.f32 %v4154, %v4606
      %v4620 = vadd.f32 %v4155, %v4608
      %v4621 = vadd.f32 %v4156, %v4611
      %v4622 = vadd.f32 %v4157, %v4613
      %s4623 = scalar_lea.vmem %s3, 28
      %v4624 = vld [vmem:[%s4623] sm:$0xf]
      %4625 = vst [vmem:[#allocation1] ss:$9 sm:$0xff] %v1066
      %v4626 = vld [vmem:[#allocation1] sm:$0xff]
      %4628 = vst [vmem:[#allocation1] ss:$9 sm:$0xff] %v1069
      %v4629 = vld [vmem:[#allocation1] sm:$0xff]
      %4631 = vst [vmem:[#allocation1] ss:$9 sm:$0xff] %v1072
      %v4632 = vld [vmem:[#allocation1] sm:$0xff]
      %4634 = vst [vmem:[#allocation1] ss:$9 sm:$0xff] %v1075
      %v4635 = vld [vmem:[#allocation1] sm:$0xff]
      %4637 = vst [vmem:[#allocation1] ss:$9 sm:$0xff] %v1078
      %v4638 = vld [vmem:[#allocation1] sm:$0xff]
      %4640 = vst [vmem:[#allocation1] ss:$9 sm:$0xff] %v1081
      %v4641 = vld [vmem:[#allocation1] sm:$0xff]
      %4643 = vst [vmem:[#allocation1] ss:$9 sm:$0xff] %v1084
      %v4644 = vld [vmem:[#allocation1] sm:$0xff]
      %4646 = vst [vmem:[#allocation1] ss:$9 sm:$0xff] %v1087
      %v4647 = vld [vmem:[#allocation1] sm:$0xff]
      %4649 = vst [vmem:[#allocation1] ss:$9 sm:$0xff] %v1093
      %v4650 = vld [vmem:[#allocation1] sm:$0xff]
      %4652 = vst [vmem:[#allocation1] ss:$9 sm:$0xff] %v1096
      %v4653 = vld [vmem:[#allocation1] sm:$0xff]
      %4655 = vst [vmem:[#allocation1] ss:$9 sm:$0xff] %v1099
      %v4656 = vld [vmem:[#allocation1] sm:$0xff]
      %4658 = vst [vmem:[#allocation1] ss:$9 sm:$0xff] %v1102
      %v4659 = vld [vmem:[#allocation1] sm:$0xff]
      %4661 = vst [vmem:[#allocation1] ss:$9 sm:$0xff] %v1105
      %v4662 = vld [vmem:[#allocation1] sm:$0xff]
      %4664 = vst [vmem:[#allocation1] ss:$9 sm:$0xff] %v1108
      %v4665 = vld [vmem:[#allocation1] sm:$0xff]
      %4667 = vst [vmem:[#allocation1] ss:$9 sm:$0xff] %v1111
      %v4668 = vld [vmem:[#allocation1] sm:$0xff]
      %4670 = vst [vmem:[#allocation1] ss:$9 sm:$0xff] %v1114
      %v4671 = vld [vmem:[#allocation1] sm:$0xff]
      %4673 = vst [vmem:[#allocation1] ss:$9 sm:$0xff] %v1120
      %v4674 = vld [vmem:[#allocation1] sm:$0xff]
      %4676 = vst [vmem:[#allocation1] ss:$9 sm:$0xff] %v1123
      %v4677 = vld [vmem:[#allocation1] sm:$0xff]
      %4679 = vst [vmem:[#allocation1] ss:$9 sm:$0xff] %v1126
      %v4680 = vld [vmem:[#allocation1] sm:$0xff]
      %4682 = vst [vmem:[#allocation1] ss:$9 sm:$0xff] %v1129
      %v4683 = vld [vmem:[#allocation1] sm:$0xff]
      %4685 = vst [vmem:[#allocation1] ss:$9 sm:$0xff] %v1132
      %v4686 = vld [vmem:[#allocation1] sm:$0xff]
      %4688 = vst [vmem:[#allocation1] ss:$9 sm:$0xff] %v1135
      %v4689 = vld [vmem:[#allocation1] sm:$0xff]
      %4691 = vst [vmem:[#allocation1] ss:$9 sm:$0xff] %v1138
      %v4692 = vld [vmem:[#allocation1] sm:$0xff]
      %4694 = vst [vmem:[#allocation1] ss:$9 sm:$0xff] %v1141
      %v4695 = vld [vmem:[#allocation1] sm:$0xff]
      %4697 = vst [vmem:[#allocation1] ss:$9 sm:$0xff] %v1147
      %v4698 = vld [vmem:[#allocation1] sm:$0xff]
      %4700 = vst [vmem:[#allocation1] ss:$9 sm:$0xff] %v1150
      %v4701 = vld [vmem:[#allocation1] sm:$0xff]
      %4703 = vst [vmem:[#allocation1] ss:$9 sm:$0xff] %v1153
      %v4704 = vld [vmem:[#allocation1] sm:$0xff]
      %4706 = vst [vmem:[#allocation1] ss:$9 sm:$0xff] %v1156
      %v4707 = vld [vmem:[#allocation1] sm:$0xff]
      %4709 = vst [vmem:[#allocation1] ss:$9 sm:$0xff] %v1159
      %v4710 = vld [vmem:[#allocation1] sm:$0xff]
      %4712 = vst [vmem:[#allocation1] ss:$9 sm:$0xff] %v1162
      %v4713 = vld [vmem:[#allocation1] sm:$0xff]
      %4715 = vst [vmem:[#allocation1] ss:$9 sm:$0xff] %v1165
      %v4716 = vld [vmem:[#allocation1] sm:$0xff]
      %4718 = vst [vmem:[#allocation1] ss:$9 sm:$0xff] %v1168
      %v4719 = vld [vmem:[#allocation1] sm:$0xff]
      %4721 = vst [vmem:[#allocation1] ss:$9 sm:$0xff] %v1174
      %v4722 = vld [vmem:[#allocation1] sm:$0xff]
      %4724 = vst [vmem:[#allocation1] ss:$9 sm:$0xff] %v1177
      %v4725 = vld [vmem:[#allocation1] sm:$0xff]
      %4727 = vst [vmem:[#allocation1] ss:$9 sm:$0xff] %v1180
      %v4728 = vld [vmem:[#allocation1] sm:$0xff]
      %4730 = vst [vmem:[#allocation1] ss:$9 sm:$0xff] %v1183
      %v4731 = vld [vmem:[#allocation1] sm:$0xff]
      %4733 = vst [vmem:[#allocation1] ss:$9 sm:$0xff] %v1186
      %v4734 = vld [vmem:[#allocation1] sm:$0xff]
      %4736 = vst [vmem:[#allocation1] ss:$9 sm:$0xff] %v1189
      %v4737 = vld [vmem:[#allocation1] sm:$0xff]
      %4739 = vst [vmem:[#allocation1] ss:$9 sm:$0xff] %v1192
      %v4740 = vld [vmem:[#allocation1] sm:$0xff]
      %4742 = vst [vmem:[#allocation1] ss:$9 sm:$0xff] %v1195
      %v4743 = vld [vmem:[#allocation1] sm:$0xff]
      %4745 = vst [vmem:[#allocation1] ss:$9 sm:$0xff] %v1201
      %v4746 = vld [vmem:[#allocation1] sm:$0xff]
      %4748 = vst [vmem:[#allocation1] ss:$9 sm:$0xff] %v1204
      %v4749 = vld [vmem:[#allocation1] sm:$0xff]
      %4751 = vst [vmem:[#allocation1] ss:$9 sm:$0xff] %v1207
      %v4752 = vld [vmem:[#allocation1] sm:$0xff]
      %4754 = vst [vmem:[#allocation1] ss:$9 sm:$0xff] %v1210
      %v4755 = vld [vmem:[#allocation1] sm:$0xff]
      %4757 = vst [vmem:[#allocation1] ss:$9 sm:$0xff] %v1213
      %v4758 = vld [vmem:[#allocation1] sm:$0xff]
      %4760 = vst [vmem:[#allocation1] ss:$9 sm:$0xff] %v1216
      %v4761 = vld [vmem:[#allocation1] sm:$0xff]
      %4763 = vst [vmem:[#allocation1] ss:$9 sm:$0xff] %v1219
      %v4764 = vld [vmem:[#allocation1] sm:$0xff]
      %4766 = vst [vmem:[#allocation1] ss:$9 sm:$0xff] %v1222
      %v4767 = vld [vmem:[#allocation1] sm:$0xff]
      %4769 = vst [vmem:[#allocation1] ss:$9 sm:$0xff] %v1228
      %v4770 = vld [vmem:[#allocation1] sm:$0xff]
      %4772 = vst [vmem:[#allocation1] ss:$9 sm:$0xff] %v1231
      %v4773 = vld [vmem:[#allocation1] sm:$0xff]
      %4775 = vst [vmem:[#allocation1] ss:$9 sm:$0xff] %v1234
      %v4776 = vld [vmem:[#allocation1] sm:$0xff]
      %4778 = vst [vmem:[#allocation1] ss:$9 sm:$0xff] %v1237
      %v4779 = vld [vmem:[#allocation1] sm:$0xff]
      %4781 = vst [vmem:[#allocation1] ss:$9 sm:$0xff] %v1240
      %v4782 = vld [vmem:[#allocation1] sm:$0xff]
      %4784 = vst [vmem:[#allocation1] ss:$9 sm:$0xff] %v1243
      %v4785 = vld [vmem:[#allocation1] sm:$0xff]
      %4787 = vst [vmem:[#allocation1] ss:$9 sm:$0xff] %v1246
      %v4788 = vld [vmem:[#allocation1] sm:$0xff]
      %4790 = vst [vmem:[#allocation1] ss:$9 sm:$0xff] %v1249
      %v4791 = vld [vmem:[#allocation1] sm:$0xff]
      %4793 = vst [vmem:[#allocation1] ss:$9 sm:$0xff] %v4166
      %v4794 = vld [vmem:[#allocation1] sm:$0xff]
      %4796 = vst [vmem:[#allocation1] ss:$9 sm:$0xff] %v4169
      %v4797 = vld [vmem:[#allocation1] sm:$0xff]
      %4799 = vst [vmem:[#allocation1] ss:$9 sm:$0xff] %v4172
      %v4800 = vld [vmem:[#allocation1] sm:$0xff]
      %4802 = vst [vmem:[#allocation1] ss:$9 sm:$0xff] %v4175
      %v4803 = vld [vmem:[#allocation1] sm:$0xff]
      %4805 = vst [vmem:[#allocation1] ss:$9 sm:$0xff] %v4178
      %v4806 = vld [vmem:[#allocation1] sm:$0xff]
      %4808 = vst [vmem:[#allocation1] ss:$9 sm:$0xff] %v4181
      %v4809 = vld [vmem:[#allocation1] sm:$0xff]
      %4811 = vst [vmem:[#allocation1] ss:$9 sm:$0xff] %v4184
      %v4812 = vld [vmem:[#allocation1] sm:$0xff]
      %4814 = vst [vmem:[#allocation1] ss:$9 sm:$0xff] %v4187
      %v4815 = vld [vmem:[#allocation1] sm:$0xff]
      %v4817 = vunpack.c.l.b16 %v4626
      %v4818 = vunpack.c.l.b16 %v4629
      %v4819 = vunpack.c.l.b16 %v4632
      %v4820 = vunpack.c.l.b16 %v4635
      %v4821 = vunpack.c.l.b16 %v4638
      %v4822 = vunpack.c.l.b16 %v4641
      %v4823 = vunpack.c.l.b16 %v4644
      %v4824 = vunpack.c.l.b16 %v4647
      %v4825 = vunpack.c.l.b16 %v4650
      %v4826 = vunpack.c.l.b16 %v4653
      %v4827 = vunpack.c.l.b16 %v4656
      %v4828 = vunpack.c.l.b16 %v4659
      %v4829 = vunpack.c.l.b16 %v4662
      %v4830 = vunpack.c.l.b16 %v4665
      %v4831 = vunpack.c.l.b16 %v4668
      %v4832 = vunpack.c.l.b16 %v4671
      %v4833 = vunpack.c.l.b16 %v4674
      %v4834 = vunpack.c.l.b16 %v4677
      %v4835 = vunpack.c.l.b16 %v4680
      %v4836 = vunpack.c.l.b16 %v4683
      %v4837 = vunpack.c.l.b16 %v4686
      %v4838 = vunpack.c.l.b16 %v4689
      %v4839 = vunpack.c.l.b16 %v4692
      %v4840 = vunpack.c.l.b16 %v4695
      %v4841 = vunpack.c.l.b16 %v4698
      %v4842 = vunpack.c.l.b16 %v4701
      %v4843 = vunpack.c.l.b16 %v4704
      %v4844 = vunpack.c.l.b16 %v4707
      %v4845 = vunpack.c.l.b16 %v4710
      %v4846 = vunpack.c.l.b16 %v4713
      %v4847 = vunpack.c.l.b16 %v4716
      %v4848 = vunpack.c.l.b16 %v4719
      %v4849 = vunpack.c.l.b16 %v4722
      %v4850 = vunpack.c.l.b16 %v4725
      %v4851 = vunpack.c.l.b16 %v4728
      %v4852 = vunpack.c.l.b16 %v4731
      %v4853 = vunpack.c.l.b16 %v4734
      %v4854 = vunpack.c.l.b16 %v4737
      %v4855 = vunpack.c.l.b16 %v4740
      %v4856 = vunpack.c.l.b16 %v4743
      %v4857 = vunpack.c.l.b16 %v4746
      %v4858 = vunpack.c.l.b16 %v4749
      %v4859 = vunpack.c.l.b16 %v4752
      %v4860 = vunpack.c.l.b16 %v4755
      %v4861 = vunpack.c.l.b16 %v4758
      %v4862 = vunpack.c.l.b16 %v4761
      %v4863 = vunpack.c.l.b16 %v4764
      %v4864 = vunpack.c.l.b16 %v4767
      %v4865 = vunpack.c.l.b16 %v4770
      %v4866 = vunpack.c.l.b16 %v4773
      %v4867 = vunpack.c.l.b16 %v4776
      %v4868 = vunpack.c.l.b16 %v4779
      %v4869 = vunpack.c.l.b16 %v4782
      %v4870 = vunpack.c.l.b16 %v4785
      %v4871 = vunpack.c.l.b16 %v4788
      %v4872 = vunpack.c.l.b16 %v4791
      %v4873 = vunpack.c.l.b16 %v4794
      %v4874 = vunpack.c.l.b16 %v4797
      %v4875 = vunpack.c.l.b16 %v4800
      %v4876 = vunpack.c.l.b16 %v4803
      %v4877 = vunpack.c.l.b16 %v4806
      %v4878 = vunpack.c.l.b16 %v4809
      %v4879 = vunpack.c.l.b16 %v4812
      %v4880 = vunpack.c.l.b16 %v4815
      %v4881 = vrot.slane %v4817, 1
      %v4882 = vsel %vm1037, %v4818, %v4881
      %v4883 = vrot.slane %v4819, 7
      %v4884 = vsel %vm1041, %v4883, %v4882
      %v4885 = vrot.slane %v4820, 6
      %v4886 = vsel %vm1045, %v4885, %v4884
      %v4887 = vrot.slane %v4821, 5
      %v4888 = vsel %vm1567, %v4887, %v4886
      %v4889 = vrot.slane %v4822, 4
      %v4890 = vsel %vm1570, %v4889, %v4888
      %v4891 = vrot.slane %v4823, 3
      %v4892 = vsel %vm1573, %v4891, %v4890
      %v4893 = vrot.slane %v4824, 2
      %v4894 = vsel %vm1576, %v4893, %v4892
      %v4895 = vrot.slane %v4825, 1
      %v4896 = vsel %vm1037, %v4826, %v4895
      %v4897 = vrot.slane %v4827, 7
      %v4898 = vsel %vm1041, %v4897, %v4896
      %v4899 = vrot.slane %v4828, 6
      %v4900 = vsel %vm1045, %v4899, %v4898
      %v4901 = vrot.slane %v4829, 5
      %v4902 = vsel %vm1567, %v4901, %v4900
      %v4903 = vrot.slane %v4830, 4
      %v4904 = vsel %vm1570, %v4903, %v4902
      %v4905 = vrot.slane %v4831, 3
      %v4906 = vsel %vm1573, %v4905, %v4904
      %v4907 = vrot.slane %v4832, 2
      %v4908 = vsel %vm1576, %v4907, %v4906
      %v4909 = vrot.slane %v4833, 1
      %v4910 = vsel %vm1037, %v4834, %v4909
      %v4911 = vrot.slane %v4835, 7
      %v4912 = vsel %vm1041, %v4911, %v4910
      %v4913 = vrot.slane %v4836, 6
      %v4914 = vsel %vm1045, %v4913, %v4912
      %v4915 = vrot.slane %v4837, 5
      %v4916 = vsel %vm1567, %v4915, %v4914
      %v4917 = vrot.slane %v4838, 4
      %v4918 = vsel %vm1570, %v4917, %v4916
      %v4919 = vrot.slane %v4839, 3
      %v4920 = vsel %vm1573, %v4919, %v4918
      %v4921 = vrot.slane %v4840, 2
      %v4922 = vsel %vm1576, %v4921, %v4920
      %v4923 = vrot.slane %v4841, 1
      %v4924 = vsel %vm1037, %v4842, %v4923
      %v4925 = vrot.slane %v4843, 7
      %v4926 = vsel %vm1041, %v4925, %v4924
      %v4927 = vrot.slane %v4844, 6
      %v4928 = vsel %vm1045, %v4927, %v4926
      %v4929 = vrot.slane %v4845, 5
      %v4930 = vsel %vm1567, %v4929, %v4928
      %v4931 = vrot.slane %v4846, 4
      %v4932 = vsel %vm1570, %v4931, %v4930
      %v4933 = vrot.slane %v4847, 3
      %v4934 = vsel %vm1573, %v4933, %v4932
      %v4935 = vrot.slane %v4848, 2
      %v4936 = vsel %vm1576, %v4935, %v4934
      %v4937 = vrot.slane %v4849, 1
      %v4938 = vsel %vm1037, %v4850, %v4937
      %v4939 = vrot.slane %v4851, 7
      %v4940 = vsel %vm1041, %v4939, %v4938
      %v4941 = vrot.slane %v4852, 6
      %v4942 = vsel %vm1045, %v4941, %v4940
      %v4943 = vrot.slane %v4853, 5
      %v4944 = vsel %vm1567, %v4943, %v4942
      %v4945 = vrot.slane %v4854, 4
      %v4946 = vsel %vm1570, %v4945, %v4944
      %v4947 = vrot.slane %v4855, 3
      %v4948 = vsel %vm1573, %v4947, %v4946
      %v4949 = vrot.slane %v4856, 2
      %v4950 = vsel %vm1576, %v4949, %v4948
      %v4951 = vrot.slane %v4857, 1
      %v4952 = vsel %vm1037, %v4858, %v4951
      %v4953 = vrot.slane %v4859, 7
      %v4954 = vsel %vm1041, %v4953, %v4952
      %v4955 = vrot.slane %v4860, 6
      %v4956 = vsel %vm1045, %v4955, %v4954
      %v4957 = vrot.slane %v4861, 5
      %v4958 = vsel %vm1567, %v4957, %v4956
      %v4959 = vrot.slane %v4862, 4
      %v4960 = vsel %vm1570, %v4959, %v4958
      %v4961 = vrot.slane %v4863, 3
      %v4962 = vsel %vm1573, %v4961, %v4960
      %v4963 = vrot.slane %v4864, 2
      %v4964 = vsel %vm1576, %v4963, %v4962
      %v4965 = vrot.slane %v4865, 1
      %v4966 = vsel %vm1037, %v4866, %v4965
      %v4967 = vrot.slane %v4867, 7
      %v4968 = vsel %vm1041, %v4967, %v4966
      %v4969 = vrot.slane %v4868, 6
      %v4970 = vsel %vm1045, %v4969, %v4968
      %v4971 = vrot.slane %v4869, 5
      %v4972 = vsel %vm1567, %v4971, %v4970
      %v4973 = vrot.slane %v4870, 4
      %v4974 = vsel %vm1570, %v4973, %v4972
      %v4975 = vrot.slane %v4871, 3
      %v4976 = vsel %vm1573, %v4975, %v4974
      %v4977 = vrot.slane %v4872, 2
      %v4978 = vsel %vm1576, %v4977, %v4976
      %v4979 = vrot.slane %v4873, 1
      %v4980 = vsel %vm1037, %v4874, %v4979
      %v4981 = vrot.slane %v4875, 7
      %v4982 = vsel %vm1041, %v4981, %v4980
      %v4983 = vrot.slane %v4876, 6
      %v4984 = vsel %vm1045, %v4983, %v4982
      %v4985 = vrot.slane %v4877, 5
      %v4986 = vsel %vm1567, %v4985, %v4984
      %v4987 = vrot.slane %v4878, 4
      %v4988 = vsel %vm1570, %v4987, %v4986
      %v4989 = vrot.slane %v4879, 3
      %v4990 = vsel %vm1573, %v4989, %v4988
      %v4991 = vrot.slane %v4880, 2
      %v4992 = vsel %vm1576, %v4991, %v4990
      %v4993 = vpack.c.b16 %v4908, %v4894
      %v4994 = vpack.c.b16 %v4936, %v4922
      %v4995 = vpack.c.b16 %v4964, %v4950
      %v4996 = vpack.c.b16 %v4992, %v4978
      %v4998 = vsel %vm1680, %v4993, 0
      %v5001 = vsel %vm1680, %v4994, 0
      %v5004 = vsel %vm1680, %v4995, 0
      %v5007 = vsel %vm1680, %v4996, 0
      %v5010 = vsel %vm1693, %v4624, 0
      %5012 = vmatpush.bf16.msra.mxu0 0
      %5013 = vmatpush.bf16.msra.mxu0 0
      %5014 = vmatpush.bf16.msra.mxu0 0
      %5015 = vmatpush.bf16.msra.mxu0 0
      %5016 = vmatpush.bf16.msra.mxu0 0
      %5017 = vmatpush.bf16.msra.mxu0 0
      %5018 = vmatpush.bf16.msra.mxu0 0
      %5019 = vmatpush.bf16.msra.mxu0 %v5010
      %5020 = vmatmul.bf16.gmra.mxu0 %v4998
      %v5021 = vpop.f32.mrf.mxu0
      %v5022 = vadd.f32 0.0, %v5021
      %v5023 = vpop.f32.mrf.mxu0
      %v5024 = vadd.f32 0.0, %v5023
      %5025 = vmatmul.bf16.gmra.mxu0 %v5001
      %v5026 = vpop.f32.mrf.mxu0
      %v5027 = vadd.f32 0.0, %v5026
      %v5028 = vpop.f32.mrf.mxu0
      %v5029 = vadd.f32 0.0, %v5028
      %5030 = vmatmul.bf16.gmra.mxu0 %v5004
      %v5031 = vpop.f32.mrf.mxu0
      %v5032 = vadd.f32 0.0, %v5031
      %v5033 = vpop.f32.mrf.mxu0
      %v5034 = vadd.f32 0.0, %v5033
      %5035 = vmatmul.bf16.gmra.mxu0 %v5007
      %v5036 = vpop.f32.mrf.mxu0
      %v5037 = vadd.f32 0.0, %v5036
      %v5038 = vpop.f32.mrf.mxu0
      %v5039 = vadd.f32 0.0, %v5038
      %5040 = vdwg.mxu0
      %v5041 = vadd.f32 %v4615, %v5022
      %v5042 = vadd.f32 %v4616, %v5024
      %v5043 = vadd.f32 %v4617, %v5027
      %v5044 = vadd.f32 %v4618, %v5029
      %v5045 = vadd.f32 %v4619, %v5032
      %v5046 = vadd.f32 %v4620, %v5034
      %v5047 = vadd.f32 %v4621, %v5037
      %v5048 = vadd.f32 %v4622, %v5039
      %s5049 = scalar_lea.vmem %s3, 32
      %v5050 = vld [vmem:[%s5049] sm:$0xf]
      %5051 = vst [vmem:[#allocation1] ss:$9 sm:$0xff] %v1069
      %v5052 = vld [vmem:[#allocation1] sm:$0xff]
      %5054 = vst [vmem:[#allocation1] ss:$9 sm:$0xff] %v1072
      %v5055 = vld [vmem:[#allocation1] sm:$0xff]
      %5057 = vst [vmem:[#allocation1] ss:$9 sm:$0xff] %v1075
      %v5058 = vld [vmem:[#allocation1] sm:$0xff]
      %5060 = vst [vmem:[#allocation1] ss:$9 sm:$0xff] %v1078
      %v5061 = vld [vmem:[#allocation1] sm:$0xff]
      %5063 = vst [vmem:[#allocation1] ss:$9 sm:$0xff] %v1081
      %v5064 = vld [vmem:[#allocation1] sm:$0xff]
      %5066 = vst [vmem:[#allocation1] ss:$9 sm:$0xff] %v1084
      %v5067 = vld [vmem:[#allocation1] sm:$0xff]
      %5069 = vst [vmem:[#allocation1] ss:$9 sm:$0xff] %v1087
      %v5070 = vld [vmem:[#allocation1] sm:$0xff]
      %5072 = vst [vmem:[#allocation1] ss:$9 sm:$0xff] %v1090
      %v5073 = vld [vmem:[#allocation1] sm:$0xff]
      %5075 = vst [vmem:[#allocation1] ss:$9 sm:$0xff] %v1096
      %v5076 = vld [vmem:[#allocation1] sm:$0xff]
      %5078 = vst [vmem:[#allocation1] ss:$9 sm:$0xff] %v1099
      %v5079 = vld [vmem:[#allocation1] sm:$0xff]
      %5081 = vst [vmem:[#allocation1] ss:$9 sm:$0xff] %v1102
      %v5082 = vld [vmem:[#allocation1] sm:$0xff]
      %5084 = vst [vmem:[#allocation1] ss:$9 sm:$0xff] %v1105
      %v5085 = vld [vmem:[#allocation1] sm:$0xff]
      %5087 = vst [vmem:[#allocation1] ss:$9 sm:$0xff] %v1108
      %v5088 = vld [vmem:[#allocation1] sm:$0xff]
      %5090 = vst [vmem:[#allocation1] ss:$9 sm:$0xff] %v1111
      %v5091 = vld [vmem:[#allocation1] sm:$0xff]
      %5093 = vst [vmem:[#allocation1] ss:$9 sm:$0xff] %v1114
      %v5094 = vld [vmem:[#allocation1] sm:$0xff]
      %5096 = vst [vmem:[#allocation1] ss:$9 sm:$0xff] %v1117
      %v5097 = vld [vmem:[#allocation1] sm:$0xff]
      %5099 = vst [vmem:[#allocation1] ss:$9 sm:$0xff] %v1123
      %v5100 = vld [vmem:[#allocation1] sm:$0xff]
      %5102 = vst [vmem:[#allocation1] ss:$9 sm:$0xff] %v1126
      %v5103 = vld [vmem:[#allocation1] sm:$0xff]
      %5105 = vst [vmem:[#allocation1] ss:$9 sm:$0xff] %v1129
      %v5106 = vld [vmem:[#allocation1] sm:$0xff]
      %5108 = vst [vmem:[#allocation1] ss:$9 sm:$0xff] %v1132
      %v5109 = vld [vmem:[#allocation1] sm:$0xff]
      %5111 = vst [vmem:[#allocation1] ss:$9 sm:$0xff] %v1135
      %v5112 = vld [vmem:[#allocation1] sm:$0xff]
      %5114 = vst [vmem:[#allocation1] ss:$9 sm:$0xff] %v1138
      %v5115 = vld [vmem:[#allocation1] sm:$0xff]
      %5117 = vst [vmem:[#allocation1] ss:$9 sm:$0xff] %v1141
      %v5118 = vld [vmem:[#allocation1] sm:$0xff]
      %5120 = vst [vmem:[#allocation1] ss:$9 sm:$0xff] %v1144
      %v5121 = vld [vmem:[#allocation1] sm:$0xff]
      %5123 = vst [vmem:[#allocation1] ss:$9 sm:$0xff] %v1150
      %v5124 = vld [vmem:[#allocation1] sm:$0xff]
      %5126 = vst [vmem:[#allocation1] ss:$9 sm:$0xff] %v1153
      %v5127 = vld [vmem:[#allocation1] sm:$0xff]
      %5129 = vst [vmem:[#allocation1] ss:$9 sm:$0xff] %v1156
      %v5130 = vld [vmem:[#allocation1] sm:$0xff]
      %5132 = vst [vmem:[#allocation1] ss:$9 sm:$0xff] %v1159
      %v5133 = vld [vmem:[#allocation1] sm:$0xff]
      %5135 = vst [vmem:[#allocation1] ss:$9 sm:$0xff] %v1162
      %v5136 = vld [vmem:[#allocation1] sm:$0xff]
      %5138 = vst [vmem:[#allocation1] ss:$9 sm:$0xff] %v1165
      %v5139 = vld [vmem:[#allocation1] sm:$0xff]
      %5141 = vst [vmem:[#allocation1] ss:$9 sm:$0xff] %v1168
      %v5142 = vld [vmem:[#allocation1] sm:$0xff]
      %5144 = vst [vmem:[#allocation1] ss:$9 sm:$0xff] %v1171
      %v5145 = vld [vmem:[#allocation1] sm:$0xff]
      %5147 = vst [vmem:[#allocation1] ss:$9 sm:$0xff] %v1177
      %v5148 = vld [vmem:[#allocation1] sm:$0xff]
      %5150 = vst [vmem:[#allocation1] ss:$9 sm:$0xff] %v1180
      %v5151 = vld [vmem:[#allocation1] sm:$0xff]
      %5153 = vst [vmem:[#allocation1] ss:$9 sm:$0xff] %v1183
      %v5154 = vld [vmem:[#allocation1] sm:$0xff]
      %5156 = vst [vmem:[#allocation1] ss:$9 sm:$0xff] %v1186
      %v5157 = vld [vmem:[#allocation1] sm:$0xff]
      %5159 = vst [vmem:[#allocation1] ss:$9 sm:$0xff] %v1189
      %v5160 = vld [vmem:[#allocation1] sm:$0xff]
      %5162 = vst [vmem:[#allocation1] ss:$9 sm:$0xff] %v1192
      %v5163 = vld [vmem:[#allocation1] sm:$0xff]
      %5165 = vst [vmem:[#allocation1] ss:$9 sm:$0xff] %v1195
      %v5166 = vld [vmem:[#allocation1] sm:$0xff]
      %5168 = vst [vmem:[#allocation1] ss:$9 sm:$0xff] %v1198
      %v5169 = vld [vmem:[#allocation1] sm:$0xff]
      %5171 = vst [vmem:[#allocation1] ss:$9 sm:$0xff] %v1204
      %v5172 = vld [vmem:[#allocation1] sm:$0xff]
      %5174 = vst [vmem:[#allocation1] ss:$9 sm:$0xff] %v1207
      %v5175 = vld [vmem:[#allocation1] sm:$0xff]
      %5177 = vst [vmem:[#allocation1] ss:$9 sm:$0xff] %v1210
      %v5178 = vld [vmem:[#allocation1] sm:$0xff]
      %5180 = vst [vmem:[#allocation1] ss:$9 sm:$0xff] %v1213
      %v5181 = vld [vmem:[#allocation1] sm:$0xff]
      %5183 = vst [vmem:[#allocation1] ss:$9 sm:$0xff] %v1216
      %v5184 = vld [vmem:[#allocation1] sm:$0xff]
      %5186 = vst [vmem:[#allocation1] ss:$9 sm:$0xff] %v1219
      %v5187 = vld [vmem:[#allocation1] sm:$0xff]
      %5189 = vst [vmem:[#allocation1] ss:$9 sm:$0xff] %v1222
      %v5190 = vld [vmem:[#allocation1] sm:$0xff]
      %5192 = vst [vmem:[#allocation1] ss:$9 sm:$0xff] %v1225
      %v5193 = vld [vmem:[#allocation1] sm:$0xff]
      %5195 = vst [vmem:[#allocation1] ss:$9 sm:$0xff] %v1231
      %v5196 = vld [vmem:[#allocation1] sm:$0xff]
      %5198 = vst [vmem:[#allocation1] ss:$9 sm:$0xff] %v1234
      %v5199 = vld [vmem:[#allocation1] sm:$0xff]
      %5201 = vst [vmem:[#allocation1] ss:$9 sm:$0xff] %v1237
      %v5202 = vld [vmem:[#allocation1] sm:$0xff]
      %5204 = vst [vmem:[#allocation1] ss:$9 sm:$0xff] %v1240
      %v5205 = vld [vmem:[#allocation1] sm:$0xff]
      %5207 = vst [vmem:[#allocation1] ss:$9 sm:$0xff] %v1243
      %v5208 = vld [vmem:[#allocation1] sm:$0xff]
      %5210 = vst [vmem:[#allocation1] ss:$9 sm:$0xff] %v1246
      %v5211 = vld [vmem:[#allocation1] sm:$0xff]
      %5213 = vst [vmem:[#allocation1] ss:$9 sm:$0xff] %v1249
      %v5214 = vld [vmem:[#allocation1] sm:$0xff]
      %5216 = vst [vmem:[#allocation1] ss:$9 sm:$0xff] %v1252
      %v5217 = vld [vmem:[#allocation1] sm:$0xff]
      %5219 = vst [vmem:[#allocation1] ss:$9 sm:$0xff] %v4169
      %v5220 = vld [vmem:[#allocation1] sm:$0xff]
      %5222 = vst [vmem:[#allocation1] ss:$9 sm:$0xff] %v4172
      %v5223 = vld [vmem:[#allocation1] sm:$0xff]
      %5225 = vst [vmem:[#allocation1] ss:$9 sm:$0xff] %v4175
      %v5226 = vld [vmem:[#allocation1] sm:$0xff]
      %5228 = vst [vmem:[#allocation1] ss:$9 sm:$0xff] %v4178
      %v5229 = vld [vmem:[#allocation1] sm:$0xff]
      %5231 = vst [vmem:[#allocation1] ss:$9 sm:$0xff] %v4181
      %v5232 = vld [vmem:[#allocation1] sm:$0xff]
      %5234 = vst [vmem:[#allocation1] ss:$9 sm:$0xff] %v4184
      %v5235 = vld [vmem:[#allocation1] sm:$0xff]
      %5237 = vst [vmem:[#allocation1] ss:$9 sm:$0xff] %v4187
      %v5238 = vld [vmem:[#allocation1] sm:$0xff]
      %5240 = vst [vmem:[#allocation1] ss:$9 sm:$0xff] %v4190
      %v5241 = vld [vmem:[#allocation1] sm:$0xff]
      %v5243 = vunpack.c.l.b16 %v5052
      %v5244 = vunpack.c.l.b16 %v5055
      %v5245 = vunpack.c.l.b16 %v5058
      %v5246 = vunpack.c.l.b16 %v5061
      %v5247 = vunpack.c.l.b16 %v5064
      %v5248 = vunpack.c.l.b16 %v5067
      %v5249 = vunpack.c.l.b16 %v5070
      %v5250 = vunpack.c.l.b16 %v5073
      %v5251 = vunpack.c.l.b16 %v5076
      %v5252 = vunpack.c.l.b16 %v5079
      %v5253 = vunpack.c.l.b16 %v5082
      %v5254 = vunpack.c.l.b16 %v5085
      %v5255 = vunpack.c.l.b16 %v5088
      %v5256 = vunpack.c.l.b16 %v5091
      %v5257 = vunpack.c.l.b16 %v5094
      %v5258 = vunpack.c.l.b16 %v5097
      %v5259 = vunpack.c.l.b16 %v5100
      %v5260 = vunpack.c.l.b16 %v5103
      %v5261 = vunpack.c.l.b16 %v5106
      %v5262 = vunpack.c.l.b16 %v5109
      %v5263 = vunpack.c.l.b16 %v5112
      %v5264 = vunpack.c.l.b16 %v5115
      %v5265 = vunpack.c.l.b16 %v5118
      %v5266 = vunpack.c.l.b16 %v5121
      %v5267 = vunpack.c.l.b16 %v5124
      %v5268 = vunpack.c.l.b16 %v5127
      %v5269 = vunpack.c.l.b16 %v5130
      %v5270 = vunpack.c.l.b16 %v5133
      %v5271 = vunpack.c.l.b16 %v5136
      %v5272 = vunpack.c.l.b16 %v5139
      %v5273 = vunpack.c.l.b16 %v5142
      %v5274 = vunpack.c.l.b16 %v5145
      %v5275 = vunpack.c.l.b16 %v5148
      %v5276 = vunpack.c.l.b16 %v5151
      %v5277 = vunpack.c.l.b16 %v5154
      %v5278 = vunpack.c.l.b16 %v5157
      %v5279 = vunpack.c.l.b16 %v5160
      %v5280 = vunpack.c.l.b16 %v5163
      %v5281 = vunpack.c.l.b16 %v5166
      %v5282 = vunpack.c.l.b16 %v5169
      %v5283 = vunpack.c.l.b16 %v5172
      %v5284 = vunpack.c.l.b16 %v5175
      %v5285 = vunpack.c.l.b16 %v5178
      %v5286 = vunpack.c.l.b16 %v5181
      %v5287 = vunpack.c.l.b16 %v5184
      %v5288 = vunpack.c.l.b16 %v5187
      %v5289 = vunpack.c.l.b16 %v5190
      %v5290 = vunpack.c.l.b16 %v5193
      %v5291 = vunpack.c.l.b16 %v5196
      %v5292 = vunpack.c.l.b16 %v5199
      %v5293 = vunpack.c.l.b16 %v5202
      %v5294 = vunpack.c.l.b16 %v5205
      %v5295 = vunpack.c.l.b16 %v5208
      %v5296 = vunpack.c.l.b16 %v5211
      %v5297 = vunpack.c.l.b16 %v5214
      %v5298 = vunpack.c.l.b16 %v5217
      %v5299 = vunpack.c.l.b16 %v5220
      %v5300 = vunpack.c.l.b16 %v5223
      %v5301 = vunpack.c.l.b16 %v5226
      %v5302 = vunpack.c.l.b16 %v5229
      %v5303 = vunpack.c.l.b16 %v5232
      %v5304 = vunpack.c.l.b16 %v5235
      %v5305 = vunpack.c.l.b16 %v5238
      %v5306 = vunpack.c.l.b16 %v5241
      %v5307 = vrot.slane %v5244, 7
      %v5308 = vsel %vm1037, %v5307, %v5243
      %v5309 = vrot.slane %v5245, 6
      %v5310 = vsel %vm1041, %v5309, %v5308
      %v5311 = vrot.slane %v5246, 5
      %v5312 = vsel %vm1045, %v5311, %v5310
      %v5313 = vrot.slane %v5247, 4
      %v5314 = vsel %vm1567, %v5313, %v5312
      %v5315 = vrot.slane %v5248, 3
      %v5316 = vsel %vm1570, %v5315, %v5314
      %v5317 = vrot.slane %v5249, 2
      %v5318 = vsel %vm1573, %v5317, %v5316
      %v5319 = vrot.slane %v5250, 1
      %v5320 = vsel %vm1576, %v5319, %v5318
      %v5321 = vrot.slane %v5252, 7
      %v5322 = vsel %vm1037, %v5321, %v5251
      %v5323 = vrot.slane %v5253, 6
      %v5324 = vsel %vm1041, %v5323, %v5322
      %v5325 = vrot.slane %v5254, 5
      %v5326 = vsel %vm1045, %v5325, %v5324
      %v5327 = vrot.slane %v5255, 4
      %v5328 = vsel %vm1567, %v5327, %v5326
      %v5329 = vrot.slane %v5256, 3
      %v5330 = vsel %vm1570, %v5329, %v5328
      %v5331 = vrot.slane %v5257, 2
      %v5332 = vsel %vm1573, %v5331, %v5330
      %v5333 = vrot.slane %v5258, 1
      %v5334 = vsel %vm1576, %v5333, %v5332
      %v5335 = vrot.slane %v5260, 7
      %v5336 = vsel %vm1037, %v5335, %v5259
      %v5337 = vrot.slane %v5261, 6
      %v5338 = vsel %vm1041, %v5337, %v5336
      %v5339 = vrot.slane %v5262, 5
      %v5340 = vsel %vm1045, %v5339, %v5338
      %v5341 = vrot.slane %v5263, 4
      %v5342 = vsel %vm1567, %v5341, %v5340
      %v5343 = vrot.slane %v5264, 3
      %v5344 = vsel %vm1570, %v5343, %v5342
      %v5345 = vrot.slane %v5265, 2
      %v5346 = vsel %vm1573, %v5345, %v5344
      %v5347 = vrot.slane %v5266, 1
      %v5348 = vsel %vm1576, %v5347, %v5346
      %v5349 = vrot.slane %v5268, 7
      %v5350 = vsel %vm1037, %v5349, %v5267
      %v5351 = vrot.slane %v5269, 6
      %v5352 = vsel %vm1041, %v5351, %v5350
      %v5353 = vrot.slane %v5270, 5
      %v5354 = vsel %vm1045, %v5353, %v5352
      %v5355 = vrot.slane %v5271, 4
      %v5356 = vsel %vm1567, %v5355, %v5354
      %v5357 = vrot.slane %v5272, 3
      %v5358 = vsel %vm1570, %v5357, %v5356
      %v5359 = vrot.slane %v5273, 2
      %v5360 = vsel %vm1573, %v5359, %v5358
      %v5361 = vrot.slane %v5274, 1
      %v5362 = vsel %vm1576, %v5361, %v5360
      %v5363 = vrot.slane %v5276, 7
      %v5364 = vsel %vm1037, %v5363, %v5275
      %v5365 = vrot.slane %v5277, 6
      %v5366 = vsel %vm1041, %v5365, %v5364
      %v5367 = vrot.slane %v5278, 5
      %v5368 = vsel %vm1045, %v5367, %v5366
      %v5369 = vrot.slane %v5279, 4
      %v5370 = vsel %vm1567, %v5369, %v5368
      %v5371 = vrot.slane %v5280, 3
      %v5372 = vsel %vm1570, %v5371, %v5370
      %v5373 = vrot.slane %v5281, 2
      %v5374 = vsel %vm1573, %v5373, %v5372
      %v5375 = vrot.slane %v5282, 1
      %v5376 = vsel %vm1576, %v5375, %v5374
      %v5377 = vrot.slane %v5284, 7
      %v5378 = vsel %vm1037, %v5377, %v5283
      %v5379 = vrot.slane %v5285, 6
      %v5380 = vsel %vm1041, %v5379, %v5378
      %v5381 = vrot.slane %v5286, 5
      %v5382 = vsel %vm1045, %v5381, %v5380
      %v5383 = vrot.slane %v5287, 4
      %v5384 = vsel %vm1567, %v5383, %v5382
      %v5385 = vrot.slane %v5288, 3
      %v5386 = vsel %vm1570, %v5385, %v5384
      %v5387 = vrot.slane %v5289, 2
      %v5388 = vsel %vm1573, %v5387, %v5386
      %v5389 = vrot.slane %v5290, 1
      %v5390 = vsel %vm1576, %v5389, %v5388
      %v5391 = vrot.slane %v5292, 7
      %v5392 = vsel %vm1037, %v5391, %v5291
      %v5393 = vrot.slane %v5293, 6
      %v5394 = vsel %vm1041, %v5393, %v5392
      %v5395 = vrot.slane %v5294, 5
      %v5396 = vsel %vm1045, %v5395, %v5394
      %v5397 = vrot.slane %v5295, 4
      %v5398 = vsel %vm1567, %v5397, %v5396
      %v5399 = vrot.slane %v5296, 3
      %v5400 = vsel %vm1570, %v5399, %v5398
      %v5401 = vrot.slane %v5297, 2
      %v5402 = vsel %vm1573, %v5401, %v5400
      %v5403 = vrot.slane %v5298, 1
      %v5404 = vsel %vm1576, %v5403, %v5402
      %v5405 = vrot.slane %v5300, 7
      %v5406 = vsel %vm1037, %v5405, %v5299
      %v5407 = vrot.slane %v5301, 6
      %v5408 = vsel %vm1041, %v5407, %v5406
      %v5409 = vrot.slane %v5302, 5
      %v5410 = vsel %vm1045, %v5409, %v5408
      %v5411 = vrot.slane %v5303, 4
      %v5412 = vsel %vm1567, %v5411, %v5410
      %v5413 = vrot.slane %v5304, 3
      %v5414 = vsel %vm1570, %v5413, %v5412
      %v5415 = vrot.slane %v5305, 2
      %v5416 = vsel %vm1573, %v5415, %v5414
      %v5417 = vrot.slane %v5306, 1
      %v5418 = vsel %vm1576, %v5417, %v5416
      %v5419 = vpack.c.b16 %v5334, %v5320
      %v5420 = vpack.c.b16 %v5362, %v5348
      %v5421 = vpack.c.b16 %v5390, %v5376
      %v5422 = vpack.c.b16 %v5418, %v5404
      %v5424 = vsel %vm1680, %v5419, 0
      %v5427 = vsel %vm1680, %v5420, 0
      %v5430 = vsel %vm1680, %v5421, 0
      %v5433 = vsel %vm1680, %v5422, 0
      %v5436 = vsel %vm1693, %v5050, 0
      %5438 = vmatpush.bf16.msra.mxu0 0
      %5439 = vmatpush.bf16.msra.mxu0 0
      %5440 = vmatpush.bf16.msra.mxu0 0
      %5441 = vmatpush.bf16.msra.mxu0 0
      %5442 = vmatpush.bf16.msra.mxu0 0
      %5443 = vmatpush.bf16.msra.mxu0 0
      %5444 = vmatpush.bf16.msra.mxu0 0
      %5445 = vmatpush.bf16.msra.mxu0 %v5436
      %5446 = vmatmul.bf16.gmra.mxu0 %v5424
      %v5447 = vpop.f32.mrf.mxu0
      %v5448 = vadd.f32 0.0, %v5447
      %v5449 = vpop.f32.mrf.mxu0
      %v5450 = vadd.f32 0.0, %v5449
      %5451 = vmatmul.bf16.gmra.mxu0 %v5427
      %v5452 = vpop.f32.mrf.mxu0
      %v5453 = vadd.f32 0.0, %v5452
      %v5454 = vpop.f32.mrf.mxu0
      %v5455 = vadd.f32 0.0, %v5454
      %5456 = vmatmul.bf16.gmra.mxu0 %v5430
      %v5457 = vpop.f32.mrf.mxu0
      %v5458 = vadd.f32 0.0, %v5457
      %v5459 = vpop.f32.mrf.mxu0
      %v5460 = vadd.f32 0.0, %v5459
      %5461 = vmatmul.bf16.gmra.mxu0 %v5433
      %v5462 = vpop.f32.mrf.mxu0
      %v5463 = vadd.f32 0.0, %v5462
      %v5464 = vpop.f32.mrf.mxu0
      %v5465 = vadd.f32 0.0, %v5464
      %5466 = vdwg.mxu0
      %v5467 = vadd.f32 %v5041, %v5448
      %v5468 = vadd.f32 %v5042, %v5450
      %v5469 = vadd.f32 %v5043, %v5453
      %v5470 = vadd.f32 %v5044, %v5455
      %v5471 = vadd.f32 %v5045, %v5458
      %v5472 = vadd.f32 %v5046, %v5460
      %v5473 = vadd.f32 %v5047, %v5463
      %v5474 = vadd.f32 %v5048, %v5465
      %v5475 = vsel %vm1680, %v5467, 0.0
      %v5476 = vsel %vm1680, %v5468, 0.0
      %v5477 = vadd.f32 %v5475, %v5476
      %v5478 = vsel %vm1680, %v5469, 0.0
      %v5479 = vadd.f32 %v5477, %v5478
      %v5480 = vsel %vm1680, %v5470, 0.0
      %v5481 = vadd.f32 %v5479, %v5480
      %v5482 = vsel %vm1680, %v5471, 0.0
      %v5483 = vadd.f32 %v5481, %v5482
      %v5484 = vsel %vm1680, %v5472, 0.0
      %v5485 = vadd.f32 %v5483, %v5484
      %v5486 = vsel %vm1680, %v5473, 0.0
      %v5487 = vadd.f32 %v5485, %v5486
      %v5488 = vsel %vm1680, %v5474, 0.0
      %v5489 = vadd.f32 %v5487, %v5488
      %v5490 = vrot.slane %v5489, 4
      %v5491 = vadd.f32 %v5489, %v5490
      %v5492 = vrot.slane %v5491, 2
      %v5493 = vadd.f32 %v5491, %v5492
      %v5494 = vrot.slane %v5493, 1
      %v5495 = vadd.f32 %v5493, %v5494
      %v5496 = vmul.f32 %v5467, %v5467
      %v5497 = vmul.f32 %v5468, %v5468
      %v5498 = vmul.f32 %v5469, %v5469
      %v5499 = vmul.f32 %v5470, %v5470
      %v5500 = vmul.f32 %v5471, %v5471
      %v5501 = vmul.f32 %v5472, %v5472
      %v5502 = vmul.f32 %v5473, %v5473
      %v5503 = vmul.f32 %v5474, %v5474
      %v5504 = vsel %vm1680, %v5496, 0.0
      %v5505 = vsel %vm1680, %v5497, 0.0
      %v5506 = vadd.f32 %v5504, %v5505
      %v5507 = vsel %vm1680, %v5498, 0.0
      %v5508 = vadd.f32 %v5506, %v5507
      %v5509 = vsel %vm1680, %v5499, 0.0
      %v5510 = vadd.f32 %v5508, %v5509
      %v5511 = vsel %vm1680, %v5500, 0.0
      %v5512 = vadd.f32 %v5510, %v5511
      %v5513 = vsel %vm1680, %v5501, 0.0
      %v5514 = vadd.f32 %v5512, %v5513
      %v5515 = vsel %vm1680, %v5502, 0.0
      %v5516 = vadd.f32 %v5514, %v5515
      %v5517 = vsel %vm1680, %v5503, 0.0
      %v5518 = vadd.f32 %v5516, %v5517
      %v5519 = vrot.slane %v5518, 4
      %v5520 = vadd.f32 %v5518, %v5519
      %v5521 = vrot.slane %v5520, 2
      %v5522 = vadd.f32 %v5520, %v5521
      %v5523 = vrot.slane %v5522, 1
      %v5524 = vadd.f32 %v5522, %v5523
      %v5525 = vsel %vm1033, %v5495, %v5524
      %vm5526 = vcmask 1041408
      %v5527 = vsel %vm5526, %v5525, 0.0
      %5528 = vst.msk [vmem:[%s235] sm:$0xff] %vm1680, %v5527
      %v5529 = vpack.c.bf16 %v5467, %v5467
      %v5530 = vpack.c.bf16 %v5468, %v5468
      %v5531 = vpack.c.bf16 %v5469, %v5469
      %v5532 = vpack.c.bf16 %v5470, %v5470
      %v5533 = vpack.c.bf16 %v5471, %v5471
      %v5534 = vpack.c.bf16 %v5472, %v5472
      %v5535 = vpack.c.bf16 %v5473, %v5473
      %v5536 = vpack.c.bf16 %v5474, %v5474
      %5537 = vst.msk [vmem:[%s231] sm:$0xf] %vm237, %v5529
      %5538 = vst.msk [vmem:[%s231 + $0x4] sm:$0xf] %vm237, %v5530
      %5539 = vst.msk [vmem:[%s231 + $0x8] sm:$0xf] %vm237, %v5531
      %5540 = vst.msk [vmem:[%s231 + $0xc] sm:$0xf] %vm237, %v5532
      %5541 = vst.msk [vmem:[%s231 + $0x10] sm:$0xf] %vm237, %v5533
      %5542 = vst.msk [vmem:[%s231 + $0x14] sm:$0xf] %vm237, %v5534
      %5543 = vst.msk [vmem:[%s231 + $0x18] sm:$0xf] %vm237, %v5535
      %5544 = vst.msk [vmem:[%s231 + $0x1c] sm:$0xf] %vm237, %v5536
      %p5545 = scmp.lt.s32.totalorder %s17, 1
      %s5546 = scalar_select %p5545, %s17, 1
      %s5547 = smul.addr %s5546, 8
      %s5548 = smul.addr %s5547, 4
      %s5549 = scalar_lea.vmem %s4, %s5548
      %p5550 = scmp.lt.s32.totalorder %s17, 1
      %s5551 = scalar_select %p5550, %s17, 1
      %s5552 = smul.addr %s5551, 8
      %s5553 = scalar_lea.vmem %s5, %s5552
      // Predicated region
      $region37: #{bottleneck_forward.6} parent=35 // pred_check
        %p5554 = pneg %p124
      $region38: #{bottleneck_forward.6} parent=35 // pred_check_branch
        %5556 = sbr.rel (%p5554) target = $region40
      $region39: #{bottleneck_forward.6} parent=35 // pred_region
        _
      $region40: #{bottleneck_forward.6} parent=35 // pred_fallthru
        _
      // Predicated region
      $region41: #{bottleneck_forward.6} parent=35 // pred_check
        %p5557 = pneg %p150
      $region42: #{bottleneck_forward.6} parent=35 // pred_check_branch
        %5559 = sbr.rel (%p5557) target = $region44
      $region43: #{bottleneck_forward.6} parent=35 // pred_region
        _
      $region44: #{bottleneck_forward.6} parent=35 // pred_fallthru
        _
    $region36: #{bottleneck_forward.6} parent=5 // pred_fallthru
      _
    %p5560 = scmp.le.s32.totalorder 2, %s12
    // Predicated region
    $region45: #{bottleneck_forward.6} parent=5 // pred_check
      %p5561 = pneg %p5560
    $region46: #{bottleneck_forward.6} parent=5 // pred_check_branch
      %5563 = sbr.rel (%p5561) target = $region48
    $region47: #{bottleneck_forward.6} parent=5 // pred_region
      %s5564 = ssub.s32 %s12, 2
      // Predicated region
      $region49: #{bottleneck_forward.6} parent=47 // pred_check
        %p5565 = pneg %p130
      $region50: #{bottleneck_forward.6} parent=47 // pred_check_branch
        %5567 = sbr.rel (%p5565) target = $region52
      $region51: #{bottleneck_forward.6} parent=47 // pred_region
        %p5568 = scmp.lt.s32.totalorder %s18, 1
        %s5569 = scalar_select %p5568, %s18, 1
        %s5570 = smul.addr %s5569, 8
        %s5571 = smul.addr %s5570, 4
        %s5572 = scalar_lea.vmem %s4, %s5571
      $region52: #{bottleneck_forward.6} parent=47 // pred_fallthru
        _
      // Predicated region
      $region53: #{bottleneck_forward.6} parent=47 // pred_check
        %p5573 = pneg %p156
      $region54: #{bottleneck_forward.6} parent=47 // pred_check_branch
        %5575 = sbr.rel (%p5573) target = $region56
      $region55: #{bottleneck_forward.6} parent=47 // pred_region
        %p5576 = scmp.lt.s32.totalorder %s18, 1
        %s5577 = scalar_select %p5576, %s18, 1
        %s5578 = smul.addr %s5577, 8
        %s5579 = scalar_lea.vmem %s5, %s5578
      $region56: #{bottleneck_forward.6} parent=47 // pred_fallthru
        _
    $region48: #{bottleneck_forward.6} parent=5 // pred_fallthru
      _
  $region6: #{bottleneck_forward.6} parent=0 // loop_footer
    %s16 = sadd.s32 1, %s12
  $region7: #{bottleneck_forward.6} parent=0 // loop_footer_branch
    %11 = sbr.rel target = $region3
  $region8: #{bottleneck_forward.6} parent=0 // loop_exit
    _

</llo_original>
